<compile_context>
chip_gen: v5e
topology: v5e:2x2
jax: 0.10.0
libtpu: 0.0.40
codegen_flags: <defaults>
</compile_context>

<pallas_src>
import functools

import jax
import jax.numpy as jnp
from jax import lax
from jax.experimental import pallas as pl
from jax.experimental.pallas import tpu as pltpu


def _vmem_limit_bytes():
    """Generation-aware scoped-VMEM request (v5e/v6e ~96 MiB, v7x ~48 MiB)."""
    try:
        cap = int(pltpu.get_tpu_info().vmem_capacity_bytes)
        return max(32 * 1024 * 1024, min(3 * cap // 4, 96 * 1024 * 1024))
    except Exception:
        return 32 * 1024 * 1024


_VMEM_LIMIT = _vmem_limit_bytes()


def _pick_tile(n, target, mult):
    """Largest tile <= target that divides n and is a multiple of `mult`; else n."""
    if n <= target:
        return n
    t = (min(target, n) // mult) * mult
    while t >= mult:
        if n % t == 0:
            return t
        t -= mult
    return n


def _pick_th(h, wd, target_rows=1024):
    """Largest divisor th of h such that th*wd <= max(target_rows, wd)."""
    th = 1
    cap = max(target_rows, wd)
    for t in range(1, h + 1):
        if h % t == 0 and t * wd <= cap:
            th = t
    return th


def _const_spec(shape, index_map):
    """BlockSpec for grid-invariant operands; single-buffered when supported."""
    try:
        return pl.BlockSpec(shape, index_map, pipeline_mode=pl.Buffered(1))
    except TypeError:  # older jax without pipeline_mode kwarg
        return pl.BlockSpec(shape, index_map)


# ----------------------------- LayerNorm -------------------------------------

def _layernorm_kernel(x_ref, g_ref, b_ref, o_ref):
    x = x_ref[...].astype(jnp.float32)
    mu = jnp.mean(x, axis=-1, keepdims=True)
    var = jnp.mean((x - mu) * (x - mu), axis=-1, keepdims=True)
    y = (x - mu) * lax.rsqrt(var + 1e-5) * g_ref[...] + b_ref[...]
    o_ref[...] = y.astype(o_ref.dtype)


def pallas_layernorm(x, gamma, beta, *, out_dtype=jnp.float32, row_tile=1024):
    M, C = x.shape
    tr = _pick_tile(M, row_tile, 8)
    return pl.pallas_call(
        _layernorm_kernel,
        out_shape=jax.ShapeDtypeStruct((M, C), out_dtype),
        grid=(M // tr,),
        in_specs=[pl.BlockSpec((tr, C), lambda i: (i, 0)),
                  pl.BlockSpec((1, C), lambda i: (0, 0)),
                  pl.BlockSpec((1, C), lambda i: (0, 0))],
        out_specs=pl.BlockSpec((tr, C), lambda i: (i, 0)),
        compiler_params=pltpu.CompilerParams(
            dimension_semantics=("parallel",),
            vmem_limit_bytes=_VMEM_LIMIT),
    )(x, gamma.reshape(1, C), beta.reshape(1, C))


# ------------------ Tiled linear (bf16 MXU, f32 accumulate) -------------------

def _linear_kernel(*refs, activation, nk, has_res):
    if has_res:
        x_ref, w_ref, b_ref, r_ref, o_ref, acc_ref = refs
    else:
        x_ref, w_ref, b_ref, o_ref, acc_ref = refs
        r_ref = None
    k = pl.program_id(2)

    @pl.when(k == 0)
    def _init():
        acc_ref[...] = jnp.zeros_like(acc_ref)

    acc_ref[...] += jnp.dot(x_ref[...].astype(jnp.bfloat16), w_ref[...],
                            preferred_element_type=jnp.float32)

    @pl.when(k == nk - 1)
    def _finalize():
        y = acc_ref[...] + b_ref[...]
        if activation == "gelu":
            # TODO(synk): torch nn.GELU defaults to exact erf; tanh approx here.
            y = jax.nn.gelu(y, approximate=True)
        if r_ref is not None:
            y = y + r_ref[...]          # fused residual add
        o_ref[...] = y.astype(o_ref.dtype)


def pallas_linear(x, w, b, activation=None, residual=None,
                  out_dtype=jnp.float32, tm=512, tn=512, tk=512):
    M, K = x.shape
    _, N = w.shape
    TM = _pick_tile(M, tm, 8)
    TN = _pick_tile(N, tn, 128)
    TK = _pick_tile(K, tk, 128)
    nk = K // TK
    has_res = residual is not None

    in_specs = [pl.BlockSpec((TM, TK), lambda i, j, k: (i, k)),
                pl.BlockSpec((TK, TN), lambda i, j, k: (k, j)),
                pl.BlockSpec((1, TN), lambda i, j, k: (0, j))]
    args = [x, w.astype(jnp.bfloat16), b.reshape(1, N)]
    if has_res:
        in_specs.append(pl.BlockSpec((TM, TN), lambda i, j, k: (i, j)))
        args.append(residual)

    return pl.pallas_call(
        functools.partial(_linear_kernel, activation=activation, nk=nk,
                          has_res=has_res),
        out_shape=jax.ShapeDtypeStruct((M, N), out_dtype),
        grid=(M // TM, N // TN, nk),
        in_specs=in_specs,
        out_specs=pl.BlockSpec((TM, TN), lambda i, j, k: (i, j)),
        scratch_shapes=[pltpu.VMEM((TM, TN), jnp.float32)],
        compiler_params=pltpu.CompilerParams(
            dimension_semantics=("parallel", "parallel", "arbitrary"),
            vmem_limit_bytes=_VMEM_LIMIT),
    )(*args)


# ---- Physics attention pass A: fused conv + slice softmax + slice reduce -----

def _slice_reduce_kernel(x_ref, w_ref, b_ref, seg_ref, sw_ref, st_ref, sn_ref,
                         *, th, W, D, HG, C3, O):
    i = pl.program_id(1)
    WD = W * D
    TM = th * WD

    # Fused 3x3x3 conv projection: the kd taps were folded into the 3C lane
    # dim of the slab by the wrapper; the 9 in-plane (kh, kw) taps are shifted
    # VMEM windows of the haloed slab -> 9 bf16 MXU matmuls, f32 accumulate.
    acc = jnp.zeros((TM, O), jnp.float32)
    for kh in range(3):
        for kw in range(3):
            win = x_ref[0, 0, kh:kh + th, kw * D:kw * D + WD, :]   # (th,WD,3C)
            acc = acc + jnp.dot(win.reshape(TM, C3), w_ref[kh * 3 + kw],
                                preferred_element_type=jnp.float32)
    acts = acc + b_ref[...]                     # (TM, HG + inner)
    logits = acts[:, :HG]                       # slice logits (1/temp folded)
    fx_mid = acts[:, HG:]                       # value branch

    # Per-head softmax over the slice dim, fully lane-dense: one exp, per-head
    # sums via a block-diagonal ones matmul (MXU), exact divide.
    # TODO(synk): uses the row-global max as the stabilization shift (exact in
    # infinite precision; per-head max would be stricter against underflow).
    m = jnp.max(logits, axis=-1, keepdims=True)
    e = jnp.exp(logits - m)
    denom = jnp.dot(e, seg_ref[...], preferred_element_type=jnp.float32)
    sw = e / jnp.maximum(denom, 1e-30)          # (TM, HG) f32
    sw_bf = sw.astype(jnp.bfloat16)
    sw_ref[0] = sw_bf

    @pl.when(i == 0)
    def _init():
        st_ref[...] = jnp.zeros_like(st_ref)
        sn_ref[...] = jnp.zeros_like(sn_ref)

    # slice tokens: st += sw^T @ fx_mid ; slice norm: sn += sw^T @ 1
    # TODO(synk): full (HG, inner) outer product; only the per-head
    # block-diagonal (G, dh) blocks are consumed downstream (~1/heads of it).
    st_ref[0] += lax.dot_general(sw_bf, fx_mid.astype(jnp.bfloat16),
                                 (((0,), (0,)), ((), ())),
                                 preferred_element_type=jnp.float32)
    ones = jnp.ones((TM, 1), jnp.float32)
    sn_ref[0] += lax.dot_general(sw, ones, (((0,), (0,)), ((), ())),
                                 preferred_element_type=jnp.float32)


def attn_pass_a(y1, p, *, H, W, D, heads):
    """y1: ln_1(fx) in bf16, (B, N, C).  Returns (sw, st, sn)."""
    B, N, C = y1.shape
    dh = C // heads
    inner = dh * heads
    G = p["slice_w"].shape[1]
    HG = heads * G
    O = HG + inner

    # Fold Conv3d(in_project_x) -> in_project_slice (block-diag, 1/temperature
    # folded) and Conv3d(in_project_fx) into one per-tap bf16 weight stack.
    inv_t = 1.0 / p["temperature"]                               # (heads,)
    ws_bd = jnp.zeros((inner, HG), jnp.float32)
    b_sl = jnp.zeros((HG,), jnp.float32)
    for h in range(heads):
        ws_bd = ws_bd.at[h * dh:(h + 1) * dh, h * G:(h + 1) * G].set(
            p["slice_w"] * inv_t[h])
        b_sl = b_sl.at[h * G:(h + 1) * G].set(p["slice_b"] * inv_t[h])
    Wx_k = p["conv_x_w"].transpose(2, 3, 4, 1, 0)                # (3,3,3,C,inner)
    Wf_k = p["conv_fx_w"].transpose(2, 3, 4, 1, 0)               # (3,3,3,C,inner)
    W_slice_k = jnp.einsum("abcio,og->abcig", Wx_k, ws_bd)       # (3,3,3,C,HG)
    w_all = jnp.concatenate([W_slice_k, Wf_k], axis=-1)          # (3,3,3,C,O)
    # rows ordered (kd, c) to match the D-axis im2col lane layout
    w9 = w_all.reshape(3, 3, 3 * C, O).reshape(9, 3 * C, O).astype(jnp.bfloat16)
    b_slice = p["conv_x_b"] @ ws_bd + b_sl
    b_fused = jnp.concatenate([b_slice, p["conv_fx_b"]]).reshape(1, O)
    seg = jnp.kron(jnp.eye(heads, dtype=jnp.float32),
                   jnp.ones((G, G), jnp.float32))                # (HG, HG)

    # D-axis im2col (3C lanes) + haloed H-slabs, bf16.  No 27x materialization.
    WD = W * D
    th = _pick_th(H, WD)
    nH = H // th
    TM = th * WD
    y5 = y1.reshape(B, H, W, D, C)
    xp = jnp.pad(y5, ((0, 0), (1, 1), (1, 1), (1, 1), (0, 0)))
    xd = jnp.concatenate([xp[:, :, :, kd:kd + D, :] for kd in range(3)], axis=-1)
    xd = xd.reshape(B, H + 2, (W + 2) * D, 3 * C)
    slabs = jnp.stack([xd[:, i * th:i * th + th + 2] for i in range(nH)],
                      axis=1)                    # (B, nH, th+2, (W+2)*D, 3C)

    kern = functools.partial(_slice_reduce_kernel, th=th, W=W, D=D, HG=HG,
                             C3=3 * C, O=O)
    return pl.pallas_call(
        kern,
        out_shape=(jax.ShapeDtypeStruct((B, N, HG), jnp.bfloat16),
                   jax.ShapeDtypeStruct((B, HG, inner), jnp.float32),
                   jax.ShapeDtypeStruct((B, HG, 1), jnp.float32)),
        grid=(B, nH),
        in_specs=[pl.BlockSpec((1, 1, th + 2, (W + 2) * D, 3 * C),
                               lambda b, i: (b, i, 0, 0, 0)),
                  _const_spec((9, 3 * C, O), lambda b, i: (0, 0, 0)),
                  pl.BlockSpec((1, O), lambda b, i: (0, 0)),
                  pl.BlockSpec((HG, HG), lambda b, i: (0, 0))],
        out_specs=(pl.BlockSpec((1, TM, HG), lambda b, i: (b, i, 0)),
                   pl.BlockSpec((1, HG, inner), lambda b, i: (b, 0, 0)),
                   pl.BlockSpec((1, HG, 1), lambda b, i: (b, 0, 0))),
        compiler_params=pltpu.CompilerParams(
            dimension_semantics=("parallel", "arbitrary"),
            vmem_limit_bytes=_VMEM_LIMIT),
    )(slabs, w9, b_fused, seg)


# ---- Physics attention pass C: slice attention + de-slice + residual + LN2 ---

def _deslice_attn_kernel(sw_ref, st_ref, sn_ref, wq_ref, wk_ref, wv_ref,
                         wo_ref, bo_ref, g2_ref, b2_ref, res_ref,
                         o_ref, y2_ref, m_scr, *, heads, G, dh, scale):
    i = pl.program_id(1)

    # Former "pass B": per-head slice-token self-attention with this head's
    # slice of to_out folded in.  Runs once per batch element (first N-chunk),
    # result cached in VMEM scratch for the remaining chunks.
    @pl.when(i == 0)
    def _slice_token_attention():
        st_all = st_ref[0]                               # (HG, inner) f32
        inv_sn = 1.0 / (sn_ref[0] + 1e-5)                # (HG, 1) f32, exact
        rows = []
        for h in range(heads):
            gs, ds = h * G, h * dh
            st_h = st_all[gs:gs + G, ds:ds + dh] * inv_sn[gs:gs + G]   # (G,dh)
            q = jnp.dot(st_h, wq_ref[...], preferred_element_type=jnp.float32)
            k = jnp.dot(st_h, wk_ref[...], preferred_element_type=jnp.float32)
            v = jnp.dot(st_h, wv_ref[...], preferred_element_type=jnp.float32)
            dots = lax.dot_general(q, k, (((1,), (1,)), ((), ())),
                                   preferred_element_type=jnp.float32) * scale
            dots = dots - jnp.max(dots, axis=-1, keepdims=True)
            e = jnp.exp(dots)
            attn = e / jnp.sum(e, axis=-1, keepdims=True)
            ot = jnp.dot(attn, v, preferred_element_type=jnp.float32)  # (G,dh)
            rows.append(jnp.dot(ot, wo_ref[ds:ds + dh, :],
                                preferred_element_type=jnp.float32))   # (G,C)
        m_scr[...] = jnp.concatenate(rows, axis=0).astype(jnp.bfloat16)

    # De-slice (lane-dense), to_out bias, fused residual add.
    out = (jnp.dot(sw_ref[0], m_scr[...], preferred_element_type=jnp.float32)
           + bo_ref[...] + res_ref[0])
    o_ref[0] = out

    # Fused LN2 epilogue -> bf16 activation for the MLP's first linear.
    mu = jnp.mean(out, axis=-1, keepdims=True)
    var = jnp.mean((out - mu) * (out - mu), axis=-1, keepdims=True)
    y2_ref[0] = ((out - mu) * lax.rsqrt(var + 1e-5) * g2_ref[...]
                 + b2_ref[...]).astype(jnp.bfloat16)


def attn_pass_c(sw, st, sn, fx_res, p, *, heads, row_tile=1024):
    B, N, HG = sw.shape
    C = fx_res.shape[-1]
    G = HG // heads
    dh = C // heads
    inner = heads * dh
    TM = _pick_tile(N, row_tile, 8)
    kern = functools.partial(_deslice_attn_kernel, heads=heads, G=G, dh=dh,
                             scale=dh ** -0.5)
    return pl.pallas_call(
        kern,
        out_shape=(jax.ShapeDtypeStruct((B, N, C), jnp.float32),
                   jax.ShapeDtypeStruct((B, N, C), jnp.bfloat16)),
        grid=(B, N // TM),
        in_specs=[pl.BlockSpec((1, TM, HG), lambda b, i: (b, i, 0)),
                  pl.BlockSpec((1, HG, inner), lambda b, i: (b, 0, 0)),
                  pl.BlockSpec((1, HG, 1), lambda b, i: (b, 0, 0)),
                  pl.BlockSpec((dh, dh), lambda b, i: (0, 0)),
                  pl.BlockSpec((dh, dh), lambda b, i: (0, 0)),
                  pl.BlockSpec((dh, dh), lambda b, i: (0, 0)),
                  pl.BlockSpec((inner, C), lambda b, i: (0, 0)),
                  pl.BlockSpec((1, C), lambda b, i: (0, 0)),
                  pl.BlockSpec((1, C), lambda b, i: (0, 0)),
                  pl.BlockSpec((1, C), lambda b, i: (0, 0)),
                  pl.BlockSpec((1, TM, C), lambda b, i: (b, i, 0))],
        out_specs=(pl.BlockSpec((1, TM, C), lambda b, i: (b, i, 0)),
                   pl.BlockSpec((1, TM, C), lambda b, i: (b, i, 0))),
        scratch_shapes=[pltpu.VMEM((HG, C), jnp.bfloat16)],
        compiler_params=pltpu.CompilerParams(
            dimension_semantics=("parallel", "arbitrary"),
            vmem_limit_bytes=_VMEM_LIMIT),
    )(sw, st, sn, p["wq"], p["wk"], p["wv"], p["to_out_w"],
      p["to_out_b"].reshape(1, C), p["ln2_g"].reshape(1, C),
      p["ln2_b"].reshape(1, C), fx_res)


# --------------------------- Model glue --------------------------------------

def transolver_erwin_block(fx, p, *, H, W, D, heads, last_layer=False):
    B, N, C = fx.shape

    # fx = Attn(ln_1(fx)) + fx      (residual and ln_2 fused into pass C)
    y1 = pallas_layernorm(fx.reshape(B * N, C), p["ln1_g"], p["ln1_b"],
                          out_dtype=jnp.bfloat16).reshape(B, N, C)
    sw, st, sn = attn_pass_a(y1, p, H=H, W=W, D=D, heads=heads)
    fx_attn, y2 = attn_pass_c(sw, st, sn, fx, p, heads=heads)

    # fx = mlp(ln_2(fx)) + fx       (gelu in finalize, residual fused)
    h1 = pallas_linear(y2.reshape(B * N, C), p["mlp_w1"], p["mlp_b1"],
                       activation="gelu", out_dtype=jnp.bfloat16)
    fx_out = pallas_linear(h1, p["mlp_w2"], p["mlp_b2"],
                           residual=fx_attn.reshape(B * N, C)).reshape(B, N, C)

    if last_layer:
        # TODO(synk): LN3 could be fused into the second MLP linear's finalize
        # when the output N-tile covers the full hidden dim.
        y3 = pallas_layernorm(fx_out.reshape(B * N, C), p["ln3_g"], p["ln3_b"],
                              out_dtype=jnp.bfloat16)
        return pallas_linear(y3, p["mlp2_w"], p["mlp2_b"]).reshape(B, N, -1)
    return fx_out


def init_params(key, hidden, heads, slice_num, mlp_ratio, out_dim, last_layer):
    dh = hidden // heads
    inner = dh * heads
    ks = jax.random.split(key, 16)

    def nrm(k, shape, s=0.02):
        return (s * jax.random.normal(k, shape)).astype(jnp.float32)

    p = dict(
        ln1_g=jnp.ones((hidden,), jnp.float32),
        ln1_b=jnp.zeros((hidden,), jnp.float32),
        ln2_g=jnp.ones((hidden,), jnp.float32),
        ln2_b=jnp.zeros((hidden,), jnp.float32),
        # Conv3d(hidden -> inner, kernel=3, padding=1), weight (out,in,kh,kw,kd)
        conv_x_w=nrm(ks[0], (inner, hidden, 3, 3, 3)),
        conv_x_b=nrm(ks[1], (inner,)),
        conv_fx_w=nrm(ks[2], (inner, hidden, 3, 3, 3)),
        conv_fx_b=nrm(ks[3], (inner,)),
        # in_project_slice: Linear(dh -> slice_num), stored (in, out)
        slice_w=nrm(ks[4], (dh, slice_num), 0.2),
        slice_b=nrm(ks[5], (slice_num,), 0.2),
        temperature=0.5 * jnp.ones((heads,), jnp.float32),
        # to_q / to_k / to_v: Linear(dh -> dh, bias=False), stored (in, out)
        wq=nrm(ks[6], (dh, dh), 0.2),
        wk=nrm(ks[7], (dh, dh), 0.2),
        wv=nrm(ks[8], (dh, dh), 0.2),
        to_out_w=nrm(ks[9], (inner, hidden)),
        to_out_b=nrm(ks[10], (hidden,)),
        # MLP(hidden -> hidden*ratio -> hidden), n_layers=0, res=False
        mlp_w1=nrm(ks[11], (hidden, hidden * mlp_ratio)),
        mlp_b1=nrm(ks[12], (hidden * mlp_ratio,)),
        mlp_w2=nrm(ks[13], (hidden * mlp_ratio, hidden)),
        mlp_b2=nrm(ks[14], (hidden,)),
    )
    if last_layer:
        p["ln3_g"] = jnp.ones((hidden,), jnp.float32)
        p["ln3_b"] = jnp.zeros((hidden,), jnp.float32)
        p["mlp2_w"] = nrm(ks[15], (hidden, out_dim))
        p["mlp2_b"] = jnp.zeros((out_dim,), jnp.float32)
    return p


if __name__ == "__main__":
    B, H, W, D = 2, 4, 4, 4
    hidden, heads, slice_num, mlp_ratio = 32, 4, 32, 4
    N = H * W * D

    key = jax.random.PRNGKey(0)
    kx, kp = jax.random.split(key)
    fx = jax.random.normal(kx, (B, N, hidden), jnp.float32)
    params = init_params(kp, hidden, heads, slice_num, mlp_ratio,
                         out_dim=1, last_layer=True)

    fwd = jax.jit(functools.partial(transolver_erwin_block,
                                    H=H, W=W, D=D, heads=heads,
                                    last_layer=False))
    out = fwd(fx, params)
    jax.block_until_ready(out)
    assert out.shape == (B, N, hidden)
    assert bool(jnp.all(jnp.isfinite(out)))

    fwd_last = jax.jit(functools.partial(transolver_erwin_block,
                                         H=H, W=W, D=D, heads=heads,
                                         last_layer=True))
    out_last = fwd_last(fx, params)
    jax.block_until_ready(out_last)
    assert out_last.shape == (B, N, 1)
    assert bool(jnp.all(jnp.isfinite(out_last)))

    print("KERNEL_OK")
</pallas_src>

<mosaic_0001>
module attributes {stable_mosaic.version = 11 : i64} {
  func.func @_layernorm_kernel(%arg0: i32, %arg1: memref<128x32xf32, #tpu.memory_space<vmem>>, %arg2: memref<1x32xf32, #tpu.memory_space<vmem>>, %arg3: memref<1x32xf32, #tpu.memory_space<vmem>>, %arg4: memref<128x32xbf16, #tpu.memory_space<vmem>>) attributes {dimension_semantics = [#tpu.dimension_semantics<parallel>], iteration_bounds = array<i64: 1>, scalar_prefetch = 0 : i64, scratch_operands = 0 : i64, tpu.core_type = #tpu.core_type<tc>, window_params = [{transform_indices = @transform_0, window_bounds = array<i64: 128, 32>}, {pipeline_mode = #tpu.pipeline_mode<synchronous>, transform_indices = @transform_1, window_bounds = array<i64: 1, 32>}, {pipeline_mode = #tpu.pipeline_mode<synchronous>, transform_indices = @transform_2, window_bounds = array<i64: 1, 32>}, {transform_indices = @transform_3, window_bounds = array<i64: 128, 32>}]} {
    %c0 = arith.constant 0 : index
    %c0_0 = arith.constant 0 : index
    %0 = vector.load %arg1[%c0, %c0_0] : memref<128x32xf32, #tpu.memory_space<vmem>>, vector<128x32xf32>
    %cst = arith.constant dense<0.000000e+00> : vector<128xf32>
    %1 = vector.multi_reduction <add>, %0, %cst [1] : vector<128x32xf32> to vector<128xf32>
    %2 = vector.shape_cast %1 : vector<128xf32> to vector<128x1xf32>
    %cst_1 = arith.constant 3.200000e+01 : f32
    %3 = vector.broadcast %cst_1 : f32 to vector<128x1xf32>
    %4 = arith.divf %2, %3 : vector<128x1xf32>
    %5 = vector.broadcast %4 : vector<128x1xf32> to vector<128x32xf32>
    %6 = arith.subf %0, %5 : vector<128x32xf32>
    %7 = vector.broadcast %4 : vector<128x1xf32> to vector<128x32xf32>
    %8 = arith.subf %0, %7 : vector<128x32xf32>
    %9 = arith.mulf %6, %8 : vector<128x32xf32>
    %cst_2 = arith.constant dense<0.000000e+00> : vector<128xf32>
    %10 = vector.multi_reduction <add>, %9, %cst_2 [1] : vector<128x32xf32> to vector<128xf32>
    %11 = vector.shape_cast %10 : vector<128xf32> to vector<128x1xf32>
    %cst_3 = arith.constant 3.200000e+01 : f32
    %12 = vector.broadcast %cst_3 : f32 to vector<128x1xf32>
    %13 = arith.divf %11, %12 : vector<128x1xf32>
    %14 = vector.broadcast %4 : vector<128x1xf32> to vector<128x32xf32>
    %15 = arith.subf %0, %14 : vector<128x32xf32>
    %cst_4 = arith.constant 9.99999974E-6 : f32
    %16 = vector.broadcast %cst_4 : f32 to vector<128x1xf32>
    %17 = arith.addf %13, %16 : vector<128x1xf32>
    %18 = math.rsqrt %17 : vector<128x1xf32>
    %19 = vector.broadcast %18 : vector<128x1xf32> to vector<128x32xf32>
    %20 = arith.mulf %15, %19 : vector<128x32xf32>
    %c0_5 = arith.constant 0 : index
    %c0_6 = arith.constant 0 : index
    %21 = vector.load %arg2[%c0_5, %c0_6] : memref<1x32xf32, #tpu.memory_space<vmem>>, vector<1x32xf32>
    %22 = vector.broadcast %21 : vector<1x32xf32> to vector<128x32xf32>
    %23 = arith.mulf %20, %22 : vector<128x32xf32>
    %c0_7 = arith.constant 0 : index
    %c0_8 = arith.constant 0 : index
    %24 = vector.load %arg3[%c0_7, %c0_8] : memref<1x32xf32, #tpu.memory_space<vmem>>, vector<1x32xf32>
    %25 = vector.broadcast %24 : vector<1x32xf32> to vector<128x32xf32>
    %26 = arith.addf %23, %25 : vector<128x32xf32>
    %27 = arith.truncf %26 : vector<128x32xf32> to vector<128x32xbf16>
    %c0_9 = arith.constant 0 : index
    %c0_10 = arith.constant 0 : index
    %28 = vector.load %arg4[%c0_9, %c0_10] : memref<128x32xbf16, #tpu.memory_space<vmem>>, vector<128x32xbf16>
    tpu.vector_store %arg4[%c0_9, %c0_10], %27 {strides = array<i32>} : memref<128x32xbf16, #tpu.memory_space<vmem>>, vector<128x32xbf16>,
    return
  }
  func.func @transform_0(%arg0: i32) -> (i32, i32) {
    %c0_i32 = arith.constant 0 : i32
    %c0_i32_0 = arith.constant 0 : i32
    return %arg0, %c0_i32 : i32, i32
  }
  func.func @transform_1(%arg0: i32) -> (i32, i32) {
    %c0_i32 = arith.constant 0 : i32
    %c0_i32_0 = arith.constant 0 : i32
    %c0_i32_1 = arith.constant 0 : i32
    return %c0_i32, %c0_i32_0 : i32, i32
  }
  func.func @transform_2(%arg0: i32) -> (i32, i32) {
    %c0_i32 = arith.constant 0 : i32
    %c0_i32_0 = arith.constant 0 : i32
    %c0_i32_1 = arith.constant 0 : i32
    return %c0_i32, %c0_i32_0 : i32, i32
  }
  func.func @transform_3(%arg0: i32) -> (i32, i32) {
    %c0_i32 = arith.constant 0 : i32
    %c0_i32_0 = arith.constant 0 : i32
    return %arg0, %c0_i32 : i32, i32
  }
}

module attributes {stable_mosaic.version = 11 : i64} {
  func.func @_slice_reduce_kernel(%arg0: i32, %arg1: i32, %arg2: memref<1x1x6x24x96xbf16, #tpu.memory_space<vmem>>, %arg3: memref<9x96x160xbf16, #tpu.memory_space<vmem>>, %arg4: memref<1x160xf32, #tpu.memory_space<vmem>>, %arg5: memref<128x128xf32, #tpu.memory_space<vmem>>, %arg6: memref<1x64x128xbf16, #tpu.memory_space<vmem>>, %arg7: memref<1x128x32xf32, #tpu.memory_space<vmem>>, %arg8: memref<1x128x1xf32, #tpu.memory_space<vmem>>) attributes {dimension_semantics = [#tpu.dimension_semantics<parallel>, #tpu.dimension_semantics<arbitrary>], iteration_bounds = array<i64: 2, 1>, scalar_prefetch = 0 : i64, scratch_operands = 0 : i64, tpu.core_type = #tpu.core_type<tc>, window_params = [{transform_indices = @transform_0, window_bounds = array<i64: 1, 1, 6, 24, 96>}, {pipeline_mode = #tpu.pipeline_mode<synchronous>, transform_indices = @transform_1, window_bounds = array<i64: 9, 96, 160>}, {pipeline_mode = #tpu.pipeline_mode<synchronous>, transform_indices = @transform_2, window_bounds = array<i64: 1, 160>}, {pipeline_mode = #tpu.pipeline_mode<synchronous>, transform_indices = @transform_3, window_bounds = array<i64: 128, 128>}, {transform_indices = @transform_4, window_bounds = array<i64: 1, 64, 128>}, {transform_indices = @transform_5, window_bounds = array<i64: 1, 128, 32>}, {transform_indices = @transform_6, window_bounds = array<i64: 1, 128, 1>}]} {
    %cst = arith.constant 0.000000e+00 : f32
    %0 = vector.broadcast %cst : f32 to vector<64x160xf32>
    %c0 = arith.constant 0 : index
    %c0_0 = arith.constant 0 : index
    %c0_1 = arith.constant 0 : index
    %c0_2 = arith.constant 0 : index
    %c0_3 = arith.constant 0 : index
    %1 = vector.load %arg2[%c0, %c0_0, %c0_1, %c0_2, %c0_3] : memref<1x1x6x24x96xbf16, #tpu.memory_space<vmem>>, vector<1x1x4x16x96xbf16>
    %2 = vector.shape_cast %1 : vector<1x1x4x16x96xbf16> to vector<4x16x96xbf16>
    %3 = vector.shape_cast %2 : vector<4x16x96xbf16> to vector<64x96xbf16>
    %c0_4 = arith.constant 0 : index
    %c0_5 = arith.constant 0 : index
    %c0_6 = arith.constant 0 : index
    %4 = vector.load %arg3[%c0_4, %c0_5, %c0_6] : memref<9x96x160xbf16, #tpu.memory_space<vmem>>, vector<1x96x160xbf16>
    %5 = vector.shape_cast %4 : vector<1x96x160xbf16> to vector<96x160xbf16>
    %cst_7 = arith.constant dense<0.000000e+00> : vector<64x160xf32>
    %6 = tpu.matmul %3, %5, %cst_7 {dimension_numbers = #tpu.dot_dimension_numbers<[1], [0], [0], [1], [0, 0, 1, 1], [], []>} : vector<64x96xbf16>, vector<96x160xbf16>, vector<64x160xf32> -> vector<64x160xf32>
    %7 = arith.addf %0, %6 : vector<64x160xf32>
    %c0_8 = arith.constant 0 : index
    %c0_9 = arith.constant 0 : index
    %c0_10 = arith.constant 0 : index
    %c4 = arith.constant 4 : index
    %c0_11 = arith.constant 0 : index
    %8 = vector.load %arg2[%c0_8, %c0_9, %c0_10, %c4, %c0_11] : memref<1x1x6x24x96xbf16, #tpu.memory_space<vmem>>, vector<1x1x4x16x96xbf16>
    %9 = vector.shape_cast %8 : vector<1x1x4x16x96xbf16> to vector<4x16x96xbf16>
    %10 = vector.shape_cast %9 : vector<4x16x96xbf16> to vector<64x96xbf16>
    %c1 = arith.constant 1 : index
    %c0_12 = arith.constant 0 : index
    %c0_13 = arith.constant 0 : index
    %11 = vector.load %arg3[%c1, %c0_12, %c0_13] : memref<9x96x160xbf16, #tpu.memory_space<vmem>>, vector<1x96x160xbf16>
    %12 = vector.shape_cast %11 : vector<1x96x160xbf16> to vector<96x160xbf16>
    %cst_14 = arith.constant dense<0.000000e+00> : vector<64x160xf32>
    %13 = tpu.matmul %10, %12, %cst_14 {dimension_numbers = #tpu.dot_dimension_numbers<[1], [0], [0], [1], [0, 0, 1, 1], [], []>} : vector<64x96xbf16>, vector<96x160xbf16>, vector<64x160xf32> -> vector<64x160xf32>
    %14 = arith.addf %7, %13 : vector<64x160xf32>
    %c0_15 = arith.constant 0 : index
    %c0_16 = arith.constant 0 : index
    %c0_17 = arith.constant 0 : index
    %c8 = arith.constant 8 : index
    %c0_18 = arith.constant 0 : index
    %15 = vector.load %arg2[%c0_15, %c0_16, %c0_17, %c8, %c0_18] : memref<1x1x6x24x96xbf16, #tpu.memory_space<vmem>>, vector<1x1x4x16x96xbf16>
    %16 = vector.shape_cast %15 : vector<1x1x4x16x96xbf16> to vector<4x16x96xbf16>
    %17 = vector.shape_cast %16 : vector<4x16x96xbf16> to vector<64x96xbf16>
    %c2 = arith.constant 2 : index
    %c0_19 = arith.constant 0 : index
    %c0_20 = arith.constant 0 : index
    %18 = vector.load %arg3[%c2, %c0_19, %c0_20] : memref<9x96x160xbf16, #tpu.memory_space<vmem>>, vector<1x96x160xbf16>
    %19 = vector.shape_cast %18 : vector<1x96x160xbf16> to vector<96x160xbf16>
    %cst_21 = arith.constant dense<0.000000e+00> : vector<64x160xf32>
    %20 = tpu.matmul %17, %19, %cst_21 {dimension_numbers = #tpu.dot_dimension_numbers<[1], [0], [0], [1], [0, 0, 1, 1], [], []>} : vector<64x96xbf16>, vector<96x160xbf16>, vector<64x160xf32> -> vector<64x160xf32>
    %21 = arith.addf %14, %20 : vector<64x160xf32>
    %c0_22 = arith.constant 0 : index
    %c0_23 = arith.constant 0 : index
    %c1_24 = arith.constant 1 : index
    %c0_25 = arith.constant 0 : index
    %c0_26 = arith.constant 0 : index
    %22 = vector.load %arg2[%c0_22, %c0_23, %c1_24, %c0_25, %c0_26] : memref<1x1x6x24x96xbf16, #tpu.memory_space<vmem>>, vector<1x1x4x16x96xbf16>
    %23 = vector.shape_cast %22 : vector<1x1x4x16x96xbf16> to vector<4x16x96xbf16>
    %24 = vector.shape_cast %23 : vector<4x16x96xbf16> to vector<64x96xbf16>
    %c3 = arith.constant 3 : index
    %c0_27 = arith.constant 0 : index
    %c0_28 = arith.constant 0 : index
    %25 = vector.load %arg3[%c3, %c0_27, %c0_28] : memref<9x96x160xbf16, #tpu.memory_space<vmem>>, vector<1x96x160xbf16>
    %26 = vector.shape_cast %25 : vector<1x96x160xbf16> to vector<96x160xbf16>
    %cst_29 = arith.constant dense<0.000000e+00> : vector<64x160xf32>
    %27 = tpu.matmul %24, %26, %cst_29 {dimension_numbers = #tpu.dot_dimension_numbers<[1], [0], [0], [1], [0, 0, 1, 1], [], []>} : vector<64x96xbf16>, vector<96x160xbf16>, vector<64x160xf32> -> vector<64x160xf32>
    %28 = arith.addf %21, %27 : vector<64x160xf32>
    %c0_30 = arith.constant 0 : index
    %c0_31 = arith.constant 0 : index
    %c1_32 = arith.constant 1 : index
    %c4_33 = arith.constant 4 : index
    %c0_34 = arith.constant 0 : index
    %29 = vector.load %arg2[%c0_30, %c0_31, %c1_32, %c4_33, %c0_34] : memref<1x1x6x24x96xbf16, #tpu.memory_space<vmem>>, vector<1x1x4x16x96xbf16>
    %30 = vector.shape_cast %29 : vector<1x1x4x16x96xbf16> to vector<4x16x96xbf16>
    %31 = vector.shape_cast %30 : vector<4x16x96xbf16> to vector<64x96xbf16>
    %c4_35 = arith.constant 4 : index
    %c0_36 = arith.constant 0 : index
    %c0_37 = arith.constant 0 : index
    %32 = vector.load %arg3[%c4_35, %c0_36, %c0_37] : memref<9x96x160xbf16, #tpu.memory_space<vmem>>, vector<1x96x160xbf16>
    %33 = vector.shape_cast %32 : vector<1x96x160xbf16> to vector<96x160xbf16>
    %cst_38 = arith.constant dense<0.000000e+00> : vector<64x160xf32>
    %34 = tpu.matmul %31, %33, %cst_38 {dimension_numbers = #tpu.dot_dimension_numbers<[1], [0], [0], [1], [0, 0, 1, 1], [], []>} : vector<64x96xbf16>, vector<96x160xbf16>, vector<64x160xf32> -> vector<64x160xf32>
    %35 = arith.addf %28, %34 : vector<64x160xf32>
    %c0_39 = arith.constant 0 : index
    %c0_40 = arith.constant 0 : index
    %c1_41 = arith.constant 1 : index
    %c8_42 = arith.constant 8 : index
    %c0_43 = arith.constant 0 : index
    %36 = vector.load %arg2[%c0_39, %c0_40, %c1_41, %c8_42, %c0_43] : memref<1x1x6x24x96xbf16, #tpu.memory_space<vmem>>, vector<1x1x4x16x96xbf16>
    %37 = vector.shape_cast %36 : vector<1x1x4x16x96xbf16> to vector<4x16x96xbf16>
    %38 = vector.shape_cast %37 : vector<4x16x96xbf16> to vector<64x96xbf16>
    %c5 = arith.constant 5 : index
    %c0_44 = arith.constant 0 : index
    %c0_45 = arith.constant 0 : index
    %39 = vector.load %arg3[%c5, %c0_44, %c0_45] : memref<9x96x160xbf16, #tpu.memory_space<vmem>>, vector<1x96x160xbf16>
    %40 = vector.shape_cast %39 : vector<1x96x160xbf16> to vector<96x160xbf16>
    %cst_46 = arith.constant dense<0.000000e+00> : vector<64x160xf32>
    %41 = tpu.matmul %38, %40, %cst_46 {dimension_numbers = #tpu.dot_dimension_numbers<[1], [0], [0], [1], [0, 0, 1, 1], [], []>} : vector<64x96xbf16>, vector<96x160xbf16>, vector<64x160xf32> -> vector<64x160xf32>
    %42 = arith.addf %35, %41 : vector<64x160xf32>
    %c0_47 = arith.constant 0 : index
    %c0_48 = arith.constant 0 : index
    %c2_49 = arith.constant 2 : index
    %c0_50 = arith.constant 0 : index
    %c0_51 = arith.constant 0 : index
    %43 = vector.load %arg2[%c0_47, %c0_48, %c2_49, %c0_50, %c0_51] : memref<1x1x6x24x96xbf16, #tpu.memory_space<vmem>>, vector<1x1x4x16x96xbf16>
    %44 = vector.shape_cast %43 : vector<1x1x4x16x96xbf16> to vector<4x16x96xbf16>
    %45 = vector.shape_cast %44 : vector<4x16x96xbf16> to vector<64x96xbf16>
    %c6 = arith.constant 6 : index
    %c0_52 = arith.constant 0 : index
    %c0_53 = arith.constant 0 : index
    %46 = vector.load %arg3[%c6, %c0_52, %c0_53] : memref<9x96x160xbf16, #tpu.memory_space<vmem>>, vector<1x96x160xbf16>
    %47 = vector.shape_cast %46 : vector<1x96x160xbf16> to vector<96x160xbf16>
    %cst_54 = arith.constant dense<0.000000e+00> : vector<64x160xf32>
    %48 = tpu.matmul %45, %47, %cst_54 {dimension_numbers = #tpu.dot_dimension_numbers<[1], [0], [0], [1], [0, 0, 1, 1], [], []>} : vector<64x96xbf16>, vector<96x160xbf16>, vector<64x160xf32> -> vector<64x160xf32>
    %49 = arith.addf %42, %48 : vector<64x160xf32>
    %c0_55 = arith.constant 0 : index
    %c0_56 = arith.constant 0 : index
    %c2_57 = arith.constant 2 : index
    %c4_58 = arith.constant 4 : index
    %c0_59 = arith.constant 0 : index
    %50 = vector.load %arg2[%c0_55, %c0_56, %c2_57, %c4_58, %c0_59] : memref<1x1x6x24x96xbf16, #tpu.memory_space<vmem>>, vector<1x1x4x16x96xbf16>
    %51 = vector.shape_cast %50 : vector<1x1x4x16x96xbf16> to vector<4x16x96xbf16>
    %52 = vector.shape_cast %51 : vector<4x16x96xbf16> to vector<64x96xbf16>
    %c7 = arith.constant 7 : index
    %c0_60 = arith.constant 0 : index
    %c0_61 = arith.constant 0 : index
    %53 = vector.load %arg3[%c7, %c0_60, %c0_61] : memref<9x96x160xbf16, #tpu.memory_space<vmem>>, vector<1x96x160xbf16>
    %54 = vector.shape_cast %53 : vector<1x96x160xbf16> to vector<96x160xbf16>
    %cst_62 = arith.constant dense<0.000000e+00> : vector<64x160xf32>
    %55 = tpu.matmul %52, %54, %cst_62 {dimension_numbers = #tpu.dot_dimension_numbers<[1], [0], [0], [1], [0, 0, 1, 1], [], []>} : vector<64x96xbf16>, vector<96x160xbf16>, vector<64x160xf32> -> vector<64x160xf32>
    %56 = arith.addf %49, %55 : vector<64x160xf32>
    %c0_63 = arith.constant 0 : index
    %c0_64 = arith.constant 0 : index
    %c2_65 = arith.constant 2 : index
    %c8_66 = arith.constant 8 : index
    %c0_67 = arith.constant 0 : index
    %57 = vector.load %arg2[%c0_63, %c0_64, %c2_65, %c8_66, %c0_67] : memref<1x1x6x24x96xbf16, #tpu.memory_space<vmem>>, vector<1x1x4x16x96xbf16>
    %58 = vector.shape_cast %57 : vector<1x1x4x16x96xbf16> to vector<4x16x96xbf16>
    %59 = vector.shape_cast %58 : vector<4x16x96xbf16> to vector<64x96xbf16>
    %c8_68 = arith.constant 8 : index
    %c0_69 = arith.constant 0 : index
    %c0_70 = arith.constant 0 : index
    %60 = vector.load %arg3[%c8_68, %c0_69, %c0_70] : memref<9x96x160xbf16, #tpu.memory_space<vmem>>, vector<1x96x160xbf16>
    %61 = vector.shape_cast %60 : vector<1x96x160xbf16> to vector<96x160xbf16>
    %cst_71 = arith.constant dense<0.000000e+00> : vector<64x160xf32>
    %62 = tpu.matmul %59, %61, %cst_71 {dimension_numbers = #tpu.dot_dimension_numbers<[1], [0], [0], [1], [0, 0, 1, 1], [], []>} : vector<64x96xbf16>, vector<96x160xbf16>, vector<64x160xf32> -> vector<64x160xf32>
    %63 = arith.addf %56, %62 : vector<64x160xf32>
    %c0_72 = arith.constant 0 : index
    %c0_73 = arith.constant 0 : index
    %64 = vector.load %arg4[%c0_72, %c0_73] : memref<1x160xf32, #tpu.memory_space<vmem>>, vector<1x160xf32>
    %65 = vector.broadcast %64 : vector<1x160xf32> to vector<64x160xf32>
    %66 = arith.addf %63, %65 : vector<64x160xf32>
    %67 = vector.extract_strided_slice %66 {offsets = [0, 0], sizes = [64, 128], strides = [1, 1]} : vector<64x160xf32> to vector<64x128xf32>
    %68 = vector.extract_strided_slice %66 {offsets = [0, 128], sizes = [64, 32], strides = [1, 1]} : vector<64x160xf32> to vector<64x32xf32>
    %cst_74 = arith.constant dense<0xFF800000> : vector<64xf32>
    %69 = vector.multi_reduction <maximumf>, %67, %cst_74 [1] : vector<64x128xf32> to vector<64xf32>
    %70 = vector.shape_cast %69 : vector<64xf32> to vector<64x1xf32>
    %71 = vector.broadcast %70 : vector<64x1xf32> to vector<64x128xf32>
    %72 = arith.subf %67, %71 : vector<64x128xf32>
    %73 = math.exp %72 : vector<64x128xf32>
    %c0_75 = arith.constant 0 : index
    %c0_76 = arith.constant 0 : index
    %74 = vector.load %arg5[%c0_75, %c0_76] : memref<128x128xf32, #tpu.memory_space<vmem>>, vector<128x128xf32>
    %cst_77 = arith.constant dense<0.000000e+00> : vector<64x128xf32>
    %75 = tpu.matmul %73, %74, %cst_77 {dimension_numbers = #tpu.dot_dimension_numbers<[1], [0], [0], [1], [0, 0, 1, 1], [], []>} : vector<64x128xf32>, vector<128x128xf32>, vector<64x128xf32> -> vector<64x128xf32>
    %cst_78 = arith.constant 1.000000e-30 : f32
    %76 = vector.broadcast %cst_78 : f32 to vector<64x128xf32>
    %77 = arith.maximumf %75, %76 : vector<64x128xf32>
    %78 = arith.divf %73, %77 : vector<64x128xf32>
    %79 = arith.truncf %78 : vector<64x128xf32> to vector<64x128xbf16>
    %c0_79 = arith.constant 0 : index
    %c0_80 = arith.constant 0 : index
    %c0_81 = arith.constant 0 : index
    %80 = vector.load %arg6[%c0_79, %c0_80, %c0_81] : memref<1x64x128xbf16, #tpu.memory_space<vmem>>, vector<1x64x128xbf16>
    %81 = vector.shape_cast %80 : vector<1x64x128xbf16> to vector<64x128xbf16>
    %82 = vector.shape_cast %79 : vector<64x128xbf16> to vector<1x64x128xbf16>
    tpu.vector_store %arg6[%c0_79, %c0_80, %c0_81], %82 {strides = array<i32>} : memref<1x64x128xbf16, #tpu.memory_space<vmem>>, vector<1x64x128xbf16>,
    %c0_i32 = arith.constant 0 : i32
    %83 = arith.cmpi eq, %arg1, %c0_i32 : i32
    %84 = arith.extui %83 : i1 to i32
    %c0_i32_82 = arith.constant 0 : i32
    %85 = arith.cmpi ne, %84, %c0_i32_82 : i32
    scf.if %85 {
      %cst_98 = arith.constant 0.000000e+00 : f32
      %102 = vector.broadcast %cst_98 : f32 to vector<1x128x32xf32>
      %c0_99 = arith.constant 0 : index
      %c0_100 = arith.constant 0 : index
      %c0_101 = arith.constant 0 : index
      %103 = vector.load %arg7[%c0_99, %c0_100, %c0_101] : memref<1x128x32xf32, #tpu.memory_space<vmem>>, vector<1x128x32xf32>
      tpu.vector_store %arg7[%c0_99, %c0_100, %c0_101], %102 {strides = array<i32>} : memref<1x128x32xf32, #tpu.memory_space<vmem>>, vector<1x128x32xf32>,
      %cst_102 = arith.constant 0.000000e+00 : f32
      %104 = vector.broadcast %cst_102 : f32 to vector<1x128x1xf32>
      %c0_103 = arith.constant 0 : index
      %c0_104 = arith.constant 0 : index
      %c0_105 = arith.constant 0 : index
      %105 = vector.load %arg8[%c0_103, %c0_104, %c0_105] : memref<1x128x1xf32, #tpu.memory_space<vmem>>, vector<1x128x1xf32>
      tpu.vector_store %arg8[%c0_103, %c0_104, %c0_105], %104 {strides = array<i32>} : memref<1x128x1xf32, #tpu.memory_space<vmem>>, vector<1x128x1xf32>,
    } else {
    }
    %c0_83 = arith.constant 0 : index
    %c0_84 = arith.constant 0 : index
    %c0_85 = arith.constant 0 : index
    %86 = vector.load %arg7[%c0_83, %c0_84, %c0_85] : memref<1x128x32xf32, #tpu.memory_space<vmem>>, vector<1x128x32xf32>
    %87 = vector.shape_cast %86 : vector<1x128x32xf32> to vector<128x32xf32>
    %88 = arith.truncf %68 : vector<64x32xf32> to vector<64x32xbf16>
    %cst_86 = arith.constant dense<0.000000e+00> : vector<128x32xf32>
    %89 = tpu.matmul %79, %88, %cst_86 {dimension_numbers = #tpu.dot_dimension_numbers<[0], [0], [1], [1], [0, 1, 1, 1], [], []>} : vector<64x128xbf16>, vector<64x32xbf16>, vector<128x32xf32> -> vector<128x32xf32>
    %90 = arith.addf %87, %89 : vector<128x32xf32>
    %c0_87 = arith.constant 0 : index
    %c0_88 = arith.constant 0 : index
    %c0_89 = arith.constant 0 : index
    %91 = vector.load %arg7[%c0_87, %c0_88, %c0_89] : memref<1x128x32xf32, #tpu.memory_space<vmem>>, vector<1x128x32xf32>
    %92 = vector.shape_cast %91 : vector<1x128x32xf32> to vector<128x32xf32>
    %93 = vector.shape_cast %90 : vector<128x32xf32> to vector<1x128x32xf32>
    tpu.vector_store %arg7[%c0_87, %c0_88, %c0_89], %93 {strides = array<i32>} : memref<1x128x32xf32, #tpu.memory_space<vmem>>, vector<1x128x32xf32>,
    %cst_90 = arith.constant 1.000000e+00 : f32
    %94 = vector.broadcast %cst_90 : f32 to vector<64x1xf32>
    %c0_91 = arith.constant 0 : index
    %c0_92 = arith.constant 0 : index
    %c0_93 = arith.constant 0 : index
    %95 = vector.load %arg8[%c0_91, %c0_92, %c0_93] : memref<1x128x1xf32, #tpu.memory_space<vmem>>, vector<1x128x1xf32>
    %96 = vector.shape_cast %95 : vector<1x128x1xf32> to vector<128x1xf32>
    %cst_94 = arith.constant dense<0.000000e+00> : vector<128x1xf32>
    %97 = tpu.matmul %78, %94, %cst_94 {dimension_numbers = #tpu.dot_dimension_numbers<[0], [0], [1], [1], [0, 1, 1, 1], [], []>} : vector<64x128xf32>, vector<64x1xf32>, vector<128x1xf32> -> vector<128x1xf32>
    %98 = arith.addf %96, %97 : vector<128x1xf32>
    %c0_95 = arith.constant 0 : index
    %c0_96 = arith.constant 0 : index
    %c0_97 = arith.constant 0 : index
    %99 = vector.load %arg8[%c0_95, %c0_96, %c0_97] : memref<1x128x1xf32, #tpu.memory_space<vmem>>, vector<1x128x1xf32>
    %100 = vector.shape_cast %99 : vector<1x128x1xf32> to vector<128x1xf32>
    %101 = vector.shape_cast %98 : vector<128x1xf32> to vector<1x128x1xf32>
    tpu.vector_store %arg8[%c0_95, %c0_96, %c0_97], %101 {strides = array<i32>} : memref<1x128x1xf32, #tpu.memory_space<vmem>>, vector<1x128x1xf32>,
    return
  }
  func.func @transform_0(%arg0: i32, %arg1: i32) -> (i32, i32, i32, i32, i32) {
    %c0_i32 = arith.constant 0 : i32
    %c0_i32_0 = arith.constant 0 : i32
    %c0_i32_1 = arith.constant 0 : i32
    %c0_i32_2 = arith.constant 0 : i32
    return %arg0, %arg1, %c0_i32, %c0_i32_0, %c0_i32_1 : i32, i32, i32, i32, i32
  }
  func.func @transform_1(%arg0: i32, %arg1: i32) -> (i32, i32, i32) {
    %c0_i32 = arith.constant 0 : i32
    %c0_i32_0 = arith.constant 0 : i32
    %c0_i32_1 = arith.constant 0 : i32
    %c0_i32_2 = arith.constant 0 : i32
    return %c0_i32, %c0_i32_0, %c0_i32_1 : i32, i32, i32
  }
  func.func @transform_2(%arg0: i32, %arg1: i32) -> (i32, i32) {
    %c0_i32 = arith.constant 0 : i32
    %c0_i32_0 = arith.constant 0 : i32
    %c0_i32_1 = arith.constant 0 : i32
    return %c0_i32, %c0_i32_0 : i32, i32
  }
  func.func @transform_3(%arg0: i32, %arg1: i32) -> (i32, i32) {
    %c0_i32 = arith.constant 0 : i32
    %c0_i32_0 = arith.constant 0 : i32
    %c0_i32_1 = arith.constant 0 : i32
    return %c0_i32, %c0_i32_0 : i32, i32
  }
  func.func @transform_4(%arg0: i32, %arg1: i32) -> (i32, i32, i32) {
    %c0_i32 = arith.constant 0 : i32
    %c0_i32_0 = arith.constant 0 : i32
    return %arg0, %arg1, %c0_i32 : i32, i32, i32
  }
  func.func @transform_5(%arg0: i32, %arg1: i32) -> (i32, i32, i32) {
    %c0_i32 = arith.constant 0 : i32
    %c0_i32_0 = arith.constant 0 : i32
    %c0_i32_1 = arith.constant 0 : i32
    return %arg0, %c0_i32, %c0_i32_0 : i32, i32, i32
  }
  func.func @transform_6(%arg0: i32, %arg1: i32) -> (i32, i32, i32) {
    %c0_i32 = arith.constant 0 : i32
    %c0_i32_0 = arith.constant 0 : i32
    %c0_i32_1 = arith.constant 0 : i32
    return %arg0, %c0_i32, %c0_i32_0 : i32, i32, i32
  }
}

module attributes {stable_mosaic.version = 11 : i64} {
  func.func @_deslice_attn_kernel(%arg0: i32, %arg1: i32, %arg2: memref<1x64x128xbf16, #tpu.memory_space<vmem>>, %arg3: memref<1x128x32xf32, #tpu.memory_space<vmem>>, %arg4: memref<1x128x1xf32, #tpu.memory_space<vmem>>, %arg5: memref<8x8xf32, #tpu.memory_space<vmem>>, %arg6: memref<8x8xf32, #tpu.memory_space<vmem>>, %arg7: memref<8x8xf32, #tpu.memory_space<vmem>>, %arg8: memref<32x32xf32, #tpu.memory_space<vmem>>, %arg9: memref<1x32xf32, #tpu.memory_space<vmem>>, %arg10: memref<1x32xf32, #tpu.memory_space<vmem>>, %arg11: memref<1x32xf32, #tpu.memory_space<vmem>>, %arg12: memref<1x64x32xf32, #tpu.memory_space<vmem>>, %arg13: memref<1x64x32xf32, #tpu.memory_space<vmem>>, %arg14: memref<1x64x32xbf16, #tpu.memory_space<vmem>>, %arg15: memref<128x32xbf16, #tpu.memory_space<vmem>>) attributes {dimension_semantics = [#tpu.dimension_semantics<parallel>, #tpu.dimension_semantics<arbitrary>], iteration_bounds = array<i64: 2, 1>, scalar_prefetch = 0 : i64, scratch_operands = 1 : i64, tpu.core_type = #tpu.core_type<tc>, window_params = [{transform_indices = @transform_0, window_bounds = array<i64: 1, 64, 128>}, {transform_indices = @transform_1, window_bounds = array<i64: 1, 128, 32>}, {transform_indices = @transform_2, window_bounds = array<i64: 1, 128, 1>}, {pipeline_mode = #tpu.pipeline_mode<synchronous>, transform_indices = @transform_3, window_bounds = array<i64: 8, 8>}, {pipeline_mode = #tpu.pipeline_mode<synchronous>, transform_indices = @transform_4, window_bounds = array<i64: 8, 8>}, {pipeline_mode = #tpu.pipeline_mode<synchronous>, transform_indices = @transform_5, window_bounds = array<i64: 8, 8>}, {pipeline_mode = #tpu.pipeline_mode<synchronous>, transform_indices = @transform_6, window_bounds = array<i64: 32, 32>}, {pipeline_mode = #tpu.pipeline_mode<synchronous>, transform_indices = @transform_7, window_bounds = array<i64: 1, 32>}, {pipeline_mode = #tpu.pipeline_mode<synchronous>, transform_indices = @transform_8, window_bounds = array<i64: 1, 32>}, {pipeline_mode = #tpu.pipeline_mode<synchronous>, transform_indices = @transform_9, window_bounds = array<i64: 1, 32>}, {transform_indices = @transform_10, window_bounds = array<i64: 1, 64, 32>}, {transform_indices = @transform_11, window_bounds = array<i64: 1, 64, 32>}, {transform_indices = @transform_12, window_bounds = array<i64: 1, 64, 32>}]} {
    %c0_i32 = arith.constant 0 : i32
    %0 = arith.cmpi eq, %arg1, %c0_i32 : i32
    %1 = arith.extui %0 : i1 to i32
    %c0_i32_0 = arith.constant 0 : i32
    %2 = arith.cmpi ne, %1, %c0_i32_0 : i32
    scf.if %2 {
      %c0_25 = arith.constant 0 : index
      %c0_26 = arith.constant 0 : index
      %c0_27 = arith.constant 0 : index
      %46 = vector.load %arg3[%c0_25, %c0_26, %c0_27] : memref<1x128x32xf32, #tpu.memory_space<vmem>>, vector<1x128x32xf32>
      %47 = vector.shape_cast %46 : vector<1x128x32xf32> to vector<128x32xf32>
      %c0_28 = arith.constant 0 : index
      %c0_29 = arith.constant 0 : index
      %c0_30 = arith.constant 0 : index
      %48 = vector.load %arg4[%c0_28, %c0_29, %c0_30] : memref<1x128x1xf32, #tpu.memory_space<vmem>>, vector<1x128x1xf32>
      %49 = vector.shape_cast %48 : vector<1x128x1xf32> to vector<128x1xf32>
      %cst_31 = arith.constant 9.99999974E-6 : f32
      %50 = vector.broadcast %cst_31 : f32 to vector<128x1xf32>
      %51 = arith.addf %49, %50 : vector<128x1xf32>
      %cst_32 = arith.constant 1.000000e+00 : f32
      %52 = vector.broadcast %cst_32 : f32 to vector<128x1xf32>
      %53 = arith.divf %52, %51 : vector<128x1xf32>
      %54 = vector.extract_strided_slice %47 {offsets = [0, 0], sizes = [32, 8], strides = [1, 1]} : vector<128x32xf32> to vector<32x8xf32>
      %55 = vector.extract_strided_slice %53 {offsets = [0, 0], sizes = [32, 1], strides = [1, 1]} : vector<128x1xf32> to vector<32x1xf32>
      %56 = vector.broadcast %55 : vector<32x1xf32> to vector<32x8xf32>
      %57 = arith.mulf %54, %56 : vector<32x8xf32>
      %c0_33 = arith.constant 0 : index
      %c0_34 = arith.constant 0 : index
      %58 = vector.load %arg5[%c0_33, %c0_34] : memref<8x8xf32, #tpu.memory_space<vmem>>, vector<8x8xf32>
      %cst_35 = arith.constant dense<0.000000e+00> : vector<32x8xf32>
      %59 = tpu.matmul %57, %58, %cst_35 {dimension_numbers = #tpu.dot_dimension_numbers<[1], [0], [0], [1], [0, 0, 1, 1], [], []>} : vector<32x8xf32>, vector<8x8xf32>, vector<32x8xf32> -> vector<32x8xf32>
      %c0_36 = arith.constant 0 : index
      %c0_37 = arith.constant 0 : index
      %60 = vector.load %arg6[%c0_36, %c0_37] : memref<8x8xf32, #tpu.memory_space<vmem>>, vector<8x8xf32>
      %cst_38 = arith.constant dense<0.000000e+00> : vector<32x8xf32>
      %61 = tpu.matmul %57, %60, %cst_38 {dimension_numbers = #tpu.dot_dimension_numbers<[1], [0], [0], [1], [0, 0, 1, 1], [], []>} : vector<32x8xf32>, vector<8x8xf32>, vector<32x8xf32> -> vector<32x8xf32>
      %c0_39 = arith.constant 0 : index
      %c0_40 = arith.constant 0 : index
      %62 = vector.load %arg7[%c0_39, %c0_40] : memref<8x8xf32, #tpu.memory_space<vmem>>, vector<8x8xf32>
      %cst_41 = arith.constant dense<0.000000e+00> : vector<32x8xf32>
      %63 = tpu.matmul %57, %62, %cst_41 {dimension_numbers = #tpu.dot_dimension_numbers<[1], [0], [0], [1], [0, 0, 1, 1], [], []>} : vector<32x8xf32>, vector<8x8xf32>, vector<32x8xf32> -> vector<32x8xf32>
      %cst_42 = arith.constant dense<0.000000e+00> : vector<32x32xf32>
      %64 = tpu.matmul %59, %61, %cst_42 {dimension_numbers = #tpu.dot_dimension_numbers<[1], [1], [0], [0], [0, 0, 1, 0], [], []>} : vector<32x8xf32>, vector<32x8xf32>, vector<32x32xf32> -> vector<32x32xf32>
      %cst_43 = arith.constant 0.353553385 : f32
      %65 = vector.broadcast %cst_43 : f32 to vector<32x32xf32>
      %66 = arith.mulf %64, %65 : vector<32x32xf32>
      %cst_44 = arith.constant dense<0xFF800000> : vector<32xf32>
      %67 = vector.multi_reduction <maximumf>, %66, %cst_44 [1] : vector<32x32xf32> to vector<32xf32>
      %68 = vector.shape_cast %67 : vector<32xf32> to vector<32x1xf32>
      %69 = vector.broadcast %68 : vector<32x1xf32> to vector<32x32xf32>
      %70 = arith.subf %66, %69 : vector<32x32xf32>
      %71 = math.exp %70 : vector<32x32xf32>
      %cst_45 = arith.constant dense<0.000000e+00> : vector<32xf32>
      %72 = vector.multi_reduction <add>, %71, %cst_45 [1] : vector<32x32xf32> to vector<32xf32>
      %73 = vector.shape_cast %72 : vector<32xf32> to vector<32x1xf32>
      %74 = vector.broadcast %73 : vector<32x1xf32> to vector<32x32xf32>
      %75 = arith.divf %71, %74 : vector<32x32xf32>
      %cst_46 = arith.constant dense<0.000000e+00> : vector<32x8xf32>
      %76 = tpu.matmul %75, %63, %cst_46 {dimension_numbers = #tpu.dot_dimension_numbers<[1], [0], [0], [1], [0, 0, 1, 1], [], []>} : vector<32x32xf32>, vector<32x8xf32>, vector<32x8xf32> -> vector<32x8xf32>
      %c0_47 = arith.constant 0 : index
      %c0_48 = arith.constant 0 : index
      %77 = vector.load %arg8[%c0_47, %c0_48] : memref<32x32xf32, #tpu.memory_space<vmem>>, vector<8x32xf32>
      %cst_49 = arith.constant dense<0.000000e+00> : vector<32x32xf32>
      %78 = tpu.matmul %76, %77, %cst_49 {dimension_numbers = #tpu.dot_dimension_numbers<[1], [0], [0], [1], [0, 0, 1, 1], [], []>} : vector<32x8xf32>, vector<8x32xf32>, vector<32x32xf32> -> vector<32x32xf32>
      %79 = vector.extract_strided_slice %47 {offsets = [32, 8], sizes = [32, 8], strides = [1, 1]} : vector<128x32xf32> to vector<32x8xf32>
      %80 = vector.extract_strided_slice %53 {offsets = [32, 0], sizes = [32, 1], strides = [1, 1]} : vector<128x1xf32> to vector<32x1xf32>
      %81 = vector.broadcast %80 : vector<32x1xf32> to vector<32x8xf32>
      %82 = arith.mulf %79, %81 : vector<32x8xf32>
      %c0_50 = arith.constant 0 : index
      %c0_51 = arith.constant 0 : index
      %83 = vector.load %arg5[%c0_50, %c0_51] : memref<8x8xf32, #tpu.memory_space<vmem>>, vector<8x8xf32>
      %cst_52 = arith.constant dense<0.000000e+00> : vector<32x8xf32>
      %84 = tpu.matmul %82, %83, %cst_52 {dimension_numbers = #tpu.dot_dimension_numbers<[1], [0], [0], [1], [0, 0, 1, 1], [], []>} : vector<32x8xf32>, vector<8x8xf32>, vector<32x8xf32> -> vector<32x8xf32>
      %c0_53 = arith.constant 0 : index
      %c0_54 = arith.constant 0 : index
      %85 = vector.load %arg6[%c0_53, %c0_54] : memref<8x8xf32, #tpu.memory_space<vmem>>, vector<8x8xf32>
      %cst_55 = arith.constant dense<0.000000e+00> : vector<32x8xf32>
      %86 = tpu.matmul %82, %85, %cst_55 {dimension_numbers = #tpu.dot_dimension_numbers<[1], [0], [0], [1], [0, 0, 1, 1], [], []>} : vector<32x8xf32>, vector<8x8xf32>, vector<32x8xf32> -> vector<32x8xf32>
      %c0_56 = arith.constant 0 : index
      %c0_57 = arith.constant 0 : index
      %87 = vector.load %arg7[%c0_56, %c0_57] : memref<8x8xf32, #tpu.memory_space<vmem>>, vector<8x8xf32>
      %cst_58 = arith.constant dense<0.000000e+00> : vector<32x8xf32>
      %88 = tpu.matmul %82, %87, %cst_58 {dimension_numbers = #tpu.dot_dimension_numbers<[1], [0], [0], [1], [0, 0, 1, 1], [], []>} : vector<32x8xf32>, vector<8x8xf32>, vector<32x8xf32> -> vector<32x8xf32>
      %cst_59 = arith.constant dense<0.000000e+00> : vector<32x32xf32>
      %89 = tpu.matmul %84, %86, %cst_59 {dimension_numbers = #tpu.dot_dimension_numbers<[1], [1], [0], [0], [0, 0, 1, 0], [], []>} : vector<32x8xf32>, vector<32x8xf32>, vector<32x32xf32> -> vector<32x32xf32>
      %cst_60 = arith.constant 0.353553385 : f32
      %90 = vector.broadcast %cst_60 : f32 to vector<32x32xf32>
      %91 = arith.mulf %89, %90 : vector<32x32xf32>
      %cst_61 = arith.constant dense<0xFF800000> : vector<32xf32>
      %92 = vector.multi_reduction <maximumf>, %91, %cst_61 [1] : vector<32x32xf32> to vector<32xf32>
      %93 = vector.shape_cast %92 : vector<32xf32> to vector<32x1xf32>
      %94 = vector.broadcast %93 : vector<32x1xf32> to vector<32x32xf32>
      %95 = arith.subf %91, %94 : vector<32x32xf32>
      %96 = math.exp %95 : vector<32x32xf32>
      %cst_62 = arith.constant dense<0.000000e+00> : vector<32xf32>
      %97 = vector.multi_reduction <add>, %96, %cst_62 [1] : vector<32x32xf32> to vector<32xf32>
      %98 = vector.shape_cast %97 : vector<32xf32> to vector<32x1xf32>
      %99 = vector.broadcast %98 : vector<32x1xf32> to vector<32x32xf32>
      %100 = arith.divf %96, %99 : vector<32x32xf32>
      %cst_63 = arith.constant dense<0.000000e+00> : vector<32x8xf32>
      %101 = tpu.matmul %100, %88, %cst_63 {dimension_numbers = #tpu.dot_dimension_numbers<[1], [0], [0], [1], [0, 0, 1, 1], [], []>} : vector<32x32xf32>, vector<32x8xf32>, vector<32x8xf32> -> vector<32x8xf32>
      %c8 = arith.constant 8 : index
      %c0_64 = arith.constant 0 : index
      %102 = vector.load %arg8[%c8, %c0_64] : memref<32x32xf32, #tpu.memory_space<vmem>>, vector<8x32xf32>
      %cst_65 = arith.constant dense<0.000000e+00> : vector<32x32xf32>
      %103 = tpu.matmul %101, %102, %cst_65 {dimension_numbers = #tpu.dot_dimension_numbers<[1], [0], [0], [1], [0, 0, 1, 1], [], []>} : vector<32x8xf32>, vector<8x32xf32>, vector<32x32xf32> -> vector<32x32xf32>
      %104 = vector.extract_strided_slice %47 {offsets = [64, 16], sizes = [32, 8], strides = [1, 1]} : vector<128x32xf32> to vector<32x8xf32>
      %105 = vector.extract_strided_slice %53 {offsets = [64, 0], sizes = [32, 1], strides = [1, 1]} : vector<128x1xf32> to vector<32x1xf32>
      %106 = vector.broadcast %105 : vector<32x1xf32> to vector<32x8xf32>
      %107 = arith.mulf %104, %106 : vector<32x8xf32>
      %c0_66 = arith.constant 0 : index
      %c0_67 = arith.constant 0 : index
      %108 = vector.load %arg5[%c0_66, %c0_67] : memref<8x8xf32, #tpu.memory_space<vmem>>, vector<8x8xf32>
      %cst_68 = arith.constant dense<0.000000e+00> : vector<32x8xf32>
      %109 = tpu.matmul %107, %108, %cst_68 {dimension_numbers = #tpu.dot_dimension_numbers<[1], [0], [0], [1], [0, 0, 1, 1], [], []>} : vector<32x8xf32>, vector<8x8xf32>, vector<32x8xf32> -> vector<32x8xf32>
      %c0_69 = arith.constant 0 : index
      %c0_70 = arith.constant 0 : index
      %110 = vector.load %arg6[%c0_69, %c0_70] : memref<8x8xf32, #tpu.memory_space<vmem>>, vector<8x8xf32>
      %cst_71 = arith.constant dense<0.000000e+00> : vector<32x8xf32>
      %111 = tpu.matmul %107, %110, %cst_71 {dimension_numbers = #tpu.dot_dimension_numbers<[1], [0], [0], [1], [0, 0, 1, 1], [], []>} : vector<32x8xf32>, vector<8x8xf32>, vector<32x8xf32> -> vector<32x8xf32>
      %c0_72 = arith.constant 0 : index
      %c0_73 = arith.constant 0 : index
      %112 = vector.load %arg7[%c0_72, %c0_73] : memref<8x8xf32, #tpu.memory_space<vmem>>, vector<8x8xf32>
      %cst_74 = arith.constant dense<0.000000e+00> : vector<32x8xf32>
      %113 = tpu.matmul %107, %112, %cst_74 {dimension_numbers = #tpu.dot_dimension_numbers<[1], [0], [0], [1], [0, 0, 1, 1], [], []>} : vector<32x8xf32>, vector<8x8xf32>, vector<32x8xf32> -> vector<32x8xf32>
      %cst_75 = arith.constant dense<0.000000e+00> : vector<32x32xf32>
      %114 = tpu.matmul %109, %111, %cst_75 {dimension_numbers = #tpu.dot_dimension_numbers<[1], [1], [0], [0], [0, 0, 1, 0], [], []>} : vector<32x8xf32>, vector<32x8xf32>, vector<32x32xf32> -> vector<32x32xf32>
      %cst_76 = arith.constant 0.353553385 : f32
      %115 = vector.broadcast %cst_76 : f32 to vector<32x32xf32>
      %116 = arith.mulf %114, %115 : vector<32x32xf32>
      %cst_77 = arith.constant dense<0xFF800000> : vector<32xf32>
      %117 = vector.multi_reduction <maximumf>, %116, %cst_77 [1] : vector<32x32xf32> to vector<32xf32>
      %118 = vector.shape_cast %117 : vector<32xf32> to vector<32x1xf32>
      %119 = vector.broadcast %118 : vector<32x1xf32> to vector<32x32xf32>
      %120 = arith.subf %116, %119 : vector<32x32xf32>
      %121 = math.exp %120 : vector<32x32xf32>
      %cst_78 = arith.constant dense<0.000000e+00> : vector<32xf32>
      %122 = vector.multi_reduction <add>, %121, %cst_78 [1] : vector<32x32xf32> to vector<32xf32>
      %123 = vector.shape_cast %122 : vector<32xf32> to vector<32x1xf32>
      %124 = vector.broadcast %123 : vector<32x1xf32> to vector<32x32xf32>
      %125 = arith.divf %121, %124 : vector<32x32xf32>
      %cst_79 = arith.constant dense<0.000000e+00> : vector<32x8xf32>
      %126 = tpu.matmul %125, %113, %cst_79 {dimension_numbers = #tpu.dot_dimension_numbers<[1], [0], [0], [1], [0, 0, 1, 1], [], []>} : vector<32x32xf32>, vector<32x8xf32>, vector<32x8xf32> -> vector<32x8xf32>
      %c16 = arith.constant 16 : index
      %c0_80 = arith.constant 0 : index
      %127 = vector.load %arg8[%c16, %c0_80] : memref<32x32xf32, #tpu.memory_space<vmem>>, vector<8x32xf32>
      %cst_81 = arith.constant dense<0.000000e+00> : vector<32x32xf32>
      %128 = tpu.matmul %126, %127, %cst_81 {dimension_numbers = #tpu.dot_dimension_numbers<[1], [0], [0], [1], [0, 0, 1, 1], [], []>} : vector<32x8xf32>, vector<8x32xf32>, vector<32x32xf32> -> vector<32x32xf32>
      %129 = vector.extract_strided_slice %47 {offsets = [96, 24], sizes = [32, 8], strides = [1, 1]} : vector<128x32xf32> to vector<32x8xf32>
      %130 = vector.extract_strided_slice %53 {offsets = [96, 0], sizes = [32, 1], strides = [1, 1]} : vector<128x1xf32> to vector<32x1xf32>
      %131 = vector.broadcast %130 : vector<32x1xf32> to vector<32x8xf32>
      %132 = arith.mulf %129, %131 : vector<32x8xf32>
      %c0_82 = arith.constant 0 : index
      %c0_83 = arith.constant 0 : index
      %133 = vector.load %arg5[%c0_82, %c0_83] : memref<8x8xf32, #tpu.memory_space<vmem>>, vector<8x8xf32>
      %cst_84 = arith.constant dense<0.000000e+00> : vector<32x8xf32>
      %134 = tpu.matmul %132, %133, %cst_84 {dimension_numbers = #tpu.dot_dimension_numbers<[1], [0], [0], [1], [0, 0, 1, 1], [], []>} : vector<32x8xf32>, vector<8x8xf32>, vector<32x8xf32> -> vector<32x8xf32>
      %c0_85 = arith.constant 0 : index
      %c0_86 = arith.constant 0 : index
      %135 = vector.load %arg6[%c0_85, %c0_86] : memref<8x8xf32, #tpu.memory_space<vmem>>, vector<8x8xf32>
      %cst_87 = arith.constant dense<0.000000e+00> : vector<32x8xf32>
      %136 = tpu.matmul %132, %135, %cst_87 {dimension_numbers = #tpu.dot_dimension_numbers<[1], [0], [0], [1], [0, 0, 1, 1], [], []>} : vector<32x8xf32>, vector<8x8xf32>, vector<32x8xf32> -> vector<32x8xf32>
      %c0_88 = arith.constant 0 : index
      %c0_89 = arith.constant 0 : index
      %137 = vector.load %arg7[%c0_88, %c0_89] : memref<8x8xf32, #tpu.memory_space<vmem>>, vector<8x8xf32>
      %cst_90 = arith.constant dense<0.000000e+00> : vector<32x8xf32>
      %138 = tpu.matmul %132, %137, %cst_90 {dimension_numbers = #tpu.dot_dimension_numbers<[1], [0], [0], [1], [0, 0, 1, 1], [], []>} : vector<32x8xf32>, vector<8x8xf32>, vector<32x8xf32> -> vector<32x8xf32>
      %cst_91 = arith.constant dense<0.000000e+00> : vector<32x32xf32>
      %139 = tpu.matmul %134, %136, %cst_91 {dimension_numbers = #tpu.dot_dimension_numbers<[1], [1], [0], [0], [0, 0, 1, 0], [], []>} : vector<32x8xf32>, vector<32x8xf32>, vector<32x32xf32> -> vector<32x32xf32>
      %cst_92 = arith.constant 0.353553385 : f32
      %140 = vector.broadcast %cst_92 : f32 to vector<32x32xf32>
      %141 = arith.mulf %139, %140 : vector<32x32xf32>
      %cst_93 = arith.constant dense<0xFF800000> : vector<32xf32>
      %142 = vector.multi_reduction <maximumf>, %141, %cst_93 [1] : vector<32x32xf32> to vector<32xf32>
      %143 = vector.shape_cast %142 : vector<32xf32> to vector<32x1xf32>
      %144 = vector.broadcast %143 : vector<32x1xf32> to vector<32x32xf32>
      %145 = arith.subf %141, %144 : vector<32x32xf32>
      %146 = math.exp %145 : vector<32x32xf32>
      %cst_94 = arith.constant dense<0.000000e+00> : vector<32xf32>
      %147 = vector.multi_reduction <add>, %146, %cst_94 [1] : vector<32x32xf32> to vector<32xf32>
      %148 = vector.shape_cast %147 : vector<32xf32> to vector<32x1xf32>
      %149 = vector.broadcast %148 : vector<32x1xf32> to vector<32x32xf32>
      %150 = arith.divf %146, %149 : vector<32x32xf32>
      %cst_95 = arith.constant dense<0.000000e+00> : vector<32x8xf32>
      %151 = tpu.matmul %150, %138, %cst_95 {dimension_numbers = #tpu.dot_dimension_numbers<[1], [0], [0], [1], [0, 0, 1, 1], [], []>} : vector<32x32xf32>, vector<32x8xf32>, vector<32x8xf32> -> vector<32x8xf32>
      %c24 = arith.constant 24 : index
      %c0_96 = arith.constant 0 : index
      %152 = vector.load %arg8[%c24, %c0_96] : memref<32x32xf32, #tpu.memory_space<vmem>>, vector<8x32xf32>
      %cst_97 = arith.constant dense<0.000000e+00> : vector<32x32xf32>
      %153 = tpu.matmul %151, %152, %cst_97 {dimension_numbers = #tpu.dot_dimension_numbers<[1], [0], [0], [1], [0, 0, 1, 1], [], []>} : vector<32x8xf32>, vector<8x32xf32>, vector<32x32xf32> -> vector<32x32xf32>
      %154 = tpu.concatenate %78, %103, %128, %153 in 0 : vector<32x32xf32>, vector<32x32xf32>, vector<32x32xf32>, vector<32x32xf32> -> vector<128x32xf32>
      %155 = arith.truncf %154 : vector<128x32xf32> to vector<128x32xbf16>
      %c0_98 = arith.constant 0 : index
      %c0_99 = arith.constant 0 : index
      %156 = vector.load %arg15[%c0_98, %c0_99] : memref<128x32xbf16, #tpu.memory_space<vmem>>, vector<128x32xbf16>
      tpu.vector_store %arg15[%c0_98, %c0_99], %155 {strides = array<i32>} : memref<128x32xbf16, #tpu.memory_space<vmem>>, vector<128x32xbf16>,
    } else {
    }
    %c0 = arith.constant 0 : index
    %c0_1 = arith.constant 0 : index
    %c0_2 = arith.constant 0 : index
    %3 = vector.load %arg2[%c0, %c0_1, %c0_2] : memref<1x64x128xbf16, #tpu.memory_space<vmem>>, vector<1x64x128xbf16>
    %4 = vector.shape_cast %3 : vector<1x64x128xbf16> to vector<64x128xbf16>
    %c0_3 = arith.constant 0 : index
    %c0_4 = arith.constant 0 : index
    %5 = vector.load %arg15[%c0_3, %c0_4] : memref<128x32xbf16, #tpu.memory_space<vmem>>, vector<128x32xbf16>
    %cst = arith.constant dense<0.000000e+00> : vector<64x32xf32>
    %6 = tpu.matmul %4, %5, %cst {dimension_numbers = #tpu.dot_dimension_numbers<[1], [0], [0], [1], [0, 0, 1, 1], [], []>} : vector<64x128xbf16>, vector<128x32xbf16>, vector<64x32xf32> -> vector<64x32xf32>
    %c0_5 = arith.constant 0 : index
    %c0_6 = arith.constant 0 : index
    %7 = vector.load %arg9[%c0_5, %c0_6] : memref<1x32xf32, #tpu.memory_space<vmem>>, vector<1x32xf32>
    %8 = vector.broadcast %7 : vector<1x32xf32> to vector<64x32xf32>
    %9 = arith.addf %6, %8 : vector<64x32xf32>
    %c0_7 = arith.constant 0 : index
    %c0_8 = arith.constant 0 : index
    %c0_9 = arith.constant 0 : index
    %10 = vector.load %arg12[%c0_7, %c0_8, %c0_9] : memref<1x64x32xf32, #tpu.memory_space<vmem>>, vector<1x64x32xf32>
    %11 = vector.shape_cast %10 : vector<1x64x32xf32> to vector<64x32xf32>
    %12 = arith.addf %9, %11 : vector<64x32xf32>
    %c0_10 = arith.constant 0 : index
    %c0_11 = arith.constant 0 : index
    %c0_12 = arith.constant 0 : index
    %13 = vector.load %arg13[%c0_10, %c0_11, %c0_12] : memref<1x64x32xf32, #tpu.memory_space<vmem>>, vector<1x64x32xf32>
    %14 = vector.shape_cast %13 : vector<1x64x32xf32> to vector<64x32xf32>
    %15 = vector.shape_cast %12 : vector<64x32xf32> to vector<1x64x32xf32>
    tpu.vector_store %arg13[%c0_10, %c0_11, %c0_12], %15 {strides = array<i32>} : memref<1x64x32xf32, #tpu.memory_space<vmem>>, vector<1x64x32xf32>,
    %cst_13 = arith.constant dense<0.000000e+00> : vector<64xf32>
    %16 = vector.multi_reduction <add>, %12, %cst_13 [1] : vector<64x32xf32> to vector<64xf32>
    %17 = vector.shape_cast %16 : vector<64xf32> to vector<64x1xf32>
    %cst_14 = arith.constant 3.200000e+01 : f32
    %18 = vector.broadcast %cst_14 : f32 to vector<64x1xf32>
    %19 = arith.divf %17, %18 : vector<64x1xf32>
    %20 = vector.broadcast %19 : vector<64x1xf32> to vector<64x32xf32>
    %21 = arith.subf %12, %20 : vector<64x32xf32>
    %22 = vector.broadcast %19 : vector<64x1xf32> to vector<64x32xf32>
    %23 = arith.subf %12, %22 : vector<64x32xf32>
    %24 = arith.mulf %21, %23 : vector<64x32xf32>
    %cst_15 = arith.constant dense<0.000000e+00> : vector<64xf32>
    %25 = vector.multi_reduction <add>, %24, %cst_15 [1] : vector<64x32xf32> to vector<64xf32>
    %26 = vector.shape_cast %25 : vector<64xf32> to vector<64x1xf32>
    %cst_16 = arith.constant 3.200000e+01 : f32
    %27 = vector.broadcast %cst_16 : f32 to vector<64x1xf32>
    %28 = arith.divf %26, %27 : vector<64x1xf32>
    %29 = vector.broadcast %19 : vector<64x1xf32> to vector<64x32xf32>
    %30 = arith.subf %12, %29 : vector<64x32xf32>
    %cst_17 = arith.constant 9.99999974E-6 : f32
    %31 = vector.broadcast %cst_17 : f32 to vector<64x1xf32>
    %32 = arith.addf %28, %31 : vector<64x1xf32>
    %33 = math.rsqrt %32 : vector<64x1xf32>
    %34 = vector.broadcast %33 : vector<64x1xf32> to vector<64x32xf32>
    %35 = arith.mulf %30, %34 : vector<64x32xf32>
    %c0_18 = arith.constant 0 : index
    %c0_19 = arith.constant 0 : index
    %36 = vector.load %arg10[%c0_18, %c0_19] : memref<1x32xf32, #tpu.memory_space<vmem>>, vector<1x32xf32>
    %37 = vector.broadcast %36 : vector<1x32xf32> to vector<64x32xf32>
    %38 = arith.mulf %35, %37 : vector<64x32xf32>
    %c0_20 = arith.constant 0 : index
    %c0_21 = arith.constant 0 : index
    %39 = vector.load %arg11[%c0_20, %c0_21] : memref<1x32xf32, #tpu.memory_space<vmem>>, vector<1x32xf32>
    %40 = vector.broadcast %39 : vector<1x32xf32> to vector<64x32xf32>
    %41 = arith.addf %38, %40 : vector<64x32xf32>
    %42 = arith.truncf %41 : vector<64x32xf32> to vector<64x32xbf16>
    %c0_22 = arith.constant 0 : index
    %c0_23 = arith.constant 0 : index
    %c0_24 = arith.constant 0 : index
    %43 = vector.load %arg14[%c0_22, %c0_23, %c0_24] : memref<1x64x32xbf16, #tpu.memory_space<vmem>>, vector<1x64x32xbf16>
    %44 = vector.shape_cast %43 : vector<1x64x32xbf16> to vector<64x32xbf16>
    %45 = vector.shape_cast %42 : vector<64x32xbf16> to vector<1x64x32xbf16>
    tpu.vector_store %arg14[%c0_22, %c0_23, %c0_24], %45 {strides = array<i32>} : memref<1x64x32xbf16, #tpu.memory_space<vmem>>, vector<1x64x32xbf16>,
    return
  }
  func.func @transform_0(%arg0: i32, %arg1: i32) -> (i32, i32, i32) {
    %c0_i32 = arith.constant 0 : i32
    %c0_i32_0 = arith.constant 0 : i32
    return %arg0, %arg1, %c0_i32 : i32, i32, i32
  }
  func.func @transform_1(%arg0: i32, %arg1: i32) -> (i32, i32, i32) {
    %c0_i32 = arith.constant 0 : i32
    %c0_i32_0 = arith.constant 0 : i32
    %c0_i32_1 = arith.constant 0 : i32
    return %arg0, %c0_i32, %c0_i32_0 : i32, i32, i32
  }
  func.func @transform_2(%arg0: i32, %arg1: i32) -> (i32, i32, i32) {
    %c0_i32 = arith.constant 0 : i32
    %c0_i32_0 = arith.constant 0 : i32
    %c0_i32_1 = arith.constant 0 : i32
    return %arg0, %c0_i32, %c0_i32_0 : i32, i32, i32
  }
  func.func @transform_3(%arg0: i32, %arg1: i32) -> (i32, i32) {
    %c0_i32 = arith.constant 0 : i32
    %c0_i32_0 = arith.constant 0 : i32
    %c0_i32_1 = arith.constant 0 : i32
    return %c0_i32, %c0_i32_0 : i32, i32
  }
  func.func @transform_4(%arg0: i32, %arg1: i32) -> (i32, i32) {
    %c0_i32 = arith.constant 0 : i32
    %c0_i32_0 = arith.constant 0 : i32
    %c0_i32_1 = arith.constant 0 : i32
    return %c0_i32, %c0_i32_0 : i32, i32
  }
  func.func @transform_5(%arg0: i32, %arg1: i32) -> (i32, i32) {
    %c0_i32 = arith.constant 0 : i32
    %c0_i32_0 = arith.constant 0 : i32
    %c0_i32_1 = arith.constant 0 : i32
    return %c0_i32, %c0_i32_0 : i32, i32
  }
  func.func @transform_6(%arg0: i32, %arg1: i32) -> (i32, i32) {
    %c0_i32 = arith.constant 0 : i32
    %c0_i32_0 = arith.constant 0 : i32
    %c0_i32_1 = arith.constant 0 : i32
    return %c0_i32, %c0_i32_0 : i32, i32
  }
  func.func @transform_7(%arg0: i32, %arg1: i32) -> (i32, i32) {
    %c0_i32 = arith.constant 0 : i32
    %c0_i32_0 = arith.constant 0 : i32
    %c0_i32_1 = arith.constant 0 : i32
    return %c0_i32, %c0_i32_0 : i32, i32
  }
  func.func @transform_8(%arg0: i32, %arg1: i32) -> (i32, i32) {
    %c0_i32 = arith.constant 0 : i32
    %c0_i32_0 = arith.constant 0 : i32
    %c0_i32_1 = arith.constant 0 : i32
    return %c0_i32, %c0_i32_0 : i32, i32
  }
  func.func @transform_9(%arg0: i32, %arg1: i32) -> (i32, i32) {
    %c0_i32 = arith.constant 0 : i32
    %c0_i32_0 = arith.constant 0 : i32
    %c0_i32_1 = arith.constant 0 : i32
    return %c0_i32, %c0_i32_0 : i32, i32
  }
  func.func @transform_10(%arg0: i32, %arg1: i32) -> (i32, i32, i32) {
    %c0_i32 = arith.constant 0 : i32
    %c0_i32_0 = arith.constant 0 : i32
    return %arg0, %arg1, %c0_i32 : i32, i32, i32
  }
  func.func @transform_11(%arg0: i32, %arg1: i32) -> (i32, i32, i32) {
    %c0_i32 = arith.constant 0 : i32
    %c0_i32_0 = arith.constant 0 : i32
    return %arg0, %arg1, %c0_i32 : i32, i32, i32
  }
  func.func @transform_12(%arg0: i32, %arg1: i32) -> (i32, i32, i32) {
    %c0_i32 = arith.constant 0 : i32
    %c0_i32_0 = arith.constant 0 : i32
    return %arg0, %arg1, %c0_i32 : i32, i32, i32
  }
}

module attributes {stable_mosaic.version = 11 : i64} {
  func.func @_linear_kernel(%arg0: i32, %arg1: i32, %arg2: i32, %arg3: memref<128x32xbf16, #tpu.memory_space<vmem>>, %arg4: memref<32x128xbf16, #tpu.memory_space<vmem>>, %arg5: memref<1x128xf32, #tpu.memory_space<vmem>>, %arg6: memref<128x128xbf16, #tpu.memory_space<vmem>>, %arg7: memref<128x128xf32, #tpu.memory_space<vmem>>) attributes {dimension_semantics = [#tpu.dimension_semantics<parallel>, #tpu.dimension_semantics<parallel>, #tpu.dimension_semantics<arbitrary>], iteration_bounds = array<i64: 1, 1, 1>, scalar_prefetch = 0 : i64, scratch_operands = 1 : i64, tpu.core_type = #tpu.core_type<tc>, window_params = [{transform_indices = @transform_0, window_bounds = array<i64: 128, 32>}, {transform_indices = @transform_1, window_bounds = array<i64: 32, 128>}, {transform_indices = @transform_2, window_bounds = array<i64: 1, 128>}, {transform_indices = @transform_3, window_bounds = array<i64: 128, 128>}]} {
    %c0_i32 = arith.constant 0 : i32
    %0 = arith.cmpi eq, %arg2, %c0_i32 : i32
    %1 = arith.extui %0 : i1 to i32
    %c0_i32_0 = arith.constant 0 : i32
    %2 = arith.cmpi ne, %1, %c0_i32_0 : i32
    scf.if %2 {
      %cst_10 = arith.constant 0.000000e+00 : f32
      %12 = vector.broadcast %cst_10 : f32 to vector<128x128xf32>
      %c0_11 = arith.constant 0 : index
      %c0_12 = arith.constant 0 : index
      %13 = vector.load %arg7[%c0_11, %c0_12] : memref<128x128xf32, #tpu.memory_space<vmem>>, vector<128x128xf32>
      tpu.vector_store %arg7[%c0_11, %c0_12], %12 {strides = array<i32>} : memref<128x128xf32, #tpu.memory_space<vmem>>, vector<128x128xf32>,
    } else {
    }
    %c0 = arith.constant 0 : index
    %c0_1 = arith.constant 0 : index
    %3 = vector.load %arg7[%c0, %c0_1] : memref<128x128xf32, #tpu.memory_space<vmem>>, vector<128x128xf32>
    %c0_2 = arith.constant 0 : index
    %c0_3 = arith.constant 0 : index
    %4 = vector.load %arg3[%c0_2, %c0_3] : memref<128x32xbf16, #tpu.memory_space<vmem>>, vector<128x32xbf16>
    %c0_4 = arith.constant 0 : index
    %c0_5 = arith.constant 0 : index
    %5 = vector.load %arg4[%c0_4, %c0_5] : memref<32x128xbf16, #tpu.memory_space<vmem>>, vector<32x128xbf16>
    %cst = arith.constant dense<0.000000e+00> : vector<128x128xf32>
    %6 = tpu.matmul %4, %5, %cst {dimension_numbers = #tpu.dot_dimension_numbers<[1], [0], [0], [1], [0, 0, 1, 1], [], []>} : vector<128x32xbf16>, vector<32x128xbf16>, vector<128x128xf32> -> vector<128x128xf32>
    %7 = arith.addf %3, %6 : vector<128x128xf32>
    %c0_6 = arith.constant 0 : index
    %c0_7 = arith.constant 0 : index
    %8 = vector.load %arg7[%c0_6, %c0_7] : memref<128x128xf32, #tpu.memory_space<vmem>>, vector<128x128xf32>
    tpu.vector_store %arg7[%c0_6, %c0_7], %7 {strides = array<i32>} : memref<128x128xf32, #tpu.memory_space<vmem>>, vector<128x128xf32>,
    %c0_i32_8 = arith.constant 0 : i32
    %9 = arith.cmpi eq, %arg2, %c0_i32_8 : i32
    %10 = arith.extui %9 : i1 to i32
    %c0_i32_9 = arith.constant 0 : i32
    %11 = arith.cmpi ne, %10, %c0_i32_9 : i32
    scf.if %11 {
      %c0_10 = arith.constant 0 : index
      %c0_11 = arith.constant 0 : index
      %12 = vector.load %arg7[%c0_10, %c0_11] : memref<128x128xf32, #tpu.memory_space<vmem>>, vector<128x128xf32>
      %c0_12 = arith.constant 0 : index
      %c0_13 = arith.constant 0 : index
      %13 = vector.load %arg5[%c0_12, %c0_13] : memref<1x128xf32, #tpu.memory_space<vmem>>, vector<1x128xf32>
      %14 = vector.broadcast %13 : vector<1x128xf32> to vector<128x128xf32>
      %15 = arith.addf %12, %14 : vector<128x128xf32>
      %16 = arith.mulf %15, %15 : vector<128x128xf32>
      %17 = arith.mulf %15, %16 : vector<128x128xf32>
      %cst_14 = arith.constant 4.471500e-02 : f32
      %18 = vector.broadcast %cst_14 : f32 to vector<128x128xf32>
      %19 = arith.mulf %18, %17 : vector<128x128xf32>
      %20 = arith.addf %15, %19 : vector<128x128xf32>
      %cst_15 = arith.constant 0.797884583 : f32
      %21 = vector.broadcast %cst_15 : f32 to vector<128x128xf32>
      %22 = arith.mulf %21, %20 : vector<128x128xf32>
      %23 = math.tanh %22 : vector<128x128xf32>
      %cst_16 = arith.constant 1.000000e+00 : f32
      %24 = vector.broadcast %cst_16 : f32 to vector<128x128xf32>
      %25 = arith.addf %24, %23 : vector<128x128xf32>
      %cst_17 = arith.constant 5.000000e-01 : f32
      %26 = vector.broadcast %cst_17 : f32 to vector<128x128xf32>
      %27 = arith.mulf %26, %25 : vector<128x128xf32>
      %28 = arith.mulf %15, %27 : vector<128x128xf32>
      %29 = arith.truncf %28 : vector<128x128xf32> to vector<128x128xbf16>
      %c0_18 = arith.constant 0 : index
      %c0_19 = arith.constant 0 : index
      %30 = vector.load %arg6[%c0_18, %c0_19] : memref<128x128xbf16, #tpu.memory_space<vmem>>, vector<128x128xbf16>
      tpu.vector_store %arg6[%c0_18, %c0_19], %29 {strides = array<i32>} : memref<128x128xbf16, #tpu.memory_space<vmem>>, vector<128x128xbf16>,
    } else {
    }
    return
  }
  func.func @transform_0(%arg0: i32, %arg1: i32, %arg2: i32) -> (i32, i32) {
    %c0_i32 = arith.constant 0 : i32
    return %arg0, %arg2 : i32, i32
  }
  func.func @transform_1(%arg0: i32, %arg1: i32, %arg2: i32) -> (i32, i32) {
    %c0_i32 = arith.constant 0 : i32
    return %arg2, %arg1 : i32, i32
  }
  func.func @transform_2(%arg0: i32, %arg1: i32, %arg2: i32) -> (i32, i32) {
    %c0_i32 = arith.constant 0 : i32
    %c0_i32_0 = arith.constant 0 : i32
    return %c0_i32, %arg1 : i32, i32
  }
  func.func @transform_3(%arg0: i32, %arg1: i32, %arg2: i32) -> (i32, i32) {
    %c0_i32 = arith.constant 0 : i32
    return %arg0, %arg1 : i32, i32
  }
}

module attributes {stable_mosaic.version = 11 : i64} {
  func.func @_linear_kernel(%arg0: i32, %arg1: i32, %arg2: i32, %arg3: memref<128x128xbf16, #tpu.memory_space<vmem>>, %arg4: memref<128x32xbf16, #tpu.memory_space<vmem>>, %arg5: memref<1x32xf32, #tpu.memory_space<vmem>>, %arg6: memref<128x32xf32, #tpu.memory_space<vmem>>, %arg7: memref<128x32xf32, #tpu.memory_space<vmem>>, %arg8: memref<128x32xf32, #tpu.memory_space<vmem>>) attributes {dimension_semantics = [#tpu.dimension_semantics<parallel>, #tpu.dimension_semantics<parallel>, #tpu.dimension_semantics<arbitrary>], iteration_bounds = array<i64: 1, 1, 1>, scalar_prefetch = 0 : i64, scratch_operands = 1 : i64, tpu.core_type = #tpu.core_type<tc>, window_params = [{transform_indices = @transform_0, window_bounds = array<i64: 128, 128>}, {transform_indices = @transform_1, window_bounds = array<i64: 128, 32>}, {transform_indices = @transform_2, window_bounds = array<i64: 1, 32>}, {transform_indices = @transform_3, window_bounds = array<i64: 128, 32>}, {transform_indices = @transform_4, window_bounds = array<i64: 128, 32>}]} {
    %c0_i32 = arith.constant 0 : i32
    %0 = arith.cmpi eq, %arg2, %c0_i32 : i32
    %1 = arith.extui %0 : i1 to i32
    %c0_i32_0 = arith.constant 0 : i32
    %2 = arith.cmpi ne, %1, %c0_i32_0 : i32
    scf.if %2 {
      %cst_10 = arith.constant 0.000000e+00 : f32
      %12 = vector.broadcast %cst_10 : f32 to vector<128x32xf32>
      %c0_11 = arith.constant 0 : index
      %c0_12 = arith.constant 0 : index
      %13 = vector.load %arg8[%c0_11, %c0_12] : memref<128x32xf32, #tpu.memory_space<vmem>>, vector<128x32xf32>
      tpu.vector_store %arg8[%c0_11, %c0_12], %12 {strides = array<i32>} : memref<128x32xf32, #tpu.memory_space<vmem>>, vector<128x32xf32>,
    } else {
    }
    %c0 = arith.constant 0 : index
    %c0_1 = arith.constant 0 : index
    %3 = vector.load %arg8[%c0, %c0_1] : memref<128x32xf32, #tpu.memory_space<vmem>>, vector<128x32xf32>
    %c0_2 = arith.constant 0 : index
    %c0_3 = arith.constant 0 : index
    %4 = vector.load %arg3[%c0_2, %c0_3] : memref<128x128xbf16, #tpu.memory_space<vmem>>, vector<128x128xbf16>
    %c0_4 = arith.constant 0 : index
    %c0_5 = arith.constant 0 : index
    %5 = vector.load %arg4[%c0_4, %c0_5] : memref<128x32xbf16, #tpu.memory_space<vmem>>, vector<128x32xbf16>
    %cst = arith.constant dense<0.000000e+00> : vector<128x32xf32>
    %6 = tpu.matmul %4, %5, %cst {dimension_numbers = #tpu.dot_dimension_numbers<[1], [0], [0], [1], [0, 0, 1, 1], [], []>} : vector<128x128xbf16>, vector<128x32xbf16>, vector<128x32xf32> -> vector<128x32xf32>
    %7 = arith.addf %3, %6 : vector<128x32xf32>
    %c0_6 = arith.constant 0 : index
    %c0_7 = arith.constant 0 : index
    %8 = vector.load %arg8[%c0_6, %c0_7] : memref<128x32xf32, #tpu.memory_space<vmem>>, vector<128x32xf32>
    tpu.vector_store %arg8[%c0_6, %c0_7], %7 {strides = array<i32>} : memref<128x32xf32, #tpu.memory_space<vmem>>, vector<128x32xf32>,
    %c0_i32_8 = arith.constant 0 : i32
    %9 = arith.cmpi eq, %arg2, %c0_i32_8 : i32
    %10 = arith.extui %9 : i1 to i32
    %c0_i32_9 = arith.constant 0 : i32
    %11 = arith.cmpi ne, %10, %c0_i32_9 : i32
    scf.if %11 {
      %c0_10 = arith.constant 0 : index
      %c0_11 = arith.constant 0 : index
      %12 = vector.load %arg8[%c0_10, %c0_11] : memref<128x32xf32, #tpu.memory_space<vmem>>, vector<128x32xf32>
      %c0_12 = arith.constant 0 : index
      %c0_13 = arith.constant 0 : index
      %13 = vector.load %arg5[%c0_12, %c0_13] : memref<1x32xf32, #tpu.memory_space<vmem>>, vector<1x32xf32>
      %14 = vector.broadcast %13 : vector<1x32xf32> to vector<128x32xf32>
      %15 = arith.addf %12, %14 : vector<128x32xf32>
      %c0_14 = arith.constant 0 : index
      %c0_15 = arith.constant 0 : index
      %16 = vector.load %arg6[%c0_14, %c0_15] : memref<128x32xf32, #tpu.memory_space<vmem>>, vector<128x32xf32>
      %17 = arith.addf %15, %16 : vector<128x32xf32>
      %c0_16 = arith.constant 0 : index
      %c0_17 = arith.constant 0 : index
      %18 = vector.load %arg7[%c0_16, %c0_17] : memref<128x32xf32, #tpu.memory_space<vmem>>, vector<128x32xf32>
      tpu.vector_store %arg7[%c0_16, %c0_17], %17 {strides = array<i32>} : memref<128x32xf32, #tpu.memory_space<vmem>>, vector<128x32xf32>,
    } else {
    }
    return
  }
  func.func @transform_0(%arg0: i32, %arg1: i32, %arg2: i32) -> (i32, i32) {
    %c0_i32 = arith.constant 0 : i32
    return %arg0, %arg2 : i32, i32
  }
  func.func @transform_1(%arg0: i32, %arg1: i32, %arg2: i32) -> (i32, i32) {
    %c0_i32 = arith.constant 0 : i32
    return %arg2, %arg1 : i32, i32
  }
  func.func @transform_2(%arg0: i32, %arg1: i32, %arg2: i32) -> (i32, i32) {
    %c0_i32 = arith.constant 0 : i32
    %c0_i32_0 = arith.constant 0 : i32
    return %c0_i32, %arg1 : i32, i32
  }
  func.func @transform_3(%arg0: i32, %arg1: i32, %arg2: i32) -> (i32, i32) {
    %c0_i32 = arith.constant 0 : i32
    return %arg0, %arg1 : i32, i32
  }
  func.func @transform_4(%arg0: i32, %arg1: i32, %arg2: i32) -> (i32, i32) {
    %c0_i32 = arith.constant 0 : i32
    return %arg0, %arg1 : i32, i32
  }
}

</mosaic_0001>

<llo_original>
// kernel: transolver_erwin_block.5
$region0: #{transolver_erwin_block.5}
  #allocation0 [shape = 'u32[]', space=smem, size = 0x4, offset = 0x4, fixed_abs, tag = 'smem constant byte address 0x4 - core index']
  #allocation1 [shape = 'u32[72,128]{1,0:T(1,128)}', space=vmem, size = 0x9000, scoped, tag = 'internal scratch']
  %s0 = inlined_call_operand.vmem [shape: f32[128,32], index: 0, kind: input, shape index: {}]
  %s1 = inlined_call_operand.vmem [shape: f32[1,32], index: 1, kind: input, shape index: {}]
  %s2 = inlined_call_operand.vmem [shape: f32[1,32], index: 2, kind: input, shape index: {}]
  %s3 = inlined_call_operand.vmem [shape: bf16[128,32], index: 3, kind: output, shape index: {}]
  %s4 = sld [smem:[#allocation0]]
  $region22: #{transolver_erwin_block.5} parent=0
    _
  %s6 = ssub.s32 1, %s4
  %s7 = scalar_select 0, %s6, %s4
  // Predicated region
  $region2: #{transolver_erwin_block.5} parent=0 // pred_check
    _
  $region3: #{transolver_erwin_block.5} parent=0 // pred_check_branch
    %9 = sbr.rel (0) target = $region5
  $region4: #{transolver_erwin_block.5} parent=0 // pred_region
    _
  $region5: #{transolver_erwin_block.5} parent=0 // pred_fallthru
    _
  // Predicated region
  $region6: #{transolver_erwin_block.5} parent=0 // pred_check
    _
  $region7: #{transolver_erwin_block.5} parent=0 // pred_check_branch
    %11 = sbr.rel (0) target = $region9
  $region8: #{transolver_erwin_block.5} parent=0 // pred_region
    _
  $region9: #{transolver_erwin_block.5} parent=0 // pred_fallthru
    _
  // Predicated region
  $region10: #{transolver_erwin_block.5} parent=0 // pred_check
    _
  $region11: #{transolver_erwin_block.5} parent=0 // pred_check_branch
    %13 = sbr.rel (0) target = $region13
  $region12: #{transolver_erwin_block.5} parent=0 // pred_region
    _
  $region13: #{transolver_erwin_block.5} parent=0 // pred_fallthru
    _
  %v14 = vld [vmem:[%s0] sm:$0xff]
  %v15 = vld [vmem:[%s0 + $0x8] sm:$0xff]
  %v16 = vld [vmem:[%s0 + $0x10] sm:$0xff]
  %v17 = vld [vmem:[%s0 + $0x18] sm:$0xff]
  %v18 = vld [vmem:[%s0 + $0x20] sm:$0xff]
  %v19 = vld [vmem:[%s0 + $0x28] sm:$0xff]
  %v20 = vld [vmem:[%s0 + $0x30] sm:$0xff]
  %v21 = vld [vmem:[%s0 + $0x38] sm:$0xff]
  %v22 = vld [vmem:[%s0 + $0x40] sm:$0xff]
  %v23 = vld [vmem:[%s0 + $0x48] sm:$0xff]
  %v24 = vld [vmem:[%s0 + $0x50] sm:$0xff]
  %v25 = vld [vmem:[%s0 + $0x58] sm:$0xff]
  %v26 = vld [vmem:[%s0 + $0x60] sm:$0xff]
  %v27 = vld [vmem:[%s0 + $0x68] sm:$0xff]
  %v28 = vld [vmem:[%s0 + $0x70] sm:$0xff]
  %v29 = vld [vmem:[%s0 + $0x78] sm:$0xff]
  %vm30 = vcmask 261120
  %v31 = vsel %vm30, %v14, 0.0
  %32 = vadd.xlane.f32.xlu0 %v31
  %v33 = vpop.xlane.xlu0 %32
  %v34 = vsel %vm30, %v15, 0.0
  %35 = vadd.xlane.f32.xlu0 %v34
  %v36 = vpop.xlane.xlu0 %35
  %v37 = vsel %vm30, %v16, 0.0
  %38 = vadd.xlane.f32.xlu0 %v37
  %v39 = vpop.xlane.xlu0 %38
  %v40 = vsel %vm30, %v17, 0.0
  %41 = vadd.xlane.f32.xlu0 %v40
  %v42 = vpop.xlane.xlu0 %41
  %v43 = vsel %vm30, %v18, 0.0
  %44 = vadd.xlane.f32.xlu0 %v43
  %v45 = vpop.xlane.xlu0 %44
  %v46 = vsel %vm30, %v19, 0.0
  %47 = vadd.xlane.f32.xlu0 %v46
  %v48 = vpop.xlane.xlu0 %47
  %v49 = vsel %vm30, %v20, 0.0
  %50 = vadd.xlane.f32.xlu0 %v49
  %v51 = vpop.xlane.xlu0 %50
  %v52 = vsel %vm30, %v21, 0.0
  %53 = vadd.xlane.f32.xlu0 %v52
  %v54 = vpop.xlane.xlu0 %53
  %v55 = vsel %vm30, %v22, 0.0
  %56 = vadd.xlane.f32.xlu0 %v55
  %v57 = vpop.xlane.xlu0 %56
  %v58 = vsel %vm30, %v23, 0.0
  %59 = vadd.xlane.f32.xlu0 %v58
  %v60 = vpop.xlane.xlu0 %59
  %v61 = vsel %vm30, %v24, 0.0
  %62 = vadd.xlane.f32.xlu0 %v61
  %v63 = vpop.xlane.xlu0 %62
  %v64 = vsel %vm30, %v25, 0.0
  %65 = vadd.xlane.f32.xlu0 %v64
  %v66 = vpop.xlane.xlu0 %65
  %v67 = vsel %vm30, %v26, 0.0
  %68 = vadd.xlane.f32.xlu0 %v67
  %v69 = vpop.xlane.xlu0 %68
  %v70 = vsel %vm30, %v27, 0.0
  %71 = vadd.xlane.f32.xlu0 %v70
  %v72 = vpop.xlane.xlu0 %71
  %v73 = vsel %vm30, %v28, 0.0
  %74 = vadd.xlane.f32.xlu0 %v73
  %v75 = vpop.xlane.xlu0 %74
  %v76 = vsel %vm30, %v29, 0.0
  %77 = vadd.xlane.f32.xlu0 %v76
  %v78 = vpop.xlane.xlu0 %77
  %v79 = vrcp.pop 32.0
  %v80 = vmul.f32 32.0, %v79
  %v81 = vsub.f32 1.0, %v80
  %v82 = vmul.f32 %v79, %v81
  %v83 = vadd.f32 %v79, %v82
  %vm84 = vweird.f32 %v79
  %v85 = vsel %vm84, %v79, %v83
  %v86 = vmul.f32 %v33, %v85
  %v87 = vmul.f32 %v36, %v85
  %v88 = vmul.f32 %v39, %v85
  %v89 = vmul.f32 %v42, %v85
  %v90 = vmul.f32 %v45, %v85
  %v91 = vmul.f32 %v48, %v85
  %v92 = vmul.f32 %v51, %v85
  %v93 = vmul.f32 %v54, %v85
  %v94 = vmul.f32 %v57, %v85
  %v95 = vmul.f32 %v60, %v85
  %v96 = vmul.f32 %v63, %v85
  %v97 = vmul.f32 %v66, %v85
  %v98 = vmul.f32 %v69, %v85
  %v99 = vmul.f32 %v72, %v85
  %v100 = vmul.f32 %v75, %v85
  %v101 = vmul.f32 %v78, %v85
  %v102 = vsub.f32 %v14, %v86
  %v103 = vsub.f32 %v15, %v87
  %v104 = vsub.f32 %v16, %v88
  %v105 = vsub.f32 %v17, %v89
  %v106 = vsub.f32 %v18, %v90
  %v107 = vsub.f32 %v19, %v91
  %v108 = vsub.f32 %v20, %v92
  %v109 = vsub.f32 %v21, %v93
  %v110 = vsub.f32 %v22, %v94
  %v111 = vsub.f32 %v23, %v95
  %v112 = vsub.f32 %v24, %v96
  %v113 = vsub.f32 %v25, %v97
  %v114 = vsub.f32 %v26, %v98
  %v115 = vsub.f32 %v27, %v99
  %v116 = vsub.f32 %v28, %v100
  %v117 = vsub.f32 %v29, %v101
  %v118 = vmul.f32 %v102, %v102
  %v119 = vmul.f32 %v103, %v103
  %v120 = vmul.f32 %v104, %v104
  %v121 = vmul.f32 %v105, %v105
  %v122 = vmul.f32 %v106, %v106
  %v123 = vmul.f32 %v107, %v107
  %v124 = vmul.f32 %v108, %v108
  %v125 = vmul.f32 %v109, %v109
  %v126 = vmul.f32 %v110, %v110
  %v127 = vmul.f32 %v111, %v111
  %v128 = vmul.f32 %v112, %v112
  %v129 = vmul.f32 %v113, %v113
  %v130 = vmul.f32 %v114, %v114
  %v131 = vmul.f32 %v115, %v115
  %v132 = vmul.f32 %v116, %v116
  %v133 = vmul.f32 %v117, %v117
  %v134 = vsel %vm30, %v118, 0.0
  %135 = vadd.xlane.f32.xlu0 %v134
  %v136 = vpop.xlane.xlu0 %135
  %v137 = vsel %vm30, %v119, 0.0
  %138 = vadd.xlane.f32.xlu0 %v137
  %v139 = vpop.xlane.xlu0 %138
  %v140 = vsel %vm30, %v120, 0.0
  %141 = vadd.xlane.f32.xlu0 %v140
  %v142 = vpop.xlane.xlu0 %141
  %v143 = vsel %vm30, %v121, 0.0
  %144 = vadd.xlane.f32.xlu0 %v143
  %v145 = vpop.xlane.xlu0 %144
  %v146 = vsel %vm30, %v122, 0.0
  %147 = vadd.xlane.f32.xlu0 %v146
  %v148 = vpop.xlane.xlu0 %147
  %v149 = vsel %vm30, %v123, 0.0
  %150 = vadd.xlane.f32.xlu0 %v149
  %v151 = vpop.xlane.xlu0 %150
  %v152 = vsel %vm30, %v124, 0.0
  %153 = vadd.xlane.f32.xlu0 %v152
  %v154 = vpop.xlane.xlu0 %153
  %v155 = vsel %vm30, %v125, 0.0
  %156 = vadd.xlane.f32.xlu0 %v155
  %v157 = vpop.xlane.xlu0 %156
  %v158 = vsel %vm30, %v126, 0.0
  %159 = vadd.xlane.f32.xlu0 %v158
  %v160 = vpop.xlane.xlu0 %159
  %v161 = vsel %vm30, %v127, 0.0
  %162 = vadd.xlane.f32.xlu0 %v161
  %v163 = vpop.xlane.xlu0 %162
  %v164 = vsel %vm30, %v128, 0.0
  %165 = vadd.xlane.f32.xlu0 %v164
  %v166 = vpop.xlane.xlu0 %165
  %v167 = vsel %vm30, %v129, 0.0
  %168 = vadd.xlane.f32.xlu0 %v167
  %v169 = vpop.xlane.xlu0 %168
  %v170 = vsel %vm30, %v130, 0.0
  %171 = vadd.xlane.f32.xlu0 %v170
  %v172 = vpop.xlane.xlu0 %171
  %v173 = vsel %vm30, %v131, 0.0
  %174 = vadd.xlane.f32.xlu0 %v173
  %v175 = vpop.xlane.xlu0 %174
  %v176 = vsel %vm30, %v132, 0.0
  %177 = vadd.xlane.f32.xlu0 %v176
  %v178 = vpop.xlane.xlu0 %177
  %v179 = vsel %vm30, %v133, 0.0
  %180 = vadd.xlane.f32.xlu0 %v179
  %v181 = vpop.xlane.xlu0 %180
  %v182 = vmul.f32 %v136, %v85
  %v183 = vmul.f32 %v139, %v85
  %v184 = vmul.f32 %v142, %v85
  %v185 = vmul.f32 %v145, %v85
  %v186 = vmul.f32 %v148, %v85
  %v187 = vmul.f32 %v151, %v85
  %v188 = vmul.f32 %v154, %v85
  %v189 = vmul.f32 %v157, %v85
  %v190 = vmul.f32 %v160, %v85
  %v191 = vmul.f32 %v163, %v85
  %v192 = vmul.f32 %v166, %v85
  %v193 = vmul.f32 %v169, %v85
  %v194 = vmul.f32 %v172, %v85
  %v195 = vmul.f32 %v175, %v85
  %v196 = vmul.f32 %v178, %v85
  %v197 = vmul.f32 %v181, %v85
  %v198 = vadd.f32 %v182, 1e-05
  %v199 = vadd.f32 %v183, 1e-05
  %v200 = vadd.f32 %v184, 1e-05
  %v201 = vadd.f32 %v185, 1e-05
  %v202 = vadd.f32 %v186, 1e-05
  %v203 = vadd.f32 %v187, 1e-05
  %v204 = vadd.f32 %v188, 1e-05
  %v205 = vadd.f32 %v189, 1e-05
  %v206 = vadd.f32 %v190, 1e-05
  %v207 = vadd.f32 %v191, 1e-05
  %v208 = vadd.f32 %v192, 1e-05
  %v209 = vadd.f32 %v193, 1e-05
  %v210 = vadd.f32 %v194, 1e-05
  %v211 = vadd.f32 %v195, 1e-05
  %v212 = vadd.f32 %v196, 1e-05
  %v213 = vadd.f32 %v197, 1e-05
  %v214 = vrsqrt.pop %v198
  %v215 = vmul.f32 %v214, %v198
  %v216 = vmul.f32 %v215, %v214
  %v217 = vmul.f32 0.5, %v216
  %v218 = vsub.f32 1.5, %v217
  %v219 = vmul.f32 %v214, %v218
  %vm220 = vweird.f32 %v198
  %vm221 = vweird.f32 %v214
  %vm222 = vmor %vm220, %vm221
  %v223 = vsel %vm222, %v214, %v219
  %v224 = vrsqrt.pop %v199
  %v225 = vmul.f32 %v224, %v199
  %v226 = vmul.f32 %v225, %v224
  %v227 = vmul.f32 0.5, %v226
  %v228 = vsub.f32 1.5, %v227
  %v229 = vmul.f32 %v224, %v228
  %vm230 = vweird.f32 %v199
  %vm231 = vweird.f32 %v224
  %vm232 = vmor %vm230, %vm231
  %v233 = vsel %vm232, %v224, %v229
  %v234 = vrsqrt.pop %v200
  %v235 = vmul.f32 %v234, %v200
  %v236 = vmul.f32 %v235, %v234
  %v237 = vmul.f32 0.5, %v236
  %v238 = vsub.f32 1.5, %v237
  %v239 = vmul.f32 %v234, %v238
  %vm240 = vweird.f32 %v200
  %vm241 = vweird.f32 %v234
  %vm242 = vmor %vm240, %vm241
  %v243 = vsel %vm242, %v234, %v239
  %v244 = vrsqrt.pop %v201
  %v245 = vmul.f32 %v244, %v201
  %v246 = vmul.f32 %v245, %v244
  %v247 = vmul.f32 0.5, %v246
  %v248 = vsub.f32 1.5, %v247
  %v249 = vmul.f32 %v244, %v248
  %vm250 = vweird.f32 %v201
  %vm251 = vweird.f32 %v244
  %vm252 = vmor %vm250, %vm251
  %v253 = vsel %vm252, %v244, %v249
  %v254 = vrsqrt.pop %v202
  %v255 = vmul.f32 %v254, %v202
  %v256 = vmul.f32 %v255, %v254
  %v257 = vmul.f32 0.5, %v256
  %v258 = vsub.f32 1.5, %v257
  %v259 = vmul.f32 %v254, %v258
  %vm260 = vweird.f32 %v202
  %vm261 = vweird.f32 %v254
  %vm262 = vmor %vm260, %vm261
  %v263 = vsel %vm262, %v254, %v259
  %v264 = vrsqrt.pop %v203
  %v265 = vmul.f32 %v264, %v203
  %v266 = vmul.f32 %v265, %v264
  %v267 = vmul.f32 0.5, %v266
  %v268 = vsub.f32 1.5, %v267
  %v269 = vmul.f32 %v264, %v268
  %vm270 = vweird.f32 %v203
  %vm271 = vweird.f32 %v264
  %vm272 = vmor %vm270, %vm271
  %v273 = vsel %vm272, %v264, %v269
  %v274 = vrsqrt.pop %v204
  %v275 = vmul.f32 %v274, %v204
  %v276 = vmul.f32 %v275, %v274
  %v277 = vmul.f32 0.5, %v276
  %v278 = vsub.f32 1.5, %v277
  %v279 = vmul.f32 %v274, %v278
  %vm280 = vweird.f32 %v204
  %vm281 = vweird.f32 %v274
  %vm282 = vmor %vm280, %vm281
  %v283 = vsel %vm282, %v274, %v279
  %v284 = vrsqrt.pop %v205
  %v285 = vmul.f32 %v284, %v205
  %v286 = vmul.f32 %v285, %v284
  %v287 = vmul.f32 0.5, %v286
  %v288 = vsub.f32 1.5, %v287
  %v289 = vmul.f32 %v284, %v288
  %vm290 = vweird.f32 %v205
  %vm291 = vweird.f32 %v284
  %vm292 = vmor %vm290, %vm291
  %v293 = vsel %vm292, %v284, %v289
  %v294 = vrsqrt.pop %v206
  %v295 = vmul.f32 %v294, %v206
  %v296 = vmul.f32 %v295, %v294
  %v297 = vmul.f32 0.5, %v296
  %v298 = vsub.f32 1.5, %v297
  %v299 = vmul.f32 %v294, %v298
  %vm300 = vweird.f32 %v206
  %vm301 = vweird.f32 %v294
  %vm302 = vmor %vm300, %vm301
  %v303 = vsel %vm302, %v294, %v299
  %v304 = vrsqrt.pop %v207
  %v305 = vmul.f32 %v304, %v207
  %v306 = vmul.f32 %v305, %v304
  %v307 = vmul.f32 0.5, %v306
  %v308 = vsub.f32 1.5, %v307
  %v309 = vmul.f32 %v304, %v308
  %vm310 = vweird.f32 %v207
  %vm311 = vweird.f32 %v304
  %vm312 = vmor %vm310, %vm311
  %v313 = vsel %vm312, %v304, %v309
  %v314 = vrsqrt.pop %v208
  %v315 = vmul.f32 %v314, %v208
  %v316 = vmul.f32 %v315, %v314
  %v317 = vmul.f32 0.5, %v316
  %v318 = vsub.f32 1.5, %v317
  %v319 = vmul.f32 %v314, %v318
  %vm320 = vweird.f32 %v208
  %vm321 = vweird.f32 %v314
  %vm322 = vmor %vm320, %vm321
  %v323 = vsel %vm322, %v314, %v319
  %v324 = vrsqrt.pop %v209
  %v325 = vmul.f32 %v324, %v209
  %v326 = vmul.f32 %v325, %v324
  %v327 = vmul.f32 0.5, %v326
  %v328 = vsub.f32 1.5, %v327
  %v329 = vmul.f32 %v324, %v328
  %vm330 = vweird.f32 %v209
  %vm331 = vweird.f32 %v324
  %vm332 = vmor %vm330, %vm331
  %v333 = vsel %vm332, %v324, %v329
  %v334 = vrsqrt.pop %v210
  %v335 = vmul.f32 %v334, %v210
  %v336 = vmul.f32 %v335, %v334
  %v337 = vmul.f32 0.5, %v336
  %v338 = vsub.f32 1.5, %v337
  %v339 = vmul.f32 %v334, %v338
  %vm340 = vweird.f32 %v210
  %vm341 = vweird.f32 %v334
  %vm342 = vmor %vm340, %vm341
  %v343 = vsel %vm342, %v334, %v339
  %v344 = vrsqrt.pop %v211
  %v345 = vmul.f32 %v344, %v211
  %v346 = vmul.f32 %v345, %v344
  %v347 = vmul.f32 0.5, %v346
  %v348 = vsub.f32 1.5, %v347
  %v349 = vmul.f32 %v344, %v348
  %vm350 = vweird.f32 %v211
  %vm351 = vweird.f32 %v344
  %vm352 = vmor %vm350, %vm351
  %v353 = vsel %vm352, %v344, %v349
  %v354 = vrsqrt.pop %v212
  %v355 = vmul.f32 %v354, %v212
  %v356 = vmul.f32 %v355, %v354
  %v357 = vmul.f32 0.5, %v356
  %v358 = vsub.f32 1.5, %v357
  %v359 = vmul.f32 %v354, %v358
  %vm360 = vweird.f32 %v212
  %vm361 = vweird.f32 %v354
  %vm362 = vmor %vm360, %vm361
  %v363 = vsel %vm362, %v354, %v359
  %v364 = vrsqrt.pop %v213
  %v365 = vmul.f32 %v364, %v213
  %v366 = vmul.f32 %v365, %v364
  %v367 = vmul.f32 0.5, %v366
  %v368 = vsub.f32 1.5, %v367
  %v369 = vmul.f32 %v364, %v368
  %vm370 = vweird.f32 %v213
  %vm371 = vweird.f32 %v364
  %vm372 = vmor %vm370, %vm371
  %v373 = vsel %vm372, %v364, %v369
  %v374 = vmul.f32 %v102, %v223
  %v375 = vmul.f32 %v103, %v233
  %v376 = vmul.f32 %v104, %v243
  %v377 = vmul.f32 %v105, %v253
  %v378 = vmul.f32 %v106, %v263
  %v379 = vmul.f32 %v107, %v273
  %v380 = vmul.f32 %v108, %v283
  %v381 = vmul.f32 %v109, %v293
  %v382 = vmul.f32 %v110, %v303
  %v383 = vmul.f32 %v111, %v313
  %v384 = vmul.f32 %v112, %v323
  %v385 = vmul.f32 %v113, %v333
  %v386 = vmul.f32 %v114, %v343
  %v387 = vmul.f32 %v115, %v353
  %v388 = vmul.f32 %v116, %v363
  %v389 = vmul.f32 %v117, %v373
  %v390 = vld [vmem:[%s1] sm:$0x1]
  %v392 = vperm.slane %v390, 0
  %v394 = vmul.f32 %v374, %v392
  %v395 = vmul.f32 %v375, %v392
  %v396 = vmul.f32 %v376, %v392
  %v397 = vmul.f32 %v377, %v392
  %v398 = vmul.f32 %v378, %v392
  %v399 = vmul.f32 %v379, %v392
  %v400 = vmul.f32 %v380, %v392
  %v401 = vmul.f32 %v381, %v392
  %v402 = vmul.f32 %v382, %v392
  %v403 = vmul.f32 %v383, %v392
  %v404 = vmul.f32 %v384, %v392
  %v405 = vmul.f32 %v385, %v392
  %v406 = vmul.f32 %v386, %v392
  %v407 = vmul.f32 %v387, %v392
  %v408 = vmul.f32 %v388, %v392
  %v409 = vmul.f32 %v389, %v392
  %v410 = vld [vmem:[%s2] sm:$0x1]
  %v412 = vperm.slane %v410, 0
  %v414 = vadd.f32 %v394, %v412
  %v415 = vadd.f32 %v395, %v412
  %v416 = vadd.f32 %v396, %v412
  %v417 = vadd.f32 %v397, %v412
  %v418 = vadd.f32 %v398, %v412
  %v419 = vadd.f32 %v399, %v412
  %v420 = vadd.f32 %v400, %v412
  %v421 = vadd.f32 %v401, %v412
  %v422 = vadd.f32 %v402, %v412
  %v423 = vadd.f32 %v403, %v412
  %v424 = vadd.f32 %v404, %v412
  %v425 = vadd.f32 %v405, %v412
  %v426 = vadd.f32 %v406, %v412
  %v427 = vadd.f32 %v407, %v412
  %v428 = vadd.f32 %v408, %v412
  %v429 = vadd.f32 %v409, %v412
  %v430 = vpack.c.bf16 %v414, %v414
  %v431 = vpack.c.bf16 %v415, %v415
  %v432 = vpack.c.bf16 %v416, %v416
  %v433 = vpack.c.bf16 %v417, %v417
  %v434 = vpack.c.bf16 %v418, %v418
  %v435 = vpack.c.bf16 %v419, %v419
  %v436 = vpack.c.bf16 %v420, %v420
  %v437 = vpack.c.bf16 %v421, %v421
  %v438 = vpack.c.bf16 %v422, %v422
  %v439 = vpack.c.bf16 %v423, %v423
  %v440 = vpack.c.bf16 %v424, %v424
  %v441 = vpack.c.bf16 %v425, %v425
  %v442 = vpack.c.bf16 %v426, %v426
  %v443 = vpack.c.bf16 %v427, %v427
  %v444 = vpack.c.bf16 %v428, %v428
  %v445 = vpack.c.bf16 %v429, %v429
  %vm446 = vcmask 257024
  %447 = vst.msk [vmem:[%s3] sm:$0xf] %vm446, %v430
  %448 = vst.msk [vmem:[%s3 + $0x4] sm:$0xf] %vm446, %v431
  %449 = vst.msk [vmem:[%s3 + $0x8] sm:$0xf] %vm446, %v432
  %450 = vst.msk [vmem:[%s3 + $0xc] sm:$0xf] %vm446, %v433
  %451 = vst.msk [vmem:[%s3 + $0x10] sm:$0xf] %vm446, %v434
  %452 = vst.msk [vmem:[%s3 + $0x14] sm:$0xf] %vm446, %v435
  %453 = vst.msk [vmem:[%s3 + $0x18] sm:$0xf] %vm446, %v436
  %454 = vst.msk [vmem:[%s3 + $0x1c] sm:$0xf] %vm446, %v437
  %455 = vst.msk [vmem:[%s3 + $0x20] sm:$0xf] %vm446, %v438
  %456 = vst.msk [vmem:[%s3 + $0x24] sm:$0xf] %vm446, %v439
  %457 = vst.msk [vmem:[%s3 + $0x28] sm:$0xf] %vm446, %v440
  %458 = vst.msk [vmem:[%s3 + $0x2c] sm:$0xf] %vm446, %v441
  %459 = vst.msk [vmem:[%s3 + $0x30] sm:$0xf] %vm446, %v442
  %460 = vst.msk [vmem:[%s3 + $0x34] sm:$0xf] %vm446, %v443
  %461 = vst.msk [vmem:[%s3 + $0x38] sm:$0xf] %vm446, %v444
  %462 = vst.msk [vmem:[%s3 + $0x3c] sm:$0xf] %vm446, %v445
  // Predicated region
  $region14: #{transolver_erwin_block.5} parent=0 // pred_check
    _
  $region15: #{transolver_erwin_block.5} parent=0 // pred_check_branch
    %464 = sbr.rel (0) target = $region17
  $region16: #{transolver_erwin_block.5} parent=0 // pred_region
    _
  $region17: #{transolver_erwin_block.5} parent=0 // pred_fallthru
    _
  // Predicated region
  $region18: #{transolver_erwin_block.5} parent=0 // pred_check
    _
  $region19: #{transolver_erwin_block.5} parent=0 // pred_check_branch
    %466 = sbr.rel (0) target = $region21
  $region20: #{transolver_erwin_block.5} parent=0 // pred_region
    _
  $region21: #{transolver_erwin_block.5} parent=0 // pred_fallthru
    _

// kernel: transolver_erwin_block.8
$region0: #{transolver_erwin_block.8}
  #allocation0 [shape = 'u32[]', space=smem, size = 0x4, offset = 0x4, fixed_abs, tag = 'smem constant byte address 0x4 - core index']
  #allocation1 [shape = 'u32[72,128]{1,0:T(1,128)}', space=vmem, size = 0x9000, scoped, tag = 'internal scratch']
  #allocation2 [shape = 'f32[128,128]{1,0:T(8,128)}', space=vmem, size = 0x10000, scoped, tag = 'scratch operand']
  %s0 = inlined_call_operand.vmem [shape: bf16[128,32], index: 0, kind: input, shape index: {}]
  %s1 = inlined_call_operand.vmem [shape: bf16[32,128], index: 1, kind: input, shape index: {}]
  %s2 = inlined_call_operand.vmem [shape: f32[1,128], index: 2, kind: input, shape index: {}]
  %s3 = inlined_call_operand.vmem [shape: bf16[128,128], index: 3, kind: output, shape index: {}]
  %s4 = sld [smem:[#allocation0]]
  $region30: #{transolver_erwin_block.8} parent=0
    _
  %s6 = ssub.s32 1, %s4
  %s7 = scalar_select 0, %s6, %s4
  // Predicated region
  $region2: #{transolver_erwin_block.8} parent=0 // pred_check
    _
  $region3: #{transolver_erwin_block.8} parent=0 // pred_check_branch
    %9 = sbr.rel (0) target = $region5
  $region4: #{transolver_erwin_block.8} parent=0 // pred_region
    _
  $region5: #{transolver_erwin_block.8} parent=0 // pred_fallthru
    _
  // Predicated region
  $region6: #{transolver_erwin_block.8} parent=0 // pred_check
    _
  $region7: #{transolver_erwin_block.8} parent=0 // pred_check_branch
    %11 = sbr.rel (0) target = $region9
  $region8: #{transolver_erwin_block.8} parent=0 // pred_region
    _
  $region9: #{transolver_erwin_block.8} parent=0 // pred_fallthru
    _
  // Predicated region
  $region10: #{transolver_erwin_block.8} parent=0 // pred_check
    _
  $region11: #{transolver_erwin_block.8} parent=0 // pred_check_branch
    %13 = sbr.rel (0) target = $region13
  $region12: #{transolver_erwin_block.8} parent=0 // pred_region
    _
  $region13: #{transolver_erwin_block.8} parent=0 // pred_fallthru
    _
  %p15 = scmp.eq.s32.totalorder 0, 0
  // Predicated region
  $region14: #{transolver_erwin_block.8} parent=0 // pred_check
    %p16 = pneg %p15
  $region15: #{transolver_erwin_block.8} parent=0 // pred_check_branch
    %18 = sbr.rel (%p16) target = $region17
  $region16: #{transolver_erwin_block.8} parent=0 // pred_region
    %19 = vst [vmem:[#allocation2] sm:$0xff] 0.0
    %20 = vst [vmem:[#allocation2 + $0x8] sm:$0xff] 0.0
    %21 = vst [vmem:[#allocation2 + $0x10] sm:$0xff] 0.0
    %22 = vst [vmem:[#allocation2 + $0x18] sm:$0xff] 0.0
    %23 = vst [vmem:[#allocation2 + $0x20] sm:$0xff] 0.0
    %24 = vst [vmem:[#allocation2 + $0x28] sm:$0xff] 0.0
    %25 = vst [vmem:[#allocation2 + $0x30] sm:$0xff] 0.0
    %26 = vst [vmem:[#allocation2 + $0x38] sm:$0xff] 0.0
    %27 = vst [vmem:[#allocation2 + $0x40] sm:$0xff] 0.0
    %28 = vst [vmem:[#allocation2 + $0x48] sm:$0xff] 0.0
    %29 = vst [vmem:[#allocation2 + $0x50] sm:$0xff] 0.0
    %30 = vst [vmem:[#allocation2 + $0x58] sm:$0xff] 0.0
    %31 = vst [vmem:[#allocation2 + $0x60] sm:$0xff] 0.0
    %32 = vst [vmem:[#allocation2 + $0x68] sm:$0xff] 0.0
    %33 = vst [vmem:[#allocation2 + $0x70] sm:$0xff] 0.0
    %34 = vst [vmem:[#allocation2 + $0x78] sm:$0xff] 0.0
  $region17: #{transolver_erwin_block.8} parent=0 // pred_fallthru
    _
  %v35 = vld [vmem:[#allocation2] sm:$0xff]
  %v36 = vld [vmem:[#allocation2 + $0x8] sm:$0xff]
  %v37 = vld [vmem:[#allocation2 + $0x10] sm:$0xff]
  %v38 = vld [vmem:[#allocation2 + $0x18] sm:$0xff]
  %v39 = vld [vmem:[#allocation2 + $0x20] sm:$0xff]
  %v40 = vld [vmem:[#allocation2 + $0x28] sm:$0xff]
  %v41 = vld [vmem:[#allocation2 + $0x30] sm:$0xff]
  %v42 = vld [vmem:[#allocation2 + $0x38] sm:$0xff]
  %v43 = vld [vmem:[#allocation2 + $0x40] sm:$0xff]
  %v44 = vld [vmem:[#allocation2 + $0x48] sm:$0xff]
  %v45 = vld [vmem:[#allocation2 + $0x50] sm:$0xff]
  %v46 = vld [vmem:[#allocation2 + $0x58] sm:$0xff]
  %v47 = vld [vmem:[#allocation2 + $0x60] sm:$0xff]
  %v48 = vld [vmem:[#allocation2 + $0x68] sm:$0xff]
  %v49 = vld [vmem:[#allocation2 + $0x70] sm:$0xff]
  %v50 = vld [vmem:[#allocation2 + $0x78] sm:$0xff]
  %v51 = vld [vmem:[%s0] sm:$0xf]
  %v52 = vld [vmem:[%s0 + $0x4] sm:$0xf]
  %v53 = vld [vmem:[%s0 + $0x8] sm:$0xf]
  %v54 = vld [vmem:[%s0 + $0xc] sm:$0xf]
  %v55 = vld [vmem:[%s0 + $0x10] sm:$0xf]
  %v56 = vld [vmem:[%s0 + $0x14] sm:$0xf]
  %v57 = vld [vmem:[%s0 + $0x18] sm:$0xf]
  %v58 = vld [vmem:[%s0 + $0x1c] sm:$0xf]
  %v59 = vld [vmem:[%s0 + $0x20] sm:$0xf]
  %v60 = vld [vmem:[%s0 + $0x24] sm:$0xf]
  %v61 = vld [vmem:[%s0 + $0x28] sm:$0xf]
  %v62 = vld [vmem:[%s0 + $0x2c] sm:$0xf]
  %v63 = vld [vmem:[%s0 + $0x30] sm:$0xf]
  %v64 = vld [vmem:[%s0 + $0x34] sm:$0xf]
  %v65 = vld [vmem:[%s0 + $0x38] sm:$0xf]
  %v66 = vld [vmem:[%s0 + $0x3c] sm:$0xf]
  %v67 = vld [vmem:[%s1] sm:$0xf]
  %v68 = vld [vmem:[%s1 + $0x4] sm:$0xf]
  %v69 = vld [vmem:[%s1 + $0x8] sm:$0xf]
  %v70 = vld [vmem:[%s1 + $0xc] sm:$0xf]
  %v87 = vunpack.c.l.b16 %v51
  %v88 = vunpack.c.l.b16 %v52
  %v89 = vunpack.c.l.b16 %v53
  %v90 = vunpack.c.l.b16 %v54
  %v91 = vunpack.c.l.b16 %v55
  %v92 = vunpack.c.l.b16 %v56
  %v93 = vunpack.c.l.b16 %v57
  %v94 = vunpack.c.l.b16 %v58
  %v95 = vunpack.c.l.b16 %v59
  %v96 = vunpack.c.l.b16 %v60
  %v97 = vunpack.c.l.b16 %v61
  %v98 = vunpack.c.l.b16 %v62
  %v99 = vunpack.c.l.b16 %v63
  %v100 = vunpack.c.l.b16 %v64
  %v101 = vunpack.c.l.b16 %v65
  %v102 = vunpack.c.l.b16 %v66
  %v103 = vpack.c.b16 %v88, %v87
  %v104 = vpack.c.b16 %v90, %v89
  %v105 = vpack.c.b16 %v92, %v91
  %v106 = vpack.c.b16 %v94, %v93
  %v107 = vpack.c.b16 %v96, %v95
  %v108 = vpack.c.b16 %v98, %v97
  %v109 = vpack.c.b16 %v100, %v99
  %v110 = vpack.c.b16 %v102, %v101
  %v115 = vunpack.c.l.b16 %v67
  %v116 = vunpack.c.l.b16 %v68
  %v117 = vunpack.c.l.b16 %v69
  %v118 = vunpack.c.l.b16 %v70
  %v119 = vpack.c.b16 %v116, %v115
  %v120 = vpack.c.b16 %v118, %v117
  %vm123 = vcmask 261120
  %v125 = vsel %vm123, %v103, 0
  %v128 = vsel %vm123, %v104, 0
  %v131 = vsel %vm123, %v105, 0
  %v134 = vsel %vm123, %v106, 0
  %v137 = vsel %vm123, %v107, 0
  %v140 = vsel %vm123, %v108, 0
  %v143 = vsel %vm123, %v109, 0
  %v146 = vsel %vm123, %v110, 0
  %148 = vmatpush.bf16.msra.mxu0 0
  %149 = vmatpush.bf16.msra.mxu0 0
  %150 = vmatpush.bf16.msra.mxu0 0
  %151 = vmatpush.bf16.msra.mxu0 0
  %152 = vmatpush.bf16.msra.mxu0 0
  %153 = vmatpush.bf16.msra.mxu0 0
  %154 = vmatpush.bf16.msra.mxu0 %v120
  %155 = vmatpush.bf16.msra.mxu0 %v119
  %156 = vmatmul.bf16.gmra.mxu0 %v125
  %v157 = vpop.f32.mrf.mxu0
  %v158 = vadd.f32 0.0, %v157
  %v159 = vpop.f32.mrf.mxu0
  %v160 = vadd.f32 0.0, %v159
  %161 = vmatmul.bf16.gmra.mxu0 %v128
  %v162 = vpop.f32.mrf.mxu0
  %v163 = vadd.f32 0.0, %v162
  %v164 = vpop.f32.mrf.mxu0
  %v165 = vadd.f32 0.0, %v164
  %166 = vmatmul.bf16.gmra.mxu0 %v131
  %v167 = vpop.f32.mrf.mxu0
  %v168 = vadd.f32 0.0, %v167
  %v169 = vpop.f32.mrf.mxu0
  %v170 = vadd.f32 0.0, %v169
  %171 = vmatmul.bf16.gmra.mxu0 %v134
  %v172 = vpop.f32.mrf.mxu0
  %v173 = vadd.f32 0.0, %v172
  %v174 = vpop.f32.mrf.mxu0
  %v175 = vadd.f32 0.0, %v174
  %176 = vmatmul.bf16.gmra.mxu0 %v137
  %v177 = vpop.f32.mrf.mxu0
  %v178 = vadd.f32 0.0, %v177
  %v179 = vpop.f32.mrf.mxu0
  %v180 = vadd.f32 0.0, %v179
  %181 = vmatmul.bf16.gmra.mxu0 %v140
  %v182 = vpop.f32.mrf.mxu0
  %v183 = vadd.f32 0.0, %v182
  %v184 = vpop.f32.mrf.mxu0
  %v185 = vadd.f32 0.0, %v184
  %186 = vmatmul.bf16.gmra.mxu0 %v143
  %v187 = vpop.f32.mrf.mxu0
  %v188 = vadd.f32 0.0, %v187
  %v189 = vpop.f32.mrf.mxu0
  %v190 = vadd.f32 0.0, %v189
  %191 = vmatmul.bf16.gmra.mxu0 %v146
  %v192 = vpop.f32.mrf.mxu0
  %v193 = vadd.f32 0.0, %v192
  %v194 = vpop.f32.mrf.mxu0
  %v195 = vadd.f32 0.0, %v194
  %196 = vdwg.mxu0
  %v197 = vadd.f32 %v35, %v158
  %v198 = vadd.f32 %v36, %v160
  %v199 = vadd.f32 %v37, %v163
  %v200 = vadd.f32 %v38, %v165
  %v201 = vadd.f32 %v39, %v168
  %v202 = vadd.f32 %v40, %v170
  %v203 = vadd.f32 %v41, %v173
  %v204 = vadd.f32 %v42, %v175
  %v205 = vadd.f32 %v43, %v178
  %v206 = vadd.f32 %v44, %v180
  %v207 = vadd.f32 %v45, %v183
  %v208 = vadd.f32 %v46, %v185
  %v209 = vadd.f32 %v47, %v188
  %v210 = vadd.f32 %v48, %v190
  %v211 = vadd.f32 %v49, %v193
  %v212 = vadd.f32 %v50, %v195
  %213 = vst [vmem:[#allocation2] sm:$0xff] %v197
  %214 = vst [vmem:[#allocation2 + $0x8] sm:$0xff] %v198
  %215 = vst [vmem:[#allocation2 + $0x10] sm:$0xff] %v199
  %216 = vst [vmem:[#allocation2 + $0x18] sm:$0xff] %v200
  %217 = vst [vmem:[#allocation2 + $0x20] sm:$0xff] %v201
  %218 = vst [vmem:[#allocation2 + $0x28] sm:$0xff] %v202
  %219 = vst [vmem:[#allocation2 + $0x30] sm:$0xff] %v203
  %220 = vst [vmem:[#allocation2 + $0x38] sm:$0xff] %v204
  %221 = vst [vmem:[#allocation2 + $0x40] sm:$0xff] %v205
  %222 = vst [vmem:[#allocation2 + $0x48] sm:$0xff] %v206
  %223 = vst [vmem:[#allocation2 + $0x50] sm:$0xff] %v207
  %224 = vst [vmem:[#allocation2 + $0x58] sm:$0xff] %v208
  %225 = vst [vmem:[#allocation2 + $0x60] sm:$0xff] %v209
  %226 = vst [vmem:[#allocation2 + $0x68] sm:$0xff] %v210
  %227 = vst [vmem:[#allocation2 + $0x70] sm:$0xff] %v211
  %228 = vst [vmem:[#allocation2 + $0x78] sm:$0xff] %v212
  // Predicated region
  $region18: #{transolver_erwin_block.8} parent=0 // pred_check
    %p229 = pneg %p15
  $region19: #{transolver_erwin_block.8} parent=0 // pred_check_branch
    %231 = sbr.rel (%p229) target = $region21
  $region20: #{transolver_erwin_block.8} parent=0 // pred_region
    %v232 = vld [vmem:[#allocation2] sm:$0xff]
    %v233 = vld [vmem:[#allocation2 + $0x8] sm:$0xff]
    %v234 = vld [vmem:[#allocation2 + $0x10] sm:$0xff]
    %v235 = vld [vmem:[#allocation2 + $0x18] sm:$0xff]
    %v236 = vld [vmem:[#allocation2 + $0x20] sm:$0xff]
    %v237 = vld [vmem:[#allocation2 + $0x28] sm:$0xff]
    %v238 = vld [vmem:[#allocation2 + $0x30] sm:$0xff]
    %v239 = vld [vmem:[#allocation2 + $0x38] sm:$0xff]
    %v240 = vld [vmem:[#allocation2 + $0x40] sm:$0xff]
    %v241 = vld [vmem:[#allocation2 + $0x48] sm:$0xff]
    %v242 = vld [vmem:[#allocation2 + $0x50] sm:$0xff]
    %v243 = vld [vmem:[#allocation2 + $0x58] sm:$0xff]
    %v244 = vld [vmem:[#allocation2 + $0x60] sm:$0xff]
    %v245 = vld [vmem:[#allocation2 + $0x68] sm:$0xff]
    %v246 = vld [vmem:[#allocation2 + $0x70] sm:$0xff]
    %v247 = vld [vmem:[#allocation2 + $0x78] sm:$0xff]
    %v248 = vld [vmem:[%s2] sm:$0x1]
    %v250 = vperm.slane %v248, 0
    %v252 = vadd.f32 %v232, %v250
    %v253 = vadd.f32 %v233, %v250
    %v254 = vadd.f32 %v234, %v250
    %v255 = vadd.f32 %v235, %v250
    %v256 = vadd.f32 %v236, %v250
    %v257 = vadd.f32 %v237, %v250
    %v258 = vadd.f32 %v238, %v250
    %v259 = vadd.f32 %v239, %v250
    %v260 = vadd.f32 %v240, %v250
    %v261 = vadd.f32 %v241, %v250
    %v262 = vadd.f32 %v242, %v250
    %v263 = vadd.f32 %v243, %v250
    %v264 = vadd.f32 %v244, %v250
    %v265 = vadd.f32 %v245, %v250
    %v266 = vadd.f32 %v246, %v250
    %v267 = vadd.f32 %v247, %v250
    %v268 = vmul.f32 %v252, %v252
    %v269 = vmul.f32 %v253, %v253
    %v270 = vmul.f32 %v254, %v254
    %v271 = vmul.f32 %v255, %v255
    %v272 = vmul.f32 %v256, %v256
    %v273 = vmul.f32 %v257, %v257
    %v274 = vmul.f32 %v258, %v258
    %v275 = vmul.f32 %v259, %v259
    %v276 = vmul.f32 %v260, %v260
    %v277 = vmul.f32 %v261, %v261
    %v278 = vmul.f32 %v262, %v262
    %v279 = vmul.f32 %v263, %v263
    %v280 = vmul.f32 %v264, %v264
    %v281 = vmul.f32 %v265, %v265
    %v282 = vmul.f32 %v266, %v266
    %v283 = vmul.f32 %v267, %v267
    %v284 = vmul.f32 %v252, %v268
    %v285 = vmul.f32 %v253, %v269
    %v286 = vmul.f32 %v254, %v270
    %v287 = vmul.f32 %v255, %v271
    %v288 = vmul.f32 %v256, %v272
    %v289 = vmul.f32 %v257, %v273
    %v290 = vmul.f32 %v258, %v274
    %v291 = vmul.f32 %v259, %v275
    %v292 = vmul.f32 %v260, %v276
    %v293 = vmul.f32 %v261, %v277
    %v294 = vmul.f32 %v262, %v278
    %v295 = vmul.f32 %v263, %v279
    %v296 = vmul.f32 %v264, %v280
    %v297 = vmul.f32 %v265, %v281
    %v298 = vmul.f32 %v266, %v282
    %v299 = vmul.f32 %v267, %v283
    %v300 = vmul.f32 %v284, 0.044715
    %v301 = vmul.f32 %v285, 0.044715
    %v302 = vmul.f32 %v286, 0.044715
    %v303 = vmul.f32 %v287, 0.044715
    %v304 = vmul.f32 %v288, 0.044715
    %v305 = vmul.f32 %v289, 0.044715
    %v306 = vmul.f32 %v290, 0.044715
    %v307 = vmul.f32 %v291, 0.044715
    %v308 = vmul.f32 %v292, 0.044715
    %v309 = vmul.f32 %v293, 0.044715
    %v310 = vmul.f32 %v294, 0.044715
    %v311 = vmul.f32 %v295, 0.044715
    %v312 = vmul.f32 %v296, 0.044715
    %v313 = vmul.f32 %v297, 0.044715
    %v314 = vmul.f32 %v298, 0.044715
    %v315 = vmul.f32 %v299, 0.044715
    %v316 = vadd.f32 %v252, %v300
    %v317 = vadd.f32 %v253, %v301
    %v318 = vadd.f32 %v254, %v302
    %v319 = vadd.f32 %v255, %v303
    %v320 = vadd.f32 %v256, %v304
    %v321 = vadd.f32 %v257, %v305
    %v322 = vadd.f32 %v258, %v306
    %v323 = vadd.f32 %v259, %v307
    %v324 = vadd.f32 %v260, %v308
    %v325 = vadd.f32 %v261, %v309
    %v326 = vadd.f32 %v262, %v310
    %v327 = vadd.f32 %v263, %v311
    %v328 = vadd.f32 %v264, %v312
    %v329 = vadd.f32 %v265, %v313
    %v330 = vadd.f32 %v266, %v314
    %v331 = vadd.f32 %v267, %v315
    %v332 = vmul.f32 %v316, 0.7978846
    %v333 = vmul.f32 %v317, 0.7978846
    %v334 = vmul.f32 %v318, 0.7978846
    %v335 = vmul.f32 %v319, 0.7978846
    %v336 = vmul.f32 %v320, 0.7978846
    %v337 = vmul.f32 %v321, 0.7978846
    %v338 = vmul.f32 %v322, 0.7978846
    %v339 = vmul.f32 %v323, 0.7978846
    %v340 = vmul.f32 %v324, 0.7978846
    %v341 = vmul.f32 %v325, 0.7978846
    %v342 = vmul.f32 %v326, 0.7978846
    %v343 = vmul.f32 %v327, 0.7978846
    %v344 = vmul.f32 %v328, 0.7978846
    %v345 = vmul.f32 %v329, 0.7978846
    %v346 = vmul.f32 %v330, 0.7978846
    %v347 = vmul.f32 %v331, 0.7978846
    %v348 = vtanh.pop %v332
    %v349 = vtanh.pop %v333
    %v350 = vtanh.pop %v334
    %v351 = vtanh.pop %v335
    %v352 = vtanh.pop %v336
    %v353 = vtanh.pop %v337
    %v354 = vtanh.pop %v338
    %v355 = vtanh.pop %v339
    %v356 = vtanh.pop %v340
    %v357 = vtanh.pop %v341
    %v358 = vtanh.pop %v342
    %v359 = vtanh.pop %v343
    %v360 = vtanh.pop %v344
    %v361 = vtanh.pop %v345
    %v362 = vtanh.pop %v346
    %v363 = vtanh.pop %v347
    %v364 = vadd.f32 %v348, 1.0
    %v365 = vadd.f32 %v349, 1.0
    %v366 = vadd.f32 %v350, 1.0
    %v367 = vadd.f32 %v351, 1.0
    %v368 = vadd.f32 %v352, 1.0
    %v369 = vadd.f32 %v353, 1.0
    %v370 = vadd.f32 %v354, 1.0
    %v371 = vadd.f32 %v355, 1.0
    %v372 = vadd.f32 %v356, 1.0
    %v373 = vadd.f32 %v357, 1.0
    %v374 = vadd.f32 %v358, 1.0
    %v375 = vadd.f32 %v359, 1.0
    %v376 = vadd.f32 %v360, 1.0
    %v377 = vadd.f32 %v361, 1.0
    %v378 = vadd.f32 %v362, 1.0
    %v379 = vadd.f32 %v363, 1.0
    %v380 = vmul.f32 %v364, 0.5
    %v381 = vmul.f32 %v365, 0.5
    %v382 = vmul.f32 %v366, 0.5
    %v383 = vmul.f32 %v367, 0.5
    %v384 = vmul.f32 %v368, 0.5
    %v385 = vmul.f32 %v369, 0.5
    %v386 = vmul.f32 %v370, 0.5
    %v387 = vmul.f32 %v371, 0.5
    %v388 = vmul.f32 %v372, 0.5
    %v389 = vmul.f32 %v373, 0.5
    %v390 = vmul.f32 %v374, 0.5
    %v391 = vmul.f32 %v375, 0.5
    %v392 = vmul.f32 %v376, 0.5
    %v393 = vmul.f32 %v377, 0.5
    %v394 = vmul.f32 %v378, 0.5
    %v395 = vmul.f32 %v379, 0.5
    %v396 = vmul.f32 %v252, %v380
    %v397 = vmul.f32 %v253, %v381
    %v398 = vmul.f32 %v254, %v382
    %v399 = vmul.f32 %v255, %v383
    %v400 = vmul.f32 %v256, %v384
    %v401 = vmul.f32 %v257, %v385
    %v402 = vmul.f32 %v258, %v386
    %v403 = vmul.f32 %v259, %v387
    %v404 = vmul.f32 %v260, %v388
    %v405 = vmul.f32 %v261, %v389
    %v406 = vmul.f32 %v262, %v390
    %v407 = vmul.f32 %v263, %v391
    %v408 = vmul.f32 %v264, %v392
    %v409 = vmul.f32 %v265, %v393
    %v410 = vmul.f32 %v266, %v394
    %v411 = vmul.f32 %v267, %v395
    %v412 = vpack.c.bf16 %v396, %v396
    %v413 = vpack.c.bf16 %v397, %v397
    %v414 = vpack.c.bf16 %v398, %v398
    %v415 = vpack.c.bf16 %v399, %v399
    %v416 = vpack.c.bf16 %v400, %v400
    %v417 = vpack.c.bf16 %v401, %v401
    %v418 = vpack.c.bf16 %v402, %v402
    %v419 = vpack.c.bf16 %v403, %v403
    %v420 = vpack.c.bf16 %v404, %v404
    %v421 = vpack.c.bf16 %v405, %v405
    %v422 = vpack.c.bf16 %v406, %v406
    %v423 = vpack.c.bf16 %v407, %v407
    %v424 = vpack.c.bf16 %v408, %v408
    %v425 = vpack.c.bf16 %v409, %v409
    %v426 = vpack.c.bf16 %v410, %v410
    %v427 = vpack.c.bf16 %v411, %v411
    %428 = vst [vmem:[%s3] sm:$0xf] %v412
    %429 = vst [vmem:[%s3 + $0x4] sm:$0xf] %v413
    %430 = vst [vmem:[%s3 + $0x8] sm:$0xf] %v414
    %431 = vst [vmem:[%s3 + $0xc] sm:$0xf] %v415
    %432 = vst [vmem:[%s3 + $0x10] sm:$0xf] %v416
    %433 = vst [vmem:[%s3 + $0x14] sm:$0xf] %v417
    %434 = vst [vmem:[%s3 + $0x18] sm:$0xf] %v418
    %435 = vst [vmem:[%s3 + $0x1c] sm:$0xf] %v419
    %436 = vst [vmem:[%s3 + $0x20] sm:$0xf] %v420
    %437 = vst [vmem:[%s3 + $0x24] sm:$0xf] %v421
    %438 = vst [vmem:[%s3 + $0x28] sm:$0xf] %v422
    %439 = vst [vmem:[%s3 + $0x2c] sm:$0xf] %v423
    %440 = vst [vmem:[%s3 + $0x30] sm:$0xf] %v424
    %441 = vst [vmem:[%s3 + $0x34] sm:$0xf] %v425
    %442 = vst [vmem:[%s3 + $0x38] sm:$0xf] %v426
    %443 = vst [vmem:[%s3 + $0x3c] sm:$0xf] %v427
  $region21: #{transolver_erwin_block.8} parent=0 // pred_fallthru
    _
  // Predicated region
  $region22: #{transolver_erwin_block.8} parent=0 // pred_check
    _
  $region23: #{transolver_erwin_block.8} parent=0 // pred_check_branch
    %445 = sbr.rel (0) target = $region25
  $region24: #{transolver_erwin_block.8} parent=0 // pred_region
    _
  $region25: #{transolver_erwin_block.8} parent=0 // pred_fallthru
    _
  // Predicated region
  $region26: #{transolver_erwin_block.8} parent=0 // pred_check
    _
  $region27: #{transolver_erwin_block.8} parent=0 // pred_check_branch
    %447 = sbr.rel (0) target = $region29
  $region28: #{transolver_erwin_block.8} parent=0 // pred_region
    _
  $region29: #{transolver_erwin_block.8} parent=0 // pred_fallthru
    _

// kernel: transolver_erwin_block.9
$region0: #{transolver_erwin_block.9}
  #allocation0 [shape = 'u32[]', space=smem, size = 0x4, offset = 0x4, fixed_abs, tag = 'smem constant byte address 0x4 - core index']
  #allocation1 [shape = 'u32[72,128]{1,0:T(1,128)}', space=vmem, size = 0x9000, scoped, tag = 'internal scratch']
  #allocation2 [shape = 'f32[128,32]{1,0:T(8,128)}', space=vmem, size = 0x10000, scoped, tag = 'scratch operand']
  %s0 = inlined_call_operand.vmem [shape: bf16[128,128], index: 0, kind: input, shape index: {}]
  %s1 = inlined_call_operand.vmem [shape: bf16[128,32], index: 1, kind: input, shape index: {}]
  %s2 = inlined_call_operand.vmem [shape: f32[1,32], index: 2, kind: input, shape index: {}]
  %s3 = inlined_call_operand.vmem [shape: f32[128,32], index: 3, kind: input, shape index: {}]
  %s4 = inlined_call_operand.vmem [shape: f32[128,32], index: 4, kind: output, shape index: {}]
  %s5 = sld [smem:[#allocation0]]
  $region34: #{transolver_erwin_block.9} parent=0
    _
  %s7 = ssub.s32 1, %s5
  %s8 = scalar_select 0, %s7, %s5
  // Predicated region
  $region2: #{transolver_erwin_block.9} parent=0 // pred_check
    _
  $region3: #{transolver_erwin_block.9} parent=0 // pred_check_branch
    %10 = sbr.rel (0) target = $region5
  $region4: #{transolver_erwin_block.9} parent=0 // pred_region
    _
  $region5: #{transolver_erwin_block.9} parent=0 // pred_fallthru
    _
  // Predicated region
  $region6: #{transolver_erwin_block.9} parent=0 // pred_check
    _
  $region7: #{transolver_erwin_block.9} parent=0 // pred_check_branch
    %12 = sbr.rel (0) target = $region9
  $region8: #{transolver_erwin_block.9} parent=0 // pred_region
    _
  $region9: #{transolver_erwin_block.9} parent=0 // pred_fallthru
    _
  // Predicated region
  $region10: #{transolver_erwin_block.9} parent=0 // pred_check
    _
  $region11: #{transolver_erwin_block.9} parent=0 // pred_check_branch
    %14 = sbr.rel (0) target = $region13
  $region12: #{transolver_erwin_block.9} parent=0 // pred_region
    _
  $region13: #{transolver_erwin_block.9} parent=0 // pred_fallthru
    _
  // Predicated region
  $region14: #{transolver_erwin_block.9} parent=0 // pred_check
    _
  $region15: #{transolver_erwin_block.9} parent=0 // pred_check_branch
    %16 = sbr.rel (0) target = $region17
  $region16: #{transolver_erwin_block.9} parent=0 // pred_region
    _
  $region17: #{transolver_erwin_block.9} parent=0 // pred_fallthru
    _
  %p17 = scmp.eq.s32.totalorder 0, 0
  // Predicated region
  $region18: #{transolver_erwin_block.9} parent=0 // pred_check
    %p18 = pneg %p17
  $region19: #{transolver_erwin_block.9} parent=0 // pred_check_branch
    %20 = sbr.rel (%p18) target = $region21
  $region20: #{transolver_erwin_block.9} parent=0 // pred_region
    %vm21 = vcmask 261120
    %22 = vst.msk [vmem:[#allocation2] sm:$0xff] %vm21, 0.0
    %23 = vst.msk [vmem:[#allocation2 + $0x8] sm:$0xff] %vm21, 0.0
    %24 = vst.msk [vmem:[#allocation2 + $0x10] sm:$0xff] %vm21, 0.0
    %25 = vst.msk [vmem:[#allocation2 + $0x18] sm:$0xff] %vm21, 0.0
    %26 = vst.msk [vmem:[#allocation2 + $0x20] sm:$0xff] %vm21, 0.0
    %27 = vst.msk [vmem:[#allocation2 + $0x28] sm:$0xff] %vm21, 0.0
    %28 = vst.msk [vmem:[#allocation2 + $0x30] sm:$0xff] %vm21, 0.0
    %29 = vst.msk [vmem:[#allocation2 + $0x38] sm:$0xff] %vm21, 0.0
    %30 = vst.msk [vmem:[#allocation2 + $0x40] sm:$0xff] %vm21, 0.0
    %31 = vst.msk [vmem:[#allocation2 + $0x48] sm:$0xff] %vm21, 0.0
    %32 = vst.msk [vmem:[#allocation2 + $0x50] sm:$0xff] %vm21, 0.0
    %33 = vst.msk [vmem:[#allocation2 + $0x58] sm:$0xff] %vm21, 0.0
    %34 = vst.msk [vmem:[#allocation2 + $0x60] sm:$0xff] %vm21, 0.0
    %35 = vst.msk [vmem:[#allocation2 + $0x68] sm:$0xff] %vm21, 0.0
    %36 = vst.msk [vmem:[#allocation2 + $0x70] sm:$0xff] %vm21, 0.0
    %37 = vst.msk [vmem:[#allocation2 + $0x78] sm:$0xff] %vm21, 0.0
  $region21: #{transolver_erwin_block.9} parent=0 // pred_fallthru
    _
  %v38 = vld [vmem:[#allocation2] sm:$0xff]
  %v39 = vld [vmem:[#allocation2 + $0x8] sm:$0xff]
  %v40 = vld [vmem:[#allocation2 + $0x10] sm:$0xff]
  %v41 = vld [vmem:[#allocation2 + $0x18] sm:$0xff]
  %v42 = vld [vmem:[#allocation2 + $0x20] sm:$0xff]
  %v43 = vld [vmem:[#allocation2 + $0x28] sm:$0xff]
  %v44 = vld [vmem:[#allocation2 + $0x30] sm:$0xff]
  %v45 = vld [vmem:[#allocation2 + $0x38] sm:$0xff]
  %v46 = vld [vmem:[#allocation2 + $0x40] sm:$0xff]
  %v47 = vld [vmem:[#allocation2 + $0x48] sm:$0xff]
  %v48 = vld [vmem:[#allocation2 + $0x50] sm:$0xff]
  %v49 = vld [vmem:[#allocation2 + $0x58] sm:$0xff]
  %v50 = vld [vmem:[#allocation2 + $0x60] sm:$0xff]
  %v51 = vld [vmem:[#allocation2 + $0x68] sm:$0xff]
  %v52 = vld [vmem:[#allocation2 + $0x70] sm:$0xff]
  %v53 = vld [vmem:[#allocation2 + $0x78] sm:$0xff]
  %v54 = vld [vmem:[%s0] sm:$0xf]
  %v55 = vld [vmem:[%s0 + $0x4] sm:$0xf]
  %v56 = vld [vmem:[%s0 + $0x8] sm:$0xf]
  %v57 = vld [vmem:[%s0 + $0xc] sm:$0xf]
  %v58 = vld [vmem:[%s0 + $0x10] sm:$0xf]
  %v59 = vld [vmem:[%s0 + $0x14] sm:$0xf]
  %v60 = vld [vmem:[%s0 + $0x18] sm:$0xf]
  %v61 = vld [vmem:[%s0 + $0x1c] sm:$0xf]
  %v62 = vld [vmem:[%s0 + $0x20] sm:$0xf]
  %v63 = vld [vmem:[%s0 + $0x24] sm:$0xf]
  %v64 = vld [vmem:[%s0 + $0x28] sm:$0xf]
  %v65 = vld [vmem:[%s0 + $0x2c] sm:$0xf]
  %v66 = vld [vmem:[%s0 + $0x30] sm:$0xf]
  %v67 = vld [vmem:[%s0 + $0x34] sm:$0xf]
  %v68 = vld [vmem:[%s0 + $0x38] sm:$0xf]
  %v69 = vld [vmem:[%s0 + $0x3c] sm:$0xf]
  %v70 = vld [vmem:[%s1] sm:$0xf]
  %v71 = vld [vmem:[%s1 + $0x4] sm:$0xf]
  %v72 = vld [vmem:[%s1 + $0x8] sm:$0xf]
  %v73 = vld [vmem:[%s1 + $0xc] sm:$0xf]
  %v74 = vld [vmem:[%s1 + $0x10] sm:$0xf]
  %v75 = vld [vmem:[%s1 + $0x14] sm:$0xf]
  %v76 = vld [vmem:[%s1 + $0x18] sm:$0xf]
  %v77 = vld [vmem:[%s1 + $0x1c] sm:$0xf]
  %v78 = vld [vmem:[%s1 + $0x20] sm:$0xf]
  %v79 = vld [vmem:[%s1 + $0x24] sm:$0xf]
  %v80 = vld [vmem:[%s1 + $0x28] sm:$0xf]
  %v81 = vld [vmem:[%s1 + $0x2c] sm:$0xf]
  %v82 = vld [vmem:[%s1 + $0x30] sm:$0xf]
  %v83 = vld [vmem:[%s1 + $0x34] sm:$0xf]
  %v84 = vld [vmem:[%s1 + $0x38] sm:$0xf]
  %v85 = vld [vmem:[%s1 + $0x3c] sm:$0xf]
  %v102 = vunpack.c.l.b16 %v54
  %v103 = vunpack.c.l.b16 %v55
  %v104 = vunpack.c.l.b16 %v56
  %v105 = vunpack.c.l.b16 %v57
  %v106 = vunpack.c.l.b16 %v58
  %v107 = vunpack.c.l.b16 %v59
  %v108 = vunpack.c.l.b16 %v60
  %v109 = vunpack.c.l.b16 %v61
  %v110 = vunpack.c.l.b16 %v62
  %v111 = vunpack.c.l.b16 %v63
  %v112 = vunpack.c.l.b16 %v64
  %v113 = vunpack.c.l.b16 %v65
  %v114 = vunpack.c.l.b16 %v66
  %v115 = vunpack.c.l.b16 %v67
  %v116 = vunpack.c.l.b16 %v68
  %v117 = vunpack.c.l.b16 %v69
  %v118 = vpack.c.b16 %v103, %v102
  %v119 = vpack.c.b16 %v105, %v104
  %v120 = vpack.c.b16 %v107, %v106
  %v121 = vpack.c.b16 %v109, %v108
  %v122 = vpack.c.b16 %v111, %v110
  %v123 = vpack.c.b16 %v113, %v112
  %v124 = vpack.c.b16 %v115, %v114
  %v125 = vpack.c.b16 %v117, %v116
  %v150 = vunpack.c.l.b16 %v70
  %v151 = vunpack.c.l.b16 %v71
  %v152 = vunpack.c.l.b16 %v72
  %v153 = vunpack.c.l.b16 %v73
  %v154 = vunpack.c.l.b16 %v74
  %v155 = vunpack.c.l.b16 %v75
  %v156 = vunpack.c.l.b16 %v76
  %v157 = vunpack.c.l.b16 %v77
  %v158 = vunpack.c.l.b16 %v78
  %v159 = vunpack.c.l.b16 %v79
  %v160 = vunpack.c.l.b16 %v80
  %v161 = vunpack.c.l.b16 %v81
  %v162 = vunpack.c.l.b16 %v82
  %v163 = vunpack.c.l.b16 %v83
  %v164 = vunpack.c.l.b16 %v84
  %v165 = vunpack.c.l.b16 %v85
  %v166 = vpack.c.b16 %v151, %v150
  %v167 = vpack.c.b16 %v153, %v152
  %v168 = vpack.c.b16 %v155, %v154
  %v169 = vpack.c.b16 %v157, %v156
  %v170 = vpack.c.b16 %v159, %v158
  %v171 = vpack.c.b16 %v161, %v160
  %v172 = vpack.c.b16 %v163, %v162
  %v173 = vpack.c.b16 %v165, %v164
  %182 = vmatpush.bf16.msra.mxu0 %v173
  %183 = vmatpush.bf16.msra.mxu0 %v172
  %184 = vmatpush.bf16.msra.mxu0 %v171
  %185 = vmatpush.bf16.msra.mxu0 %v170
  %186 = vmatpush.bf16.msra.mxu0 %v169
  %187 = vmatpush.bf16.msra.mxu0 %v168
  %188 = vmatpush.bf16.msra.mxu0 %v167
  %189 = vmatpush.bf16.msra.mxu0 %v166
  %190 = vmatmul.bf16.gmra.mxu0 %v118
  %v191 = vpop.f32.mrf.mxu0
  %v192 = vadd.f32 0.0, %v191
  %v193 = vpop.f32.mrf.mxu0
  %v194 = vadd.f32 0.0, %v193
  %195 = vmatmul.bf16.gmra.mxu0 %v119
  %v196 = vpop.f32.mrf.mxu0
  %v197 = vadd.f32 0.0, %v196
  %v198 = vpop.f32.mrf.mxu0
  %v199 = vadd.f32 0.0, %v198
  %200 = vmatmul.bf16.gmra.mxu0 %v120
  %v201 = vpop.f32.mrf.mxu0
  %v202 = vadd.f32 0.0, %v201
  %v203 = vpop.f32.mrf.mxu0
  %v204 = vadd.f32 0.0, %v203
  %205 = vmatmul.bf16.gmra.mxu0 %v121
  %v206 = vpop.f32.mrf.mxu0
  %v207 = vadd.f32 0.0, %v206
  %v208 = vpop.f32.mrf.mxu0
  %v209 = vadd.f32 0.0, %v208
  %210 = vmatmul.bf16.gmra.mxu0 %v122
  %v211 = vpop.f32.mrf.mxu0
  %v212 = vadd.f32 0.0, %v211
  %v213 = vpop.f32.mrf.mxu0
  %v214 = vadd.f32 0.0, %v213
  %215 = vmatmul.bf16.gmra.mxu0 %v123
  %v216 = vpop.f32.mrf.mxu0
  %v217 = vadd.f32 0.0, %v216
  %v218 = vpop.f32.mrf.mxu0
  %v219 = vadd.f32 0.0, %v218
  %220 = vmatmul.bf16.gmra.mxu0 %v124
  %v221 = vpop.f32.mrf.mxu0
  %v222 = vadd.f32 0.0, %v221
  %v223 = vpop.f32.mrf.mxu0
  %v224 = vadd.f32 0.0, %v223
  %225 = vmatmul.bf16.gmra.mxu0 %v125
  %v226 = vpop.f32.mrf.mxu0
  %v227 = vadd.f32 0.0, %v226
  %v228 = vpop.f32.mrf.mxu0
  %v229 = vadd.f32 0.0, %v228
  %230 = vdwg.mxu0
  %v231 = vadd.f32 %v38, %v192
  %v232 = vadd.f32 %v39, %v194
  %v233 = vadd.f32 %v40, %v197
  %v234 = vadd.f32 %v41, %v199
  %v235 = vadd.f32 %v42, %v202
  %v236 = vadd.f32 %v43, %v204
  %v237 = vadd.f32 %v44, %v207
  %v238 = vadd.f32 %v45, %v209
  %v239 = vadd.f32 %v46, %v212
  %v240 = vadd.f32 %v47, %v214
  %v241 = vadd.f32 %v48, %v217
  %v242 = vadd.f32 %v49, %v219
  %v243 = vadd.f32 %v50, %v222
  %v244 = vadd.f32 %v51, %v224
  %v245 = vadd.f32 %v52, %v227
  %v246 = vadd.f32 %v53, %v229
  %vm247 = vcmask 261120
  %248 = vst.msk [vmem:[#allocation2] sm:$0xff] %vm247, %v231
  %249 = vst.msk [vmem:[#allocation2 + $0x8] sm:$0xff] %vm247, %v232
  %250 = vst.msk [vmem:[#allocation2 + $0x10] sm:$0xff] %vm247, %v233
  %251 = vst.msk [vmem:[#allocation2 + $0x18] sm:$0xff] %vm247, %v234
  %252 = vst.msk [vmem:[#allocation2 + $0x20] sm:$0xff] %vm247, %v235
  %253 = vst.msk [vmem:[#allocation2 + $0x28] sm:$0xff] %vm247, %v236
  %254 = vst.msk [vmem:[#allocation2 + $0x30] sm:$0xff] %vm247, %v237
  %255 = vst.msk [vmem:[#allocation2 + $0x38] sm:$0xff] %vm247, %v238
  %256 = vst.msk [vmem:[#allocation2 + $0x40] sm:$0xff] %vm247, %v239
  %257 = vst.msk [vmem:[#allocation2 + $0x48] sm:$0xff] %vm247, %v240
  %258 = vst.msk [vmem:[#allocation2 + $0x50] sm:$0xff] %vm247, %v241
  %259 = vst.msk [vmem:[#allocation2 + $0x58] sm:$0xff] %vm247, %v242
  %260 = vst.msk [vmem:[#allocation2 + $0x60] sm:$0xff] %vm247, %v243
  %261 = vst.msk [vmem:[#allocation2 + $0x68] sm:$0xff] %vm247, %v244
  %262 = vst.msk [vmem:[#allocation2 + $0x70] sm:$0xff] %vm247, %v245
  %263 = vst.msk [vmem:[#allocation2 + $0x78] sm:$0xff] %vm247, %v246
  // Predicated region
  $region22: #{transolver_erwin_block.9} parent=0 // pred_check
    %p264 = pneg %p17
  $region23: #{transolver_erwin_block.9} parent=0 // pred_check_branch
    %266 = sbr.rel (%p264) target = $region25
  $region24: #{transolver_erwin_block.9} parent=0 // pred_region
    %v267 = vld [vmem:[#allocation2] sm:$0xff]
    %v268 = vld [vmem:[#allocation2 + $0x8] sm:$0xff]
    %v269 = vld [vmem:[#allocation2 + $0x10] sm:$0xff]
    %v270 = vld [vmem:[#allocation2 + $0x18] sm:$0xff]
    %v271 = vld [vmem:[#allocation2 + $0x20] sm:$0xff]
    %v272 = vld [vmem:[#allocation2 + $0x28] sm:$0xff]
    %v273 = vld [vmem:[#allocation2 + $0x30] sm:$0xff]
    %v274 = vld [vmem:[#allocation2 + $0x38] sm:$0xff]
    %v275 = vld [vmem:[#allocation2 + $0x40] sm:$0xff]
    %v276 = vld [vmem:[#allocation2 + $0x48] sm:$0xff]
    %v277 = vld [vmem:[#allocation2 + $0x50] sm:$0xff]
    %v278 = vld [vmem:[#allocation2 + $0x58] sm:$0xff]
    %v279 = vld [vmem:[#allocation2 + $0x60] sm:$0xff]
    %v280 = vld [vmem:[#allocation2 + $0x68] sm:$0xff]
    %v281 = vld [vmem:[#allocation2 + $0x70] sm:$0xff]
    %v282 = vld [vmem:[#allocation2 + $0x78] sm:$0xff]
    %v283 = vld [vmem:[%s2] sm:$0x1]
    %v285 = vperm.slane %v283, 0
    %v287 = vadd.f32 %v267, %v285
    %v288 = vadd.f32 %v268, %v285
    %v289 = vadd.f32 %v269, %v285
    %v290 = vadd.f32 %v270, %v285
    %v291 = vadd.f32 %v271, %v285
    %v292 = vadd.f32 %v272, %v285
    %v293 = vadd.f32 %v273, %v285
    %v294 = vadd.f32 %v274, %v285
    %v295 = vadd.f32 %v275, %v285
    %v296 = vadd.f32 %v276, %v285
    %v297 = vadd.f32 %v277, %v285
    %v298 = vadd.f32 %v278, %v285
    %v299 = vadd.f32 %v279, %v285
    %v300 = vadd.f32 %v280, %v285
    %v301 = vadd.f32 %v281, %v285
    %v302 = vadd.f32 %v282, %v285
    %v303 = vld [vmem:[%s3] sm:$0xff]
    %v304 = vld [vmem:[%s3 + $0x8] sm:$0xff]
    %v305 = vld [vmem:[%s3 + $0x10] sm:$0xff]
    %v306 = vld [vmem:[%s3 + $0x18] sm:$0xff]
    %v307 = vld [vmem:[%s3 + $0x20] sm:$0xff]
    %v308 = vld [vmem:[%s3 + $0x28] sm:$0xff]
    %v309 = vld [vmem:[%s3 + $0x30] sm:$0xff]
    %v310 = vld [vmem:[%s3 + $0x38] sm:$0xff]
    %v311 = vld [vmem:[%s3 + $0x40] sm:$0xff]
    %v312 = vld [vmem:[%s3 + $0x48] sm:$0xff]
    %v313 = vld [vmem:[%s3 + $0x50] sm:$0xff]
    %v314 = vld [vmem:[%s3 + $0x58] sm:$0xff]
    %v315 = vld [vmem:[%s3 + $0x60] sm:$0xff]
    %v316 = vld [vmem:[%s3 + $0x68] sm:$0xff]
    %v317 = vld [vmem:[%s3 + $0x70] sm:$0xff]
    %v318 = vld [vmem:[%s3 + $0x78] sm:$0xff]
    %v319 = vadd.f32 %v287, %v303
    %v320 = vadd.f32 %v288, %v304
    %v321 = vadd.f32 %v289, %v305
    %v322 = vadd.f32 %v290, %v306
    %v323 = vadd.f32 %v291, %v307
    %v324 = vadd.f32 %v292, %v308
    %v325 = vadd.f32 %v293, %v309
    %v326 = vadd.f32 %v294, %v310
    %v327 = vadd.f32 %v295, %v311
    %v328 = vadd.f32 %v296, %v312
    %v329 = vadd.f32 %v297, %v313
    %v330 = vadd.f32 %v298, %v314
    %v331 = vadd.f32 %v299, %v315
    %v332 = vadd.f32 %v300, %v316
    %v333 = vadd.f32 %v301, %v317
    %v334 = vadd.f32 %v302, %v318
    %335 = vst.msk [vmem:[%s4] sm:$0xff] %vm247, %v319
    %336 = vst.msk [vmem:[%s4 + $0x8] sm:$0xff] %vm247, %v320
    %337 = vst.msk [vmem:[%s4 + $0x10] sm:$0xff] %vm247, %v321
    %338 = vst.msk [vmem:[%s4 + $0x18] sm:$0xff] %vm247, %v322
    %339 = vst.msk [vmem:[%s4 + $0x20] sm:$0xff] %vm247, %v323
    %340 = vst.msk [vmem:[%s4 + $0x28] sm:$0xff] %vm247, %v324
    %341 = vst.msk [vmem:[%s4 + $0x30] sm:$0xff] %vm247, %v325
    %342 = vst.msk [vmem:[%s4 + $0x38] sm:$0xff] %vm247, %v326
    %343 = vst.msk [vmem:[%s4 + $0x40] sm:$0xff] %vm247, %v327
    %344 = vst.msk [vmem:[%s4 + $0x48] sm:$0xff] %vm247, %v328
    %345 = vst.msk [vmem:[%s4 + $0x50] sm:$0xff] %vm247, %v329
    %346 = vst.msk [vmem:[%s4 + $0x58] sm:$0xff] %vm247, %v330
    %347 = vst.msk [vmem:[%s4 + $0x60] sm:$0xff] %vm247, %v331
    %348 = vst.msk [vmem:[%s4 + $0x68] sm:$0xff] %vm247, %v332
    %349 = vst.msk [vmem:[%s4 + $0x70] sm:$0xff] %vm247, %v333
    %350 = vst.msk [vmem:[%s4 + $0x78] sm:$0xff] %vm247, %v334
  $region25: #{transolver_erwin_block.9} parent=0 // pred_fallthru
    _
  // Predicated region
  $region26: #{transolver_erwin_block.9} parent=0 // pred_check
    _
  $region27: #{transolver_erwin_block.9} parent=0 // pred_check_branch
    %352 = sbr.rel (0) target = $region29
  $region28: #{transolver_erwin_block.9} parent=0 // pred_region
    _
  $region29: #{transolver_erwin_block.9} parent=0 // pred_fallthru
    _
  // Predicated region
  $region30: #{transolver_erwin_block.9} parent=0 // pred_check
    _
  $region31: #{transolver_erwin_block.9} parent=0 // pred_check_branch
    %354 = sbr.rel (0) target = $region33
  $region32: #{transolver_erwin_block.9} parent=0 // pred_region
    _
  $region33: #{transolver_erwin_block.9} parent=0 // pred_fallthru
    _

// kernel: transolver_erwin_block.7
$region0: #{transolver_erwin_block.7}
  #allocation0 [shape = 'u32[]', space=smem, size = 0x4, offset = 0x4, fixed_abs, tag = 'smem constant byte address 0x4 - core index']
  #allocation1 [shape = 'u32[72,128]{1,0:T(1,128)}', space=vmem, size = 0x9000, scoped, tag = 'internal scratch']
  #allocation2 [shape = 'bf16[128,32]{1,0:T(8,128)(2,1)}', space=vmem, size = 0x8000, scoped, tag = 'scratch operand']
  %s0 = inlined_call_operand.vmem [shape: bf16[2,64,128], index: 0, kind: input, shape index: {}]
  %s1 = inlined_call_operand.vmem [shape: f32[2,128,32], index: 1, kind: input, shape index: {}]
  %s2 = inlined_call_operand.vmem [shape: f32[2,128,1], index: 2, kind: input, shape index: {}]
  %s3 = inlined_call_operand.vmem [shape: f32[8,8], index: 3, kind: input, shape index: {}]
  %s4 = inlined_call_operand.vmem [shape: f32[8,8], index: 4, kind: input, shape index: {}]
  %s5 = inlined_call_operand.vmem [shape: f32[8,8], index: 5, kind: input, shape index: {}]
  %s6 = inlined_call_operand.vmem [shape: f32[32,32], index: 6, kind: input, shape index: {}]
  %s7 = inlined_call_operand.vmem [shape: f32[1,32], index: 7, kind: input, shape index: {}]
  %s8 = inlined_call_operand.vmem [shape: f32[1,32], index: 8, kind: input, shape index: {}]
  %s9 = inlined_call_operand.vmem [shape: f32[1,32], index: 9, kind: input, shape index: {}]
  %s10 = inlined_call_operand.vmem [shape: f32[2,64,32], index: 10, kind: input, shape index: {}]
  %s11 = inlined_call_operand.vmem [shape: f32[2,64,32], index: 11, kind: output, shape index: {0}]
  %s12 = inlined_call_operand.vmem [shape: bf16[2,64,32], index: 12, kind: output, shape index: {1}]
  %13 = xla_tuple %s11, %s12
  %s14 = sld [smem:[#allocation0]]
  $region89: #{transolver_erwin_block.7} parent=0
    _
  %s16 = ssub.s32 1, %s14
  %s17 = scalar_select 0, %s16, %s14
  loop: start=0, step=1, limit=4
  $region2: #{transolver_erwin_block.7} parent=0 // loop_pre_header
    _
  $region3: #{transolver_erwin_block.7} parent=0 // loop_header
    %s19 = sphi 0, %s23
    %p20 = scmp.ge.s32.totalorder %s19, 4
    %s26 = sphi 0, %s38
    %s27 = sphi 0, %s34
    %s28 = sphi 0, %s26
    %s29 = sphi 0, %s27
    %s30 = sphi 0, %s28
    %s31 = sphi 0, %s29
    %s43 = sphi 0, %s45
    %s46 = sphi 0, %s43
    %s47 = sphi 0, %s46
    %s63 = sphi 0, %s47
    %s69 = sphi 0, %s71
    %s72 = sphi 0, %s69
    %s73 = sphi 0, %s72
    %s89 = sphi 0, %s73
    %s95 = sphi 0, %s97
    %s98 = sphi 0, %s95
    %s99 = sphi 0, %s98
    %s115 = sphi 0, %s99
    %s119 = sphi 0, %s119
    %s121 = sphi 0, %s119
    %s122 = sphi 0, %s121
    %s136 = sphi 0, %s122
    %s140 = sphi 0, %s140
    %s142 = sphi 0, %s140
    %s143 = sphi 0, %s142
    %s157 = sphi 0, %s143
    %s161 = sphi 0, %s161
    %s163 = sphi 0, %s161
    %s164 = sphi 0, %s163
    %s178 = sphi 0, %s164
    %s182 = sphi 0, %s182
    %s184 = sphi 0, %s182
    %s185 = sphi 0, %s184
    %s199 = sphi 0, %s185
    %s203 = sphi 0, %s203
    %s205 = sphi 0, %s203
    %s206 = sphi 0, %s205
    %s220 = sphi 0, %s206
    %s224 = sphi 0, %s224
    %s226 = sphi 0, %s224
    %s227 = sphi 0, %s226
    %s241 = sphi 0, %s227
    %s245 = sphi 0, %s245
    %s247 = sphi 0, %s245
    %s248 = sphi 0, %s247
    %s262 = sphi 0, %s248
    %s270 = sphi 0, %s272
    %s273 = sphi 0, %s270
    %s274 = sphi 0, %s273
    %s290 = sphi 0, %s274
    %s298 = sphi 0, %s300
    %s301 = sphi 0, %s298
    %s302 = sphi 0, %s301
    %s318 = sphi 0, %s302
    %s326 = sphi 0, %s328
    %s329 = sphi 0, %s326
    %s330 = sphi 0, %s329
    %s346 = sphi 0, %s330
  $region4: #{transolver_erwin_block.7} parent=0 // loop_header_branch
    %22 = sbr.rel (%p20) target = $region8
  $region5: #{transolver_erwin_block.7} parent=0 // loop_body
    %s24 = ssub.s32 %s19, 1
    %s25 = ssub.s32 %s19, 2
    %s32 = sadd.s32 1, %s27
    %p33 = scmp.ge.s32.totalorder %s32, 1
    %s34 = scalar_select %p33, 0, %s32
    %s35 = sadd.s32 1, %s26
    %s36 = scalar_select %p33, %s35, %s26
    %p37 = scmp.ge.s32.totalorder %s36, 2
    %s38 = scalar_select %p37, 0, %s36
    %s39 = ssub.s32 %s26, %s38
    %s40 = ssub.s32 %s27, %s34
    %s41 = sor.u32 %s39, %s40
    %p42 = scmp.eq.s32.totalorder %s41, 0
    %s44 = sadd.s32 %s43, 1
    %s45 = scalar_select %p42, %s43, %s44
    %p48 = pneg %p42
    %p49 = scmp.eq.s32.totalorder %s19, 1
    %p50 = por %p48, %p49
    %p51 = scmp.ne.s32.totalorder %s43, %s46
    %p52 = scmp.eq.s32.totalorder %s19, 0
    %p53 = por %p51, %p52
    %p54 = scmp.ne.s32.totalorder %s43, %s46
    %p55 = scmp.eq.s32.totalorder %s24, 1
    %p56 = por %p54, %p55
    %p57 = scmp.ne.s32.totalorder %s46, %s47
    %p58 = scmp.eq.s32.totalorder %s24, 0
    %p59 = por %p57, %p58
    %p60 = scmp.ne.s32.totalorder %s46, %s47
    %p61 = scmp.eq.s32.totalorder %s25, 1
    %p62 = por %p60, %p61
    %p64 = scmp.ne.s32.totalorder %s47, %s63
    %p65 = scmp.eq.s32.totalorder %s25, 0
    %p66 = por %p64, %p65
    %s67 = ssub.s32 %s26, %s38
    %p68 = scmp.eq.s32.totalorder %s67, 0
    %s70 = sadd.s32 %s69, 1
    %s71 = scalar_select %p68, %s69, %s70
    %p74 = pneg %p68
    %p75 = scmp.eq.s32.totalorder %s19, 1
    %p76 = por %p74, %p75
    %p77 = scmp.ne.s32.totalorder %s69, %s72
    %p78 = scmp.eq.s32.totalorder %s19, 0
    %p79 = por %p77, %p78
    %p80 = scmp.ne.s32.totalorder %s69, %s72
    %p81 = scmp.eq.s32.totalorder %s24, 1
    %p82 = por %p80, %p81
    %p83 = scmp.ne.s32.totalorder %s72, %s73
    %p84 = scmp.eq.s32.totalorder %s24, 0
    %p85 = por %p83, %p84
    %p86 = scmp.ne.s32.totalorder %s72, %s73
    %p87 = scmp.eq.s32.totalorder %s25, 1
    %p88 = por %p86, %p87
    %p90 = scmp.ne.s32.totalorder %s73, %s89
    %p91 = scmp.eq.s32.totalorder %s25, 0
    %p92 = por %p90, %p91
    %s93 = ssub.s32 %s26, %s38
    %p94 = scmp.eq.s32.totalorder %s93, 0
    %s96 = sadd.s32 %s95, 1
    %s97 = scalar_select %p94, %s95, %s96
    %p100 = pneg %p94
    %p101 = scmp.eq.s32.totalorder %s19, 1
    %p102 = por %p100, %p101
    %p103 = scmp.ne.s32.totalorder %s95, %s98
    %p104 = scmp.eq.s32.totalorder %s19, 0
    %p105 = por %p103, %p104
    %p106 = scmp.ne.s32.totalorder %s95, %s98
    %p107 = scmp.eq.s32.totalorder %s24, 1
    %p108 = por %p106, %p107
    %p109 = scmp.ne.s32.totalorder %s98, %s99
    %p110 = scmp.eq.s32.totalorder %s24, 0
    %p111 = por %p109, %p110
    %p112 = scmp.ne.s32.totalorder %s98, %s99
    %p113 = scmp.eq.s32.totalorder %s25, 1
    %p114 = por %p112, %p113
    %p116 = scmp.ne.s32.totalorder %s99, %s115
    %p117 = scmp.eq.s32.totalorder %s25, 0
    %p118 = por %p116, %p117
    %s120 = sadd.s32 %s119, 1
    %p123 = scmp.eq.s32.totalorder %s19, 1
    %p124 = scmp.ne.s32.totalorder %s119, %s121
    %p125 = scmp.eq.s32.totalorder %s19, 0
    %p126 = por %p124, %p125
    %p127 = scmp.ne.s32.totalorder %s119, %s121
    %p128 = scmp.eq.s32.totalorder %s24, 1
    %p129 = por %p127, %p128
    %p130 = scmp.ne.s32.totalorder %s121, %s122
    %p131 = scmp.eq.s32.totalorder %s24, 0
    %p132 = por %p130, %p131
    %p133 = scmp.ne.s32.totalorder %s121, %s122
    %p134 = scmp.eq.s32.totalorder %s25, 1
    %p135 = por %p133, %p134
    %p137 = scmp.ne.s32.totalorder %s122, %s136
    %p138 = scmp.eq.s32.totalorder %s25, 0
    %p139 = por %p137, %p138
    %s141 = sadd.s32 %s140, 1
    %p144 = scmp.eq.s32.totalorder %s19, 1
    %p145 = scmp.ne.s32.totalorder %s140, %s142
    %p146 = scmp.eq.s32.totalorder %s19, 0
    %p147 = por %p145, %p146
    %p148 = scmp.ne.s32.totalorder %s140, %s142
    %p149 = scmp.eq.s32.totalorder %s24, 1
    %p150 = por %p148, %p149
    %p151 = scmp.ne.s32.totalorder %s142, %s143
    %p152 = scmp.eq.s32.totalorder %s24, 0
    %p153 = por %p151, %p152
    %p154 = scmp.ne.s32.totalorder %s142, %s143
    %p155 = scmp.eq.s32.totalorder %s25, 1
    %p156 = por %p154, %p155
    %p158 = scmp.ne.s32.totalorder %s143, %s157
    %p159 = scmp.eq.s32.totalorder %s25, 0
    %p160 = por %p158, %p159
    %s162 = sadd.s32 %s161, 1
    %p165 = scmp.eq.s32.totalorder %s19, 1
    %p166 = scmp.ne.s32.totalorder %s161, %s163
    %p167 = scmp.eq.s32.totalorder %s19, 0
    %p168 = por %p166, %p167
    %p169 = scmp.ne.s32.totalorder %s161, %s163
    %p170 = scmp.eq.s32.totalorder %s24, 1
    %p171 = por %p169, %p170
    %p172 = scmp.ne.s32.totalorder %s163, %s164
    %p173 = scmp.eq.s32.totalorder %s24, 0
    %p174 = por %p172, %p173
    %p175 = scmp.ne.s32.totalorder %s163, %s164
    %p176 = scmp.eq.s32.totalorder %s25, 1
    %p177 = por %p175, %p176
    %p179 = scmp.ne.s32.totalorder %s164, %s178
    %p180 = scmp.eq.s32.totalorder %s25, 0
    %p181 = por %p179, %p180
    %s183 = sadd.s32 %s182, 1
    %p186 = scmp.eq.s32.totalorder %s19, 1
    %p187 = scmp.ne.s32.totalorder %s182, %s184
    %p188 = scmp.eq.s32.totalorder %s19, 0
    %p189 = por %p187, %p188
    %p190 = scmp.ne.s32.totalorder %s182, %s184
    %p191 = scmp.eq.s32.totalorder %s24, 1
    %p192 = por %p190, %p191
    %p193 = scmp.ne.s32.totalorder %s184, %s185
    %p194 = scmp.eq.s32.totalorder %s24, 0
    %p195 = por %p193, %p194
    %p196 = scmp.ne.s32.totalorder %s184, %s185
    %p197 = scmp.eq.s32.totalorder %s25, 1
    %p198 = por %p196, %p197
    %p200 = scmp.ne.s32.totalorder %s185, %s199
    %p201 = scmp.eq.s32.totalorder %s25, 0
    %p202 = por %p200, %p201
    %s204 = sadd.s32 %s203, 1
    %p207 = scmp.eq.s32.totalorder %s19, 1
    %p208 = scmp.ne.s32.totalorder %s203, %s205
    %p209 = scmp.eq.s32.totalorder %s19, 0
    %p210 = por %p208, %p209
    %p211 = scmp.ne.s32.totalorder %s203, %s205
    %p212 = scmp.eq.s32.totalorder %s24, 1
    %p213 = por %p211, %p212
    %p214 = scmp.ne.s32.totalorder %s205, %s206
    %p215 = scmp.eq.s32.totalorder %s24, 0
    %p216 = por %p214, %p215
    %p217 = scmp.ne.s32.totalorder %s205, %s206
    %p218 = scmp.eq.s32.totalorder %s25, 1
    %p219 = por %p217, %p218
    %p221 = scmp.ne.s32.totalorder %s206, %s220
    %p222 = scmp.eq.s32.totalorder %s25, 0
    %p223 = por %p221, %p222
    %s225 = sadd.s32 %s224, 1
    %p228 = scmp.eq.s32.totalorder %s19, 1
    %p229 = scmp.ne.s32.totalorder %s224, %s226
    %p230 = scmp.eq.s32.totalorder %s19, 0
    %p231 = por %p229, %p230
    %p232 = scmp.ne.s32.totalorder %s224, %s226
    %p233 = scmp.eq.s32.totalorder %s24, 1
    %p234 = por %p232, %p233
    %p235 = scmp.ne.s32.totalorder %s226, %s227
    %p236 = scmp.eq.s32.totalorder %s24, 0
    %p237 = por %p235, %p236
    %p238 = scmp.ne.s32.totalorder %s226, %s227
    %p239 = scmp.eq.s32.totalorder %s25, 1
    %p240 = por %p238, %p239
    %p242 = scmp.ne.s32.totalorder %s227, %s241
    %p243 = scmp.eq.s32.totalorder %s25, 0
    %p244 = por %p242, %p243
    %s246 = sadd.s32 %s245, 1
    %p249 = scmp.eq.s32.totalorder %s19, 1
    %p250 = scmp.ne.s32.totalorder %s245, %s247
    %p251 = scmp.eq.s32.totalorder %s19, 0
    %p252 = por %p250, %p251
    %p253 = scmp.ne.s32.totalorder %s245, %s247
    %p254 = scmp.eq.s32.totalorder %s24, 1
    %p255 = por %p253, %p254
    %p256 = scmp.ne.s32.totalorder %s247, %s248
    %p257 = scmp.eq.s32.totalorder %s24, 0
    %p258 = por %p256, %p257
    %p259 = scmp.ne.s32.totalorder %s247, %s248
    %p260 = scmp.eq.s32.totalorder %s25, 1
    %p261 = por %p259, %p260
    %p263 = scmp.ne.s32.totalorder %s248, %s262
    %p264 = scmp.eq.s32.totalorder %s25, 0
    %p265 = por %p263, %p264
    %s266 = ssub.s32 %s26, %s38
    %s267 = ssub.s32 %s27, %s34
    %s268 = sor.u32 %s266, %s267
    %p269 = scmp.eq.s32.totalorder %s268, 0
    %s271 = sadd.s32 %s270, 1
    %s272 = scalar_select %p269, %s270, %s271
    %p275 = pneg %p269
    %p276 = scmp.eq.s32.totalorder %s19, 1
    %p277 = por %p275, %p276
    %p278 = scmp.ne.s32.totalorder %s270, %s273
    %p279 = scmp.eq.s32.totalorder %s19, 0
    %p280 = por %p278, %p279
    %p281 = scmp.ne.s32.totalorder %s270, %s273
    %p282 = scmp.eq.s32.totalorder %s24, 1
    %p283 = por %p281, %p282
    %p284 = scmp.ne.s32.totalorder %s273, %s274
    %p285 = scmp.eq.s32.totalorder %s24, 0
    %p286 = por %p284, %p285
    %p287 = scmp.ne.s32.totalorder %s273, %s274
    %p288 = scmp.eq.s32.totalorder %s25, 1
    %p289 = por %p287, %p288
    %p291 = scmp.ne.s32.totalorder %s274, %s290
    %p292 = scmp.eq.s32.totalorder %s25, 0
    %p293 = por %p291, %p292
    %s294 = ssub.s32 %s26, %s38
    %s295 = ssub.s32 %s27, %s34
    %s296 = sor.u32 %s294, %s295
    %p297 = scmp.eq.s32.totalorder %s296, 0
    %s299 = sadd.s32 %s298, 1
    %s300 = scalar_select %p297, %s298, %s299
    %p303 = pneg %p297
    %p304 = scmp.eq.s32.totalorder %s19, 1
    %p305 = por %p303, %p304
    %p306 = scmp.ne.s32.totalorder %s298, %s301
    %p307 = scmp.eq.s32.totalorder %s19, 0
    %p308 = por %p306, %p307
    %p309 = scmp.ne.s32.totalorder %s298, %s301
    %p310 = scmp.eq.s32.totalorder %s24, 1
    %p311 = por %p309, %p310
    %p312 = scmp.ne.s32.totalorder %s301, %s302
    %p313 = scmp.eq.s32.totalorder %s24, 0
    %p314 = por %p312, %p313
    %p315 = scmp.ne.s32.totalorder %s301, %s302
    %p316 = scmp.eq.s32.totalorder %s25, 1
    %p317 = por %p315, %p316
    %p319 = scmp.ne.s32.totalorder %s302, %s318
    %p320 = scmp.eq.s32.totalorder %s25, 0
    %p321 = por %p319, %p320
    %s322 = ssub.s32 %s26, %s38
    %s323 = ssub.s32 %s27, %s34
    %s324 = sor.u32 %s322, %s323
    %p325 = scmp.eq.s32.totalorder %s324, 0
    %s327 = sadd.s32 %s326, 1
    %s328 = scalar_select %p325, %s326, %s327
    %p331 = pneg %p325
    %p332 = scmp.eq.s32.totalorder %s19, 1
    %p333 = por %p331, %p332
    %p334 = scmp.ne.s32.totalorder %s326, %s329
    %p335 = scmp.eq.s32.totalorder %s19, 0
    %p336 = por %p334, %p335
    %p337 = scmp.ne.s32.totalorder %s326, %s329
    %p338 = scmp.eq.s32.totalorder %s24, 1
    %p339 = por %p337, %p338
    %p340 = scmp.ne.s32.totalorder %s329, %s330
    %p341 = scmp.eq.s32.totalorder %s24, 0
    %p342 = por %p340, %p341
    %p343 = scmp.ne.s32.totalorder %s329, %s330
    %p344 = scmp.eq.s32.totalorder %s25, 1
    %p345 = por %p343, %p344
    %p347 = scmp.ne.s32.totalorder %s330, %s346
    %p348 = scmp.eq.s32.totalorder %s25, 0
    %p349 = por %p347, %p348
    %p350 = scmp.le.s32.totalorder 1, %s19
    %p351 = scmp.lt.s32.totalorder %s19, 3
    %p352 = pnand %p350, %p351
    %p353 = pneg %p352
    // Predicated region
    $region9: #{transolver_erwin_block.7} parent=5 // pred_check
      _
    $region10: #{transolver_erwin_block.7} parent=5 // pred_check_branch
      %355 = sbr.rel (%p352) target = $region12
    $region11: #{transolver_erwin_block.7} parent=5 // pred_region
      %s356 = ssub.s32 %s19, 1
      // Predicated region
      $region13: #{transolver_erwin_block.7} parent=11 // pred_check
        %p357 = pneg %p132
      $region14: #{transolver_erwin_block.7} parent=11 // pred_check_branch
        %359 = sbr.rel (%p357) target = $region16
      $region15: #{transolver_erwin_block.7} parent=11 // pred_region
        _
      $region16: #{transolver_erwin_block.7} parent=11 // pred_fallthru
        _
      // Predicated region
      $region17: #{transolver_erwin_block.7} parent=11 // pred_check
        %p360 = pneg %p153
      $region18: #{transolver_erwin_block.7} parent=11 // pred_check_branch
        %362 = sbr.rel (%p360) target = $region20
      $region19: #{transolver_erwin_block.7} parent=11 // pred_region
        _
      $region20: #{transolver_erwin_block.7} parent=11 // pred_fallthru
        _
      // Predicated region
      $region21: #{transolver_erwin_block.7} parent=11 // pred_check
        %p363 = pneg %p174
      $region22: #{transolver_erwin_block.7} parent=11 // pred_check_branch
        %365 = sbr.rel (%p363) target = $region24
      $region23: #{transolver_erwin_block.7} parent=11 // pred_region
        _
      $region24: #{transolver_erwin_block.7} parent=11 // pred_fallthru
        _
      // Predicated region
      $region25: #{transolver_erwin_block.7} parent=11 // pred_check
        %p366 = pneg %p195
      $region26: #{transolver_erwin_block.7} parent=11 // pred_check_branch
        %368 = sbr.rel (%p366) target = $region28
      $region27: #{transolver_erwin_block.7} parent=11 // pred_region
        _
      $region28: #{transolver_erwin_block.7} parent=11 // pred_fallthru
        _
      // Predicated region
      $region29: #{transolver_erwin_block.7} parent=11 // pred_check
        %p369 = pneg %p216
      $region30: #{transolver_erwin_block.7} parent=11 // pred_check_branch
        %371 = sbr.rel (%p369) target = $region32
      $region31: #{transolver_erwin_block.7} parent=11 // pred_region
        _
      $region32: #{transolver_erwin_block.7} parent=11 // pred_fallthru
        _
      // Predicated region
      $region33: #{transolver_erwin_block.7} parent=11 // pred_check
        %p372 = pneg %p237
      $region34: #{transolver_erwin_block.7} parent=11 // pred_check_branch
        %374 = sbr.rel (%p372) target = $region36
      $region35: #{transolver_erwin_block.7} parent=11 // pred_region
        _
      $region36: #{transolver_erwin_block.7} parent=11 // pred_fallthru
        _
      // Predicated region
      $region37: #{transolver_erwin_block.7} parent=11 // pred_check
        %p375 = pneg %p258
      $region38: #{transolver_erwin_block.7} parent=11 // pred_check_branch
        %377 = sbr.rel (%p375) target = $region40
      $region39: #{transolver_erwin_block.7} parent=11 // pred_region
        _
      $region40: #{transolver_erwin_block.7} parent=11 // pred_fallthru
        _
    $region12: #{transolver_erwin_block.7} parent=5 // pred_fallthru
      _
    %p378 = scmp.lt.s32.totalorder %s19, 2
    // Predicated region
    $region41: #{transolver_erwin_block.7} parent=5 // pred_check
      %p379 = pneg %p378
    $region42: #{transolver_erwin_block.7} parent=5 // pred_check_branch
      %381 = sbr.rel (%p379) target = $region44
    $region43: #{transolver_erwin_block.7} parent=5 // pred_region
      // Predicated region
      $region45: #{transolver_erwin_block.7} parent=43 // pred_check
        %p382 = pneg %p53
      $region46: #{transolver_erwin_block.7} parent=43 // pred_check_branch
        %384 = sbr.rel (%p382) target = $region48
      $region47: #{transolver_erwin_block.7} parent=43 // pred_region
        %s385 = smul.u32 8, %s27
        %p386 = scmp.lt.s32.totalorder %s26, 1
        %s387 = scalar_select %p386, %s26, 1
        %p388 = scmp.lt.s32.totalorder %s385, 7
        %s389 = scalar_select %p388, %s385, 7
        %s390 = smul.addr %s387, 8
        %s391 = sadd.s32 %s389, %s390
        %s392 = smul.addr %s391, 4
        %s393 = scalar_lea.vmem %s0, %s392
        %s394 = smul.u32 8, %s27
      $region48: #{transolver_erwin_block.7} parent=43 // pred_fallthru
        _
      // Predicated region
      $region49: #{transolver_erwin_block.7} parent=43 // pred_check
        %p395 = pneg %p79
      $region50: #{transolver_erwin_block.7} parent=43 // pred_check_branch
        %397 = sbr.rel (%p395) target = $region52
      $region51: #{transolver_erwin_block.7} parent=43 // pred_region
        %p398 = scmp.lt.s32.totalorder %s26, 1
        %s399 = scalar_select %p398, %s26, 1
        %s400 = smul.addr %s399, 16
        %s401 = smul.addr %s400, 8
        %s402 = scalar_lea.vmem %s1, %s401
      $region52: #{transolver_erwin_block.7} parent=43 // pred_fallthru
        _
      // Predicated region
      $region53: #{transolver_erwin_block.7} parent=43 // pred_check
        %p403 = pneg %p105
      $region54: #{transolver_erwin_block.7} parent=43 // pred_check_branch
        %405 = sbr.rel (%p403) target = $region56
      $region55: #{transolver_erwin_block.7} parent=43 // pred_region
        %p406 = scmp.lt.s32.totalorder %s26, 1
        %s407 = scalar_select %p406, %s26, 1
        %s408 = smul.addr %s407, 16
        %s409 = smul.addr %s408, 8
        %s410 = scalar_lea.vmem %s2, %s409
      $region56: #{transolver_erwin_block.7} parent=43 // pred_fallthru
        _
      // Predicated region
      $region57: #{transolver_erwin_block.7} parent=43 // pred_check
        %p411 = pneg %p280
      $region58: #{transolver_erwin_block.7} parent=43 // pred_check_branch
        %413 = sbr.rel (%p411) target = $region60
      $region59: #{transolver_erwin_block.7} parent=43 // pred_region
        %s414 = smul.u32 8, %s27
        %p415 = scmp.lt.s32.totalorder %s26, 1
        %s416 = scalar_select %p415, %s26, 1
        %p417 = scmp.lt.s32.totalorder %s414, 7
        %s418 = scalar_select %p417, %s414, 7
        %s419 = smul.addr %s416, 8
        %s420 = sadd.s32 %s418, %s419
        %s421 = smul.addr %s420, 8
        %s422 = scalar_lea.vmem %s10, %s421
        %s423 = smul.u32 8, %s27
      $region60: #{transolver_erwin_block.7} parent=43 // pred_fallthru
        _
    $region44: #{transolver_erwin_block.7} parent=5 // pred_fallthru
      _
    %p424 = scmp.le.s32.totalorder 1, %s19
    %p425 = scmp.lt.s32.totalorder %s19, 3
    %p426 = pnand %p424, %p425
    %p427 = pneg %p426
    // Predicated region
    $region61: #{transolver_erwin_block.7} parent=5 // pred_check
      _
    $region62: #{transolver_erwin_block.7} parent=5 // pred_check_branch
      %429 = sbr.rel (%p426) target = $region64
    $region63: #{transolver_erwin_block.7} parent=5 // pred_region
      %s430 = ssub.s32 %s19, 1
      %s431 = smul.u32 8, %s29
      %p432 = scmp.lt.s32.totalorder %s28, 1
      %s433 = scalar_select %p432, %s28, 1
      %p434 = scmp.lt.s32.totalorder %s431, 7
      %s435 = scalar_select %p434, %s431, 7
      %s436 = smul.addr %s433, 8
      %s437 = sadd.s32 %s435, %s436
      %s438 = smul.addr %s437, 4
      %s439 = scalar_lea.vmem %s0, %s438
      %p440 = pneg %p59
      %p441 = pneg %p56
      %p442 = scmp.lt.s32.totalorder %s28, 1
      %s443 = scalar_select %p442, %s28, 1
      %s444 = smul.addr %s443, 16
      %s445 = smul.addr %s444, 8
      %s446 = scalar_lea.vmem %s1, %s445
      %p447 = pneg %p85
      %p448 = pneg %p82
      %p449 = scmp.lt.s32.totalorder %s28, 1
      %s450 = scalar_select %p449, %s28, 1
      %s451 = smul.addr %s450, 16
      %s452 = smul.addr %s451, 8
      %s453 = scalar_lea.vmem %s2, %s452
      %p454 = pneg %p111
      %p455 = pneg %p108
      %p456 = pneg %p132
      %p457 = pneg %p129
      %p458 = pneg %p153
      %p459 = pneg %p150
      %p460 = pneg %p174
      %p461 = pneg %p171
      %p462 = pneg %p195
      %p463 = pneg %p192
      %p464 = pneg %p216
      %p465 = pneg %p213
      %p466 = pneg %p237
      %p467 = pneg %p234
      %p468 = pneg %p258
      %p469 = pneg %p255
      %s470 = smul.u32 8, %s29
      %p471 = scmp.lt.s32.totalorder %s28, 1
      %s472 = scalar_select %p471, %s28, 1
      %p473 = scmp.lt.s32.totalorder %s470, 7
      %s474 = scalar_select %p473, %s470, 7
      %s475 = smul.addr %s472, 8
      %s476 = sadd.s32 %s474, %s475
      %s477 = smul.addr %s476, 8
      %s478 = scalar_lea.vmem %s10, %s477
      %p479 = pneg %p286
      %p480 = pneg %p283
      %p481 = pneg %p314
      %p482 = pneg %p311
      %s483 = smul.u32 8, %s29
      %p484 = scmp.lt.s32.totalorder %s28, 1
      %s485 = scalar_select %p484, %s28, 1
      %p486 = scmp.lt.s32.totalorder %s483, 7
      %s487 = scalar_select %p486, %s483, 7
      %s488 = smul.addr %s485, 8
      %s489 = sadd.s32 %s487, %s488
      %s490 = smul.addr %s489, 8
      %s491 = scalar_lea.vmem %s11, %s490
      %p492 = pneg %p342
      %p493 = pneg %p339
      %s494 = smul.u32 8, %s29
      %p495 = scmp.lt.s32.totalorder %s28, 1
      %s496 = scalar_select %p495, %s28, 1
      %p497 = scmp.lt.s32.totalorder %s494, 7
      %s498 = scalar_select %p497, %s494, 7
      %s499 = smul.addr %s496, 8
      %s500 = sadd.s32 %s498, %s499
      %s501 = smul.addr %s500, 4
      %s502 = scalar_lea.vmem %s12, %s501
      %s503 = smul.u32 8, %s29
      %p504 = scmp.lt.s32.totalorder %s28, 1
      %s505 = scalar_select %p504, %s28, 1
      %p506 = scmp.lt.s32.totalorder %s503, 7
      %s507 = scalar_select %p506, %s503, 7
      %s508 = smul.addr %s505, 8
      %s509 = sadd.s32 %s507, %s508
      %s510 = smul.addr %s509, 4
      %s511 = scalar_lea.vmem %s0, %s510
      %s512 = smul.u32 8, %s29
      %p513 = scmp.lt.s32.totalorder %s28, 1
      %s514 = scalar_select %p513, %s28, 1
      %s515 = smul.addr %s514, 16
      %s516 = smul.addr %s515, 8
      %s517 = scalar_lea.vmem %s1, %s516
      %p518 = scmp.lt.s32.totalorder %s28, 1
      %s519 = scalar_select %p518, %s28, 1
      %s520 = smul.addr %s519, 16
      %s521 = smul.addr %s520, 8
      %s522 = scalar_lea.vmem %s2, %s521
      %s523 = smul.u32 8, %s29
      %p524 = scmp.lt.s32.totalorder %s28, 1
      %s525 = scalar_select %p524, %s28, 1
      %p526 = scmp.lt.s32.totalorder %s523, 7
      %s527 = scalar_select %p526, %s523, 7
      %s528 = smul.addr %s525, 8
      %s529 = sadd.s32 %s527, %s528
      %s530 = smul.addr %s529, 8
      %s531 = scalar_lea.vmem %s10, %s530
      %s532 = smul.u32 8, %s29
      %s533 = smul.u32 8, %s29
      %p534 = scmp.lt.s32.totalorder %s28, 1
      %s535 = scalar_select %p534, %s28, 1
      %p536 = scmp.lt.s32.totalorder %s533, 7
      %s537 = scalar_select %p536, %s533, 7
      %s538 = smul.addr %s535, 8
      %s539 = sadd.s32 %s537, %s538
      %s540 = smul.addr %s539, 8
      %s541 = scalar_lea.vmem %s11, %s540
      %s542 = smul.u32 8, %s29
      %s543 = smul.u32 8, %s29
      %p544 = scmp.lt.s32.totalorder %s28, 1
      %s545 = scalar_select %p544, %s28, 1
      %p546 = scmp.lt.s32.totalorder %s543, 7
      %s547 = scalar_select %p546, %s543, 7
      %s548 = smul.addr %s545, 8
      %s549 = sadd.s32 %s547, %s548
      %s550 = smul.addr %s549, 4
      %s551 = scalar_lea.vmem %s12, %s550
      %s552 = smul.u32 8, %s29
      %p553 = scmp.eq.s32.totalorder %s29, 0
      // Predicated region
      $region65: #{transolver_erwin_block.7} parent=63 // pred_check
        %p554 = pneg %p553
      $region66: #{transolver_erwin_block.7} parent=63 // pred_check_branch
        %556 = sbr.rel (%p554) target = $region68
      $region67: #{transolver_erwin_block.7} parent=63 // pred_region
        %v557 = vld [vmem:[%s517] sm:$0xff]
        %v558 = vld [vmem:[%s517 + $0x8] sm:$0xff]
        %v559 = vld [vmem:[%s517 + $0x10] sm:$0xff]
        %v560 = vld [vmem:[%s517 + $0x18] sm:$0xff]
        %v561 = vld [vmem:[%s517 + $0x20] sm:$0xff]
        %v562 = vld [vmem:[%s517 + $0x28] sm:$0xff]
        %v563 = vld [vmem:[%s517 + $0x30] sm:$0xff]
        %v564 = vld [vmem:[%s517 + $0x38] sm:$0xff]
        %v565 = vld [vmem:[%s517 + $0x40] sm:$0xff]
        %v566 = vld [vmem:[%s517 + $0x48] sm:$0xff]
        %v567 = vld [vmem:[%s517 + $0x50] sm:$0xff]
        %v568 = vld [vmem:[%s517 + $0x58] sm:$0xff]
        %v569 = vld [vmem:[%s517 + $0x60] sm:$0xff]
        %v570 = vld [vmem:[%s517 + $0x68] sm:$0xff]
        %v571 = vld [vmem:[%s517 + $0x70] sm:$0xff]
        %v572 = vld [vmem:[%s517 + $0x78] sm:$0xff]
        %v573 = vld [vmem:[%s522] sm:$0xff]
        %v574 = vld [vmem:[%s522 + $0x8] sm:$0xff]
        %v575 = vld [vmem:[%s522 + $0x10] sm:$0xff]
        %v576 = vld [vmem:[%s522 + $0x18] sm:$0xff]
        %v577 = vld [vmem:[%s522 + $0x20] sm:$0xff]
        %v578 = vld [vmem:[%s522 + $0x28] sm:$0xff]
        %v579 = vld [vmem:[%s522 + $0x30] sm:$0xff]
        %v580 = vld [vmem:[%s522 + $0x38] sm:$0xff]
        %v581 = vld [vmem:[%s522 + $0x40] sm:$0xff]
        %v582 = vld [vmem:[%s522 + $0x48] sm:$0xff]
        %v583 = vld [vmem:[%s522 + $0x50] sm:$0xff]
        %v584 = vld [vmem:[%s522 + $0x58] sm:$0xff]
        %v585 = vld [vmem:[%s522 + $0x60] sm:$0xff]
        %v586 = vld [vmem:[%s522 + $0x68] sm:$0xff]
        %v587 = vld [vmem:[%s522 + $0x70] sm:$0xff]
        %v588 = vld [vmem:[%s522 + $0x78] sm:$0xff]
        %v589 = vadd.f32 %v573, 1e-05
        %v590 = vadd.f32 %v574, 1e-05
        %v591 = vadd.f32 %v575, 1e-05
        %v592 = vadd.f32 %v576, 1e-05
        %v593 = vadd.f32 %v577, 1e-05
        %v594 = vadd.f32 %v578, 1e-05
        %v595 = vadd.f32 %v579, 1e-05
        %v596 = vadd.f32 %v580, 1e-05
        %v597 = vadd.f32 %v581, 1e-05
        %v598 = vadd.f32 %v582, 1e-05
        %v599 = vadd.f32 %v583, 1e-05
        %v600 = vadd.f32 %v584, 1e-05
        %v601 = vadd.f32 %v585, 1e-05
        %v602 = vadd.f32 %v586, 1e-05
        %v603 = vadd.f32 %v587, 1e-05
        %v604 = vadd.f32 %v588, 1e-05
        %v605 = vrcp.pop %v589
        %v606 = vmul.f32 %v589, %v605
        %v607 = vsub.f32 1.0, %v606
        %v608 = vmul.f32 %v605, %v607
        %v609 = vadd.f32 %v605, %v608
        %vm610 = vweird.f32 %v589
        %vm611 = vweird.f32 %v605
        %vm612 = vmor %vm610, %vm611
        %v613 = vsel %vm612, %v605, %v609
        %v614 = vand.u32 2147483647, %v589
        %vm615 = vcmp.eq.f32.partialorder %v614, 8.507059e+37
        %v616 = vand.u32 %v589, 2147483648
        %v617 = vor.u32 1.1754944e-38, %v616
        %v618 = vsel %vm615, %v617, %v613
        %v619 = vmul.f32 1.0, %v618
        %v620 = vrcp.pop %v590
        %v621 = vmul.f32 %v590, %v620
        %v622 = vsub.f32 1.0, %v621
        %v623 = vmul.f32 %v620, %v622
        %v624 = vadd.f32 %v620, %v623
        %vm625 = vweird.f32 %v590
        %vm626 = vweird.f32 %v620
        %vm627 = vmor %vm625, %vm626
        %v628 = vsel %vm627, %v620, %v624
        %v629 = vand.u32 2147483647, %v590
        %vm630 = vcmp.eq.f32.partialorder %v629, 8.507059e+37
        %v631 = vand.u32 %v590, 2147483648
        %v632 = vor.u32 1.1754944e-38, %v631
        %v633 = vsel %vm630, %v632, %v628
        %v634 = vmul.f32 1.0, %v633
        %v635 = vrcp.pop %v591
        %v636 = vmul.f32 %v591, %v635
        %v637 = vsub.f32 1.0, %v636
        %v638 = vmul.f32 %v635, %v637
        %v639 = vadd.f32 %v635, %v638
        %vm640 = vweird.f32 %v591
        %vm641 = vweird.f32 %v635
        %vm642 = vmor %vm640, %vm641
        %v643 = vsel %vm642, %v635, %v639
        %v644 = vand.u32 2147483647, %v591
        %vm645 = vcmp.eq.f32.partialorder %v644, 8.507059e+37
        %v646 = vand.u32 %v591, 2147483648
        %v647 = vor.u32 1.1754944e-38, %v646
        %v648 = vsel %vm645, %v647, %v643
        %v649 = vmul.f32 1.0, %v648
        %v650 = vrcp.pop %v592
        %v651 = vmul.f32 %v592, %v650
        %v652 = vsub.f32 1.0, %v651
        %v653 = vmul.f32 %v650, %v652
        %v654 = vadd.f32 %v650, %v653
        %vm655 = vweird.f32 %v592
        %vm656 = vweird.f32 %v650
        %vm657 = vmor %vm655, %vm656
        %v658 = vsel %vm657, %v650, %v654
        %v659 = vand.u32 2147483647, %v592
        %vm660 = vcmp.eq.f32.partialorder %v659, 8.507059e+37
        %v661 = vand.u32 %v592, 2147483648
        %v662 = vor.u32 1.1754944e-38, %v661
        %v663 = vsel %vm660, %v662, %v658
        %v664 = vmul.f32 1.0, %v663
        %v665 = vrcp.pop %v593
        %v666 = vmul.f32 %v593, %v665
        %v667 = vsub.f32 1.0, %v666
        %v668 = vmul.f32 %v665, %v667
        %v669 = vadd.f32 %v665, %v668
        %vm670 = vweird.f32 %v593
        %vm671 = vweird.f32 %v665
        %vm672 = vmor %vm670, %vm671
        %v673 = vsel %vm672, %v665, %v669
        %v674 = vand.u32 2147483647, %v593
        %vm675 = vcmp.eq.f32.partialorder %v674, 8.507059e+37
        %v676 = vand.u32 %v593, 2147483648
        %v677 = vor.u32 1.1754944e-38, %v676
        %v678 = vsel %vm675, %v677, %v673
        %v679 = vmul.f32 1.0, %v678
        %v680 = vrcp.pop %v594
        %v681 = vmul.f32 %v594, %v680
        %v682 = vsub.f32 1.0, %v681
        %v683 = vmul.f32 %v680, %v682
        %v684 = vadd.f32 %v680, %v683
        %vm685 = vweird.f32 %v594
        %vm686 = vweird.f32 %v680
        %vm687 = vmor %vm685, %vm686
        %v688 = vsel %vm687, %v680, %v684
        %v689 = vand.u32 2147483647, %v594
        %vm690 = vcmp.eq.f32.partialorder %v689, 8.507059e+37
        %v691 = vand.u32 %v594, 2147483648
        %v692 = vor.u32 1.1754944e-38, %v691
        %v693 = vsel %vm690, %v692, %v688
        %v694 = vmul.f32 1.0, %v693
        %v695 = vrcp.pop %v595
        %v696 = vmul.f32 %v595, %v695
        %v697 = vsub.f32 1.0, %v696
        %v698 = vmul.f32 %v695, %v697
        %v699 = vadd.f32 %v695, %v698
        %vm700 = vweird.f32 %v595
        %vm701 = vweird.f32 %v695
        %vm702 = vmor %vm700, %vm701
        %v703 = vsel %vm702, %v695, %v699
        %v704 = vand.u32 2147483647, %v595
        %vm705 = vcmp.eq.f32.partialorder %v704, 8.507059e+37
        %v706 = vand.u32 %v595, 2147483648
        %v707 = vor.u32 1.1754944e-38, %v706
        %v708 = vsel %vm705, %v707, %v703
        %v709 = vmul.f32 1.0, %v708
        %v710 = vrcp.pop %v596
        %v711 = vmul.f32 %v596, %v710
        %v712 = vsub.f32 1.0, %v711
        %v713 = vmul.f32 %v710, %v712
        %v714 = vadd.f32 %v710, %v713
        %vm715 = vweird.f32 %v596
        %vm716 = vweird.f32 %v710
        %vm717 = vmor %vm715, %vm716
        %v718 = vsel %vm717, %v710, %v714
        %v719 = vand.u32 2147483647, %v596
        %vm720 = vcmp.eq.f32.partialorder %v719, 8.507059e+37
        %v721 = vand.u32 %v596, 2147483648
        %v722 = vor.u32 1.1754944e-38, %v721
        %v723 = vsel %vm720, %v722, %v718
        %v724 = vmul.f32 1.0, %v723
        %v725 = vrcp.pop %v597
        %v726 = vmul.f32 %v597, %v725
        %v727 = vsub.f32 1.0, %v726
        %v728 = vmul.f32 %v725, %v727
        %v729 = vadd.f32 %v725, %v728
        %vm730 = vweird.f32 %v597
        %vm731 = vweird.f32 %v725
        %vm732 = vmor %vm730, %vm731
        %v733 = vsel %vm732, %v725, %v729
        %v734 = vand.u32 2147483647, %v597
        %vm735 = vcmp.eq.f32.partialorder %v734, 8.507059e+37
        %v736 = vand.u32 %v597, 2147483648
        %v737 = vor.u32 1.1754944e-38, %v736
        %v738 = vsel %vm735, %v737, %v733
        %v739 = vmul.f32 1.0, %v738
        %v740 = vrcp.pop %v598
        %v741 = vmul.f32 %v598, %v740
        %v742 = vsub.f32 1.0, %v741
        %v743 = vmul.f32 %v740, %v742
        %v744 = vadd.f32 %v740, %v743
        %vm745 = vweird.f32 %v598
        %vm746 = vweird.f32 %v740
        %vm747 = vmor %vm745, %vm746
        %v748 = vsel %vm747, %v740, %v744
        %v749 = vand.u32 2147483647, %v598
        %vm750 = vcmp.eq.f32.partialorder %v749, 8.507059e+37
        %v751 = vand.u32 %v598, 2147483648
        %v752 = vor.u32 1.1754944e-38, %v751
        %v753 = vsel %vm750, %v752, %v748
        %v754 = vmul.f32 1.0, %v753
        %v755 = vrcp.pop %v599
        %v756 = vmul.f32 %v599, %v755
        %v757 = vsub.f32 1.0, %v756
        %v758 = vmul.f32 %v755, %v757
        %v759 = vadd.f32 %v755, %v758
        %vm760 = vweird.f32 %v599
        %vm761 = vweird.f32 %v755
        %vm762 = vmor %vm760, %vm761
        %v763 = vsel %vm762, %v755, %v759
        %v764 = vand.u32 2147483647, %v599
        %vm765 = vcmp.eq.f32.partialorder %v764, 8.507059e+37
        %v766 = vand.u32 %v599, 2147483648
        %v767 = vor.u32 1.1754944e-38, %v766
        %v768 = vsel %vm765, %v767, %v763
        %v769 = vmul.f32 1.0, %v768
        %v770 = vrcp.pop %v600
        %v771 = vmul.f32 %v600, %v770
        %v772 = vsub.f32 1.0, %v771
        %v773 = vmul.f32 %v770, %v772
        %v774 = vadd.f32 %v770, %v773
        %vm775 = vweird.f32 %v600
        %vm776 = vweird.f32 %v770
        %vm777 = vmor %vm775, %vm776
        %v778 = vsel %vm777, %v770, %v774
        %v779 = vand.u32 2147483647, %v600
        %vm780 = vcmp.eq.f32.partialorder %v779, 8.507059e+37
        %v781 = vand.u32 %v600, 2147483648
        %v782 = vor.u32 1.1754944e-38, %v781
        %v783 = vsel %vm780, %v782, %v778
        %v784 = vmul.f32 1.0, %v783
        %v785 = vrcp.pop %v601
        %v786 = vmul.f32 %v601, %v785
        %v787 = vsub.f32 1.0, %v786
        %v788 = vmul.f32 %v785, %v787
        %v789 = vadd.f32 %v785, %v788
        %vm790 = vweird.f32 %v601
        %vm791 = vweird.f32 %v785
        %vm792 = vmor %vm790, %vm791
        %v793 = vsel %vm792, %v785, %v789
        %v794 = vand.u32 2147483647, %v601
        %vm795 = vcmp.eq.f32.partialorder %v794, 8.507059e+37
        %v796 = vand.u32 %v601, 2147483648
        %v797 = vor.u32 1.1754944e-38, %v796
        %v798 = vsel %vm795, %v797, %v793
        %v799 = vmul.f32 1.0, %v798
        %v800 = vrcp.pop %v602
        %v801 = vmul.f32 %v602, %v800
        %v802 = vsub.f32 1.0, %v801
        %v803 = vmul.f32 %v800, %v802
        %v804 = vadd.f32 %v800, %v803
        %vm805 = vweird.f32 %v602
        %vm806 = vweird.f32 %v800
        %vm807 = vmor %vm805, %vm806
        %v808 = vsel %vm807, %v800, %v804
        %v809 = vand.u32 2147483647, %v602
        %vm810 = vcmp.eq.f32.partialorder %v809, 8.507059e+37
        %v811 = vand.u32 %v602, 2147483648
        %v812 = vor.u32 1.1754944e-38, %v811
        %v813 = vsel %vm810, %v812, %v808
        %v814 = vmul.f32 1.0, %v813
        %v815 = vrcp.pop %v603
        %v816 = vmul.f32 %v603, %v815
        %v817 = vsub.f32 1.0, %v816
        %v818 = vmul.f32 %v815, %v817
        %v819 = vadd.f32 %v815, %v818
        %vm820 = vweird.f32 %v603
        %vm821 = vweird.f32 %v815
        %vm822 = vmor %vm820, %vm821
        %v823 = vsel %vm822, %v815, %v819
        %v824 = vand.u32 2147483647, %v603
        %vm825 = vcmp.eq.f32.partialorder %v824, 8.507059e+37
        %v826 = vand.u32 %v603, 2147483648
        %v827 = vor.u32 1.1754944e-38, %v826
        %v828 = vsel %vm825, %v827, %v823
        %v829 = vmul.f32 1.0, %v828
        %v830 = vrcp.pop %v604
        %v831 = vmul.f32 %v604, %v830
        %v832 = vsub.f32 1.0, %v831
        %v833 = vmul.f32 %v830, %v832
        %v834 = vadd.f32 %v830, %v833
        %vm835 = vweird.f32 %v604
        %vm836 = vweird.f32 %v830
        %vm837 = vmor %vm835, %vm836
        %v838 = vsel %vm837, %v830, %v834
        %v839 = vand.u32 2147483647, %v604
        %vm840 = vcmp.eq.f32.partialorder %v839, 8.507059e+37
        %v841 = vand.u32 %v604, 2147483648
        %v842 = vor.u32 1.1754944e-38, %v841
        %v843 = vsel %vm840, %v842, %v838
        %v844 = vmul.f32 1.0, %v843
        %846 = vset.pattern.permute.xlu0 0
        %847 = vperm.xlu0 %846, %v619
        %v848 = vpop.permute.xlu0 %847
        %851 = vset.pattern.permute.xlu0 0
        %852 = vperm.xlu0 %851, %v634
        %v853 = vpop.permute.xlu0 %852
        %856 = vset.pattern.permute.xlu0 0
        %857 = vperm.xlu0 %856, %v649
        %v858 = vpop.permute.xlu0 %857
        %861 = vset.pattern.permute.xlu0 0
        %862 = vperm.xlu0 %861, %v664
        %v863 = vpop.permute.xlu0 %862
        %v865 = vmul.f32 %v557, %v848
        %v866 = vmul.f32 %v558, %v853
        %v867 = vmul.f32 %v559, %v858
        %v868 = vmul.f32 %v560, %v863
        %v869 = vld [vmem:[%s3] sm:$0xff]
        %vm870 = vcmask 64512
        %v872 = vsel %vm870, %v865, 0
        %v875 = vsel %vm870, %v866, 0
        %v878 = vsel %vm870, %v867, 0
        %v881 = vsel %vm870, %v868, 0
        %883 = vmatpush.msra.mxu0 0.0
        %884 = vmatpush.msra.mxu0 0.0
        %885 = vmatpush.msra.mxu0 0.0
        %886 = vmatpush.msra.mxu0 0.0
        %887 = vmatpush.msra.mxu0 0.0
        %888 = vmatpush.msra.mxu0 0.0
        %889 = vmatpush.msra.mxu0 0.0
        %890 = vmatpush.msra.mxu0 0.0
        %891 = vmatpush.msra.mxu0 0.0
        %892 = vmatpush.msra.mxu0 0.0
        %893 = vmatpush.msra.mxu0 0.0
        %894 = vmatpush.msra.mxu0 0.0
        %895 = vmatpush.msra.mxu0 0.0
        %896 = vmatpush.msra.mxu0 0.0
        %897 = vmatpush.msra.mxu0 0.0
        %898 = vmatpush.msra.mxu0 %v869
        %899 = vmatmul.f32.gmra.mxu0 %v872
        %v900 = vpop.f32.mrf.mxu0
        %v901 = vadd.f32 0.0, %v900
        %902 = vmatmul.f32.gmra.mxu0 %v875
        %v903 = vpop.f32.mrf.mxu0
        %v904 = vadd.f32 0.0, %v903
        %905 = vmatmul.f32.gmra.mxu0 %v878
        %v906 = vpop.f32.mrf.mxu0
        %v907 = vadd.f32 0.0, %v906
        %908 = vmatmul.f32.gmra.mxu0 %v881
        %v909 = vpop.f32.mrf.mxu0
        %v910 = vadd.f32 0.0, %v909
        %911 = vdwg.mxu0
        %v912 = vld [vmem:[%s4] sm:$0xff]
        %913 = vmatpush.msra.mxu0 0.0
        %914 = vmatpush.msra.mxu0 0.0
        %915 = vmatpush.msra.mxu0 0.0
        %916 = vmatpush.msra.mxu0 0.0
        %917 = vmatpush.msra.mxu0 0.0
        %918 = vmatpush.msra.mxu0 0.0
        %919 = vmatpush.msra.mxu0 0.0
        %920 = vmatpush.msra.mxu0 0.0
        %921 = vmatpush.msra.mxu0 0.0
        %922 = vmatpush.msra.mxu0 0.0
        %923 = vmatpush.msra.mxu0 0.0
        %924 = vmatpush.msra.mxu0 0.0
        %925 = vmatpush.msra.mxu0 0.0
        %926 = vmatpush.msra.mxu0 0.0
        %927 = vmatpush.msra.mxu0 0.0
        %928 = vmatpush.msra.mxu0 %v912
        %929 = vmatmul.f32.gmra.mxu0 %v872
        %v930 = vpop.f32.mrf.mxu0
        %v931 = vadd.f32 0.0, %v930
        %932 = vmatmul.f32.gmra.mxu0 %v875
        %v933 = vpop.f32.mrf.mxu0
        %v934 = vadd.f32 0.0, %v933
        %935 = vmatmul.f32.gmra.mxu0 %v878
        %v936 = vpop.f32.mrf.mxu0
        %v937 = vadd.f32 0.0, %v936
        %938 = vmatmul.f32.gmra.mxu0 %v881
        %v939 = vpop.f32.mrf.mxu0
        %v940 = vadd.f32 0.0, %v939
        %941 = vdwg.mxu0
        %v942 = vld [vmem:[%s5] sm:$0xff]
        %943 = vmatpush.msra.mxu0 0.0
        %944 = vmatpush.msra.mxu0 0.0
        %945 = vmatpush.msra.mxu0 0.0
        %946 = vmatpush.msra.mxu0 0.0
        %947 = vmatpush.msra.mxu0 0.0
        %948 = vmatpush.msra.mxu0 0.0
        %949 = vmatpush.msra.mxu0 0.0
        %950 = vmatpush.msra.mxu0 0.0
        %951 = vmatpush.msra.mxu0 0.0
        %952 = vmatpush.msra.mxu0 0.0
        %953 = vmatpush.msra.mxu0 0.0
        %954 = vmatpush.msra.mxu0 0.0
        %955 = vmatpush.msra.mxu0 0.0
        %956 = vmatpush.msra.mxu0 0.0
        %957 = vmatpush.msra.mxu0 0.0
        %958 = vmatpush.msra.mxu0 %v942
        %959 = vmatmul.f32.gmra.mxu0 %v872
        %v960 = vpop.f32.mrf.mxu0
        %v961 = vadd.f32 0.0, %v960
        %962 = vmatmul.f32.gmra.mxu0 %v875
        %v963 = vpop.f32.mrf.mxu0
        %v964 = vadd.f32 0.0, %v963
        %965 = vmatmul.f32.gmra.mxu0 %v878
        %v966 = vpop.f32.mrf.mxu0
        %v967 = vadd.f32 0.0, %v966
        %968 = vmatmul.f32.gmra.mxu0 %v881
        %v969 = vpop.f32.mrf.mxu0
        %v970 = vadd.f32 0.0, %v969
        %971 = vdwg.mxu0
        %v973 = vsel %vm870, %v901, 0
        %v976 = vsel %vm870, %v904, 0
        %v979 = vsel %vm870, %v907, 0
        %v982 = vsel %vm870, %v910, 0
        %v985 = vsel %vm870, %v931, 0
        %v988 = vsel %vm870, %v934, 0
        %v991 = vsel %vm870, %v937, 0
        %v994 = vsel %vm870, %v940, 0
        %996 = vmatpush.xpose.msra.mxu0 0.0
        %997 = vmatpush.xpose.msra.mxu0 0.0
        %998 = vmatpush.xpose.msra.mxu0 0.0
        %999 = vmatpush.xpose.msra.mxu0 0.0
        %1000 = vmatpush.xpose.msra.mxu0 0.0
        %1001 = vmatpush.xpose.msra.mxu0 0.0
        %1002 = vmatpush.xpose.msra.mxu0 0.0
        %1003 = vmatpush.xpose.msra.mxu0 0.0
        %1004 = vmatpush.xpose.msra.mxu0 0.0
        %1005 = vmatpush.xpose.msra.mxu0 0.0
        %1006 = vmatpush.xpose.msra.mxu0 0.0
        %1007 = vmatpush.xpose.msra.mxu0 0.0
        %1008 = vmatpush.xpose.msra.mxu0 %v994
        %1009 = vmatpush.xpose.msra.mxu0 %v991
        %1010 = vmatpush.xpose.msra.mxu0 %v988
        %1011 = vmatpush.xpose.msra.mxu0 %v985
        %1012 = vmatmul.f32.gmra.mxu0 %v973
        %v1013 = vpop.f32.mrf.mxu0
        %v1014 = vadd.f32 0.0, %v1013
        %1015 = vmatmul.f32.gmra.mxu0 %v976
        %v1016 = vpop.f32.mrf.mxu0
        %v1017 = vadd.f32 0.0, %v1016
        %1018 = vmatmul.f32.gmra.mxu0 %v979
        %v1019 = vpop.f32.mrf.mxu0
        %v1020 = vadd.f32 0.0, %v1019
        %1021 = vmatmul.f32.gmra.mxu0 %v982
        %v1022 = vpop.f32.mrf.mxu0
        %v1023 = vadd.f32 0.0, %v1022
        %1024 = vdwg.mxu0
        %v1025 = vmul.f32 %v1014, 0.35355338
        %v1026 = vmul.f32 %v1017, 0.35355338
        %v1027 = vmul.f32 %v1020, 0.35355338
        %v1028 = vmul.f32 %v1023, 0.35355338
        %vm1029 = vcmask 261120
        %v1030 = vsel %vm1029, %v1025, -inf
        %1031 = vmax.xlane.f32.xlu0 %v1030
        %v1032 = vpop.xlane.xlu0 %1031
        %v1033 = vsel %vm1029, %v1026, -inf
        %1034 = vmax.xlane.f32.xlu0 %v1033
        %v1035 = vpop.xlane.xlu0 %1034
        %v1036 = vsel %vm1029, %v1027, -inf
        %1037 = vmax.xlane.f32.xlu0 %v1036
        %v1038 = vpop.xlane.xlu0 %1037
        %v1039 = vsel %vm1029, %v1028, -inf
        %1040 = vmax.xlane.f32.xlu0 %v1039
        %v1041 = vpop.xlane.xlu0 %1040
        %v1042 = vsub.f32 %v1025, %v1032
        %v1043 = vsub.f32 %v1026, %v1035
        %v1044 = vsub.f32 %v1027, %v1038
        %v1045 = vsub.f32 %v1028, %v1041
        %v1046 = vmul.f32 %v1042, 1.442695
        %v1047 = vpow.pop %v1046
        %v1048 = vmul.f32 %v1043, 1.442695
        %v1049 = vpow.pop %v1048
        %v1050 = vmul.f32 %v1044, 1.442695
        %v1051 = vpow.pop %v1050
        %v1052 = vmul.f32 %v1045, 1.442695
        %v1053 = vpow.pop %v1052
        %v1054 = vsel %vm1029, %v1047, 0.0
        %1055 = vadd.xlane.f32.xlu0 %v1054
        %v1056 = vpop.xlane.xlu0 %1055
        %v1057 = vsel %vm1029, %v1049, 0.0
        %1058 = vadd.xlane.f32.xlu0 %v1057
        %v1059 = vpop.xlane.xlu0 %1058
        %v1060 = vsel %vm1029, %v1051, 0.0
        %1061 = vadd.xlane.f32.xlu0 %v1060
        %v1062 = vpop.xlane.xlu0 %1061
        %v1063 = vsel %vm1029, %v1053, 0.0
        %1064 = vadd.xlane.f32.xlu0 %v1063
        %v1065 = vpop.xlane.xlu0 %1064
        %v1066 = vrcp.pop %v1056
        %v1067 = vmul.f32 %v1056, %v1066
        %v1068 = vsub.f32 1.0, %v1067
        %v1069 = vmul.f32 %v1066, %v1068
        %v1070 = vadd.f32 %v1066, %v1069
        %vm1071 = vweird.f32 %v1056
        %vm1072 = vweird.f32 %v1066
        %vm1073 = vmor %vm1071, %vm1072
        %v1074 = vsel %vm1073, %v1066, %v1070
        %v1075 = vand.u32 2147483647, %v1056
        %vm1076 = vcmp.eq.f32.partialorder %v1075, 8.507059e+37
        %v1077 = vand.u32 %v1056, 2147483648
        %v1078 = vor.u32 1.1754944e-38, %v1077
        %v1079 = vsel %vm1076, %v1078, %v1074
        %v1080 = vmul.f32 %v1047, %v1079
        %v1081 = vrcp.pop %v1059
        %v1082 = vmul.f32 %v1059, %v1081
        %v1083 = vsub.f32 1.0, %v1082
        %v1084 = vmul.f32 %v1081, %v1083
        %v1085 = vadd.f32 %v1081, %v1084
        %vm1086 = vweird.f32 %v1059
        %vm1087 = vweird.f32 %v1081
        %vm1088 = vmor %vm1086, %vm1087
        %v1089 = vsel %vm1088, %v1081, %v1085
        %v1090 = vand.u32 2147483647, %v1059
        %vm1091 = vcmp.eq.f32.partialorder %v1090, 8.507059e+37
        %v1092 = vand.u32 %v1059, 2147483648
        %v1093 = vor.u32 1.1754944e-38, %v1092
        %v1094 = vsel %vm1091, %v1093, %v1089
        %v1095 = vmul.f32 %v1049, %v1094
        %v1096 = vrcp.pop %v1062
        %v1097 = vmul.f32 %v1062, %v1096
        %v1098 = vsub.f32 1.0, %v1097
        %v1099 = vmul.f32 %v1096, %v1098
        %v1100 = vadd.f32 %v1096, %v1099
        %vm1101 = vweird.f32 %v1062
        %vm1102 = vweird.f32 %v1096
        %vm1103 = vmor %vm1101, %vm1102
        %v1104 = vsel %vm1103, %v1096, %v1100
        %v1105 = vand.u32 2147483647, %v1062
        %vm1106 = vcmp.eq.f32.partialorder %v1105, 8.507059e+37
        %v1107 = vand.u32 %v1062, 2147483648
        %v1108 = vor.u32 1.1754944e-38, %v1107
        %v1109 = vsel %vm1106, %v1108, %v1104
        %v1110 = vmul.f32 %v1051, %v1109
        %v1111 = vrcp.pop %v1065
        %v1112 = vmul.f32 %v1065, %v1111
        %v1113 = vsub.f32 1.0, %v1112
        %v1114 = vmul.f32 %v1111, %v1113
        %v1115 = vadd.f32 %v1111, %v1114
        %vm1116 = vweird.f32 %v1065
        %vm1117 = vweird.f32 %v1111
        %vm1118 = vmor %vm1116, %vm1117
        %v1119 = vsel %vm1118, %v1111, %v1115
        %v1120 = vand.u32 2147483647, %v1065
        %vm1121 = vcmp.eq.f32.partialorder %v1120, 8.507059e+37
        %v1122 = vand.u32 %v1065, 2147483648
        %v1123 = vor.u32 1.1754944e-38, %v1122
        %v1124 = vsel %vm1121, %v1123, %v1119
        %v1125 = vmul.f32 %v1053, %v1124
        %v1127 = vsel %vm1029, %v1080, 0
        %v1130 = vsel %vm1029, %v1095, 0
        %v1133 = vsel %vm1029, %v1110, 0
        %v1136 = vsel %vm1029, %v1125, 0
        %1138 = vmatpush.msra.mxu0 0.0
        %1139 = vmatpush.msra.mxu0 0.0
        %1140 = vmatpush.msra.mxu0 0.0
        %1141 = vmatpush.msra.mxu0 0.0
        %1142 = vmatpush.msra.mxu0 0.0
        %1143 = vmatpush.msra.mxu0 0.0
        %1144 = vmatpush.msra.mxu0 0.0
        %1145 = vmatpush.msra.mxu0 0.0
        %1146 = vmatpush.msra.mxu0 0.0
        %1147 = vmatpush.msra.mxu0 0.0
        %1148 = vmatpush.msra.mxu0 0.0
        %1149 = vmatpush.msra.mxu0 0.0
        %1150 = vmatpush.msra.mxu0 %v970
        %1151 = vmatpush.msra.mxu0 %v967
        %1152 = vmatpush.msra.mxu0 %v964
        %1153 = vmatpush.msra.mxu0 %v961
        %1154 = vmatmul.f32.gmra.mxu0 %v1127
        %v1155 = vpop.f32.mrf.mxu0
        %v1156 = vadd.f32 0.0, %v1155
        %1157 = vmatmul.f32.gmra.mxu0 %v1130
        %v1158 = vpop.f32.mrf.mxu0
        %v1159 = vadd.f32 0.0, %v1158
        %1160 = vmatmul.f32.gmra.mxu0 %v1133
        %v1161 = vpop.f32.mrf.mxu0
        %v1162 = vadd.f32 0.0, %v1161
        %1163 = vmatmul.f32.gmra.mxu0 %v1136
        %v1164 = vpop.f32.mrf.mxu0
        %v1165 = vadd.f32 0.0, %v1164
        %1166 = vdwg.mxu0
        %v1167 = vld [vmem:[%s6] sm:$0xff]
        %v1169 = vsel %vm870, %v1156, 0
        %v1172 = vsel %vm870, %v1159, 0
        %v1175 = vsel %vm870, %v1162, 0
        %v1178 = vsel %vm870, %v1165, 0
        %1180 = vmatpush.msra.mxu0 0.0
        %1181 = vmatpush.msra.mxu0 0.0
        %1182 = vmatpush.msra.mxu0 0.0
        %1183 = vmatpush.msra.mxu0 0.0
        %1184 = vmatpush.msra.mxu0 0.0
        %1185 = vmatpush.msra.mxu0 0.0
        %1186 = vmatpush.msra.mxu0 0.0
        %1187 = vmatpush.msra.mxu0 0.0
        %1188 = vmatpush.msra.mxu0 0.0
        %1189 = vmatpush.msra.mxu0 0.0
        %1190 = vmatpush.msra.mxu0 0.0
        %1191 = vmatpush.msra.mxu0 0.0
        %1192 = vmatpush.msra.mxu0 0.0
        %1193 = vmatpush.msra.mxu0 0.0
        %1194 = vmatpush.msra.mxu0 0.0
        %1195 = vmatpush.msra.mxu0 %v1167
        %1196 = vmatmul.f32.gmra.mxu0 %v1169
        %v1197 = vpop.f32.mrf.mxu0
        %v1198 = vadd.f32 0.0, %v1197
        %1199 = vmatmul.f32.gmra.mxu0 %v1172
        %v1200 = vpop.f32.mrf.mxu0
        %v1201 = vadd.f32 0.0, %v1200
        %1202 = vmatmul.f32.gmra.mxu0 %v1175
        %v1203 = vpop.f32.mrf.mxu0
        %v1204 = vadd.f32 0.0, %v1203
        %1205 = vmatmul.f32.gmra.mxu0 %v1178
        %v1206 = vpop.f32.mrf.mxu0
        %v1207 = vadd.f32 0.0, %v1206
        %1208 = vdwg.mxu0
        %1210 = vset.pattern.permute.xlu0 0
        %1211 = vperm.xlu0 %1210, %v679
        %v1212 = vpop.permute.xlu0 %1211
        %1215 = vset.pattern.permute.xlu0 0
        %1216 = vperm.xlu0 %1215, %v694
        %v1217 = vpop.permute.xlu0 %1216
        %1220 = vset.pattern.permute.xlu0 0
        %1221 = vperm.xlu0 %1220, %v709
        %v1222 = vpop.permute.xlu0 %1221
        %1225 = vset.pattern.permute.xlu0 0
        %1226 = vperm.xlu0 %1225, %v724
        %v1227 = vpop.permute.xlu0 %1226
        %v1229 = vmul.f32 %v561, %v1212
        %v1230 = vmul.f32 %v562, %v1217
        %v1231 = vmul.f32 %v563, %v1222
        %v1232 = vmul.f32 %v564, %v1227
        %1237 = vrot.lane.b32.xlu0 %v1229, 120
        %v1238 = vpop.permute.xlu0 %1237
        %1239 = vrot.lane.b32.xlu0 %v1230, 120
        %v1240 = vpop.permute.xlu0 %1239
        %1241 = vrot.lane.b32.xlu0 %v1231, 120
        %v1242 = vpop.permute.xlu0 %1241
        %1243 = vrot.lane.b32.xlu0 %v1232, 120
        %v1244 = vpop.permute.xlu0 %1243
        %v1245 = vsel %vm870, %v1238, 0
        %v1247 = vsel %vm870, %v1240, 0
        %v1249 = vsel %vm870, %v1242, 0
        %v1251 = vsel %vm870, %v1244, 0
        %1253 = vmatpush.msra.mxu0 0.0
        %1254 = vmatpush.msra.mxu0 0.0
        %1255 = vmatpush.msra.mxu0 0.0
        %1256 = vmatpush.msra.mxu0 0.0
        %1257 = vmatpush.msra.mxu0 0.0
        %1258 = vmatpush.msra.mxu0 0.0
        %1259 = vmatpush.msra.mxu0 0.0
        %1260 = vmatpush.msra.mxu0 0.0
        %1261 = vmatpush.msra.mxu0 0.0
        %1262 = vmatpush.msra.mxu0 0.0
        %1263 = vmatpush.msra.mxu0 0.0
        %1264 = vmatpush.msra.mxu0 0.0
        %1265 = vmatpush.msra.mxu0 0.0
        %1266 = vmatpush.msra.mxu0 0.0
        %1267 = vmatpush.msra.mxu0 0.0
        %1268 = vmatpush.msra.mxu0 %v869
        %1269 = vmatmul.f32.gmra.mxu0 %v1245
        %v1270 = vpop.f32.mrf.mxu0
        %v1271 = vadd.f32 0.0, %v1270
        %1272 = vmatmul.f32.gmra.mxu0 %v1247
        %v1273 = vpop.f32.mrf.mxu0
        %v1274 = vadd.f32 0.0, %v1273
        %1275 = vmatmul.f32.gmra.mxu0 %v1249
        %v1276 = vpop.f32.mrf.mxu0
        %v1277 = vadd.f32 0.0, %v1276
        %1278 = vmatmul.f32.gmra.mxu0 %v1251
        %v1279 = vpop.f32.mrf.mxu0
        %v1280 = vadd.f32 0.0, %v1279
        %1281 = vdwg.mxu0
        %1282 = vmatpush.msra.mxu0 0.0
        %1283 = vmatpush.msra.mxu0 0.0
        %1284 = vmatpush.msra.mxu0 0.0
        %1285 = vmatpush.msra.mxu0 0.0
        %1286 = vmatpush.msra.mxu0 0.0
        %1287 = vmatpush.msra.mxu0 0.0
        %1288 = vmatpush.msra.mxu0 0.0
        %1289 = vmatpush.msra.mxu0 0.0
        %1290 = vmatpush.msra.mxu0 0.0
        %1291 = vmatpush.msra.mxu0 0.0
        %1292 = vmatpush.msra.mxu0 0.0
        %1293 = vmatpush.msra.mxu0 0.0
        %1294 = vmatpush.msra.mxu0 0.0
        %1295 = vmatpush.msra.mxu0 0.0
        %1296 = vmatpush.msra.mxu0 0.0
        %1297 = vmatpush.msra.mxu0 %v912
        %1298 = vmatmul.f32.gmra.mxu0 %v1245
        %v1299 = vpop.f32.mrf.mxu0
        %v1300 = vadd.f32 0.0, %v1299
        %1301 = vmatmul.f32.gmra.mxu0 %v1247
        %v1302 = vpop.f32.mrf.mxu0
        %v1303 = vadd.f32 0.0, %v1302
        %1304 = vmatmul.f32.gmra.mxu0 %v1249
        %v1305 = vpop.f32.mrf.mxu0
        %v1306 = vadd.f32 0.0, %v1305
        %1307 = vmatmul.f32.gmra.mxu0 %v1251
        %v1308 = vpop.f32.mrf.mxu0
        %v1309 = vadd.f32 0.0, %v1308
        %1310 = vdwg.mxu0
        %1311 = vmatpush.msra.mxu0 0.0
        %1312 = vmatpush.msra.mxu0 0.0
        %1313 = vmatpush.msra.mxu0 0.0
        %1314 = vmatpush.msra.mxu0 0.0
        %1315 = vmatpush.msra.mxu0 0.0
        %1316 = vmatpush.msra.mxu0 0.0
        %1317 = vmatpush.msra.mxu0 0.0
        %1318 = vmatpush.msra.mxu0 0.0
        %1319 = vmatpush.msra.mxu0 0.0
        %1320 = vmatpush.msra.mxu0 0.0
        %1321 = vmatpush.msra.mxu0 0.0
        %1322 = vmatpush.msra.mxu0 0.0
        %1323 = vmatpush.msra.mxu0 0.0
        %1324 = vmatpush.msra.mxu0 0.0
        %1325 = vmatpush.msra.mxu0 0.0
        %1326 = vmatpush.msra.mxu0 %v942
        %1327 = vmatmul.f32.gmra.mxu0 %v1245
        %v1328 = vpop.f32.mrf.mxu0
        %v1329 = vadd.f32 0.0, %v1328
        %1330 = vmatmul.f32.gmra.mxu0 %v1247
        %v1331 = vpop.f32.mrf.mxu0
        %v1332 = vadd.f32 0.0, %v1331
        %1333 = vmatmul.f32.gmra.mxu0 %v1249
        %v1334 = vpop.f32.mrf.mxu0
        %v1335 = vadd.f32 0.0, %v1334
        %1336 = vmatmul.f32.gmra.mxu0 %v1251
        %v1337 = vpop.f32.mrf.mxu0
        %v1338 = vadd.f32 0.0, %v1337
        %1339 = vdwg.mxu0
        %v1341 = vsel %vm870, %v1271, 0
        %v1344 = vsel %vm870, %v1274, 0
        %v1347 = vsel %vm870, %v1277, 0
        %v1350 = vsel %vm870, %v1280, 0
        %v1353 = vsel %vm870, %v1300, 0
        %v1356 = vsel %vm870, %v1303, 0
        %v1359 = vsel %vm870, %v1306, 0
        %v1362 = vsel %vm870, %v1309, 0
        %1364 = vmatpush.xpose.msra.mxu0 0.0
        %1365 = vmatpush.xpose.msra.mxu0 0.0
        %1366 = vmatpush.xpose.msra.mxu0 0.0
        %1367 = vmatpush.xpose.msra.mxu0 0.0
        %1368 = vmatpush.xpose.msra.mxu0 0.0
        %1369 = vmatpush.xpose.msra.mxu0 0.0
        %1370 = vmatpush.xpose.msra.mxu0 0.0
        %1371 = vmatpush.xpose.msra.mxu0 0.0
        %1372 = vmatpush.xpose.msra.mxu0 0.0
        %1373 = vmatpush.xpose.msra.mxu0 0.0
        %1374 = vmatpush.xpose.msra.mxu0 0.0
        %1375 = vmatpush.xpose.msra.mxu0 0.0
        %1376 = vmatpush.xpose.msra.mxu0 %v1362
        %1377 = vmatpush.xpose.msra.mxu0 %v1359
        %1378 = vmatpush.xpose.msra.mxu0 %v1356
        %1379 = vmatpush.xpose.msra.mxu0 %v1353
        %1380 = vmatmul.f32.gmra.mxu0 %v1341
        %v1381 = vpop.f32.mrf.mxu0
        %v1382 = vadd.f32 0.0, %v1381
        %1383 = vmatmul.f32.gmra.mxu0 %v1344
        %v1384 = vpop.f32.mrf.mxu0
        %v1385 = vadd.f32 0.0, %v1384
        %1386 = vmatmul.f32.gmra.mxu0 %v1347
        %v1387 = vpop.f32.mrf.mxu0
        %v1388 = vadd.f32 0.0, %v1387
        %1389 = vmatmul.f32.gmra.mxu0 %v1350
        %v1390 = vpop.f32.mrf.mxu0
        %v1391 = vadd.f32 0.0, %v1390
        %1392 = vdwg.mxu0
        %v1393 = vmul.f32 %v1382, 0.35355338
        %v1394 = vmul.f32 %v1385, 0.35355338
        %v1395 = vmul.f32 %v1388, 0.35355338
        %v1396 = vmul.f32 %v1391, 0.35355338
        %v1397 = vsel %vm1029, %v1393, -inf
        %1398 = vmax.xlane.f32.xlu0 %v1397
        %v1399 = vpop.xlane.xlu0 %1398
        %v1400 = vsel %vm1029, %v1394, -inf
        %1401 = vmax.xlane.f32.xlu0 %v1400
        %v1402 = vpop.xlane.xlu0 %1401
        %v1403 = vsel %vm1029, %v1395, -inf
        %1404 = vmax.xlane.f32.xlu0 %v1403
        %v1405 = vpop.xlane.xlu0 %1404
        %v1406 = vsel %vm1029, %v1396, -inf
        %1407 = vmax.xlane.f32.xlu0 %v1406
        %v1408 = vpop.xlane.xlu0 %1407
        %v1409 = vsub.f32 %v1393, %v1399
        %v1410 = vsub.f32 %v1394, %v1402
        %v1411 = vsub.f32 %v1395, %v1405
        %v1412 = vsub.f32 %v1396, %v1408
        %v1413 = vmul.f32 %v1409, 1.442695
        %v1414 = vpow.pop %v1413
        %v1415 = vmul.f32 %v1410, 1.442695
        %v1416 = vpow.pop %v1415
        %v1417 = vmul.f32 %v1411, 1.442695
        %v1418 = vpow.pop %v1417
        %v1419 = vmul.f32 %v1412, 1.442695
        %v1420 = vpow.pop %v1419
        %v1421 = vsel %vm1029, %v1414, 0.0
        %1422 = vadd.xlane.f32.xlu0 %v1421
        %v1423 = vpop.xlane.xlu0 %1422
        %v1424 = vsel %vm1029, %v1416, 0.0
        %1425 = vadd.xlane.f32.xlu0 %v1424
        %v1426 = vpop.xlane.xlu0 %1425
        %v1427 = vsel %vm1029, %v1418, 0.0
        %1428 = vadd.xlane.f32.xlu0 %v1427
        %v1429 = vpop.xlane.xlu0 %1428
        %v1430 = vsel %vm1029, %v1420, 0.0
        %1431 = vadd.xlane.f32.xlu0 %v1430
        %v1432 = vpop.xlane.xlu0 %1431
        %v1433 = vrcp.pop %v1423
        %v1434 = vmul.f32 %v1423, %v1433
        %v1435 = vsub.f32 1.0, %v1434
        %v1436 = vmul.f32 %v1433, %v1435
        %v1437 = vadd.f32 %v1433, %v1436
        %vm1438 = vweird.f32 %v1423
        %vm1439 = vweird.f32 %v1433
        %vm1440 = vmor %vm1438, %vm1439
        %v1441 = vsel %vm1440, %v1433, %v1437
        %v1442 = vand.u32 2147483647, %v1423
        %vm1443 = vcmp.eq.f32.partialorder %v1442, 8.507059e+37
        %v1444 = vand.u32 %v1423, 2147483648
        %v1445 = vor.u32 1.1754944e-38, %v1444
        %v1446 = vsel %vm1443, %v1445, %v1441
        %v1447 = vmul.f32 %v1414, %v1446
        %v1448 = vrcp.pop %v1426
        %v1449 = vmul.f32 %v1426, %v1448
        %v1450 = vsub.f32 1.0, %v1449
        %v1451 = vmul.f32 %v1448, %v1450
        %v1452 = vadd.f32 %v1448, %v1451
        %vm1453 = vweird.f32 %v1426
        %vm1454 = vweird.f32 %v1448
        %vm1455 = vmor %vm1453, %vm1454
        %v1456 = vsel %vm1455, %v1448, %v1452
        %v1457 = vand.u32 2147483647, %v1426
        %vm1458 = vcmp.eq.f32.partialorder %v1457, 8.507059e+37
        %v1459 = vand.u32 %v1426, 2147483648
        %v1460 = vor.u32 1.1754944e-38, %v1459
        %v1461 = vsel %vm1458, %v1460, %v1456
        %v1462 = vmul.f32 %v1416, %v1461
        %v1463 = vrcp.pop %v1429
        %v1464 = vmul.f32 %v1429, %v1463
        %v1465 = vsub.f32 1.0, %v1464
        %v1466 = vmul.f32 %v1463, %v1465
        %v1467 = vadd.f32 %v1463, %v1466
        %vm1468 = vweird.f32 %v1429
        %vm1469 = vweird.f32 %v1463
        %vm1470 = vmor %vm1468, %vm1469
        %v1471 = vsel %vm1470, %v1463, %v1467
        %v1472 = vand.u32 2147483647, %v1429
        %vm1473 = vcmp.eq.f32.partialorder %v1472, 8.507059e+37
        %v1474 = vand.u32 %v1429, 2147483648
        %v1475 = vor.u32 1.1754944e-38, %v1474
        %v1476 = vsel %vm1473, %v1475, %v1471
        %v1477 = vmul.f32 %v1418, %v1476
        %v1478 = vrcp.pop %v1432
        %v1479 = vmul.f32 %v1432, %v1478
        %v1480 = vsub.f32 1.0, %v1479
        %v1481 = vmul.f32 %v1478, %v1480
        %v1482 = vadd.f32 %v1478, %v1481
        %vm1483 = vweird.f32 %v1432
        %vm1484 = vweird.f32 %v1478
        %vm1485 = vmor %vm1483, %vm1484
        %v1486 = vsel %vm1485, %v1478, %v1482
        %v1487 = vand.u32 2147483647, %v1432
        %vm1488 = vcmp.eq.f32.partialorder %v1487, 8.507059e+37
        %v1489 = vand.u32 %v1432, 2147483648
        %v1490 = vor.u32 1.1754944e-38, %v1489
        %v1491 = vsel %vm1488, %v1490, %v1486
        %v1492 = vmul.f32 %v1420, %v1491
        %v1494 = vsel %vm1029, %v1447, 0
        %v1497 = vsel %vm1029, %v1462, 0
        %v1500 = vsel %vm1029, %v1477, 0
        %v1503 = vsel %vm1029, %v1492, 0
        %1505 = vmatpush.msra.mxu0 0.0
        %1506 = vmatpush.msra.mxu0 0.0
        %1507 = vmatpush.msra.mxu0 0.0
        %1508 = vmatpush.msra.mxu0 0.0
        %1509 = vmatpush.msra.mxu0 0.0
        %1510 = vmatpush.msra.mxu0 0.0
        %1511 = vmatpush.msra.mxu0 0.0
        %1512 = vmatpush.msra.mxu0 0.0
        %1513 = vmatpush.msra.mxu0 0.0
        %1514 = vmatpush.msra.mxu0 0.0
        %1515 = vmatpush.msra.mxu0 0.0
        %1516 = vmatpush.msra.mxu0 0.0
        %1517 = vmatpush.msra.mxu0 %v1338
        %1518 = vmatpush.msra.mxu0 %v1335
        %1519 = vmatpush.msra.mxu0 %v1332
        %1520 = vmatpush.msra.mxu0 %v1329
        %1521 = vmatmul.f32.gmra.mxu0 %v1494
        %v1522 = vpop.f32.mrf.mxu0
        %v1523 = vadd.f32 0.0, %v1522
        %1524 = vmatmul.f32.gmra.mxu0 %v1497
        %v1525 = vpop.f32.mrf.mxu0
        %v1526 = vadd.f32 0.0, %v1525
        %1527 = vmatmul.f32.gmra.mxu0 %v1500
        %v1528 = vpop.f32.mrf.mxu0
        %v1529 = vadd.f32 0.0, %v1528
        %1530 = vmatmul.f32.gmra.mxu0 %v1503
        %v1531 = vpop.f32.mrf.mxu0
        %v1532 = vadd.f32 0.0, %v1531
        %1533 = vdwg.mxu0
        %v1534 = vld [vmem:[%s6 + $0x8] sm:$0xff]
        %v1536 = vsel %vm870, %v1523, 0
        %v1539 = vsel %vm870, %v1526, 0
        %v1542 = vsel %vm870, %v1529, 0
        %v1545 = vsel %vm870, %v1532, 0
        %1547 = vmatpush.msra.mxu0 0.0
        %1548 = vmatpush.msra.mxu0 0.0
        %1549 = vmatpush.msra.mxu0 0.0
        %1550 = vmatpush.msra.mxu0 0.0
        %1551 = vmatpush.msra.mxu0 0.0
        %1552 = vmatpush.msra.mxu0 0.0
        %1553 = vmatpush.msra.mxu0 0.0
        %1554 = vmatpush.msra.mxu0 0.0
        %1555 = vmatpush.msra.mxu0 0.0
        %1556 = vmatpush.msra.mxu0 0.0
        %1557 = vmatpush.msra.mxu0 0.0
        %1558 = vmatpush.msra.mxu0 0.0
        %1559 = vmatpush.msra.mxu0 0.0
        %1560 = vmatpush.msra.mxu0 0.0
        %1561 = vmatpush.msra.mxu0 0.0
        %1562 = vmatpush.msra.mxu0 %v1534
        %1563 = vmatmul.f32.gmra.mxu0 %v1536
        %v1564 = vpop.f32.mrf.mxu0
        %v1565 = vadd.f32 0.0, %v1564
        %1566 = vmatmul.f32.gmra.mxu0 %v1539
        %v1567 = vpop.f32.mrf.mxu0
        %v1568 = vadd.f32 0.0, %v1567
        %1569 = vmatmul.f32.gmra.mxu0 %v1542
        %v1570 = vpop.f32.mrf.mxu0
        %v1571 = vadd.f32 0.0, %v1570
        %1572 = vmatmul.f32.gmra.mxu0 %v1545
        %v1573 = vpop.f32.mrf.mxu0
        %v1574 = vadd.f32 0.0, %v1573
        %1575 = vdwg.mxu0
        %1577 = vset.pattern.permute.xlu0 0
        %1578 = vperm.xlu0 %1577, %v739
        %v1579 = vpop.permute.xlu0 %1578
        %1582 = vset.pattern.permute.xlu0 0
        %1583 = vperm.xlu0 %1582, %v754
        %v1584 = vpop.permute.xlu0 %1583
        %1587 = vset.pattern.permute.xlu0 0
        %1588 = vperm.xlu0 %1587, %v769
        %v1589 = vpop.permute.xlu0 %1588
        %1592 = vset.pattern.permute.xlu0 0
        %1593 = vperm.xlu0 %1592, %v784
        %v1594 = vpop.permute.xlu0 %1593
        %v1596 = vmul.f32 %v565, %v1579
        %v1597 = vmul.f32 %v566, %v1584
        %v1598 = vmul.f32 %v567, %v1589
        %v1599 = vmul.f32 %v568, %v1594
        %1604 = vrot.lane.b32.xlu0 %v1596, 112
        %v1605 = vpop.permute.xlu0 %1604
        %1606 = vrot.lane.b32.xlu0 %v1597, 112
        %v1607 = vpop.permute.xlu0 %1606
        %1608 = vrot.lane.b32.xlu0 %v1598, 112
        %v1609 = vpop.permute.xlu0 %1608
        %1610 = vrot.lane.b32.xlu0 %v1599, 112
        %v1611 = vpop.permute.xlu0 %1610
        %v1612 = vsel %vm870, %v1605, 0
        %v1614 = vsel %vm870, %v1607, 0
        %v1616 = vsel %vm870, %v1609, 0
        %v1618 = vsel %vm870, %v1611, 0
        %1620 = vmatpush.msra.mxu0 0.0
        %1621 = vmatpush.msra.mxu0 0.0
        %1622 = vmatpush.msra.mxu0 0.0
        %1623 = vmatpush.msra.mxu0 0.0
        %1624 = vmatpush.msra.mxu0 0.0
        %1625 = vmatpush.msra.mxu0 0.0
        %1626 = vmatpush.msra.mxu0 0.0
        %1627 = vmatpush.msra.mxu0 0.0
        %1628 = vmatpush.msra.mxu0 0.0
        %1629 = vmatpush.msra.mxu0 0.0
        %1630 = vmatpush.msra.mxu0 0.0
        %1631 = vmatpush.msra.mxu0 0.0
        %1632 = vmatpush.msra.mxu0 0.0
        %1633 = vmatpush.msra.mxu0 0.0
        %1634 = vmatpush.msra.mxu0 0.0
        %1635 = vmatpush.msra.mxu0 %v869
        %1636 = vmatmul.f32.gmra.mxu0 %v1612
        %v1637 = vpop.f32.mrf.mxu0
        %v1638 = vadd.f32 0.0, %v1637
        %1639 = vmatmul.f32.gmra.mxu0 %v1614
        %v1640 = vpop.f32.mrf.mxu0
        %v1641 = vadd.f32 0.0, %v1640
        %1642 = vmatmul.f32.gmra.mxu0 %v1616
        %v1643 = vpop.f32.mrf.mxu0
        %v1644 = vadd.f32 0.0, %v1643
        %1645 = vmatmul.f32.gmra.mxu0 %v1618
        %v1646 = vpop.f32.mrf.mxu0
        %v1647 = vadd.f32 0.0, %v1646
        %1648 = vdwg.mxu0
        %1649 = vmatpush.msra.mxu0 0.0
        %1650 = vmatpush.msra.mxu0 0.0
        %1651 = vmatpush.msra.mxu0 0.0
        %1652 = vmatpush.msra.mxu0 0.0
        %1653 = vmatpush.msra.mxu0 0.0
        %1654 = vmatpush.msra.mxu0 0.0
        %1655 = vmatpush.msra.mxu0 0.0
        %1656 = vmatpush.msra.mxu0 0.0
        %1657 = vmatpush.msra.mxu0 0.0
        %1658 = vmatpush.msra.mxu0 0.0
        %1659 = vmatpush.msra.mxu0 0.0
        %1660 = vmatpush.msra.mxu0 0.0
        %1661 = vmatpush.msra.mxu0 0.0
        %1662 = vmatpush.msra.mxu0 0.0
        %1663 = vmatpush.msra.mxu0 0.0
        %1664 = vmatpush.msra.mxu0 %v912
        %1665 = vmatmul.f32.gmra.mxu0 %v1612
        %v1666 = vpop.f32.mrf.mxu0
        %v1667 = vadd.f32 0.0, %v1666
        %1668 = vmatmul.f32.gmra.mxu0 %v1614
        %v1669 = vpop.f32.mrf.mxu0
        %v1670 = vadd.f32 0.0, %v1669
        %1671 = vmatmul.f32.gmra.mxu0 %v1616
        %v1672 = vpop.f32.mrf.mxu0
        %v1673 = vadd.f32 0.0, %v1672
        %1674 = vmatmul.f32.gmra.mxu0 %v1618
        %v1675 = vpop.f32.mrf.mxu0
        %v1676 = vadd.f32 0.0, %v1675
        %1677 = vdwg.mxu0
        %1678 = vmatpush.msra.mxu0 0.0
        %1679 = vmatpush.msra.mxu0 0.0
        %1680 = vmatpush.msra.mxu0 0.0
        %1681 = vmatpush.msra.mxu0 0.0
        %1682 = vmatpush.msra.mxu0 0.0
        %1683 = vmatpush.msra.mxu0 0.0
        %1684 = vmatpush.msra.mxu0 0.0
        %1685 = vmatpush.msra.mxu0 0.0
        %1686 = vmatpush.msra.mxu0 0.0
        %1687 = vmatpush.msra.mxu0 0.0
        %1688 = vmatpush.msra.mxu0 0.0
        %1689 = vmatpush.msra.mxu0 0.0
        %1690 = vmatpush.msra.mxu0 0.0
        %1691 = vmatpush.msra.mxu0 0.0
        %1692 = vmatpush.msra.mxu0 0.0
        %1693 = vmatpush.msra.mxu0 %v942
        %1694 = vmatmul.f32.gmra.mxu0 %v1612
        %v1695 = vpop.f32.mrf.mxu0
        %v1696 = vadd.f32 0.0, %v1695
        %1697 = vmatmul.f32.gmra.mxu0 %v1614
        %v1698 = vpop.f32.mrf.mxu0
        %v1699 = vadd.f32 0.0, %v1698
        %1700 = vmatmul.f32.gmra.mxu0 %v1616
        %v1701 = vpop.f32.mrf.mxu0
        %v1702 = vadd.f32 0.0, %v1701
        %1703 = vmatmul.f32.gmra.mxu0 %v1618
        %v1704 = vpop.f32.mrf.mxu0
        %v1705 = vadd.f32 0.0, %v1704
        %1706 = vdwg.mxu0
        %v1708 = vsel %vm870, %v1638, 0
        %v1711 = vsel %vm870, %v1641, 0
        %v1714 = vsel %vm870, %v1644, 0
        %v1717 = vsel %vm870, %v1647, 0
        %v1720 = vsel %vm870, %v1667, 0
        %v1723 = vsel %vm870, %v1670, 0
        %v1726 = vsel %vm870, %v1673, 0
        %v1729 = vsel %vm870, %v1676, 0
        %1731 = vmatpush.xpose.msra.mxu0 0.0
        %1732 = vmatpush.xpose.msra.mxu0 0.0
        %1733 = vmatpush.xpose.msra.mxu0 0.0
        %1734 = vmatpush.xpose.msra.mxu0 0.0
        %1735 = vmatpush.xpose.msra.mxu0 0.0
        %1736 = vmatpush.xpose.msra.mxu0 0.0
        %1737 = vmatpush.xpose.msra.mxu0 0.0
        %1738 = vmatpush.xpose.msra.mxu0 0.0
        %1739 = vmatpush.xpose.msra.mxu0 0.0
        %1740 = vmatpush.xpose.msra.mxu0 0.0
        %1741 = vmatpush.xpose.msra.mxu0 0.0
        %1742 = vmatpush.xpose.msra.mxu0 0.0
        %1743 = vmatpush.xpose.msra.mxu0 %v1729
        %1744 = vmatpush.xpose.msra.mxu0 %v1726
        %1745 = vmatpush.xpose.msra.mxu0 %v1723
        %1746 = vmatpush.xpose.msra.mxu0 %v1720
        %1747 = vmatmul.f32.gmra.mxu0 %v1708
        %v1748 = vpop.f32.mrf.mxu0
        %v1749 = vadd.f32 0.0, %v1748
        %1750 = vmatmul.f32.gmra.mxu0 %v1711
        %v1751 = vpop.f32.mrf.mxu0
        %v1752 = vadd.f32 0.0, %v1751
        %1753 = vmatmul.f32.gmra.mxu0 %v1714
        %v1754 = vpop.f32.mrf.mxu0
        %v1755 = vadd.f32 0.0, %v1754
        %1756 = vmatmul.f32.gmra.mxu0 %v1717
        %v1757 = vpop.f32.mrf.mxu0
        %v1758 = vadd.f32 0.0, %v1757
        %1759 = vdwg.mxu0
        %v1760 = vmul.f32 %v1749, 0.35355338
        %v1761 = vmul.f32 %v1752, 0.35355338
        %v1762 = vmul.f32 %v1755, 0.35355338
        %v1763 = vmul.f32 %v1758, 0.35355338
        %v1764 = vsel %vm1029, %v1760, -inf
        %1765 = vmax.xlane.f32.xlu0 %v1764
        %v1766 = vpop.xlane.xlu0 %1765
        %v1767 = vsel %vm1029, %v1761, -inf
        %1768 = vmax.xlane.f32.xlu0 %v1767
        %v1769 = vpop.xlane.xlu0 %1768
        %v1770 = vsel %vm1029, %v1762, -inf
        %1771 = vmax.xlane.f32.xlu0 %v1770
        %v1772 = vpop.xlane.xlu0 %1771
        %v1773 = vsel %vm1029, %v1763, -inf
        %1774 = vmax.xlane.f32.xlu0 %v1773
        %v1775 = vpop.xlane.xlu0 %1774
        %v1776 = vsub.f32 %v1760, %v1766
        %v1777 = vsub.f32 %v1761, %v1769
        %v1778 = vsub.f32 %v1762, %v1772
        %v1779 = vsub.f32 %v1763, %v1775
        %v1780 = vmul.f32 %v1776, 1.442695
        %v1781 = vpow.pop %v1780
        %v1782 = vmul.f32 %v1777, 1.442695
        %v1783 = vpow.pop %v1782
        %v1784 = vmul.f32 %v1778, 1.442695
        %v1785 = vpow.pop %v1784
        %v1786 = vmul.f32 %v1779, 1.442695
        %v1787 = vpow.pop %v1786
        %v1788 = vsel %vm1029, %v1781, 0.0
        %1789 = vadd.xlane.f32.xlu0 %v1788
        %v1790 = vpop.xlane.xlu0 %1789
        %v1791 = vsel %vm1029, %v1783, 0.0
        %1792 = vadd.xlane.f32.xlu0 %v1791
        %v1793 = vpop.xlane.xlu0 %1792
        %v1794 = vsel %vm1029, %v1785, 0.0
        %1795 = vadd.xlane.f32.xlu0 %v1794
        %v1796 = vpop.xlane.xlu0 %1795
        %v1797 = vsel %vm1029, %v1787, 0.0
        %1798 = vadd.xlane.f32.xlu0 %v1797
        %v1799 = vpop.xlane.xlu0 %1798
        %v1800 = vrcp.pop %v1790
        %v1801 = vmul.f32 %v1790, %v1800
        %v1802 = vsub.f32 1.0, %v1801
        %v1803 = vmul.f32 %v1800, %v1802
        %v1804 = vadd.f32 %v1800, %v1803
        %vm1805 = vweird.f32 %v1790
        %vm1806 = vweird.f32 %v1800
        %vm1807 = vmor %vm1805, %vm1806
        %v1808 = vsel %vm1807, %v1800, %v1804
        %v1809 = vand.u32 2147483647, %v1790
        %vm1810 = vcmp.eq.f32.partialorder %v1809, 8.507059e+37
        %v1811 = vand.u32 %v1790, 2147483648
        %v1812 = vor.u32 1.1754944e-38, %v1811
        %v1813 = vsel %vm1810, %v1812, %v1808
        %v1814 = vmul.f32 %v1781, %v1813
        %v1815 = vrcp.pop %v1793
        %v1816 = vmul.f32 %v1793, %v1815
        %v1817 = vsub.f32 1.0, %v1816
        %v1818 = vmul.f32 %v1815, %v1817
        %v1819 = vadd.f32 %v1815, %v1818
        %vm1820 = vweird.f32 %v1793
        %vm1821 = vweird.f32 %v1815
        %vm1822 = vmor %vm1820, %vm1821
        %v1823 = vsel %vm1822, %v1815, %v1819
        %v1824 = vand.u32 2147483647, %v1793
        %vm1825 = vcmp.eq.f32.partialorder %v1824, 8.507059e+37
        %v1826 = vand.u32 %v1793, 2147483648
        %v1827 = vor.u32 1.1754944e-38, %v1826
        %v1828 = vsel %vm1825, %v1827, %v1823
        %v1829 = vmul.f32 %v1783, %v1828
        %v1830 = vrcp.pop %v1796
        %v1831 = vmul.f32 %v1796, %v1830
        %v1832 = vsub.f32 1.0, %v1831
        %v1833 = vmul.f32 %v1830, %v1832
        %v1834 = vadd.f32 %v1830, %v1833
        %vm1835 = vweird.f32 %v1796
        %vm1836 = vweird.f32 %v1830
        %vm1837 = vmor %vm1835, %vm1836
        %v1838 = vsel %vm1837, %v1830, %v1834
        %v1839 = vand.u32 2147483647, %v1796
        %vm1840 = vcmp.eq.f32.partialorder %v1839, 8.507059e+37
        %v1841 = vand.u32 %v1796, 2147483648
        %v1842 = vor.u32 1.1754944e-38, %v1841
        %v1843 = vsel %vm1840, %v1842, %v1838
        %v1844 = vmul.f32 %v1785, %v1843
        %v1845 = vrcp.pop %v1799
        %v1846 = vmul.f32 %v1799, %v1845
        %v1847 = vsub.f32 1.0, %v1846
        %v1848 = vmul.f32 %v1845, %v1847
        %v1849 = vadd.f32 %v1845, %v1848
        %vm1850 = vweird.f32 %v1799
        %vm1851 = vweird.f32 %v1845
        %vm1852 = vmor %vm1850, %vm1851
        %v1853 = vsel %vm1852, %v1845, %v1849
        %v1854 = vand.u32 2147483647, %v1799
        %vm1855 = vcmp.eq.f32.partialorder %v1854, 8.507059e+37
        %v1856 = vand.u32 %v1799, 2147483648
        %v1857 = vor.u32 1.1754944e-38, %v1856
        %v1858 = vsel %vm1855, %v1857, %v1853
        %v1859 = vmul.f32 %v1787, %v1858
        %v1861 = vsel %vm1029, %v1814, 0
        %v1864 = vsel %vm1029, %v1829, 0
        %v1867 = vsel %vm1029, %v1844, 0
        %v1870 = vsel %vm1029, %v1859, 0
        %1872 = vmatpush.msra.mxu0 0.0
        %1873 = vmatpush.msra.mxu0 0.0
        %1874 = vmatpush.msra.mxu0 0.0
        %1875 = vmatpush.msra.mxu0 0.0
        %1876 = vmatpush.msra.mxu0 0.0
        %1877 = vmatpush.msra.mxu0 0.0
        %1878 = vmatpush.msra.mxu0 0.0
        %1879 = vmatpush.msra.mxu0 0.0
        %1880 = vmatpush.msra.mxu0 0.0
        %1881 = vmatpush.msra.mxu0 0.0
        %1882 = vmatpush.msra.mxu0 0.0
        %1883 = vmatpush.msra.mxu0 0.0
        %1884 = vmatpush.msra.mxu0 %v1705
        %1885 = vmatpush.msra.mxu0 %v1702
        %1886 = vmatpush.msra.mxu0 %v1699
        %1887 = vmatpush.msra.mxu0 %v1696
        %1888 = vmatmul.f32.gmra.mxu0 %v1861
        %v1889 = vpop.f32.mrf.mxu0
        %v1890 = vadd.f32 0.0, %v1889
        %1891 = vmatmul.f32.gmra.mxu0 %v1864
        %v1892 = vpop.f32.mrf.mxu0
        %v1893 = vadd.f32 0.0, %v1892
        %1894 = vmatmul.f32.gmra.mxu0 %v1867
        %v1895 = vpop.f32.mrf.mxu0
        %v1896 = vadd.f32 0.0, %v1895
        %1897 = vmatmul.f32.gmra.mxu0 %v1870
        %v1898 = vpop.f32.mrf.mxu0
        %v1899 = vadd.f32 0.0, %v1898
        %1900 = vdwg.mxu0
        %v1901 = vld [vmem:[%s6 + $0x10] sm:$0xff]
        %v1903 = vsel %vm870, %v1890, 0
        %v1906 = vsel %vm870, %v1893, 0
        %v1909 = vsel %vm870, %v1896, 0
        %v1912 = vsel %vm870, %v1899, 0
        %1914 = vmatpush.msra.mxu0 0.0
        %1915 = vmatpush.msra.mxu0 0.0
        %1916 = vmatpush.msra.mxu0 0.0
        %1917 = vmatpush.msra.mxu0 0.0
        %1918 = vmatpush.msra.mxu0 0.0
        %1919 = vmatpush.msra.mxu0 0.0
        %1920 = vmatpush.msra.mxu0 0.0
        %1921 = vmatpush.msra.mxu0 0.0
        %1922 = vmatpush.msra.mxu0 0.0
        %1923 = vmatpush.msra.mxu0 0.0
        %1924 = vmatpush.msra.mxu0 0.0
        %1925 = vmatpush.msra.mxu0 0.0
        %1926 = vmatpush.msra.mxu0 0.0
        %1927 = vmatpush.msra.mxu0 0.0
        %1928 = vmatpush.msra.mxu0 0.0
        %1929 = vmatpush.msra.mxu0 %v1901
        %1930 = vmatmul.f32.gmra.mxu0 %v1903
        %v1931 = vpop.f32.mrf.mxu0
        %v1932 = vadd.f32 0.0, %v1931
        %1933 = vmatmul.f32.gmra.mxu0 %v1906
        %v1934 = vpop.f32.mrf.mxu0
        %v1935 = vadd.f32 0.0, %v1934
        %1936 = vmatmul.f32.gmra.mxu0 %v1909
        %v1937 = vpop.f32.mrf.mxu0
        %v1938 = vadd.f32 0.0, %v1937
        %1939 = vmatmul.f32.gmra.mxu0 %v1912
        %v1940 = vpop.f32.mrf.mxu0
        %v1941 = vadd.f32 0.0, %v1940
        %1942 = vdwg.mxu0
        %1944 = vset.pattern.permute.xlu0 0
        %1945 = vperm.xlu0 %1944, %v799
        %v1946 = vpop.permute.xlu0 %1945
        %1949 = vset.pattern.permute.xlu0 0
        %1950 = vperm.xlu0 %1949, %v814
        %v1951 = vpop.permute.xlu0 %1950
        %1954 = vset.pattern.permute.xlu0 0
        %1955 = vperm.xlu0 %1954, %v829
        %v1956 = vpop.permute.xlu0 %1955
        %1959 = vset.pattern.permute.xlu0 0
        %1960 = vperm.xlu0 %1959, %v844
        %v1961 = vpop.permute.xlu0 %1960
        %v1963 = vmul.f32 %v569, %v1946
        %v1964 = vmul.f32 %v570, %v1951
        %v1965 = vmul.f32 %v571, %v1956
        %v1966 = vmul.f32 %v572, %v1961
        %1971 = vrot.lane.b32.xlu0 %v1963, 104
        %v1972 = vpop.permute.xlu0 %1971
        %1973 = vrot.lane.b32.xlu0 %v1964, 104
        %v1974 = vpop.permute.xlu0 %1973
        %1975 = vrot.lane.b32.xlu0 %v1965, 104
        %v1976 = vpop.permute.xlu0 %1975
        %1977 = vrot.lane.b32.xlu0 %v1966, 104
        %v1978 = vpop.permute.xlu0 %1977
        %v1979 = vsel %vm870, %v1972, 0
        %v1981 = vsel %vm870, %v1974, 0
        %v1983 = vsel %vm870, %v1976, 0
        %v1985 = vsel %vm870, %v1978, 0
        %1987 = vmatpush.msra.mxu0 0.0
        %1988 = vmatpush.msra.mxu0 0.0
        %1989 = vmatpush.msra.mxu0 0.0
        %1990 = vmatpush.msra.mxu0 0.0
        %1991 = vmatpush.msra.mxu0 0.0
        %1992 = vmatpush.msra.mxu0 0.0
        %1993 = vmatpush.msra.mxu0 0.0
        %1994 = vmatpush.msra.mxu0 0.0
        %1995 = vmatpush.msra.mxu0 0.0
        %1996 = vmatpush.msra.mxu0 0.0
        %1997 = vmatpush.msra.mxu0 0.0
        %1998 = vmatpush.msra.mxu0 0.0
        %1999 = vmatpush.msra.mxu0 0.0
        %2000 = vmatpush.msra.mxu0 0.0
        %2001 = vmatpush.msra.mxu0 0.0
        %2002 = vmatpush.msra.mxu0 %v869
        %2003 = vmatmul.f32.gmra.mxu0 %v1979
        %v2004 = vpop.f32.mrf.mxu0
        %v2005 = vadd.f32 0.0, %v2004
        %2006 = vmatmul.f32.gmra.mxu0 %v1981
        %v2007 = vpop.f32.mrf.mxu0
        %v2008 = vadd.f32 0.0, %v2007
        %2009 = vmatmul.f32.gmra.mxu0 %v1983
        %v2010 = vpop.f32.mrf.mxu0
        %v2011 = vadd.f32 0.0, %v2010
        %2012 = vmatmul.f32.gmra.mxu0 %v1985
        %v2013 = vpop.f32.mrf.mxu0
        %v2014 = vadd.f32 0.0, %v2013
        %2015 = vdwg.mxu0
        %2016 = vmatpush.msra.mxu0 0.0
        %2017 = vmatpush.msra.mxu0 0.0
        %2018 = vmatpush.msra.mxu0 0.0
        %2019 = vmatpush.msra.mxu0 0.0
        %2020 = vmatpush.msra.mxu0 0.0
        %2021 = vmatpush.msra.mxu0 0.0
        %2022 = vmatpush.msra.mxu0 0.0
        %2023 = vmatpush.msra.mxu0 0.0
        %2024 = vmatpush.msra.mxu0 0.0
        %2025 = vmatpush.msra.mxu0 0.0
        %2026 = vmatpush.msra.mxu0 0.0
        %2027 = vmatpush.msra.mxu0 0.0
        %2028 = vmatpush.msra.mxu0 0.0
        %2029 = vmatpush.msra.mxu0 0.0
        %2030 = vmatpush.msra.mxu0 0.0
        %2031 = vmatpush.msra.mxu0 %v912
        %2032 = vmatmul.f32.gmra.mxu0 %v1979
        %v2033 = vpop.f32.mrf.mxu0
        %v2034 = vadd.f32 0.0, %v2033
        %2035 = vmatmul.f32.gmra.mxu0 %v1981
        %v2036 = vpop.f32.mrf.mxu0
        %v2037 = vadd.f32 0.0, %v2036
        %2038 = vmatmul.f32.gmra.mxu0 %v1983
        %v2039 = vpop.f32.mrf.mxu0
        %v2040 = vadd.f32 0.0, %v2039
        %2041 = vmatmul.f32.gmra.mxu0 %v1985
        %v2042 = vpop.f32.mrf.mxu0
        %v2043 = vadd.f32 0.0, %v2042
        %2044 = vdwg.mxu0
        %2045 = vmatpush.msra.mxu0 0.0
        %2046 = vmatpush.msra.mxu0 0.0
        %2047 = vmatpush.msra.mxu0 0.0
        %2048 = vmatpush.msra.mxu0 0.0
        %2049 = vmatpush.msra.mxu0 0.0
        %2050 = vmatpush.msra.mxu0 0.0
        %2051 = vmatpush.msra.mxu0 0.0
        %2052 = vmatpush.msra.mxu0 0.0
        %2053 = vmatpush.msra.mxu0 0.0
        %2054 = vmatpush.msra.mxu0 0.0
        %2055 = vmatpush.msra.mxu0 0.0
        %2056 = vmatpush.msra.mxu0 0.0
        %2057 = vmatpush.msra.mxu0 0.0
        %2058 = vmatpush.msra.mxu0 0.0
        %2059 = vmatpush.msra.mxu0 0.0
        %2060 = vmatpush.msra.mxu0 %v942
        %2061 = vmatmul.f32.gmra.mxu0 %v1979
        %v2062 = vpop.f32.mrf.mxu0
        %v2063 = vadd.f32 0.0, %v2062
        %2064 = vmatmul.f32.gmra.mxu0 %v1981
        %v2065 = vpop.f32.mrf.mxu0
        %v2066 = vadd.f32 0.0, %v2065
        %2067 = vmatmul.f32.gmra.mxu0 %v1983
        %v2068 = vpop.f32.mrf.mxu0
        %v2069 = vadd.f32 0.0, %v2068
        %2070 = vmatmul.f32.gmra.mxu0 %v1985
        %v2071 = vpop.f32.mrf.mxu0
        %v2072 = vadd.f32 0.0, %v2071
        %2073 = vdwg.mxu0
        %v2075 = vsel %vm870, %v2005, 0
        %v2078 = vsel %vm870, %v2008, 0
        %v2081 = vsel %vm870, %v2011, 0
        %v2084 = vsel %vm870, %v2014, 0
        %v2087 = vsel %vm870, %v2034, 0
        %v2090 = vsel %vm870, %v2037, 0
        %v2093 = vsel %vm870, %v2040, 0
        %v2096 = vsel %vm870, %v2043, 0
        %2098 = vmatpush.xpose.msra.mxu0 0.0
        %2099 = vmatpush.xpose.msra.mxu0 0.0
        %2100 = vmatpush.xpose.msra.mxu0 0.0
        %2101 = vmatpush.xpose.msra.mxu0 0.0
        %2102 = vmatpush.xpose.msra.mxu0 0.0
        %2103 = vmatpush.xpose.msra.mxu0 0.0
        %2104 = vmatpush.xpose.msra.mxu0 0.0
        %2105 = vmatpush.xpose.msra.mxu0 0.0
        %2106 = vmatpush.xpose.msra.mxu0 0.0
        %2107 = vmatpush.xpose.msra.mxu0 0.0
        %2108 = vmatpush.xpose.msra.mxu0 0.0
        %2109 = vmatpush.xpose.msra.mxu0 0.0
        %2110 = vmatpush.xpose.msra.mxu0 %v2096
        %2111 = vmatpush.xpose.msra.mxu0 %v2093
        %2112 = vmatpush.xpose.msra.mxu0 %v2090
        %2113 = vmatpush.xpose.msra.mxu0 %v2087
        %2114 = vmatmul.f32.gmra.mxu0 %v2075
        %v2115 = vpop.f32.mrf.mxu0
        %v2116 = vadd.f32 0.0, %v2115
        %2117 = vmatmul.f32.gmra.mxu0 %v2078
        %v2118 = vpop.f32.mrf.mxu0
        %v2119 = vadd.f32 0.0, %v2118
        %2120 = vmatmul.f32.gmra.mxu0 %v2081
        %v2121 = vpop.f32.mrf.mxu0
        %v2122 = vadd.f32 0.0, %v2121
        %2123 = vmatmul.f32.gmra.mxu0 %v2084
        %v2124 = vpop.f32.mrf.mxu0
        %v2125 = vadd.f32 0.0, %v2124
        %2126 = vdwg.mxu0
        %v2127 = vmul.f32 %v2116, 0.35355338
        %v2128 = vmul.f32 %v2119, 0.35355338
        %v2129 = vmul.f32 %v2122, 0.35355338
        %v2130 = vmul.f32 %v2125, 0.35355338
        %v2131 = vsel %vm1029, %v2127, -inf
        %2132 = vmax.xlane.f32.xlu0 %v2131
        %v2133 = vpop.xlane.xlu0 %2132
        %v2134 = vsel %vm1029, %v2128, -inf
        %2135 = vmax.xlane.f32.xlu0 %v2134
        %v2136 = vpop.xlane.xlu0 %2135
        %v2137 = vsel %vm1029, %v2129, -inf
        %2138 = vmax.xlane.f32.xlu0 %v2137
        %v2139 = vpop.xlane.xlu0 %2138
        %v2140 = vsel %vm1029, %v2130, -inf
        %2141 = vmax.xlane.f32.xlu0 %v2140
        %v2142 = vpop.xlane.xlu0 %2141
        %v2143 = vsub.f32 %v2127, %v2133
        %v2144 = vsub.f32 %v2128, %v2136
        %v2145 = vsub.f32 %v2129, %v2139
        %v2146 = vsub.f32 %v2130, %v2142
        %v2147 = vmul.f32 %v2143, 1.442695
        %v2148 = vpow.pop %v2147
        %v2149 = vmul.f32 %v2144, 1.442695
        %v2150 = vpow.pop %v2149
        %v2151 = vmul.f32 %v2145, 1.442695
        %v2152 = vpow.pop %v2151
        %v2153 = vmul.f32 %v2146, 1.442695
        %v2154 = vpow.pop %v2153
        %v2155 = vsel %vm1029, %v2148, 0.0
        %2156 = vadd.xlane.f32.xlu0 %v2155
        %v2157 = vpop.xlane.xlu0 %2156
        %v2158 = vsel %vm1029, %v2150, 0.0
        %2159 = vadd.xlane.f32.xlu0 %v2158
        %v2160 = vpop.xlane.xlu0 %2159
        %v2161 = vsel %vm1029, %v2152, 0.0
        %2162 = vadd.xlane.f32.xlu0 %v2161
        %v2163 = vpop.xlane.xlu0 %2162
        %v2164 = vsel %vm1029, %v2154, 0.0
        %2165 = vadd.xlane.f32.xlu0 %v2164
        %v2166 = vpop.xlane.xlu0 %2165
        %v2167 = vrcp.pop %v2157
        %v2168 = vmul.f32 %v2157, %v2167
        %v2169 = vsub.f32 1.0, %v2168
        %v2170 = vmul.f32 %v2167, %v2169
        %v2171 = vadd.f32 %v2167, %v2170
        %vm2172 = vweird.f32 %v2157
        %vm2173 = vweird.f32 %v2167
        %vm2174 = vmor %vm2172, %vm2173
        %v2175 = vsel %vm2174, %v2167, %v2171
        %v2176 = vand.u32 2147483647, %v2157
        %vm2177 = vcmp.eq.f32.partialorder %v2176, 8.507059e+37
        %v2178 = vand.u32 %v2157, 2147483648
        %v2179 = vor.u32 1.1754944e-38, %v2178
        %v2180 = vsel %vm2177, %v2179, %v2175
        %v2181 = vmul.f32 %v2148, %v2180
        %v2182 = vrcp.pop %v2160
        %v2183 = vmul.f32 %v2160, %v2182
        %v2184 = vsub.f32 1.0, %v2183
        %v2185 = vmul.f32 %v2182, %v2184
        %v2186 = vadd.f32 %v2182, %v2185
        %vm2187 = vweird.f32 %v2160
        %vm2188 = vweird.f32 %v2182
        %vm2189 = vmor %vm2187, %vm2188
        %v2190 = vsel %vm2189, %v2182, %v2186
        %v2191 = vand.u32 2147483647, %v2160
        %vm2192 = vcmp.eq.f32.partialorder %v2191, 8.507059e+37
        %v2193 = vand.u32 %v2160, 2147483648
        %v2194 = vor.u32 1.1754944e-38, %v2193
        %v2195 = vsel %vm2192, %v2194, %v2190
        %v2196 = vmul.f32 %v2150, %v2195
        %v2197 = vrcp.pop %v2163
        %v2198 = vmul.f32 %v2163, %v2197
        %v2199 = vsub.f32 1.0, %v2198
        %v2200 = vmul.f32 %v2197, %v2199
        %v2201 = vadd.f32 %v2197, %v2200
        %vm2202 = vweird.f32 %v2163
        %vm2203 = vweird.f32 %v2197
        %vm2204 = vmor %vm2202, %vm2203
        %v2205 = vsel %vm2204, %v2197, %v2201
        %v2206 = vand.u32 2147483647, %v2163
        %vm2207 = vcmp.eq.f32.partialorder %v2206, 8.507059e+37
        %v2208 = vand.u32 %v2163, 2147483648
        %v2209 = vor.u32 1.1754944e-38, %v2208
        %v2210 = vsel %vm2207, %v2209, %v2205
        %v2211 = vmul.f32 %v2152, %v2210
        %v2212 = vrcp.pop %v2166
        %v2213 = vmul.f32 %v2166, %v2212
        %v2214 = vsub.f32 1.0, %v2213
        %v2215 = vmul.f32 %v2212, %v2214
        %v2216 = vadd.f32 %v2212, %v2215
        %vm2217 = vweird.f32 %v2166
        %vm2218 = vweird.f32 %v2212
        %vm2219 = vmor %vm2217, %vm2218
        %v2220 = vsel %vm2219, %v2212, %v2216
        %v2221 = vand.u32 2147483647, %v2166
        %vm2222 = vcmp.eq.f32.partialorder %v2221, 8.507059e+37
        %v2223 = vand.u32 %v2166, 2147483648
        %v2224 = vor.u32 1.1754944e-38, %v2223
        %v2225 = vsel %vm2222, %v2224, %v2220
        %v2226 = vmul.f32 %v2154, %v2225
        %v2228 = vsel %vm1029, %v2181, 0
        %v2231 = vsel %vm1029, %v2196, 0
        %v2234 = vsel %vm1029, %v2211, 0
        %v2237 = vsel %vm1029, %v2226, 0
        %2239 = vmatpush.msra.mxu0 0.0
        %2240 = vmatpush.msra.mxu0 0.0
        %2241 = vmatpush.msra.mxu0 0.0
        %2242 = vmatpush.msra.mxu0 0.0
        %2243 = vmatpush.msra.mxu0 0.0
        %2244 = vmatpush.msra.mxu0 0.0
        %2245 = vmatpush.msra.mxu0 0.0
        %2246 = vmatpush.msra.mxu0 0.0
        %2247 = vmatpush.msra.mxu0 0.0
        %2248 = vmatpush.msra.mxu0 0.0
        %2249 = vmatpush.msra.mxu0 0.0
        %2250 = vmatpush.msra.mxu0 0.0
        %2251 = vmatpush.msra.mxu0 %v2072
        %2252 = vmatpush.msra.mxu0 %v2069
        %2253 = vmatpush.msra.mxu0 %v2066
        %2254 = vmatpush.msra.mxu0 %v2063
        %2255 = vmatmul.f32.gmra.mxu0 %v2228
        %v2256 = vpop.f32.mrf.mxu0
        %v2257 = vadd.f32 0.0, %v2256
        %2258 = vmatmul.f32.gmra.mxu0 %v2231
        %v2259 = vpop.f32.mrf.mxu0
        %v2260 = vadd.f32 0.0, %v2259
        %2261 = vmatmul.f32.gmra.mxu0 %v2234
        %v2262 = vpop.f32.mrf.mxu0
        %v2263 = vadd.f32 0.0, %v2262
        %2264 = vmatmul.f32.gmra.mxu0 %v2237
        %v2265 = vpop.f32.mrf.mxu0
        %v2266 = vadd.f32 0.0, %v2265
        %2267 = vdwg.mxu0
        %v2268 = vld [vmem:[%s6 + $0x18] sm:$0xff]
        %v2270 = vsel %vm870, %v2257, 0
        %v2273 = vsel %vm870, %v2260, 0
        %v2276 = vsel %vm870, %v2263, 0
        %v2279 = vsel %vm870, %v2266, 0
        %2281 = vmatpush.msra.mxu0 0.0
        %2282 = vmatpush.msra.mxu0 0.0
        %2283 = vmatpush.msra.mxu0 0.0
        %2284 = vmatpush.msra.mxu0 0.0
        %2285 = vmatpush.msra.mxu0 0.0
        %2286 = vmatpush.msra.mxu0 0.0
        %2287 = vmatpush.msra.mxu0 0.0
        %2288 = vmatpush.msra.mxu0 0.0
        %2289 = vmatpush.msra.mxu0 0.0
        %2290 = vmatpush.msra.mxu0 0.0
        %2291 = vmatpush.msra.mxu0 0.0
        %2292 = vmatpush.msra.mxu0 0.0
        %2293 = vmatpush.msra.mxu0 0.0
        %2294 = vmatpush.msra.mxu0 0.0
        %2295 = vmatpush.msra.mxu0 0.0
        %2296 = vmatpush.msra.mxu0 %v2268
        %2297 = vmatmul.f32.gmra.mxu0 %v2270
        %v2298 = vpop.f32.mrf.mxu0
        %v2299 = vadd.f32 0.0, %v2298
        %2300 = vmatmul.f32.gmra.mxu0 %v2273
        %v2301 = vpop.f32.mrf.mxu0
        %v2302 = vadd.f32 0.0, %v2301
        %2303 = vmatmul.f32.gmra.mxu0 %v2276
        %v2304 = vpop.f32.mrf.mxu0
        %v2305 = vadd.f32 0.0, %v2304
        %2306 = vmatmul.f32.gmra.mxu0 %v2279
        %v2307 = vpop.f32.mrf.mxu0
        %v2308 = vadd.f32 0.0, %v2307
        %2309 = vdwg.mxu0
        %v2310 = vpack.c.bf16 %v1198, %v1198
        %v2311 = vpack.c.bf16 %v1201, %v1201
        %v2312 = vpack.c.bf16 %v1204, %v1204
        %v2313 = vpack.c.bf16 %v1207, %v1207
        %v2314 = vpack.c.bf16 %v1565, %v1565
        %v2315 = vpack.c.bf16 %v1568, %v1568
        %v2316 = vpack.c.bf16 %v1571, %v1571
        %v2317 = vpack.c.bf16 %v1574, %v1574
        %v2318 = vpack.c.bf16 %v1932, %v1932
        %v2319 = vpack.c.bf16 %v1935, %v1935
        %v2320 = vpack.c.bf16 %v1938, %v1938
        %v2321 = vpack.c.bf16 %v1941, %v1941
        %v2322 = vpack.c.bf16 %v2299, %v2299
        %v2323 = vpack.c.bf16 %v2302, %v2302
        %v2324 = vpack.c.bf16 %v2305, %v2305
        %v2325 = vpack.c.bf16 %v2308, %v2308
        %vm2326 = vcmask 257024
        %2327 = vst.msk [vmem:[#allocation2] sm:$0xf] %vm2326, %v2310
        %2328 = vst.msk [vmem:[#allocation2 + $0x4] sm:$0xf] %vm2326, %v2311
        %2329 = vst.msk [vmem:[#allocation2 + $0x8] sm:$0xf] %vm2326, %v2312
        %2330 = vst.msk [vmem:[#allocation2 + $0xc] sm:$0xf] %vm2326, %v2313
        %2331 = vst.msk [vmem:[#allocation2 + $0x10] sm:$0xf] %vm2326, %v2314
        %2332 = vst.msk [vmem:[#allocation2 + $0x14] sm:$0xf] %vm2326, %v2315
        %2333 = vst.msk [vmem:[#allocation2 + $0x18] sm:$0xf] %vm2326, %v2316
        %2334 = vst.msk [vmem:[#allocation2 + $0x1c] sm:$0xf] %vm2326, %v2317
        %2335 = vst.msk [vmem:[#allocation2 + $0x20] sm:$0xf] %vm2326, %v2318
        %2336 = vst.msk [vmem:[#allocation2 + $0x24] sm:$0xf] %vm2326, %v2319
        %2337 = vst.msk [vmem:[#allocation2 + $0x28] sm:$0xf] %vm2326, %v2320
        %2338 = vst.msk [vmem:[#allocation2 + $0x2c] sm:$0xf] %vm2326, %v2321
        %2339 = vst.msk [vmem:[#allocation2 + $0x30] sm:$0xf] %vm2326, %v2322
        %2340 = vst.msk [vmem:[#allocation2 + $0x34] sm:$0xf] %vm2326, %v2323
        %2341 = vst.msk [vmem:[#allocation2 + $0x38] sm:$0xf] %vm2326, %v2324
        %2342 = vst.msk [vmem:[#allocation2 + $0x3c] sm:$0xf] %vm2326, %v2325
      $region68: #{transolver_erwin_block.7} parent=63 // pred_fallthru
        _
      %v2343 = vld [vmem:[%s511] sm:$0xf]
      %v2344 = vld [vmem:[%s511 + $0x4] sm:$0xf]
      %v2345 = vld [vmem:[%s511 + $0x8] sm:$0xf]
      %v2346 = vld [vmem:[%s511 + $0xc] sm:$0xf]
      %v2347 = vld [vmem:[%s511 + $0x10] sm:$0xf]
      %v2348 = vld [vmem:[%s511 + $0x14] sm:$0xf]
      %v2349 = vld [vmem:[%s511 + $0x18] sm:$0xf]
      %v2350 = vld [vmem:[%s511 + $0x1c] sm:$0xf]
      %v2351 = vld [vmem:[#allocation2] sm:$0xf]
      %v2352 = vld [vmem:[#allocation2 + $0x4] sm:$0xf]
      %v2353 = vld [vmem:[#allocation2 + $0x8] sm:$0xf]
      %v2354 = vld [vmem:[#allocation2 + $0xc] sm:$0xf]
      %v2355 = vld [vmem:[#allocation2 + $0x10] sm:$0xf]
      %v2356 = vld [vmem:[#allocation2 + $0x14] sm:$0xf]
      %v2357 = vld [vmem:[#allocation2 + $0x18] sm:$0xf]
      %v2358 = vld [vmem:[#allocation2 + $0x1c] sm:$0xf]
      %v2359 = vld [vmem:[#allocation2 + $0x20] sm:$0xf]
      %v2360 = vld [vmem:[#allocation2 + $0x24] sm:$0xf]
      %v2361 = vld [vmem:[#allocation2 + $0x28] sm:$0xf]
      %v2362 = vld [vmem:[#allocation2 + $0x2c] sm:$0xf]
      %v2363 = vld [vmem:[#allocation2 + $0x30] sm:$0xf]
      %v2364 = vld [vmem:[#allocation2 + $0x34] sm:$0xf]
      %v2365 = vld [vmem:[#allocation2 + $0x38] sm:$0xf]
      %v2366 = vld [vmem:[#allocation2 + $0x3c] sm:$0xf]
      %v2367 = vld [vmem:[%s7] sm:$0x1]
      %v2369 = vperm.slane %v2367, 0
      %v2379 = vunpack.c.l.b16 %v2343
      %v2380 = vunpack.c.l.b16 %v2344
      %v2381 = vunpack.c.l.b16 %v2345
      %v2382 = vunpack.c.l.b16 %v2346
      %v2383 = vunpack.c.l.b16 %v2347
      %v2384 = vunpack.c.l.b16 %v2348
      %v2385 = vunpack.c.l.b16 %v2349
      %v2386 = vunpack.c.l.b16 %v2350
      %v2387 = vpack.c.b16 %v2380, %v2379
      %v2388 = vpack.c.b16 %v2382, %v2381
      %v2389 = vpack.c.b16 %v2384, %v2383
      %v2390 = vpack.c.b16 %v2386, %v2385
      %v2411 = vunpack.c.l.b16 %v2351
      %v2412 = vunpack.c.l.b16 %v2352
      %v2413 = vunpack.c.l.b16 %v2353
      %v2414 = vunpack.c.l.b16 %v2354
      %v2415 = vunpack.c.l.b16 %v2355
      %v2416 = vunpack.c.l.b16 %v2356
      %v2417 = vunpack.c.l.b16 %v2357
      %v2418 = vunpack.c.l.b16 %v2358
      %v2419 = vunpack.c.l.b16 %v2359
      %v2420 = vunpack.c.l.b16 %v2360
      %v2421 = vunpack.c.l.b16 %v2361
      %v2422 = vunpack.c.l.b16 %v2362
      %v2423 = vunpack.c.l.b16 %v2363
      %v2424 = vunpack.c.l.b16 %v2364
      %v2425 = vunpack.c.l.b16 %v2365
      %v2426 = vunpack.c.l.b16 %v2366
      %v2427 = vpack.c.b16 %v2412, %v2411
      %v2428 = vpack.c.b16 %v2414, %v2413
      %v2429 = vpack.c.b16 %v2416, %v2415
      %v2430 = vpack.c.b16 %v2418, %v2417
      %v2431 = vpack.c.b16 %v2420, %v2419
      %v2432 = vpack.c.b16 %v2422, %v2421
      %v2433 = vpack.c.b16 %v2424, %v2423
      %v2434 = vpack.c.b16 %v2426, %v2425
      %2443 = vmatpush.bf16.msra.mxu0 %v2434
      %2444 = vmatpush.bf16.msra.mxu0 %v2433
      %2445 = vmatpush.bf16.msra.mxu0 %v2432
      %2446 = vmatpush.bf16.msra.mxu0 %v2431
      %2447 = vmatpush.bf16.msra.mxu0 %v2430
      %2448 = vmatpush.bf16.msra.mxu0 %v2429
      %2449 = vmatpush.bf16.msra.mxu0 %v2428
      %2450 = vmatpush.bf16.msra.mxu0 %v2427
      %2451 = vmatmul.bf16.gmra.mxu0 %v2387
      %v2452 = vpop.f32.mrf.mxu0
      %v2453 = vadd.f32 %v2369, %v2452
      %v2454 = vpop.f32.mrf.mxu0
      %v2455 = vadd.f32 %v2369, %v2454
      %2456 = vmatmul.bf16.gmra.mxu0 %v2388
      %v2457 = vpop.f32.mrf.mxu0
      %v2458 = vadd.f32 %v2369, %v2457
      %v2459 = vpop.f32.mrf.mxu0
      %v2460 = vadd.f32 %v2369, %v2459
      %2461 = vmatmul.bf16.gmra.mxu0 %v2389
      %v2462 = vpop.f32.mrf.mxu0
      %v2463 = vadd.f32 %v2369, %v2462
      %v2464 = vpop.f32.mrf.mxu0
      %v2465 = vadd.f32 %v2369, %v2464
      %2466 = vmatmul.bf16.gmra.mxu0 %v2390
      %v2467 = vpop.f32.mrf.mxu0
      %v2468 = vadd.f32 %v2369, %v2467
      %v2469 = vpop.f32.mrf.mxu0
      %v2470 = vadd.f32 %v2369, %v2469
      %2471 = vdwg.mxu0
      %v2472 = vld [vmem:[%s531] sm:$0xff]
      %v2473 = vld [vmem:[%s531 + $0x8] sm:$0xff]
      %v2474 = vld [vmem:[%s531 + $0x10] sm:$0xff]
      %v2475 = vld [vmem:[%s531 + $0x18] sm:$0xff]
      %v2476 = vld [vmem:[%s531 + $0x20] sm:$0xff]
      %v2477 = vld [vmem:[%s531 + $0x28] sm:$0xff]
      %v2478 = vld [vmem:[%s531 + $0x30] sm:$0xff]
      %v2479 = vld [vmem:[%s531 + $0x38] sm:$0xff]
      %v2480 = vadd.f32 %v2453, %v2472
      %v2481 = vadd.f32 %v2455, %v2473
      %v2482 = vadd.f32 %v2458, %v2474
      %v2483 = vadd.f32 %v2460, %v2475
      %v2484 = vadd.f32 %v2463, %v2476
      %v2485 = vadd.f32 %v2465, %v2477
      %v2486 = vadd.f32 %v2468, %v2478
      %v2487 = vadd.f32 %v2470, %v2479
      %vm2488 = vcmask 261120
      %2489 = vst.msk [vmem:[%s541] sm:$0xff] %vm2488, %v2480
      %2490 = vst.msk [vmem:[%s541 + $0x8] sm:$0xff] %vm2488, %v2481
      %2491 = vst.msk [vmem:[%s541 + $0x10] sm:$0xff] %vm2488, %v2482
      %2492 = vst.msk [vmem:[%s541 + $0x18] sm:$0xff] %vm2488, %v2483
      %2493 = vst.msk [vmem:[%s541 + $0x20] sm:$0xff] %vm2488, %v2484
      %2494 = vst.msk [vmem:[%s541 + $0x28] sm:$0xff] %vm2488, %v2485
      %2495 = vst.msk [vmem:[%s541 + $0x30] sm:$0xff] %vm2488, %v2486
      %2496 = vst.msk [vmem:[%s541 + $0x38] sm:$0xff] %vm2488, %v2487
      %v2497 = vsel %vm2488, %v2480, 0.0
      %2498 = vadd.xlane.f32.xlu0 %v2497
      %v2499 = vpop.xlane.xlu0 %2498
      %v2500 = vsel %vm2488, %v2481, 0.0
      %2501 = vadd.xlane.f32.xlu0 %v2500
      %v2502 = vpop.xlane.xlu0 %2501
      %v2503 = vsel %vm2488, %v2482, 0.0
      %2504 = vadd.xlane.f32.xlu0 %v2503
      %v2505 = vpop.xlane.xlu0 %2504
      %v2506 = vsel %vm2488, %v2483, 0.0
      %2507 = vadd.xlane.f32.xlu0 %v2506
      %v2508 = vpop.xlane.xlu0 %2507
      %v2509 = vsel %vm2488, %v2484, 0.0
      %2510 = vadd.xlane.f32.xlu0 %v2509
      %v2511 = vpop.xlane.xlu0 %2510
      %v2512 = vsel %vm2488, %v2485, 0.0
      %2513 = vadd.xlane.f32.xlu0 %v2512
      %v2514 = vpop.xlane.xlu0 %2513
      %v2515 = vsel %vm2488, %v2486, 0.0
      %2516 = vadd.xlane.f32.xlu0 %v2515
      %v2517 = vpop.xlane.xlu0 %2516
      %v2518 = vsel %vm2488, %v2487, 0.0
      %2519 = vadd.xlane.f32.xlu0 %v2518
      %v2520 = vpop.xlane.xlu0 %2519
      %v2521 = vrcp.pop 32.0
      %v2522 = vmul.f32 32.0, %v2521
      %v2523 = vsub.f32 1.0, %v2522
      %v2524 = vmul.f32 %v2521, %v2523
      %v2525 = vadd.f32 %v2521, %v2524
      %vm2526 = vweird.f32 %v2521
      %v2527 = vsel %vm2526, %v2521, %v2525
      %v2528 = vmul.f32 %v2499, %v2527
      %v2529 = vmul.f32 %v2502, %v2527
      %v2530 = vmul.f32 %v2505, %v2527
      %v2531 = vmul.f32 %v2508, %v2527
      %v2532 = vmul.f32 %v2511, %v2527
      %v2533 = vmul.f32 %v2514, %v2527
      %v2534 = vmul.f32 %v2517, %v2527
      %v2535 = vmul.f32 %v2520, %v2527
      %v2536 = vsub.f32 %v2480, %v2528
      %v2537 = vsub.f32 %v2481, %v2529
      %v2538 = vsub.f32 %v2482, %v2530
      %v2539 = vsub.f32 %v2483, %v2531
      %v2540 = vsub.f32 %v2484, %v2532
      %v2541 = vsub.f32 %v2485, %v2533
      %v2542 = vsub.f32 %v2486, %v2534
      %v2543 = vsub.f32 %v2487, %v2535
      %v2544 = vmul.f32 %v2536, %v2536
      %v2545 = vmul.f32 %v2537, %v2537
      %v2546 = vmul.f32 %v2538, %v2538
      %v2547 = vmul.f32 %v2539, %v2539
      %v2548 = vmul.f32 %v2540, %v2540
      %v2549 = vmul.f32 %v2541, %v2541
      %v2550 = vmul.f32 %v2542, %v2542
      %v2551 = vmul.f32 %v2543, %v2543
      %v2552 = vsel %vm2488, %v2544, 0.0
      %2553 = vadd.xlane.f32.xlu0 %v2552
      %v2554 = vpop.xlane.xlu0 %2553
      %v2555 = vsel %vm2488, %v2545, 0.0
      %2556 = vadd.xlane.f32.xlu0 %v2555
      %v2557 = vpop.xlane.xlu0 %2556
      %v2558 = vsel %vm2488, %v2546, 0.0
      %2559 = vadd.xlane.f32.xlu0 %v2558
      %v2560 = vpop.xlane.xlu0 %2559
      %v2561 = vsel %vm2488, %v2547, 0.0
      %2562 = vadd.xlane.f32.xlu0 %v2561
      %v2563 = vpop.xlane.xlu0 %2562
      %v2564 = vsel %vm2488, %v2548, 0.0
      %2565 = vadd.xlane.f32.xlu0 %v2564
      %v2566 = vpop.xlane.xlu0 %2565
      %v2567 = vsel %vm2488, %v2549, 0.0
      %2568 = vadd.xlane.f32.xlu0 %v2567
      %v2569 = vpop.xlane.xlu0 %2568
      %v2570 = vsel %vm2488, %v2550, 0.0
      %2571 = vadd.xlane.f32.xlu0 %v2570
      %v2572 = vpop.xlane.xlu0 %2571
      %v2573 = vsel %vm2488, %v2551, 0.0
      %2574 = vadd.xlane.f32.xlu0 %v2573
      %v2575 = vpop.xlane.xlu0 %2574
      %v2576 = vmul.f32 %v2554, %v2527
      %v2577 = vmul.f32 %v2557, %v2527
      %v2578 = vmul.f32 %v2560, %v2527
      %v2579 = vmul.f32 %v2563, %v2527
      %v2580 = vmul.f32 %v2566, %v2527
      %v2581 = vmul.f32 %v2569, %v2527
      %v2582 = vmul.f32 %v2572, %v2527
      %v2583 = vmul.f32 %v2575, %v2527
      %v2584 = vadd.f32 %v2576, 1e-05
      %v2585 = vadd.f32 %v2577, 1e-05
      %v2586 = vadd.f32 %v2578, 1e-05
      %v2587 = vadd.f32 %v2579, 1e-05
      %v2588 = vadd.f32 %v2580, 1e-05
      %v2589 = vadd.f32 %v2581, 1e-05
      %v2590 = vadd.f32 %v2582, 1e-05
      %v2591 = vadd.f32 %v2583, 1e-05
      %v2592 = vrsqrt.pop %v2584
      %v2593 = vmul.f32 %v2592, %v2584
      %v2594 = vmul.f32 %v2593, %v2592
      %v2595 = vmul.f32 0.5, %v2594
      %v2596 = vsub.f32 1.5, %v2595
      %v2597 = vmul.f32 %v2592, %v2596
      %vm2598 = vweird.f32 %v2584
      %vm2599 = vweird.f32 %v2592
      %vm2600 = vmor %vm2598, %vm2599
      %v2601 = vsel %vm2600, %v2592, %v2597
      %v2602 = vrsqrt.pop %v2585
      %v2603 = vmul.f32 %v2602, %v2585
      %v2604 = vmul.f32 %v2603, %v2602
      %v2605 = vmul.f32 0.5, %v2604
      %v2606 = vsub.f32 1.5, %v2605
      %v2607 = vmul.f32 %v2602, %v2606
      %vm2608 = vweird.f32 %v2585
      %vm2609 = vweird.f32 %v2602
      %vm2610 = vmor %vm2608, %vm2609
      %v2611 = vsel %vm2610, %v2602, %v2607
      %v2612 = vrsqrt.pop %v2586
      %v2613 = vmul.f32 %v2612, %v2586
      %v2614 = vmul.f32 %v2613, %v2612
      %v2615 = vmul.f32 0.5, %v2614
      %v2616 = vsub.f32 1.5, %v2615
      %v2617 = vmul.f32 %v2612, %v2616
      %vm2618 = vweird.f32 %v2586
      %vm2619 = vweird.f32 %v2612
      %vm2620 = vmor %vm2618, %vm2619
      %v2621 = vsel %vm2620, %v2612, %v2617
      %v2622 = vrsqrt.pop %v2587
      %v2623 = vmul.f32 %v2622, %v2587
      %v2624 = vmul.f32 %v2623, %v2622
      %v2625 = vmul.f32 0.5, %v2624
      %v2626 = vsub.f32 1.5, %v2625
      %v2627 = vmul.f32 %v2622, %v2626
      %vm2628 = vweird.f32 %v2587
      %vm2629 = vweird.f32 %v2622
      %vm2630 = vmor %vm2628, %vm2629
      %v2631 = vsel %vm2630, %v2622, %v2627
      %v2632 = vrsqrt.pop %v2588
      %v2633 = vmul.f32 %v2632, %v2588
      %v2634 = vmul.f32 %v2633, %v2632
      %v2635 = vmul.f32 0.5, %v2634
      %v2636 = vsub.f32 1.5, %v2635
      %v2637 = vmul.f32 %v2632, %v2636
      %vm2638 = vweird.f32 %v2588
      %vm2639 = vweird.f32 %v2632
      %vm2640 = vmor %vm2638, %vm2639
      %v2641 = vsel %vm2640, %v2632, %v2637
      %v2642 = vrsqrt.pop %v2589
      %v2643 = vmul.f32 %v2642, %v2589
      %v2644 = vmul.f32 %v2643, %v2642
      %v2645 = vmul.f32 0.5, %v2644
      %v2646 = vsub.f32 1.5, %v2645
      %v2647 = vmul.f32 %v2642, %v2646
      %vm2648 = vweird.f32 %v2589
      %vm2649 = vweird.f32 %v2642
      %vm2650 = vmor %vm2648, %vm2649
      %v2651 = vsel %vm2650, %v2642, %v2647
      %v2652 = vrsqrt.pop %v2590
      %v2653 = vmul.f32 %v2652, %v2590
      %v2654 = vmul.f32 %v2653, %v2652
      %v2655 = vmul.f32 0.5, %v2654
      %v2656 = vsub.f32 1.5, %v2655
      %v2657 = vmul.f32 %v2652, %v2656
      %vm2658 = vweird.f32 %v2590
      %vm2659 = vweird.f32 %v2652
      %vm2660 = vmor %vm2658, %vm2659
      %v2661 = vsel %vm2660, %v2652, %v2657
      %v2662 = vrsqrt.pop %v2591
      %v2663 = vmul.f32 %v2662, %v2591
      %v2664 = vmul.f32 %v2663, %v2662
      %v2665 = vmul.f32 0.5, %v2664
      %v2666 = vsub.f32 1.5, %v2665
      %v2667 = vmul.f32 %v2662, %v2666
      %vm2668 = vweird.f32 %v2591
      %vm2669 = vweird.f32 %v2662
      %vm2670 = vmor %vm2668, %vm2669
      %v2671 = vsel %vm2670, %v2662, %v2667
      %v2672 = vmul.f32 %v2536, %v2601
      %v2673 = vmul.f32 %v2537, %v2611
      %v2674 = vmul.f32 %v2538, %v2621
      %v2675 = vmul.f32 %v2539, %v2631
      %v2676 = vmul.f32 %v2540, %v2641
      %v2677 = vmul.f32 %v2541, %v2651
      %v2678 = vmul.f32 %v2542, %v2661
      %v2679 = vmul.f32 %v2543, %v2671
      %v2680 = vld [vmem:[%s8] sm:$0x1]
      %v2682 = vperm.slane %v2680, 0
      %v2684 = vmul.f32 %v2672, %v2682
      %v2685 = vmul.f32 %v2673, %v2682
      %v2686 = vmul.f32 %v2674, %v2682
      %v2687 = vmul.f32 %v2675, %v2682
      %v2688 = vmul.f32 %v2676, %v2682
      %v2689 = vmul.f32 %v2677, %v2682
      %v2690 = vmul.f32 %v2678, %v2682
      %v2691 = vmul.f32 %v2679, %v2682
      %v2692 = vld [vmem:[%s9] sm:$0x1]
      %v2694 = vperm.slane %v2692, 0
      %v2696 = vadd.f32 %v2684, %v2694
      %v2697 = vadd.f32 %v2685, %v2694
      %v2698 = vadd.f32 %v2686, %v2694
      %v2699 = vadd.f32 %v2687, %v2694
      %v2700 = vadd.f32 %v2688, %v2694
      %v2701 = vadd.f32 %v2689, %v2694
      %v2702 = vadd.f32 %v2690, %v2694
      %v2703 = vadd.f32 %v2691, %v2694
      %v2704 = vpack.c.bf16 %v2696, %v2696
      %v2705 = vpack.c.bf16 %v2697, %v2697
      %v2706 = vpack.c.bf16 %v2698, %v2698
      %v2707 = vpack.c.bf16 %v2699, %v2699
      %v2708 = vpack.c.bf16 %v2700, %v2700
      %v2709 = vpack.c.bf16 %v2701, %v2701
      %v2710 = vpack.c.bf16 %v2702, %v2702
      %v2711 = vpack.c.bf16 %v2703, %v2703
      %vm2712 = vcmask 257024
      %2713 = vst.msk [vmem:[%s551] sm:$0xf] %vm2712, %v2704
      %2714 = vst.msk [vmem:[%s551 + $0x4] sm:$0xf] %vm2712, %v2705
      %2715 = vst.msk [vmem:[%s551 + $0x8] sm:$0xf] %vm2712, %v2706
      %2716 = vst.msk [vmem:[%s551 + $0xc] sm:$0xf] %vm2712, %v2707
      %2717 = vst.msk [vmem:[%s551 + $0x10] sm:$0xf] %vm2712, %v2708
      %2718 = vst.msk [vmem:[%s551 + $0x14] sm:$0xf] %vm2712, %v2709
      %2719 = vst.msk [vmem:[%s551 + $0x18] sm:$0xf] %vm2712, %v2710
      %2720 = vst.msk [vmem:[%s551 + $0x1c] sm:$0xf] %vm2712, %v2711
      %s2721 = smul.u32 8, %s29
      %p2722 = scmp.lt.s32.totalorder %s28, 1
      %s2723 = scalar_select %p2722, %s28, 1
      %p2724 = scmp.lt.s32.totalorder %s2721, 7
      %s2725 = scalar_select %p2724, %s2721, 7
      %s2726 = smul.addr %s2723, 8
      %s2727 = sadd.s32 %s2725, %s2726
      %s2728 = smul.addr %s2727, 8
      %s2729 = scalar_lea.vmem %s11, %s2728
      %s2730 = smul.u32 8, %s29
      %p2731 = scmp.lt.s32.totalorder %s28, 1
      %s2732 = scalar_select %p2731, %s28, 1
      %p2733 = scmp.lt.s32.totalorder %s2730, 7
      %s2734 = scalar_select %p2733, %s2730, 7
      %s2735 = smul.addr %s2732, 8
      %s2736 = sadd.s32 %s2734, %s2735
      %s2737 = smul.addr %s2736, 4
      %s2738 = scalar_lea.vmem %s12, %s2737
      // Predicated region
      $region69: #{transolver_erwin_block.7} parent=63 // pred_check
        %p2739 = pneg %p311
      $region70: #{transolver_erwin_block.7} parent=63 // pred_check_branch
        %2741 = sbr.rel (%p2739) target = $region72
      $region71: #{transolver_erwin_block.7} parent=63 // pred_region
        %s2742 = smul.u32 8, %s29
      $region72: #{transolver_erwin_block.7} parent=63 // pred_fallthru
        _
      // Predicated region
      $region73: #{transolver_erwin_block.7} parent=63 // pred_check
        %p2743 = pneg %p339
      $region74: #{transolver_erwin_block.7} parent=63 // pred_check_branch
        %2745 = sbr.rel (%p2743) target = $region76
      $region75: #{transolver_erwin_block.7} parent=63 // pred_region
        %s2746 = smul.u32 8, %s29
      $region76: #{transolver_erwin_block.7} parent=63 // pred_fallthru
        _
    $region64: #{transolver_erwin_block.7} parent=5 // pred_fallthru
      _
    %p2747 = scmp.le.s32.totalorder 2, %s19
    // Predicated region
    $region77: #{transolver_erwin_block.7} parent=5 // pred_check
      %p2748 = pneg %p2747
    $region78: #{transolver_erwin_block.7} parent=5 // pred_check_branch
      %2750 = sbr.rel (%p2748) target = $region80
    $region79: #{transolver_erwin_block.7} parent=5 // pred_region
      %s2751 = ssub.s32 %s19, 2
      // Predicated region
      $region81: #{transolver_erwin_block.7} parent=79 // pred_check
        %p2752 = pneg %p317
      $region82: #{transolver_erwin_block.7} parent=79 // pred_check_branch
        %2754 = sbr.rel (%p2752) target = $region84
      $region83: #{transolver_erwin_block.7} parent=79 // pred_region
        %s2755 = smul.u32 8, %s31
        %p2756 = scmp.lt.s32.totalorder %s30, 1
        %s2757 = scalar_select %p2756, %s30, 1
        %p2758 = scmp.lt.s32.totalorder %s2755, 7
        %s2759 = scalar_select %p2758, %s2755, 7
        %s2760 = smul.addr %s2757, 8
        %s2761 = sadd.s32 %s2759, %s2760
        %s2762 = smul.addr %s2761, 8
        %s2763 = scalar_lea.vmem %s11, %s2762
      $region84: #{transolver_erwin_block.7} parent=79 // pred_fallthru
        _
      // Predicated region
      $region85: #{transolver_erwin_block.7} parent=79 // pred_check
        %p2764 = pneg %p345
      $region86: #{transolver_erwin_block.7} parent=79 // pred_check_branch
        %2766 = sbr.rel (%p2764) target = $region88
      $region87: #{transolver_erwin_block.7} parent=79 // pred_region
        %s2767 = smul.u32 8, %s31
        %p2768 = scmp.lt.s32.totalorder %s30, 1
        %s2769 = scalar_select %p2768, %s30, 1
        %p2770 = scmp.lt.s32.totalorder %s2767, 7
        %s2771 = scalar_select %p2770, %s2767, 7
        %s2772 = smul.addr %s2769, 8
        %s2773 = sadd.s32 %s2771, %s2772
        %s2774 = smul.addr %s2773, 4
        %s2775 = scalar_lea.vmem %s12, %s2774
      $region88: #{transolver_erwin_block.7} parent=79 // pred_fallthru
        _
    $region80: #{transolver_erwin_block.7} parent=5 // pred_fallthru
      _
  $region6: #{transolver_erwin_block.7} parent=0 // loop_footer
    %s23 = sadd.s32 1, %s19
  $region7: #{transolver_erwin_block.7} parent=0 // loop_footer_branch
    %18 = sbr.rel target = $region3
  $region8: #{transolver_erwin_block.7} parent=0 // loop_exit
    _

// kernel: transolver_erwin_block.6
$region0: #{transolver_erwin_block.6}
  #allocation0 [shape = 'u32[]', space=smem, size = 0x4, offset = 0x4, fixed_abs, tag = 'smem constant byte address 0x4 - core index']
  #allocation1 [shape = 'u32[72,128]{1,0:T(1,128)}', space=vmem, size = 0x9000, scoped, tag = 'internal scratch']
  %s0 = inlined_call_operand.vmem [shape: bf16[2,1,6,24,96], index: 0, kind: input, shape index: {}]
  %s1 = inlined_call_operand.vmem [shape: bf16[9,96,160], index: 1, kind: input, shape index: {}]
  %s2 = inlined_call_operand.vmem [shape: f32[1,160], index: 2, kind: input, shape index: {}]
  %s3 = inlined_call_operand.vmem [shape: f32[128,128], index: 3, kind: input, shape index: {}]
  %s4 = inlined_call_operand.vmem [shape: bf16[2,64,128], index: 4, kind: output, shape index: {0}]
  %s5 = inlined_call_operand.vmem [shape: f32[2,128,32], index: 5, kind: output, shape index: {1}]
  %s6 = inlined_call_operand.vmem [shape: f32[2,128,1], index: 6, kind: output, shape index: {2}]
  %7 = xla_tuple %s4, %s5, %s6
  %s8 = sld [smem:[#allocation0]]
  $region69: #{transolver_erwin_block.6} parent=0
    _
  %s10 = ssub.s32 1, %s8
  %s11 = scalar_select 0, %s10, %s8
  loop: start=0, step=1, limit=4
  $region2: #{transolver_erwin_block.6} parent=0 // loop_pre_header
    _
  $region3: #{transolver_erwin_block.6} parent=0 // loop_header
    %s13 = sphi 0, %s17
    %p14 = scmp.ge.s32.totalorder %s13, 4
    %s20 = sphi 0, %s32
    %s21 = sphi 0, %s28
    %s22 = sphi 0, %s20
    %s23 = sphi 0, %s21
    %s24 = sphi 0, %s22
    %s25 = sphi 0, %s23
    %s37 = sphi 0, %s39
    %s40 = sphi 0, %s37
    %s41 = sphi 0, %s40
    %s57 = sphi 0, %s41
    %s61 = sphi 0, %s61
    %s63 = sphi 0, %s61
    %s64 = sphi 0, %s63
    %s78 = sphi 0, %s64
    %s82 = sphi 0, %s82
    %s84 = sphi 0, %s82
    %s85 = sphi 0, %s84
    %s99 = sphi 0, %s85
    %s103 = sphi 0, %s103
    %s105 = sphi 0, %s103
    %s106 = sphi 0, %s105
    %s120 = sphi 0, %s106
    %s128 = sphi 0, %s130
    %s131 = sphi 0, %s128
    %s132 = sphi 0, %s131
    %s148 = sphi 0, %s132
    %s154 = sphi 0, %s156
    %s157 = sphi 0, %s154
    %s158 = sphi 0, %s157
    %s174 = sphi 0, %s158
    %s180 = sphi 0, %s182
    %s183 = sphi 0, %s180
    %s184 = sphi 0, %s183
    %s200 = sphi 0, %s184
  $region4: #{transolver_erwin_block.6} parent=0 // loop_header_branch
    %16 = sbr.rel (%p14) target = $region8
  $region5: #{transolver_erwin_block.6} parent=0 // loop_body
    %s18 = ssub.s32 %s13, 1
    %s19 = ssub.s32 %s13, 2
    %s26 = sadd.s32 1, %s21
    %p27 = scmp.ge.s32.totalorder %s26, 1
    %s28 = scalar_select %p27, 0, %s26
    %s29 = sadd.s32 1, %s20
    %s30 = scalar_select %p27, %s29, %s20
    %p31 = scmp.ge.s32.totalorder %s30, 2
    %s32 = scalar_select %p31, 0, %s30
    %s33 = ssub.s32 %s20, %s32
    %s34 = ssub.s32 %s21, %s28
    %s35 = sor.u32 %s33, %s34
    %p36 = scmp.eq.s32.totalorder %s35, 0
    %s38 = sadd.s32 %s37, 1
    %s39 = scalar_select %p36, %s37, %s38
    %p42 = pneg %p36
    %p43 = scmp.eq.s32.totalorder %s13, 1
    %p44 = por %p42, %p43
    %p45 = scmp.ne.s32.totalorder %s37, %s40
    %p46 = scmp.eq.s32.totalorder %s13, 0
    %p47 = por %p45, %p46
    %p48 = scmp.ne.s32.totalorder %s37, %s40
    %p49 = scmp.eq.s32.totalorder %s18, 1
    %p50 = por %p48, %p49
    %p51 = scmp.ne.s32.totalorder %s40, %s41
    %p52 = scmp.eq.s32.totalorder %s18, 0
    %p53 = por %p51, %p52
    %p54 = scmp.ne.s32.totalorder %s40, %s41
    %p55 = scmp.eq.s32.totalorder %s19, 1
    %p56 = por %p54, %p55
    %p58 = scmp.ne.s32.totalorder %s41, %s57
    %p59 = scmp.eq.s32.totalorder %s19, 0
    %p60 = por %p58, %p59
    %s62 = sadd.s32 %s61, 1
    %p65 = scmp.eq.s32.totalorder %s13, 1
    %p66 = scmp.ne.s32.totalorder %s61, %s63
    %p67 = scmp.eq.s32.totalorder %s13, 0
    %p68 = por %p66, %p67
    %p69 = scmp.ne.s32.totalorder %s61, %s63
    %p70 = scmp.eq.s32.totalorder %s18, 1
    %p71 = por %p69, %p70
    %p72 = scmp.ne.s32.totalorder %s63, %s64
    %p73 = scmp.eq.s32.totalorder %s18, 0
    %p74 = por %p72, %p73
    %p75 = scmp.ne.s32.totalorder %s63, %s64
    %p76 = scmp.eq.s32.totalorder %s19, 1
    %p77 = por %p75, %p76
    %p79 = scmp.ne.s32.totalorder %s64, %s78
    %p80 = scmp.eq.s32.totalorder %s19, 0
    %p81 = por %p79, %p80
    %s83 = sadd.s32 %s82, 1
    %p86 = scmp.eq.s32.totalorder %s13, 1
    %p87 = scmp.ne.s32.totalorder %s82, %s84
    %p88 = scmp.eq.s32.totalorder %s13, 0
    %p89 = por %p87, %p88
    %p90 = scmp.ne.s32.totalorder %s82, %s84
    %p91 = scmp.eq.s32.totalorder %s18, 1
    %p92 = por %p90, %p91
    %p93 = scmp.ne.s32.totalorder %s84, %s85
    %p94 = scmp.eq.s32.totalorder %s18, 0
    %p95 = por %p93, %p94
    %p96 = scmp.ne.s32.totalorder %s84, %s85
    %p97 = scmp.eq.s32.totalorder %s19, 1
    %p98 = por %p96, %p97
    %p100 = scmp.ne.s32.totalorder %s85, %s99
    %p101 = scmp.eq.s32.totalorder %s19, 0
    %p102 = por %p100, %p101
    %s104 = sadd.s32 %s103, 1
    %p107 = scmp.eq.s32.totalorder %s13, 1
    %p108 = scmp.ne.s32.totalorder %s103, %s105
    %p109 = scmp.eq.s32.totalorder %s13, 0
    %p110 = por %p108, %p109
    %p111 = scmp.ne.s32.totalorder %s103, %s105
    %p112 = scmp.eq.s32.totalorder %s18, 1
    %p113 = por %p111, %p112
    %p114 = scmp.ne.s32.totalorder %s105, %s106
    %p115 = scmp.eq.s32.totalorder %s18, 0
    %p116 = por %p114, %p115
    %p117 = scmp.ne.s32.totalorder %s105, %s106
    %p118 = scmp.eq.s32.totalorder %s19, 1
    %p119 = por %p117, %p118
    %p121 = scmp.ne.s32.totalorder %s106, %s120
    %p122 = scmp.eq.s32.totalorder %s19, 0
    %p123 = por %p121, %p122
    %s124 = ssub.s32 %s20, %s32
    %s125 = ssub.s32 %s21, %s28
    %s126 = sor.u32 %s124, %s125
    %p127 = scmp.eq.s32.totalorder %s126, 0
    %s129 = sadd.s32 %s128, 1
    %s130 = scalar_select %p127, %s128, %s129
    %p133 = pneg %p127
    %p134 = scmp.eq.s32.totalorder %s13, 1
    %p135 = por %p133, %p134
    %p136 = scmp.ne.s32.totalorder %s128, %s131
    %p137 = scmp.eq.s32.totalorder %s13, 0
    %p138 = por %p136, %p137
    %p139 = scmp.ne.s32.totalorder %s128, %s131
    %p140 = scmp.eq.s32.totalorder %s18, 1
    %p141 = por %p139, %p140
    %p142 = scmp.ne.s32.totalorder %s131, %s132
    %p143 = scmp.eq.s32.totalorder %s18, 0
    %p144 = por %p142, %p143
    %p145 = scmp.ne.s32.totalorder %s131, %s132
    %p146 = scmp.eq.s32.totalorder %s19, 1
    %p147 = por %p145, %p146
    %p149 = scmp.ne.s32.totalorder %s132, %s148
    %p150 = scmp.eq.s32.totalorder %s19, 0
    %p151 = por %p149, %p150
    %s152 = ssub.s32 %s20, %s32
    %p153 = scmp.eq.s32.totalorder %s152, 0
    %s155 = sadd.s32 %s154, 1
    %s156 = scalar_select %p153, %s154, %s155
    %p159 = pneg %p153
    %p160 = scmp.eq.s32.totalorder %s13, 1
    %p161 = por %p159, %p160
    %p162 = scmp.ne.s32.totalorder %s154, %s157
    %p163 = scmp.eq.s32.totalorder %s13, 0
    %p164 = por %p162, %p163
    %p165 = scmp.ne.s32.totalorder %s154, %s157
    %p166 = scmp.eq.s32.totalorder %s18, 1
    %p167 = por %p165, %p166
    %p168 = scmp.ne.s32.totalorder %s157, %s158
    %p169 = scmp.eq.s32.totalorder %s18, 0
    %p170 = por %p168, %p169
    %p171 = scmp.ne.s32.totalorder %s157, %s158
    %p172 = scmp.eq.s32.totalorder %s19, 1
    %p173 = por %p171, %p172
    %p175 = scmp.ne.s32.totalorder %s158, %s174
    %p176 = scmp.eq.s32.totalorder %s19, 0
    %p177 = por %p175, %p176
    %s178 = ssub.s32 %s20, %s32
    %p179 = scmp.eq.s32.totalorder %s178, 0
    %s181 = sadd.s32 %s180, 1
    %s182 = scalar_select %p179, %s180, %s181
    %p185 = pneg %p179
    %p186 = scmp.eq.s32.totalorder %s13, 1
    %p187 = por %p185, %p186
    %p188 = scmp.ne.s32.totalorder %s180, %s183
    %p189 = scmp.eq.s32.totalorder %s13, 0
    %p190 = por %p188, %p189
    %p191 = scmp.ne.s32.totalorder %s180, %s183
    %p192 = scmp.eq.s32.totalorder %s18, 1
    %p193 = por %p191, %p192
    %p194 = scmp.ne.s32.totalorder %s183, %s184
    %p195 = scmp.eq.s32.totalorder %s18, 0
    %p196 = por %p194, %p195
    %p197 = scmp.ne.s32.totalorder %s183, %s184
    %p198 = scmp.eq.s32.totalorder %s19, 1
    %p199 = por %p197, %p198
    %p201 = scmp.ne.s32.totalorder %s184, %s200
    %p202 = scmp.eq.s32.totalorder %s19, 0
    %p203 = por %p201, %p202
    %p204 = scmp.le.s32.totalorder 1, %s13
    %p205 = scmp.lt.s32.totalorder %s13, 3
    %p206 = pnand %p204, %p205
    %p207 = pneg %p206
    // Predicated region
    $region9: #{transolver_erwin_block.6} parent=5 // pred_check
      _
    $region10: #{transolver_erwin_block.6} parent=5 // pred_check_branch
      %209 = sbr.rel (%p206) target = $region12
    $region11: #{transolver_erwin_block.6} parent=5 // pred_region
      %s210 = ssub.s32 %s13, 1
      // Predicated region
      $region13: #{transolver_erwin_block.6} parent=11 // pred_check
        %p211 = pneg %p74
      $region14: #{transolver_erwin_block.6} parent=11 // pred_check_branch
        %213 = sbr.rel (%p211) target = $region16
      $region15: #{transolver_erwin_block.6} parent=11 // pred_region
        _
      $region16: #{transolver_erwin_block.6} parent=11 // pred_fallthru
        _
      // Predicated region
      $region17: #{transolver_erwin_block.6} parent=11 // pred_check
        %p214 = pneg %p95
      $region18: #{transolver_erwin_block.6} parent=11 // pred_check_branch
        %216 = sbr.rel (%p214) target = $region20
      $region19: #{transolver_erwin_block.6} parent=11 // pred_region
        _
      $region20: #{transolver_erwin_block.6} parent=11 // pred_fallthru
        _
      // Predicated region
      $region21: #{transolver_erwin_block.6} parent=11 // pred_check
        %p217 = pneg %p116
      $region22: #{transolver_erwin_block.6} parent=11 // pred_check_branch
        %219 = sbr.rel (%p217) target = $region24
      $region23: #{transolver_erwin_block.6} parent=11 // pred_region
        _
      $region24: #{transolver_erwin_block.6} parent=11 // pred_fallthru
        _
    $region12: #{transolver_erwin_block.6} parent=5 // pred_fallthru
      _
    %p220 = scmp.lt.s32.totalorder %s13, 2
    // Predicated region
    $region25: #{transolver_erwin_block.6} parent=5 // pred_check
      %p221 = pneg %p220
    $region26: #{transolver_erwin_block.6} parent=5 // pred_check_branch
      %223 = sbr.rel (%p221) target = $region28
    $region27: #{transolver_erwin_block.6} parent=5 // pred_region
      // Predicated region
      $region29: #{transolver_erwin_block.6} parent=27 // pred_check
        %p224 = pneg %p47
      $region30: #{transolver_erwin_block.6} parent=27 // pred_check_branch
        %226 = sbr.rel (%p224) target = $region32
      $region31: #{transolver_erwin_block.6} parent=27 // pred_region
        %p227 = scmp.lt.s32.totalorder %s20, 1
        %s228 = scalar_select %p227, %s20, 1
        %p229 = scmp.lt.s32.totalorder %s21, 0
        %s230 = scalar_select %p229, %s21, 0
        %s231 = smul.addr %s230, 18
        %s232 = smul.addr %s228, 18
        %s233 = sadd.s32 %s231, %s232
        %s234 = smul.addr %s233, 4
        %s235 = scalar_lea.vmem %s0, %s234
      $region32: #{transolver_erwin_block.6} parent=27 // pred_fallthru
        _
    $region28: #{transolver_erwin_block.6} parent=5 // pred_fallthru
      _
    %p236 = scmp.le.s32.totalorder 1, %s13
    %p237 = scmp.lt.s32.totalorder %s13, 3
    %p238 = pnand %p236, %p237
    %p239 = pneg %p238
    // Predicated region
    $region33: #{transolver_erwin_block.6} parent=5 // pred_check
      _
    $region34: #{transolver_erwin_block.6} parent=5 // pred_check_branch
      %241 = sbr.rel (%p238) target = $region36
    $region35: #{transolver_erwin_block.6} parent=5 // pred_region
      %s242 = ssub.s32 %s13, 1
      %p243 = scmp.lt.s32.totalorder %s22, 1
      %s244 = scalar_select %p243, %s22, 1
      %p245 = scmp.lt.s32.totalorder %s23, 0
      %s246 = scalar_select %p245, %s23, 0
      %s247 = smul.addr %s246, 18
      %s248 = smul.addr %s244, 18
      %s249 = sadd.s32 %s247, %s248
      %s250 = smul.addr %s249, 4
      %s251 = scalar_lea.vmem %s0, %s250
      %p252 = pneg %p53
      %p253 = pneg %p50
      %p254 = pneg %p74
      %p255 = pneg %p71
      %p256 = pneg %p95
      %p257 = pneg %p92
      %p258 = pneg %p116
      %p259 = pneg %p113
      %p260 = pneg %p144
      %p261 = pneg %p141
      %s262 = smul.u32 8, %s23
      %p263 = scmp.lt.s32.totalorder %s22, 1
      %s264 = scalar_select %p263, %s22, 1
      %p265 = scmp.lt.s32.totalorder %s262, 7
      %s266 = scalar_select %p265, %s262, 7
      %s267 = smul.addr %s264, 8
      %s268 = sadd.s32 %s266, %s267
      %s269 = smul.addr %s268, 4
      %s270 = scalar_lea.vmem %s4, %s269
      %p271 = pneg %p170
      %p272 = pneg %p167
      %p273 = scmp.lt.s32.totalorder %s22, 1
      %s274 = scalar_select %p273, %s22, 1
      %s275 = smul.addr %s274, 16
      %s276 = smul.addr %s275, 8
      %s277 = scalar_lea.vmem %s5, %s276
      %p278 = pneg %p196
      %p279 = pneg %p193
      %p280 = scmp.lt.s32.totalorder %s22, 1
      %s281 = scalar_select %p280, %s22, 1
      %s282 = smul.addr %s281, 16
      %s283 = smul.addr %s282, 8
      %s284 = scalar_lea.vmem %s6, %s283
      %p285 = scmp.lt.s32.totalorder %s22, 1
      %s286 = scalar_select %p285, %s22, 1
      %p287 = scmp.lt.s32.totalorder %s23, 0
      %s288 = scalar_select %p287, %s23, 0
      %s289 = smul.addr %s288, 18
      %s290 = smul.addr %s286, 18
      %s291 = sadd.s32 %s289, %s290
      %s292 = smul.addr %s291, 4
      %s293 = scalar_lea.vmem %s0, %s292
      %s294 = smul.u32 8, %s23
      %p295 = scmp.lt.s32.totalorder %s22, 1
      %s296 = scalar_select %p295, %s22, 1
      %p297 = scmp.lt.s32.totalorder %s294, 7
      %s298 = scalar_select %p297, %s294, 7
      %s299 = smul.addr %s296, 8
      %s300 = sadd.s32 %s298, %s299
      %s301 = smul.addr %s300, 4
      %s302 = scalar_lea.vmem %s4, %s301
      %s303 = smul.u32 8, %s23
      %p304 = scmp.lt.s32.totalorder %s22, 1
      %s305 = scalar_select %p304, %s22, 1
      %s306 = smul.addr %s305, 16
      %s307 = smul.addr %s306, 8
      %s308 = scalar_lea.vmem %s5, %s307
      %p309 = scmp.lt.s32.totalorder %s22, 1
      %s310 = scalar_select %p309, %s22, 1
      %s311 = smul.addr %s310, 16
      %s312 = smul.addr %s311, 8
      %s313 = scalar_lea.vmem %s6, %s312
      %v315 = vld [vmem:[%s293] sm:$0xf]
      %v316 = vld [vmem:[%s293 + $0x4] sm:$0xf]
      %v317 = vld [vmem:[%s293 + $0xc] sm:$0xf]
      %v318 = vld [vmem:[%s293 + $0x10] sm:$0xf]
      %v319 = vld [vmem:[%s293 + $0x18] sm:$0xf]
      %v320 = vld [vmem:[%s293 + $0x1c] sm:$0xf]
      %v321 = vld [vmem:[%s293 + $0x24] sm:$0xf]
      %v322 = vld [vmem:[%s293 + $0x28] sm:$0xf]
      %v323 = vld [vmem:[%s1] sm:$0xff]
      %v324 = vld [vmem:[%s1 + $0x8] sm:$0xff]
      %v325 = vld [vmem:[%s1 + $0x10] sm:$0xff]
      %v326 = vld [vmem:[%s1 + $0x18] sm:$0xff]
      %v327 = vld [vmem:[%s1 + $0x20] sm:$0xff]
      %v328 = vld [vmem:[%s1 + $0x28] sm:$0xff]
      %v329 = vld [vmem:[%s1 + $0x30] sm:$0xff]
      %v330 = vld [vmem:[%s1 + $0x38] sm:$0xff]
      %v331 = vld [vmem:[%s1 + $0x40] sm:$0xff]
      %v332 = vld [vmem:[%s1 + $0x48] sm:$0xff]
      %v333 = vld [vmem:[%s1 + $0x50] sm:$0xff]
      %v334 = vld [vmem:[%s1 + $0x58] sm:$0xff]
      %v335 = vld [vmem:[%s293] sm:$0xc]
      %v336 = vld [vmem:[%s293 + $0x8] sm:$0x3]
      %v337 = vld [vmem:[%s293 + $0xc] sm:$0xc]
      %v338 = vld [vmem:[%s293 + $0x14] sm:$0x3]
      %v339 = vld [vmem:[%s293 + $0x18] sm:$0xc]
      %v340 = vld [vmem:[%s293 + $0x20] sm:$0x3]
      %v341 = vld [vmem:[%s293 + $0x24] sm:$0xc]
      %v342 = vld [vmem:[%s293 + $0x2c] sm:$0x3]
      %vm355 = vcmask 1041408
      %vm356 = vcmask 1045508
      %vm357 = vmor %vm355, %vm356
      %v358 = vrot.slane %v335, 6
      %v359 = vrot.slane %v358, 4
      %v360 = vrot.slane %v316, 6
      %v361 = vsel %vm357, %v359, %v360
      %v362 = vrot.slane %v360, 4
      %v363 = vrot.slane %v336, 6
      %v364 = vsel %vm357, %v362, %v363
      %v365 = vrot.slane %v337, 6
      %v366 = vrot.slane %v365, 4
      %v367 = vrot.slane %v318, 6
      %v368 = vsel %vm357, %v366, %v367
      %v369 = vrot.slane %v367, 4
      %v370 = vrot.slane %v338, 6
      %v371 = vsel %vm357, %v369, %v370
      %v372 = vrot.slane %v339, 6
      %v373 = vrot.slane %v372, 4
      %v374 = vrot.slane %v320, 6
      %v375 = vsel %vm357, %v373, %v374
      %v376 = vrot.slane %v374, 4
      %v377 = vrot.slane %v340, 6
      %v378 = vsel %vm357, %v376, %v377
      %v379 = vrot.slane %v341, 6
      %v380 = vrot.slane %v379, 4
      %v381 = vrot.slane %v322, 6
      %v382 = vsel %vm357, %v380, %v381
      %v383 = vrot.slane %v381, 4
      %v384 = vrot.slane %v342, 6
      %v385 = vsel %vm357, %v383, %v384
      %s386 = scalar_lea.vmem %s1, 96
      %v387 = vld [vmem:[%s386] sm:$0xff]
      %v388 = vld [vmem:[%s386 + $0x8] sm:$0xff]
      %v389 = vld [vmem:[%s386 + $0x10] sm:$0xff]
      %v390 = vld [vmem:[%s386 + $0x18] sm:$0xff]
      %v391 = vld [vmem:[%s386 + $0x20] sm:$0xff]
      %v392 = vld [vmem:[%s386 + $0x28] sm:$0xff]
      %v393 = vld [vmem:[%s386 + $0x30] sm:$0xff]
      %v394 = vld [vmem:[%s386 + $0x38] sm:$0xff]
      %v395 = vld [vmem:[%s386 + $0x40] sm:$0xff]
      %v396 = vld [vmem:[%s386 + $0x48] sm:$0xff]
      %v397 = vld [vmem:[%s386 + $0x50] sm:$0xff]
      %v398 = vld [vmem:[%s386 + $0x58] sm:$0xff]
      %v399 = vunpack.c.l.b16 %v361
      %v400 = vunpack.c.l.b16 %v364
      %v401 = vunpack.c.l.b16 %v368
      %v402 = vunpack.c.l.b16 %v371
      %v403 = vunpack.c.l.b16 %v375
      %v404 = vunpack.c.l.b16 %v378
      %v405 = vunpack.c.l.b16 %v382
      %v406 = vunpack.c.l.b16 %v385
      %v407 = vpack.c.b16 %v400, %v399
      %v408 = vpack.c.b16 %v402, %v401
      %v409 = vpack.c.b16 %v404, %v403
      %v410 = vpack.c.b16 %v406, %v405
      %v423 = vunpack.c.l.b16 %v387
      %v424 = vunpack.c.h.b16 %v387
      %v425 = vunpack.c.l.b16 %v388
      %v426 = vunpack.c.h.b16 %v388
      %v427 = vunpack.c.l.b16 %v389
      %v428 = vunpack.c.h.b16 %v389
      %v429 = vunpack.c.l.b16 %v390
      %v430 = vunpack.c.h.b16 %v390
      %v431 = vunpack.c.l.b16 %v391
      %v432 = vunpack.c.h.b16 %v391
      %v433 = vunpack.c.l.b16 %v392
      %v434 = vunpack.c.h.b16 %v392
      %v435 = vunpack.c.l.b16 %v393
      %v436 = vunpack.c.h.b16 %v393
      %v437 = vunpack.c.l.b16 %v394
      %v438 = vunpack.c.h.b16 %v394
      %v439 = vunpack.c.l.b16 %v395
      %v440 = vunpack.c.h.b16 %v395
      %v441 = vunpack.c.l.b16 %v396
      %v442 = vunpack.c.h.b16 %v396
      %v443 = vunpack.c.l.b16 %v397
      %v444 = vunpack.c.h.b16 %v397
      %v445 = vunpack.c.l.b16 %v398
      %v446 = vunpack.c.h.b16 %v398
      %v447 = vpack.c.b16 %v425, %v423
      %v448 = vpack.c.b16 %v426, %v424
      %v449 = vpack.c.b16 %v429, %v427
      %v450 = vpack.c.b16 %v430, %v428
      %v451 = vpack.c.b16 %v433, %v431
      %v452 = vpack.c.b16 %v434, %v432
      %v453 = vpack.c.b16 %v437, %v435
      %v454 = vpack.c.b16 %v438, %v436
      %v455 = vpack.c.b16 %v441, %v439
      %v456 = vpack.c.b16 %v442, %v440
      %v457 = vpack.c.b16 %v445, %v443
      %v458 = vpack.c.b16 %v446, %v444
      %vm471 = vcmask 785408
      %v473 = vsel %vm471, %v407, 0
      %v476 = vsel %vm471, %v408, 0
      %v479 = vsel %vm471, %v409, 0
      %v482 = vsel %vm471, %v410, 0
      %484 = vmatpush.bf16.msra.mxu0 0
      %485 = vmatpush.bf16.msra.mxu0 0
      %486 = vmatpush.bf16.msra.mxu0 %v457
      %487 = vmatpush.bf16.msra.mxu0 %v455
      %488 = vmatpush.bf16.msra.mxu0 %v453
      %489 = vmatpush.bf16.msra.mxu0 %v451
      %490 = vmatpush.bf16.msra.mxu0 %v449
      %491 = vmatpush.bf16.msra.mxu0 %v447
      %492 = vmatmul.bf16.gmra.mxu0 %v473
      %v493 = vpop.f32.mrf.mxu0
      %v494 = vadd.f32 0.0, %v493
      %v495 = vpop.f32.mrf.mxu0
      %v496 = vadd.f32 0.0, %v495
      %497 = vmatmul.bf16.gmra.mxu0 %v476
      %v498 = vpop.f32.mrf.mxu0
      %v499 = vadd.f32 0.0, %v498
      %v500 = vpop.f32.mrf.mxu0
      %v501 = vadd.f32 0.0, %v500
      %502 = vmatmul.bf16.gmra.mxu0 %v479
      %v503 = vpop.f32.mrf.mxu0
      %v504 = vadd.f32 0.0, %v503
      %v505 = vpop.f32.mrf.mxu0
      %v506 = vadd.f32 0.0, %v505
      %507 = vmatmul.bf16.gmra.mxu0 %v482
      %v508 = vpop.f32.mrf.mxu0
      %v509 = vadd.f32 0.0, %v508
      %v510 = vpop.f32.mrf.mxu0
      %v511 = vadd.f32 0.0, %v510
      %512 = vdwg.mxu0
      %513 = vmatpush.bf16.msra.mxu0 0
      %514 = vmatpush.bf16.msra.mxu0 0
      %515 = vmatpush.bf16.msra.mxu0 %v458
      %516 = vmatpush.bf16.msra.mxu0 %v456
      %517 = vmatpush.bf16.msra.mxu0 %v454
      %518 = vmatpush.bf16.msra.mxu0 %v452
      %519 = vmatpush.bf16.msra.mxu0 %v450
      %520 = vmatpush.bf16.msra.mxu0 %v448
      %521 = vmatmul.bf16.gmra.mxu0 %v473
      %v522 = vpop.f32.mrf.mxu0
      %v523 = vadd.f32 0.0, %v522
      %v524 = vpop.f32.mrf.mxu0
      %v525 = vadd.f32 0.0, %v524
      %526 = vmatmul.bf16.gmra.mxu0 %v476
      %v527 = vpop.f32.mrf.mxu0
      %v528 = vadd.f32 0.0, %v527
      %v529 = vpop.f32.mrf.mxu0
      %v530 = vadd.f32 0.0, %v529
      %531 = vmatmul.bf16.gmra.mxu0 %v479
      %v532 = vpop.f32.mrf.mxu0
      %v533 = vadd.f32 0.0, %v532
      %v534 = vpop.f32.mrf.mxu0
      %v535 = vadd.f32 0.0, %v534
      %536 = vmatmul.bf16.gmra.mxu0 %v482
      %v537 = vpop.f32.mrf.mxu0
      %v538 = vadd.f32 0.0, %v537
      %v539 = vpop.f32.mrf.mxu0
      %v540 = vadd.f32 0.0, %v539
      %541 = vdwg.mxu0
      %v546 = vunpack.c.l.b16 %v315
      %v547 = vunpack.c.l.b16 %v316
      %v548 = vunpack.c.l.b16 %v317
      %v549 = vunpack.c.l.b16 %v318
      %v550 = vunpack.c.l.b16 %v319
      %v551 = vunpack.c.l.b16 %v320
      %v552 = vunpack.c.l.b16 %v321
      %v553 = vunpack.c.l.b16 %v322
      %v554 = vpack.c.b16 %v547, %v546
      %v555 = vpack.c.b16 %v549, %v548
      %v556 = vpack.c.b16 %v551, %v550
      %v557 = vpack.c.b16 %v553, %v552
      %v570 = vunpack.c.l.b16 %v323
      %v571 = vunpack.c.h.b16 %v323
      %v572 = vunpack.c.l.b16 %v324
      %v573 = vunpack.c.h.b16 %v324
      %v574 = vunpack.c.l.b16 %v325
      %v575 = vunpack.c.h.b16 %v325
      %v576 = vunpack.c.l.b16 %v326
      %v577 = vunpack.c.h.b16 %v326
      %v578 = vunpack.c.l.b16 %v327
      %v579 = vunpack.c.h.b16 %v327
      %v580 = vunpack.c.l.b16 %v328
      %v581 = vunpack.c.h.b16 %v328
      %v582 = vunpack.c.l.b16 %v329
      %v583 = vunpack.c.h.b16 %v329
      %v584 = vunpack.c.l.b16 %v330
      %v585 = vunpack.c.h.b16 %v330
      %v586 = vunpack.c.l.b16 %v331
      %v587 = vunpack.c.h.b16 %v331
      %v588 = vunpack.c.l.b16 %v332
      %v589 = vunpack.c.h.b16 %v332
      %v590 = vunpack.c.l.b16 %v333
      %v591 = vunpack.c.h.b16 %v333
      %v592 = vunpack.c.l.b16 %v334
      %v593 = vunpack.c.h.b16 %v334
      %v594 = vpack.c.b16 %v572, %v570
      %v595 = vpack.c.b16 %v573, %v571
      %v596 = vpack.c.b16 %v576, %v574
      %v597 = vpack.c.b16 %v577, %v575
      %v598 = vpack.c.b16 %v580, %v578
      %v599 = vpack.c.b16 %v581, %v579
      %v600 = vpack.c.b16 %v584, %v582
      %v601 = vpack.c.b16 %v585, %v583
      %v602 = vpack.c.b16 %v588, %v586
      %v603 = vpack.c.b16 %v589, %v587
      %v604 = vpack.c.b16 %v592, %v590
      %v605 = vpack.c.b16 %v593, %v591
      %v619 = vsel %vm471, %v554, 0
      %v622 = vsel %vm471, %v555, 0
      %v625 = vsel %vm471, %v556, 0
      %v628 = vsel %vm471, %v557, 0
      %630 = vmatpush.bf16.msra.mxu0 0
      %631 = vmatpush.bf16.msra.mxu0 0
      %632 = vmatpush.bf16.msra.mxu0 %v604
      %633 = vmatpush.bf16.msra.mxu0 %v602
      %634 = vmatpush.bf16.msra.mxu0 %v600
      %635 = vmatpush.bf16.msra.mxu0 %v598
      %636 = vmatpush.bf16.msra.mxu0 %v596
      %637 = vmatpush.bf16.msra.mxu0 %v594
      %638 = vmatmul.bf16.gmra.mxu0 %v619
      %v639 = vpop.f32.mrf.mxu0
      %v640 = vadd.f32 %v494, %v639
      %v641 = vpop.f32.mrf.mxu0
      %v642 = vadd.f32 %v496, %v641
      %643 = vmatmul.bf16.gmra.mxu0 %v622
      %v644 = vpop.f32.mrf.mxu0
      %v645 = vadd.f32 %v499, %v644
      %v646 = vpop.f32.mrf.mxu0
      %v647 = vadd.f32 %v501, %v646
      %648 = vmatmul.bf16.gmra.mxu0 %v625
      %v649 = vpop.f32.mrf.mxu0
      %v650 = vadd.f32 %v504, %v649
      %v651 = vpop.f32.mrf.mxu0
      %v652 = vadd.f32 %v506, %v651
      %653 = vmatmul.bf16.gmra.mxu0 %v628
      %v654 = vpop.f32.mrf.mxu0
      %v655 = vadd.f32 %v509, %v654
      %v656 = vpop.f32.mrf.mxu0
      %v657 = vadd.f32 %v511, %v656
      %658 = vdwg.mxu0
      %659 = vmatpush.bf16.msra.mxu0 0
      %660 = vmatpush.bf16.msra.mxu0 0
      %661 = vmatpush.bf16.msra.mxu0 %v605
      %662 = vmatpush.bf16.msra.mxu0 %v603
      %663 = vmatpush.bf16.msra.mxu0 %v601
      %664 = vmatpush.bf16.msra.mxu0 %v599
      %665 = vmatpush.bf16.msra.mxu0 %v597
      %666 = vmatpush.bf16.msra.mxu0 %v595
      %667 = vmatmul.bf16.gmra.mxu0 %v619
      %v668 = vpop.f32.mrf.mxu0
      %v669 = vadd.f32 %v523, %v668
      %v670 = vpop.f32.mrf.mxu0
      %v671 = vadd.f32 %v525, %v670
      %672 = vmatmul.bf16.gmra.mxu0 %v622
      %v673 = vpop.f32.mrf.mxu0
      %v674 = vadd.f32 %v528, %v673
      %v675 = vpop.f32.mrf.mxu0
      %v676 = vadd.f32 %v530, %v675
      %677 = vmatmul.bf16.gmra.mxu0 %v625
      %v678 = vpop.f32.mrf.mxu0
      %v679 = vadd.f32 %v533, %v678
      %v680 = vpop.f32.mrf.mxu0
      %v681 = vadd.f32 %v535, %v680
      %682 = vmatmul.bf16.gmra.mxu0 %v628
      %v683 = vpop.f32.mrf.mxu0
      %v684 = vadd.f32 %v538, %v683
      %v685 = vpop.f32.mrf.mxu0
      %v686 = vadd.f32 %v540, %v685
      %687 = vdwg.mxu0
      %v688 = vld [vmem:[%s293 + $0x8] sm:$0xf]
      %v689 = vld [vmem:[%s293 + $0x14] sm:$0xf]
      %v690 = vld [vmem:[%s293 + $0x20] sm:$0xf]
      %v691 = vld [vmem:[%s293 + $0x2c] sm:$0xf]
      %s692 = scalar_lea.vmem %s1, 192
      %v693 = vld [vmem:[%s692] sm:$0xff]
      %v694 = vld [vmem:[%s692 + $0x8] sm:$0xff]
      %v695 = vld [vmem:[%s692 + $0x10] sm:$0xff]
      %v696 = vld [vmem:[%s692 + $0x18] sm:$0xff]
      %v697 = vld [vmem:[%s692 + $0x20] sm:$0xff]
      %v698 = vld [vmem:[%s692 + $0x28] sm:$0xff]
      %v699 = vld [vmem:[%s692 + $0x30] sm:$0xff]
      %v700 = vld [vmem:[%s692 + $0x38] sm:$0xff]
      %v701 = vld [vmem:[%s692 + $0x40] sm:$0xff]
      %v702 = vld [vmem:[%s692 + $0x48] sm:$0xff]
      %v703 = vld [vmem:[%s692 + $0x50] sm:$0xff]
      %v704 = vld [vmem:[%s692 + $0x58] sm:$0xff]
      %v709 = vunpack.c.l.b16 %v688
      %v710 = vunpack.c.l.b16 %v689
      %v711 = vunpack.c.l.b16 %v690
      %v712 = vunpack.c.l.b16 %v691
      %v713 = vpack.c.b16 %v709, %v547
      %v714 = vpack.c.b16 %v710, %v549
      %v715 = vpack.c.b16 %v711, %v551
      %v716 = vpack.c.b16 %v712, %v553
      %v729 = vunpack.c.l.b16 %v693
      %v730 = vunpack.c.h.b16 %v693
      %v731 = vunpack.c.l.b16 %v694
      %v732 = vunpack.c.h.b16 %v694
      %v733 = vunpack.c.l.b16 %v695
      %v734 = vunpack.c.h.b16 %v695
      %v735 = vunpack.c.l.b16 %v696
      %v736 = vunpack.c.h.b16 %v696
      %v737 = vunpack.c.l.b16 %v697
      %v738 = vunpack.c.h.b16 %v697
      %v739 = vunpack.c.l.b16 %v698
      %v740 = vunpack.c.h.b16 %v698
      %v741 = vunpack.c.l.b16 %v699
      %v742 = vunpack.c.h.b16 %v699
      %v743 = vunpack.c.l.b16 %v700
      %v744 = vunpack.c.h.b16 %v700
      %v745 = vunpack.c.l.b16 %v701
      %v746 = vunpack.c.h.b16 %v701
      %v747 = vunpack.c.l.b16 %v702
      %v748 = vunpack.c.h.b16 %v702
      %v749 = vunpack.c.l.b16 %v703
      %v750 = vunpack.c.h.b16 %v703
      %v751 = vunpack.c.l.b16 %v704
      %v752 = vunpack.c.h.b16 %v704
      %v753 = vpack.c.b16 %v731, %v729
      %v754 = vpack.c.b16 %v732, %v730
      %v755 = vpack.c.b16 %v735, %v733
      %v756 = vpack.c.b16 %v736, %v734
      %v757 = vpack.c.b16 %v739, %v737
      %v758 = vpack.c.b16 %v740, %v738
      %v759 = vpack.c.b16 %v743, %v741
      %v760 = vpack.c.b16 %v744, %v742
      %v761 = vpack.c.b16 %v747, %v745
      %v762 = vpack.c.b16 %v748, %v746
      %v763 = vpack.c.b16 %v751, %v749
      %v764 = vpack.c.b16 %v752, %v750
      %v778 = vsel %vm471, %v713, 0
      %v781 = vsel %vm471, %v714, 0
      %v784 = vsel %vm471, %v715, 0
      %v787 = vsel %vm471, %v716, 0
      %789 = vmatpush.bf16.msra.mxu0 0
      %790 = vmatpush.bf16.msra.mxu0 0
      %791 = vmatpush.bf16.msra.mxu0 %v763
      %792 = vmatpush.bf16.msra.mxu0 %v761
      %793 = vmatpush.bf16.msra.mxu0 %v759
      %794 = vmatpush.bf16.msra.mxu0 %v757
      %795 = vmatpush.bf16.msra.mxu0 %v755
      %796 = vmatpush.bf16.msra.mxu0 %v753
      %797 = vmatmul.bf16.gmra.mxu0 %v778
      %v798 = vpop.f32.mrf.mxu0
      %v799 = vadd.f32 0.0, %v798
      %v800 = vpop.f32.mrf.mxu0
      %v801 = vadd.f32 0.0, %v800
      %802 = vmatmul.bf16.gmra.mxu0 %v781
      %v803 = vpop.f32.mrf.mxu0
      %v804 = vadd.f32 0.0, %v803
      %v805 = vpop.f32.mrf.mxu0
      %v806 = vadd.f32 0.0, %v805
      %807 = vmatmul.bf16.gmra.mxu0 %v784
      %v808 = vpop.f32.mrf.mxu0
      %v809 = vadd.f32 0.0, %v808
      %v810 = vpop.f32.mrf.mxu0
      %v811 = vadd.f32 0.0, %v810
      %812 = vmatmul.bf16.gmra.mxu0 %v787
      %v813 = vpop.f32.mrf.mxu0
      %v814 = vadd.f32 0.0, %v813
      %v815 = vpop.f32.mrf.mxu0
      %v816 = vadd.f32 0.0, %v815
      %817 = vdwg.mxu0
      %818 = vmatpush.bf16.msra.mxu0 0
      %819 = vmatpush.bf16.msra.mxu0 0
      %820 = vmatpush.bf16.msra.mxu0 %v764
      %821 = vmatpush.bf16.msra.mxu0 %v762
      %822 = vmatpush.bf16.msra.mxu0 %v760
      %823 = vmatpush.bf16.msra.mxu0 %v758
      %824 = vmatpush.bf16.msra.mxu0 %v756
      %825 = vmatpush.bf16.msra.mxu0 %v754
      %826 = vmatmul.bf16.gmra.mxu0 %v778
      %v827 = vpop.f32.mrf.mxu0
      %v828 = vadd.f32 0.0, %v827
      %v829 = vpop.f32.mrf.mxu0
      %v830 = vadd.f32 0.0, %v829
      %831 = vmatmul.bf16.gmra.mxu0 %v781
      %v832 = vpop.f32.mrf.mxu0
      %v833 = vadd.f32 0.0, %v832
      %v834 = vpop.f32.mrf.mxu0
      %v835 = vadd.f32 0.0, %v834
      %836 = vmatmul.bf16.gmra.mxu0 %v784
      %v837 = vpop.f32.mrf.mxu0
      %v838 = vadd.f32 0.0, %v837
      %v839 = vpop.f32.mrf.mxu0
      %v840 = vadd.f32 0.0, %v839
      %841 = vmatmul.bf16.gmra.mxu0 %v787
      %v842 = vpop.f32.mrf.mxu0
      %v843 = vadd.f32 0.0, %v842
      %v844 = vpop.f32.mrf.mxu0
      %v845 = vadd.f32 0.0, %v844
      %846 = vdwg.mxu0
      %v847 = vadd.f32 %v640, %v799
      %v848 = vadd.f32 %v669, %v828
      %v849 = vadd.f32 %v642, %v801
      %v850 = vadd.f32 %v671, %v830
      %v851 = vadd.f32 %v645, %v804
      %v852 = vadd.f32 %v674, %v833
      %v853 = vadd.f32 %v647, %v806
      %v854 = vadd.f32 %v676, %v835
      %v855 = vadd.f32 %v650, %v809
      %v856 = vadd.f32 %v679, %v838
      %v857 = vadd.f32 %v652, %v811
      %v858 = vadd.f32 %v681, %v840
      %v859 = vadd.f32 %v655, %v814
      %v860 = vadd.f32 %v684, %v843
      %v861 = vadd.f32 %v657, %v816
      %v862 = vadd.f32 %v686, %v845
      %s863 = scalar_lea.vmem %s293, 12
      %v864 = vld [vmem:[%s863] sm:$0xf]
      %v865 = vld [vmem:[%s863 + $0x4] sm:$0xf]
      %v866 = vld [vmem:[%s863 + $0xc] sm:$0xf]
      %v867 = vld [vmem:[%s863 + $0x10] sm:$0xf]
      %v868 = vld [vmem:[%s863 + $0x18] sm:$0xf]
      %v869 = vld [vmem:[%s863 + $0x1c] sm:$0xf]
      %v870 = vld [vmem:[%s863 + $0x24] sm:$0xf]
      %v871 = vld [vmem:[%s863 + $0x28] sm:$0xf]
      %s872 = scalar_lea.vmem %s1, 288
      %v873 = vld [vmem:[%s872] sm:$0xff]
      %v874 = vld [vmem:[%s872 + $0x8] sm:$0xff]
      %v875 = vld [vmem:[%s872 + $0x10] sm:$0xff]
      %v876 = vld [vmem:[%s872 + $0x18] sm:$0xff]
      %v877 = vld [vmem:[%s872 + $0x20] sm:$0xff]
      %v878 = vld [vmem:[%s872 + $0x28] sm:$0xff]
      %v879 = vld [vmem:[%s872 + $0x30] sm:$0xff]
      %v880 = vld [vmem:[%s872 + $0x38] sm:$0xff]
      %v881 = vld [vmem:[%s872 + $0x40] sm:$0xff]
      %v882 = vld [vmem:[%s872 + $0x48] sm:$0xff]
      %v883 = vld [vmem:[%s872 + $0x50] sm:$0xff]
      %v884 = vld [vmem:[%s872 + $0x58] sm:$0xff]
      %v893 = vunpack.c.l.b16 %v864
      %v894 = vunpack.c.l.b16 %v865
      %v895 = vunpack.c.l.b16 %v866
      %v896 = vunpack.c.l.b16 %v867
      %v897 = vunpack.c.l.b16 %v868
      %v898 = vunpack.c.l.b16 %v869
      %v899 = vunpack.c.l.b16 %v870
      %v900 = vunpack.c.l.b16 %v871
      %v901 = vpack.c.b16 %v894, %v893
      %v902 = vpack.c.b16 %v896, %v895
      %v903 = vpack.c.b16 %v898, %v897
      %v904 = vpack.c.b16 %v900, %v899
      %v917 = vunpack.c.l.b16 %v873
      %v918 = vunpack.c.h.b16 %v873
      %v919 = vunpack.c.l.b16 %v874
      %v920 = vunpack.c.h.b16 %v874
      %v921 = vunpack.c.l.b16 %v875
      %v922 = vunpack.c.h.b16 %v875
      %v923 = vunpack.c.l.b16 %v876
      %v924 = vunpack.c.h.b16 %v876
      %v925 = vunpack.c.l.b16 %v877
      %v926 = vunpack.c.h.b16 %v877
      %v927 = vunpack.c.l.b16 %v878
      %v928 = vunpack.c.h.b16 %v878
      %v929 = vunpack.c.l.b16 %v879
      %v930 = vunpack.c.h.b16 %v879
      %v931 = vunpack.c.l.b16 %v880
      %v932 = vunpack.c.h.b16 %v880
      %v933 = vunpack.c.l.b16 %v881
      %v934 = vunpack.c.h.b16 %v881
      %v935 = vunpack.c.l.b16 %v882
      %v936 = vunpack.c.h.b16 %v882
      %v937 = vunpack.c.l.b16 %v883
      %v938 = vunpack.c.h.b16 %v883
      %v939 = vunpack.c.l.b16 %v884
      %v940 = vunpack.c.h.b16 %v884
      %v941 = vpack.c.b16 %v919, %v917
      %v942 = vpack.c.b16 %v920, %v918
      %v943 = vpack.c.b16 %v923, %v921
      %v944 = vpack.c.b16 %v924, %v922
      %v945 = vpack.c.b16 %v927, %v925
      %v946 = vpack.c.b16 %v928, %v926
      %v947 = vpack.c.b16 %v931, %v929
      %v948 = vpack.c.b16 %v932, %v930
      %v949 = vpack.c.b16 %v935, %v933
      %v950 = vpack.c.b16 %v936, %v934
      %v951 = vpack.c.b16 %v939, %v937
      %v952 = vpack.c.b16 %v940, %v938
      %v966 = vsel %vm471, %v901, 0
      %v969 = vsel %vm471, %v902, 0
      %v972 = vsel %vm471, %v903, 0
      %v975 = vsel %vm471, %v904, 0
      %977 = vmatpush.bf16.msra.mxu0 0
      %978 = vmatpush.bf16.msra.mxu0 0
      %979 = vmatpush.bf16.msra.mxu0 %v951
      %980 = vmatpush.bf16.msra.mxu0 %v949
      %981 = vmatpush.bf16.msra.mxu0 %v947
      %982 = vmatpush.bf16.msra.mxu0 %v945
      %983 = vmatpush.bf16.msra.mxu0 %v943
      %984 = vmatpush.bf16.msra.mxu0 %v941
      %985 = vmatmul.bf16.gmra.mxu0 %v966
      %v986 = vpop.f32.mrf.mxu0
      %v987 = vadd.f32 0.0, %v986
      %v988 = vpop.f32.mrf.mxu0
      %v989 = vadd.f32 0.0, %v988
      %990 = vmatmul.bf16.gmra.mxu0 %v969
      %v991 = vpop.f32.mrf.mxu0
      %v992 = vadd.f32 0.0, %v991
      %v993 = vpop.f32.mrf.mxu0
      %v994 = vadd.f32 0.0, %v993
      %995 = vmatmul.bf16.gmra.mxu0 %v972
      %v996 = vpop.f32.mrf.mxu0
      %v997 = vadd.f32 0.0, %v996
      %v998 = vpop.f32.mrf.mxu0
      %v999 = vadd.f32 0.0, %v998
      %1000 = vmatmul.bf16.gmra.mxu0 %v975
      %v1001 = vpop.f32.mrf.mxu0
      %v1002 = vadd.f32 0.0, %v1001
      %v1003 = vpop.f32.mrf.mxu0
      %v1004 = vadd.f32 0.0, %v1003
      %1005 = vdwg.mxu0
      %1006 = vmatpush.bf16.msra.mxu0 0
      %1007 = vmatpush.bf16.msra.mxu0 0
      %1008 = vmatpush.bf16.msra.mxu0 %v952
      %1009 = vmatpush.bf16.msra.mxu0 %v950
      %1010 = vmatpush.bf16.msra.mxu0 %v948
      %1011 = vmatpush.bf16.msra.mxu0 %v946
      %1012 = vmatpush.bf16.msra.mxu0 %v944
      %1013 = vmatpush.bf16.msra.mxu0 %v942
      %1014 = vmatmul.bf16.gmra.mxu0 %v966
      %v1015 = vpop.f32.mrf.mxu0
      %v1016 = vadd.f32 0.0, %v1015
      %v1017 = vpop.f32.mrf.mxu0
      %v1018 = vadd.f32 0.0, %v1017
      %1019 = vmatmul.bf16.gmra.mxu0 %v969
      %v1020 = vpop.f32.mrf.mxu0
      %v1021 = vadd.f32 0.0, %v1020
      %v1022 = vpop.f32.mrf.mxu0
      %v1023 = vadd.f32 0.0, %v1022
      %1024 = vmatmul.bf16.gmra.mxu0 %v972
      %v1025 = vpop.f32.mrf.mxu0
      %v1026 = vadd.f32 0.0, %v1025
      %v1027 = vpop.f32.mrf.mxu0
      %v1028 = vadd.f32 0.0, %v1027
      %1029 = vmatmul.bf16.gmra.mxu0 %v975
      %v1030 = vpop.f32.mrf.mxu0
      %v1031 = vadd.f32 0.0, %v1030
      %v1032 = vpop.f32.mrf.mxu0
      %v1033 = vadd.f32 0.0, %v1032
      %1034 = vdwg.mxu0
      %v1035 = vadd.f32 %v847, %v987
      %v1036 = vadd.f32 %v848, %v1016
      %v1037 = vadd.f32 %v849, %v989
      %v1038 = vadd.f32 %v850, %v1018
      %v1039 = vadd.f32 %v851, %v992
      %v1040 = vadd.f32 %v852, %v1021
      %v1041 = vadd.f32 %v853, %v994
      %v1042 = vadd.f32 %v854, %v1023
      %v1043 = vadd.f32 %v855, %v997
      %v1044 = vadd.f32 %v856, %v1026
      %v1045 = vadd.f32 %v857, %v999
      %v1046 = vadd.f32 %v858, %v1028
      %v1047 = vadd.f32 %v859, %v1002
      %v1048 = vadd.f32 %v860, %v1031
      %v1049 = vadd.f32 %v861, %v1004
      %v1050 = vadd.f32 %v862, %v1033
      %v1051 = vld [vmem:[%s863] sm:$0xc]
      %v1052 = vld [vmem:[%s863 + $0x4] sm:$0xf]
      %v1053 = vld [vmem:[%s863 + $0x8] sm:$0x3]
      %v1054 = vld [vmem:[%s863 + $0xc] sm:$0xc]
      %v1055 = vld [vmem:[%s863 + $0x10] sm:$0xf]
      %v1056 = vld [vmem:[%s863 + $0x14] sm:$0x3]
      %v1057 = vld [vmem:[%s863 + $0x18] sm:$0xc]
      %v1058 = vld [vmem:[%s863 + $0x1c] sm:$0xf]
      %v1059 = vld [vmem:[%s863 + $0x20] sm:$0x3]
      %v1060 = vld [vmem:[%s863 + $0x24] sm:$0xc]
      %v1061 = vld [vmem:[%s863 + $0x28] sm:$0xf]
      %v1062 = vld [vmem:[%s863 + $0x2c] sm:$0x3]
      %v1075 = vrot.slane %v1051, 6
      %v1076 = vrot.slane %v1075, 4
      %v1077 = vrot.slane %v1052, 6
      %v1078 = vsel %vm357, %v1076, %v1077
      %v1079 = vrot.slane %v1077, 4
      %v1080 = vrot.slane %v1053, 6
      %v1081 = vsel %vm357, %v1079, %v1080
      %v1082 = vrot.slane %v1054, 6
      %v1083 = vrot.slane %v1082, 4
      %v1084 = vrot.slane %v1055, 6
      %v1085 = vsel %vm357, %v1083, %v1084
      %v1086 = vrot.slane %v1084, 4
      %v1087 = vrot.slane %v1056, 6
      %v1088 = vsel %vm357, %v1086, %v1087
      %v1089 = vrot.slane %v1057, 6
      %v1090 = vrot.slane %v1089, 4
      %v1091 = vrot.slane %v1058, 6
      %v1092 = vsel %vm357, %v1090, %v1091
      %v1093 = vrot.slane %v1091, 4
      %v1094 = vrot.slane %v1059, 6
      %v1095 = vsel %vm357, %v1093, %v1094
      %v1096 = vrot.slane %v1060, 6
      %v1097 = vrot.slane %v1096, 4
      %v1098 = vrot.slane %v1061, 6
      %v1099 = vsel %vm357, %v1097, %v1098
      %v1100 = vrot.slane %v1098, 4
      %v1101 = vrot.slane %v1062, 6
      %v1102 = vsel %vm357, %v1100, %v1101
      %s1103 = scalar_lea.vmem %s1, 384
      %v1104 = vld [vmem:[%s1103] sm:$0xff]
      %v1105 = vld [vmem:[%s1103 + $0x8] sm:$0xff]
      %v1106 = vld [vmem:[%s1103 + $0x10] sm:$0xff]
      %v1107 = vld [vmem:[%s1103 + $0x18] sm:$0xff]
      %v1108 = vld [vmem:[%s1103 + $0x20] sm:$0xff]
      %v1109 = vld [vmem:[%s1103 + $0x28] sm:$0xff]
      %v1110 = vld [vmem:[%s1103 + $0x30] sm:$0xff]
      %v1111 = vld [vmem:[%s1103 + $0x38] sm:$0xff]
      %v1112 = vld [vmem:[%s1103 + $0x40] sm:$0xff]
      %v1113 = vld [vmem:[%s1103 + $0x48] sm:$0xff]
      %v1114 = vld [vmem:[%s1103 + $0x50] sm:$0xff]
      %v1115 = vld [vmem:[%s1103 + $0x58] sm:$0xff]
      %v1116 = vunpack.c.l.b16 %v1078
      %v1117 = vunpack.c.l.b16 %v1081
      %v1118 = vunpack.c.l.b16 %v1085
      %v1119 = vunpack.c.l.b16 %v1088
      %v1120 = vunpack.c.l.b16 %v1092
      %v1121 = vunpack.c.l.b16 %v1095
      %v1122 = vunpack.c.l.b16 %v1099
      %v1123 = vunpack.c.l.b16 %v1102
      %v1124 = vpack.c.b16 %v1117, %v1116
      %v1125 = vpack.c.b16 %v1119, %v1118
      %v1126 = vpack.c.b16 %v1121, %v1120
      %v1127 = vpack.c.b16 %v1123, %v1122
      %v1140 = vunpack.c.l.b16 %v1104
      %v1141 = vunpack.c.h.b16 %v1104
      %v1142 = vunpack.c.l.b16 %v1105
      %v1143 = vunpack.c.h.b16 %v1105
      %v1144 = vunpack.c.l.b16 %v1106
      %v1145 = vunpack.c.h.b16 %v1106
      %v1146 = vunpack.c.l.b16 %v1107
      %v1147 = vunpack.c.h.b16 %v1107
      %v1148 = vunpack.c.l.b16 %v1108
      %v1149 = vunpack.c.h.b16 %v1108
      %v1150 = vunpack.c.l.b16 %v1109
      %v1151 = vunpack.c.h.b16 %v1109
      %v1152 = vunpack.c.l.b16 %v1110
      %v1153 = vunpack.c.h.b16 %v1110
      %v1154 = vunpack.c.l.b16 %v1111
      %v1155 = vunpack.c.h.b16 %v1111
      %v1156 = vunpack.c.l.b16 %v1112
      %v1157 = vunpack.c.h.b16 %v1112
      %v1158 = vunpack.c.l.b16 %v1113
      %v1159 = vunpack.c.h.b16 %v1113
      %v1160 = vunpack.c.l.b16 %v1114
      %v1161 = vunpack.c.h.b16 %v1114
      %v1162 = vunpack.c.l.b16 %v1115
      %v1163 = vunpack.c.h.b16 %v1115
      %v1164 = vpack.c.b16 %v1142, %v1140
      %v1165 = vpack.c.b16 %v1143, %v1141
      %v1166 = vpack.c.b16 %v1146, %v1144
      %v1167 = vpack.c.b16 %v1147, %v1145
      %v1168 = vpack.c.b16 %v1150, %v1148
      %v1169 = vpack.c.b16 %v1151, %v1149
      %v1170 = vpack.c.b16 %v1154, %v1152
      %v1171 = vpack.c.b16 %v1155, %v1153
      %v1172 = vpack.c.b16 %v1158, %v1156
      %v1173 = vpack.c.b16 %v1159, %v1157
      %v1174 = vpack.c.b16 %v1162, %v1160
      %v1175 = vpack.c.b16 %v1163, %v1161
      %v1189 = vsel %vm471, %v1124, 0
      %v1192 = vsel %vm471, %v1125, 0
      %v1195 = vsel %vm471, %v1126, 0
      %v1198 = vsel %vm471, %v1127, 0
      %1200 = vmatpush.bf16.msra.mxu0 0
      %1201 = vmatpush.bf16.msra.mxu0 0
      %1202 = vmatpush.bf16.msra.mxu0 %v1174
      %1203 = vmatpush.bf16.msra.mxu0 %v1172
      %1204 = vmatpush.bf16.msra.mxu0 %v1170
      %1205 = vmatpush.bf16.msra.mxu0 %v1168
      %1206 = vmatpush.bf16.msra.mxu0 %v1166
      %1207 = vmatpush.bf16.msra.mxu0 %v1164
      %1208 = vmatmul.bf16.gmra.mxu0 %v1189
      %v1209 = vpop.f32.mrf.mxu0
      %v1210 = vadd.f32 0.0, %v1209
      %v1211 = vpop.f32.mrf.mxu0
      %v1212 = vadd.f32 0.0, %v1211
      %1213 = vmatmul.bf16.gmra.mxu0 %v1192
      %v1214 = vpop.f32.mrf.mxu0
      %v1215 = vadd.f32 0.0, %v1214
      %v1216 = vpop.f32.mrf.mxu0
      %v1217 = vadd.f32 0.0, %v1216
      %1218 = vmatmul.bf16.gmra.mxu0 %v1195
      %v1219 = vpop.f32.mrf.mxu0
      %v1220 = vadd.f32 0.0, %v1219
      %v1221 = vpop.f32.mrf.mxu0
      %v1222 = vadd.f32 0.0, %v1221
      %1223 = vmatmul.bf16.gmra.mxu0 %v1198
      %v1224 = vpop.f32.mrf.mxu0
      %v1225 = vadd.f32 0.0, %v1224
      %v1226 = vpop.f32.mrf.mxu0
      %v1227 = vadd.f32 0.0, %v1226
      %1228 = vdwg.mxu0
      %1229 = vmatpush.bf16.msra.mxu0 0
      %1230 = vmatpush.bf16.msra.mxu0 0
      %1231 = vmatpush.bf16.msra.mxu0 %v1175
      %1232 = vmatpush.bf16.msra.mxu0 %v1173
      %1233 = vmatpush.bf16.msra.mxu0 %v1171
      %1234 = vmatpush.bf16.msra.mxu0 %v1169
      %1235 = vmatpush.bf16.msra.mxu0 %v1167
      %1236 = vmatpush.bf16.msra.mxu0 %v1165
      %1237 = vmatmul.bf16.gmra.mxu0 %v1189
      %v1238 = vpop.f32.mrf.mxu0
      %v1239 = vadd.f32 0.0, %v1238
      %v1240 = vpop.f32.mrf.mxu0
      %v1241 = vadd.f32 0.0, %v1240
      %1242 = vmatmul.bf16.gmra.mxu0 %v1192
      %v1243 = vpop.f32.mrf.mxu0
      %v1244 = vadd.f32 0.0, %v1243
      %v1245 = vpop.f32.mrf.mxu0
      %v1246 = vadd.f32 0.0, %v1245
      %1247 = vmatmul.bf16.gmra.mxu0 %v1195
      %v1248 = vpop.f32.mrf.mxu0
      %v1249 = vadd.f32 0.0, %v1248
      %v1250 = vpop.f32.mrf.mxu0
      %v1251 = vadd.f32 0.0, %v1250
      %1252 = vmatmul.bf16.gmra.mxu0 %v1198
      %v1253 = vpop.f32.mrf.mxu0
      %v1254 = vadd.f32 0.0, %v1253
      %v1255 = vpop.f32.mrf.mxu0
      %v1256 = vadd.f32 0.0, %v1255
      %1257 = vdwg.mxu0
      %v1258 = vadd.f32 %v1035, %v1210
      %v1259 = vadd.f32 %v1036, %v1239
      %v1260 = vadd.f32 %v1037, %v1212
      %v1261 = vadd.f32 %v1038, %v1241
      %v1262 = vadd.f32 %v1039, %v1215
      %v1263 = vadd.f32 %v1040, %v1244
      %v1264 = vadd.f32 %v1041, %v1217
      %v1265 = vadd.f32 %v1042, %v1246
      %v1266 = vadd.f32 %v1043, %v1220
      %v1267 = vadd.f32 %v1044, %v1249
      %v1268 = vadd.f32 %v1045, %v1222
      %v1269 = vadd.f32 %v1046, %v1251
      %v1270 = vadd.f32 %v1047, %v1225
      %v1271 = vadd.f32 %v1048, %v1254
      %v1272 = vadd.f32 %v1049, %v1227
      %v1273 = vadd.f32 %v1050, %v1256
      %v1274 = vld [vmem:[%s863 + $0x8] sm:$0xf]
      %v1275 = vld [vmem:[%s863 + $0x14] sm:$0xf]
      %v1276 = vld [vmem:[%s863 + $0x20] sm:$0xf]
      %v1277 = vld [vmem:[%s863 + $0x2c] sm:$0xf]
      %s1278 = scalar_lea.vmem %s1, 480
      %v1279 = vld [vmem:[%s1278] sm:$0xff]
      %v1280 = vld [vmem:[%s1278 + $0x8] sm:$0xff]
      %v1281 = vld [vmem:[%s1278 + $0x10] sm:$0xff]
      %v1282 = vld [vmem:[%s1278 + $0x18] sm:$0xff]
      %v1283 = vld [vmem:[%s1278 + $0x20] sm:$0xff]
      %v1284 = vld [vmem:[%s1278 + $0x28] sm:$0xff]
      %v1285 = vld [vmem:[%s1278 + $0x30] sm:$0xff]
      %v1286 = vld [vmem:[%s1278 + $0x38] sm:$0xff]
      %v1287 = vld [vmem:[%s1278 + $0x40] sm:$0xff]
      %v1288 = vld [vmem:[%s1278 + $0x48] sm:$0xff]
      %v1289 = vld [vmem:[%s1278 + $0x50] sm:$0xff]
      %v1290 = vld [vmem:[%s1278 + $0x58] sm:$0xff]
      %v1295 = vunpack.c.l.b16 %v1052
      %v1296 = vunpack.c.l.b16 %v1274
      %v1297 = vunpack.c.l.b16 %v1055
      %v1298 = vunpack.c.l.b16 %v1275
      %v1299 = vunpack.c.l.b16 %v1058
      %v1300 = vunpack.c.l.b16 %v1276
      %v1301 = vunpack.c.l.b16 %v1061
      %v1302 = vunpack.c.l.b16 %v1277
      %v1303 = vpack.c.b16 %v1296, %v1295
      %v1304 = vpack.c.b16 %v1298, %v1297
      %v1305 = vpack.c.b16 %v1300, %v1299
      %v1306 = vpack.c.b16 %v1302, %v1301
      %v1319 = vunpack.c.l.b16 %v1279
      %v1320 = vunpack.c.h.b16 %v1279
      %v1321 = vunpack.c.l.b16 %v1280
      %v1322 = vunpack.c.h.b16 %v1280
      %v1323 = vunpack.c.l.b16 %v1281
      %v1324 = vunpack.c.h.b16 %v1281
      %v1325 = vunpack.c.l.b16 %v1282
      %v1326 = vunpack.c.h.b16 %v1282
      %v1327 = vunpack.c.l.b16 %v1283
      %v1328 = vunpack.c.h.b16 %v1283
      %v1329 = vunpack.c.l.b16 %v1284
      %v1330 = vunpack.c.h.b16 %v1284
      %v1331 = vunpack.c.l.b16 %v1285
      %v1332 = vunpack.c.h.b16 %v1285
      %v1333 = vunpack.c.l.b16 %v1286
      %v1334 = vunpack.c.h.b16 %v1286
      %v1335 = vunpack.c.l.b16 %v1287
      %v1336 = vunpack.c.h.b16 %v1287
      %v1337 = vunpack.c.l.b16 %v1288
      %v1338 = vunpack.c.h.b16 %v1288
      %v1339 = vunpack.c.l.b16 %v1289
      %v1340 = vunpack.c.h.b16 %v1289
      %v1341 = vunpack.c.l.b16 %v1290
      %v1342 = vunpack.c.h.b16 %v1290
      %v1343 = vpack.c.b16 %v1321, %v1319
      %v1344 = vpack.c.b16 %v1322, %v1320
      %v1345 = vpack.c.b16 %v1325, %v1323
      %v1346 = vpack.c.b16 %v1326, %v1324
      %v1347 = vpack.c.b16 %v1329, %v1327
      %v1348 = vpack.c.b16 %v1330, %v1328
      %v1349 = vpack.c.b16 %v1333, %v1331
      %v1350 = vpack.c.b16 %v1334, %v1332
      %v1351 = vpack.c.b16 %v1337, %v1335
      %v1352 = vpack.c.b16 %v1338, %v1336
      %v1353 = vpack.c.b16 %v1341, %v1339
      %v1354 = vpack.c.b16 %v1342, %v1340
      %v1368 = vsel %vm471, %v1303, 0
      %v1371 = vsel %vm471, %v1304, 0
      %v1374 = vsel %vm471, %v1305, 0
      %v1377 = vsel %vm471, %v1306, 0
      %1379 = vmatpush.bf16.msra.mxu0 0
      %1380 = vmatpush.bf16.msra.mxu0 0
      %1381 = vmatpush.bf16.msra.mxu0 %v1353
      %1382 = vmatpush.bf16.msra.mxu0 %v1351
      %1383 = vmatpush.bf16.msra.mxu0 %v1349
      %1384 = vmatpush.bf16.msra.mxu0 %v1347
      %1385 = vmatpush.bf16.msra.mxu0 %v1345
      %1386 = vmatpush.bf16.msra.mxu0 %v1343
      %1387 = vmatmul.bf16.gmra.mxu0 %v1368
      %v1388 = vpop.f32.mrf.mxu0
      %v1389 = vadd.f32 0.0, %v1388
      %v1390 = vpop.f32.mrf.mxu0
      %v1391 = vadd.f32 0.0, %v1390
      %1392 = vmatmul.bf16.gmra.mxu0 %v1371
      %v1393 = vpop.f32.mrf.mxu0
      %v1394 = vadd.f32 0.0, %v1393
      %v1395 = vpop.f32.mrf.mxu0
      %v1396 = vadd.f32 0.0, %v1395
      %1397 = vmatmul.bf16.gmra.mxu0 %v1374
      %v1398 = vpop.f32.mrf.mxu0
      %v1399 = vadd.f32 0.0, %v1398
      %v1400 = vpop.f32.mrf.mxu0
      %v1401 = vadd.f32 0.0, %v1400
      %1402 = vmatmul.bf16.gmra.mxu0 %v1377
      %v1403 = vpop.f32.mrf.mxu0
      %v1404 = vadd.f32 0.0, %v1403
      %v1405 = vpop.f32.mrf.mxu0
      %v1406 = vadd.f32 0.0, %v1405
      %1407 = vdwg.mxu0
      %1408 = vmatpush.bf16.msra.mxu0 0
      %1409 = vmatpush.bf16.msra.mxu0 0
      %1410 = vmatpush.bf16.msra.mxu0 %v1354
      %1411 = vmatpush.bf16.msra.mxu0 %v1352
      %1412 = vmatpush.bf16.msra.mxu0 %v1350
      %1413 = vmatpush.bf16.msra.mxu0 %v1348
      %1414 = vmatpush.bf16.msra.mxu0 %v1346
      %1415 = vmatpush.bf16.msra.mxu0 %v1344
      %1416 = vmatmul.bf16.gmra.mxu0 %v1368
      %v1417 = vpop.f32.mrf.mxu0
      %v1418 = vadd.f32 0.0, %v1417
      %v1419 = vpop.f32.mrf.mxu0
      %v1420 = vadd.f32 0.0, %v1419
      %1421 = vmatmul.bf16.gmra.mxu0 %v1371
      %v1422 = vpop.f32.mrf.mxu0
      %v1423 = vadd.f32 0.0, %v1422
      %v1424 = vpop.f32.mrf.mxu0
      %v1425 = vadd.f32 0.0, %v1424
      %1426 = vmatmul.bf16.gmra.mxu0 %v1374
      %v1427 = vpop.f32.mrf.mxu0
      %v1428 = vadd.f32 0.0, %v1427
      %v1429 = vpop.f32.mrf.mxu0
      %v1430 = vadd.f32 0.0, %v1429
      %1431 = vmatmul.bf16.gmra.mxu0 %v1377
      %v1432 = vpop.f32.mrf.mxu0
      %v1433 = vadd.f32 0.0, %v1432
      %v1434 = vpop.f32.mrf.mxu0
      %v1435 = vadd.f32 0.0, %v1434
      %1436 = vdwg.mxu0
      %v1437 = vadd.f32 %v1258, %v1389
      %v1438 = vadd.f32 %v1259, %v1418
      %v1439 = vadd.f32 %v1260, %v1391
      %v1440 = vadd.f32 %v1261, %v1420
      %v1441 = vadd.f32 %v1262, %v1394
      %v1442 = vadd.f32 %v1263, %v1423
      %v1443 = vadd.f32 %v1264, %v1396
      %v1444 = vadd.f32 %v1265, %v1425
      %v1445 = vadd.f32 %v1266, %v1399
      %v1446 = vadd.f32 %v1267, %v1428
      %v1447 = vadd.f32 %v1268, %v1401
      %v1448 = vadd.f32 %v1269, %v1430
      %v1449 = vadd.f32 %v1270, %v1404
      %v1450 = vadd.f32 %v1271, %v1433
      %v1451 = vadd.f32 %v1272, %v1406
      %v1452 = vadd.f32 %v1273, %v1435
      %s1453 = scalar_lea.vmem %s293, 24
      %v1454 = vld [vmem:[%s1453] sm:$0xf]
      %v1455 = vld [vmem:[%s1453 + $0x4] sm:$0xf]
      %v1456 = vld [vmem:[%s1453 + $0xc] sm:$0xf]
      %v1457 = vld [vmem:[%s1453 + $0x10] sm:$0xf]
      %v1458 = vld [vmem:[%s1453 + $0x18] sm:$0xf]
      %v1459 = vld [vmem:[%s1453 + $0x1c] sm:$0xf]
      %v1460 = vld [vmem:[%s1453 + $0x24] sm:$0xf]
      %v1461 = vld [vmem:[%s1453 + $0x28] sm:$0xf]
      %s1462 = scalar_lea.vmem %s1, 576
      %v1463 = vld [vmem:[%s1462] sm:$0xff]
      %v1464 = vld [vmem:[%s1462 + $0x8] sm:$0xff]
      %v1465 = vld [vmem:[%s1462 + $0x10] sm:$0xff]
      %v1466 = vld [vmem:[%s1462 + $0x18] sm:$0xff]
      %v1467 = vld [vmem:[%s1462 + $0x20] sm:$0xff]
      %v1468 = vld [vmem:[%s1462 + $0x28] sm:$0xff]
      %v1469 = vld [vmem:[%s1462 + $0x30] sm:$0xff]
      %v1470 = vld [vmem:[%s1462 + $0x38] sm:$0xff]
      %v1471 = vld [vmem:[%s1462 + $0x40] sm:$0xff]
      %v1472 = vld [vmem:[%s1462 + $0x48] sm:$0xff]
      %v1473 = vld [vmem:[%s1462 + $0x50] sm:$0xff]
      %v1474 = vld [vmem:[%s1462 + $0x58] sm:$0xff]
      %v1483 = vunpack.c.l.b16 %v1454
      %v1484 = vunpack.c.l.b16 %v1455
      %v1485 = vunpack.c.l.b16 %v1456
      %v1486 = vunpack.c.l.b16 %v1457
      %v1487 = vunpack.c.l.b16 %v1458
      %v1488 = vunpack.c.l.b16 %v1459
      %v1489 = vunpack.c.l.b16 %v1460
      %v1490 = vunpack.c.l.b16 %v1461
      %v1491 = vpack.c.b16 %v1484, %v1483
      %v1492 = vpack.c.b16 %v1486, %v1485
      %v1493 = vpack.c.b16 %v1488, %v1487
      %v1494 = vpack.c.b16 %v1490, %v1489
      %v1507 = vunpack.c.l.b16 %v1463
      %v1508 = vunpack.c.h.b16 %v1463
      %v1509 = vunpack.c.l.b16 %v1464
      %v1510 = vunpack.c.h.b16 %v1464
      %v1511 = vunpack.c.l.b16 %v1465
      %v1512 = vunpack.c.h.b16 %v1465
      %v1513 = vunpack.c.l.b16 %v1466
      %v1514 = vunpack.c.h.b16 %v1466
      %v1515 = vunpack.c.l.b16 %v1467
      %v1516 = vunpack.c.h.b16 %v1467
      %v1517 = vunpack.c.l.b16 %v1468
      %v1518 = vunpack.c.h.b16 %v1468
      %v1519 = vunpack.c.l.b16 %v1469
      %v1520 = vunpack.c.h.b16 %v1469
      %v1521 = vunpack.c.l.b16 %v1470
      %v1522 = vunpack.c.h.b16 %v1470
      %v1523 = vunpack.c.l.b16 %v1471
      %v1524 = vunpack.c.h.b16 %v1471
      %v1525 = vunpack.c.l.b16 %v1472
      %v1526 = vunpack.c.h.b16 %v1472
      %v1527 = vunpack.c.l.b16 %v1473
      %v1528 = vunpack.c.h.b16 %v1473
      %v1529 = vunpack.c.l.b16 %v1474
      %v1530 = vunpack.c.h.b16 %v1474
      %v1531 = vpack.c.b16 %v1509, %v1507
      %v1532 = vpack.c.b16 %v1510, %v1508
      %v1533 = vpack.c.b16 %v1513, %v1511
      %v1534 = vpack.c.b16 %v1514, %v1512
      %v1535 = vpack.c.b16 %v1517, %v1515
      %v1536 = vpack.c.b16 %v1518, %v1516
      %v1537 = vpack.c.b16 %v1521, %v1519
      %v1538 = vpack.c.b16 %v1522, %v1520
      %v1539 = vpack.c.b16 %v1525, %v1523
      %v1540 = vpack.c.b16 %v1526, %v1524
      %v1541 = vpack.c.b16 %v1529, %v1527
      %v1542 = vpack.c.b16 %v1530, %v1528
      %v1556 = vsel %vm471, %v1491, 0
      %v1559 = vsel %vm471, %v1492, 0
      %v1562 = vsel %vm471, %v1493, 0
      %v1565 = vsel %vm471, %v1494, 0
      %1567 = vmatpush.bf16.msra.mxu0 0
      %1568 = vmatpush.bf16.msra.mxu0 0
      %1569 = vmatpush.bf16.msra.mxu0 %v1541
      %1570 = vmatpush.bf16.msra.mxu0 %v1539
      %1571 = vmatpush.bf16.msra.mxu0 %v1537
      %1572 = vmatpush.bf16.msra.mxu0 %v1535
      %1573 = vmatpush.bf16.msra.mxu0 %v1533
      %1574 = vmatpush.bf16.msra.mxu0 %v1531
      %1575 = vmatmul.bf16.gmra.mxu0 %v1556
      %v1576 = vpop.f32.mrf.mxu0
      %v1577 = vadd.f32 0.0, %v1576
      %v1578 = vpop.f32.mrf.mxu0
      %v1579 = vadd.f32 0.0, %v1578
      %1580 = vmatmul.bf16.gmra.mxu0 %v1559
      %v1581 = vpop.f32.mrf.mxu0
      %v1582 = vadd.f32 0.0, %v1581
      %v1583 = vpop.f32.mrf.mxu0
      %v1584 = vadd.f32 0.0, %v1583
      %1585 = vmatmul.bf16.gmra.mxu0 %v1562
      %v1586 = vpop.f32.mrf.mxu0
      %v1587 = vadd.f32 0.0, %v1586
      %v1588 = vpop.f32.mrf.mxu0
      %v1589 = vadd.f32 0.0, %v1588
      %1590 = vmatmul.bf16.gmra.mxu0 %v1565
      %v1591 = vpop.f32.mrf.mxu0
      %v1592 = vadd.f32 0.0, %v1591
      %v1593 = vpop.f32.mrf.mxu0
      %v1594 = vadd.f32 0.0, %v1593
      %1595 = vdwg.mxu0
      %1596 = vmatpush.bf16.msra.mxu0 0
      %1597 = vmatpush.bf16.msra.mxu0 0
      %1598 = vmatpush.bf16.msra.mxu0 %v1542
      %1599 = vmatpush.bf16.msra.mxu0 %v1540
      %1600 = vmatpush.bf16.msra.mxu0 %v1538
      %1601 = vmatpush.bf16.msra.mxu0 %v1536
      %1602 = vmatpush.bf16.msra.mxu0 %v1534
      %1603 = vmatpush.bf16.msra.mxu0 %v1532
      %1604 = vmatmul.bf16.gmra.mxu0 %v1556
      %v1605 = vpop.f32.mrf.mxu0
      %v1606 = vadd.f32 0.0, %v1605
      %v1607 = vpop.f32.mrf.mxu0
      %v1608 = vadd.f32 0.0, %v1607
      %1609 = vmatmul.bf16.gmra.mxu0 %v1559
      %v1610 = vpop.f32.mrf.mxu0
      %v1611 = vadd.f32 0.0, %v1610
      %v1612 = vpop.f32.mrf.mxu0
      %v1613 = vadd.f32 0.0, %v1612
      %1614 = vmatmul.bf16.gmra.mxu0 %v1562
      %v1615 = vpop.f32.mrf.mxu0
      %v1616 = vadd.f32 0.0, %v1615
      %v1617 = vpop.f32.mrf.mxu0
      %v1618 = vadd.f32 0.0, %v1617
      %1619 = vmatmul.bf16.gmra.mxu0 %v1565
      %v1620 = vpop.f32.mrf.mxu0
      %v1621 = vadd.f32 0.0, %v1620
      %v1622 = vpop.f32.mrf.mxu0
      %v1623 = vadd.f32 0.0, %v1622
      %1624 = vdwg.mxu0
      %v1625 = vadd.f32 %v1437, %v1577
      %v1626 = vadd.f32 %v1438, %v1606
      %v1627 = vadd.f32 %v1439, %v1579
      %v1628 = vadd.f32 %v1440, %v1608
      %v1629 = vadd.f32 %v1441, %v1582
      %v1630 = vadd.f32 %v1442, %v1611
      %v1631 = vadd.f32 %v1443, %v1584
      %v1632 = vadd.f32 %v1444, %v1613
      %v1633 = vadd.f32 %v1445, %v1587
      %v1634 = vadd.f32 %v1446, %v1616
      %v1635 = vadd.f32 %v1447, %v1589
      %v1636 = vadd.f32 %v1448, %v1618
      %v1637 = vadd.f32 %v1449, %v1592
      %v1638 = vadd.f32 %v1450, %v1621
      %v1639 = vadd.f32 %v1451, %v1594
      %v1640 = vadd.f32 %v1452, %v1623
      %v1641 = vld [vmem:[%s1453] sm:$0xc]
      %v1642 = vld [vmem:[%s1453 + $0x4] sm:$0xf]
      %v1643 = vld [vmem:[%s1453 + $0x8] sm:$0x3]
      %v1644 = vld [vmem:[%s1453 + $0xc] sm:$0xc]
      %v1645 = vld [vmem:[%s1453 + $0x10] sm:$0xf]
      %v1646 = vld [vmem:[%s1453 + $0x14] sm:$0x3]
      %v1647 = vld [vmem:[%s1453 + $0x18] sm:$0xc]
      %v1648 = vld [vmem:[%s1453 + $0x1c] sm:$0xf]
      %v1649 = vld [vmem:[%s1453 + $0x20] sm:$0x3]
      %v1650 = vld [vmem:[%s1453 + $0x24] sm:$0xc]
      %v1651 = vld [vmem:[%s1453 + $0x28] sm:$0xf]
      %v1652 = vld [vmem:[%s1453 + $0x2c] sm:$0x3]
      %v1665 = vrot.slane %v1641, 6
      %v1666 = vrot.slane %v1665, 4
      %v1667 = vrot.slane %v1642, 6
      %v1668 = vsel %vm357, %v1666, %v1667
      %v1669 = vrot.slane %v1667, 4
      %v1670 = vrot.slane %v1643, 6
      %v1671 = vsel %vm357, %v1669, %v1670
      %v1672 = vrot.slane %v1644, 6
      %v1673 = vrot.slane %v1672, 4
      %v1674 = vrot.slane %v1645, 6
      %v1675 = vsel %vm357, %v1673, %v1674
      %v1676 = vrot.slane %v1674, 4
      %v1677 = vrot.slane %v1646, 6
      %v1678 = vsel %vm357, %v1676, %v1677
      %v1679 = vrot.slane %v1647, 6
      %v1680 = vrot.slane %v1679, 4
      %v1681 = vrot.slane %v1648, 6
      %v1682 = vsel %vm357, %v1680, %v1681
      %v1683 = vrot.slane %v1681, 4
      %v1684 = vrot.slane %v1649, 6
      %v1685 = vsel %vm357, %v1683, %v1684
      %v1686 = vrot.slane %v1650, 6
      %v1687 = vrot.slane %v1686, 4
      %v1688 = vrot.slane %v1651, 6
      %v1689 = vsel %vm357, %v1687, %v1688
      %v1690 = vrot.slane %v1688, 4
      %v1691 = vrot.slane %v1652, 6
      %v1692 = vsel %vm357, %v1690, %v1691
      %s1693 = scalar_lea.vmem %s1, 672
      %v1694 = vld [vmem:[%s1693] sm:$0xff]
      %v1695 = vld [vmem:[%s1693 + $0x8] sm:$0xff]
      %v1696 = vld [vmem:[%s1693 + $0x10] sm:$0xff]
      %v1697 = vld [vmem:[%s1693 + $0x18] sm:$0xff]
      %v1698 = vld [vmem:[%s1693 + $0x20] sm:$0xff]
      %v1699 = vld [vmem:[%s1693 + $0x28] sm:$0xff]
      %v1700 = vld [vmem:[%s1693 + $0x30] sm:$0xff]
      %v1701 = vld [vmem:[%s1693 + $0x38] sm:$0xff]
      %v1702 = vld [vmem:[%s1693 + $0x40] sm:$0xff]
      %v1703 = vld [vmem:[%s1693 + $0x48] sm:$0xff]
      %v1704 = vld [vmem:[%s1693 + $0x50] sm:$0xff]
      %v1705 = vld [vmem:[%s1693 + $0x58] sm:$0xff]
      %v1706 = vunpack.c.l.b16 %v1668
      %v1707 = vunpack.c.l.b16 %v1671
      %v1708 = vunpack.c.l.b16 %v1675
      %v1709 = vunpack.c.l.b16 %v1678
      %v1710 = vunpack.c.l.b16 %v1682
      %v1711 = vunpack.c.l.b16 %v1685
      %v1712 = vunpack.c.l.b16 %v1689
      %v1713 = vunpack.c.l.b16 %v1692
      %v1714 = vpack.c.b16 %v1707, %v1706
      %v1715 = vpack.c.b16 %v1709, %v1708
      %v1716 = vpack.c.b16 %v1711, %v1710
      %v1717 = vpack.c.b16 %v1713, %v1712
      %v1730 = vunpack.c.l.b16 %v1694
      %v1731 = vunpack.c.h.b16 %v1694
      %v1732 = vunpack.c.l.b16 %v1695
      %v1733 = vunpack.c.h.b16 %v1695
      %v1734 = vunpack.c.l.b16 %v1696
      %v1735 = vunpack.c.h.b16 %v1696
      %v1736 = vunpack.c.l.b16 %v1697
      %v1737 = vunpack.c.h.b16 %v1697
      %v1738 = vunpack.c.l.b16 %v1698
      %v1739 = vunpack.c.h.b16 %v1698
      %v1740 = vunpack.c.l.b16 %v1699
      %v1741 = vunpack.c.h.b16 %v1699
      %v1742 = vunpack.c.l.b16 %v1700
      %v1743 = vunpack.c.h.b16 %v1700
      %v1744 = vunpack.c.l.b16 %v1701
      %v1745 = vunpack.c.h.b16 %v1701
      %v1746 = vunpack.c.l.b16 %v1702
      %v1747 = vunpack.c.h.b16 %v1702
      %v1748 = vunpack.c.l.b16 %v1703
      %v1749 = vunpack.c.h.b16 %v1703
      %v1750 = vunpack.c.l.b16 %v1704
      %v1751 = vunpack.c.h.b16 %v1704
      %v1752 = vunpack.c.l.b16 %v1705
      %v1753 = vunpack.c.h.b16 %v1705
      %v1754 = vpack.c.b16 %v1732, %v1730
      %v1755 = vpack.c.b16 %v1733, %v1731
      %v1756 = vpack.c.b16 %v1736, %v1734
      %v1757 = vpack.c.b16 %v1737, %v1735
      %v1758 = vpack.c.b16 %v1740, %v1738
      %v1759 = vpack.c.b16 %v1741, %v1739
      %v1760 = vpack.c.b16 %v1744, %v1742
      %v1761 = vpack.c.b16 %v1745, %v1743
      %v1762 = vpack.c.b16 %v1748, %v1746
      %v1763 = vpack.c.b16 %v1749, %v1747
      %v1764 = vpack.c.b16 %v1752, %v1750
      %v1765 = vpack.c.b16 %v1753, %v1751
      %v1779 = vsel %vm471, %v1714, 0
      %v1782 = vsel %vm471, %v1715, 0
      %v1785 = vsel %vm471, %v1716, 0
      %v1788 = vsel %vm471, %v1717, 0
      %1790 = vmatpush.bf16.msra.mxu0 0
      %1791 = vmatpush.bf16.msra.mxu0 0
      %1792 = vmatpush.bf16.msra.mxu0 %v1764
      %1793 = vmatpush.bf16.msra.mxu0 %v1762
      %1794 = vmatpush.bf16.msra.mxu0 %v1760
      %1795 = vmatpush.bf16.msra.mxu0 %v1758
      %1796 = vmatpush.bf16.msra.mxu0 %v1756
      %1797 = vmatpush.bf16.msra.mxu0 %v1754
      %1798 = vmatmul.bf16.gmra.mxu0 %v1779
      %v1799 = vpop.f32.mrf.mxu0
      %v1800 = vadd.f32 0.0, %v1799
      %v1801 = vpop.f32.mrf.mxu0
      %v1802 = vadd.f32 0.0, %v1801
      %1803 = vmatmul.bf16.gmra.mxu0 %v1782
      %v1804 = vpop.f32.mrf.mxu0
      %v1805 = vadd.f32 0.0, %v1804
      %v1806 = vpop.f32.mrf.mxu0
      %v1807 = vadd.f32 0.0, %v1806
      %1808 = vmatmul.bf16.gmra.mxu0 %v1785
      %v1809 = vpop.f32.mrf.mxu0
      %v1810 = vadd.f32 0.0, %v1809
      %v1811 = vpop.f32.mrf.mxu0
      %v1812 = vadd.f32 0.0, %v1811
      %1813 = vmatmul.bf16.gmra.mxu0 %v1788
      %v1814 = vpop.f32.mrf.mxu0
      %v1815 = vadd.f32 0.0, %v1814
      %v1816 = vpop.f32.mrf.mxu0
      %v1817 = vadd.f32 0.0, %v1816
      %1818 = vdwg.mxu0
      %1819 = vmatpush.bf16.msra.mxu0 0
      %1820 = vmatpush.bf16.msra.mxu0 0
      %1821 = vmatpush.bf16.msra.mxu0 %v1765
      %1822 = vmatpush.bf16.msra.mxu0 %v1763
      %1823 = vmatpush.bf16.msra.mxu0 %v1761
      %1824 = vmatpush.bf16.msra.mxu0 %v1759
      %1825 = vmatpush.bf16.msra.mxu0 %v1757
      %1826 = vmatpush.bf16.msra.mxu0 %v1755
      %1827 = vmatmul.bf16.gmra.mxu0 %v1779
      %v1828 = vpop.f32.mrf.mxu0
      %v1829 = vadd.f32 0.0, %v1828
      %v1830 = vpop.f32.mrf.mxu0
      %v1831 = vadd.f32 0.0, %v1830
      %1832 = vmatmul.bf16.gmra.mxu0 %v1782
      %v1833 = vpop.f32.mrf.mxu0
      %v1834 = vadd.f32 0.0, %v1833
      %v1835 = vpop.f32.mrf.mxu0
      %v1836 = vadd.f32 0.0, %v1835
      %1837 = vmatmul.bf16.gmra.mxu0 %v1785
      %v1838 = vpop.f32.mrf.mxu0
      %v1839 = vadd.f32 0.0, %v1838
      %v1840 = vpop.f32.mrf.mxu0
      %v1841 = vadd.f32 0.0, %v1840
      %1842 = vmatmul.bf16.gmra.mxu0 %v1788
      %v1843 = vpop.f32.mrf.mxu0
      %v1844 = vadd.f32 0.0, %v1843
      %v1845 = vpop.f32.mrf.mxu0
      %v1846 = vadd.f32 0.0, %v1845
      %1847 = vdwg.mxu0
      %v1848 = vadd.f32 %v1625, %v1800
      %v1849 = vadd.f32 %v1626, %v1829
      %v1850 = vadd.f32 %v1627, %v1802
      %v1851 = vadd.f32 %v1628, %v1831
      %v1852 = vadd.f32 %v1629, %v1805
      %v1853 = vadd.f32 %v1630, %v1834
      %v1854 = vadd.f32 %v1631, %v1807
      %v1855 = vadd.f32 %v1632, %v1836
      %v1856 = vadd.f32 %v1633, %v1810
      %v1857 = vadd.f32 %v1634, %v1839
      %v1858 = vadd.f32 %v1635, %v1812
      %v1859 = vadd.f32 %v1636, %v1841
      %v1860 = vadd.f32 %v1637, %v1815
      %v1861 = vadd.f32 %v1638, %v1844
      %v1862 = vadd.f32 %v1639, %v1817
      %v1863 = vadd.f32 %v1640, %v1846
      %v1864 = vld [vmem:[%s1453 + $0x8] sm:$0xf]
      %v1865 = vld [vmem:[%s1453 + $0x14] sm:$0xf]
      %v1866 = vld [vmem:[%s1453 + $0x20] sm:$0xf]
      %v1867 = vld [vmem:[%s1453 + $0x2c] sm:$0xf]
      %s1868 = scalar_lea.vmem %s1, 768
      %v1869 = vld [vmem:[%s1868] sm:$0xff]
      %v1870 = vld [vmem:[%s1868 + $0x8] sm:$0xff]
      %v1871 = vld [vmem:[%s1868 + $0x10] sm:$0xff]
      %v1872 = vld [vmem:[%s1868 + $0x18] sm:$0xff]
      %v1873 = vld [vmem:[%s1868 + $0x20] sm:$0xff]
      %v1874 = vld [vmem:[%s1868 + $0x28] sm:$0xff]
      %v1875 = vld [vmem:[%s1868 + $0x30] sm:$0xff]
      %v1876 = vld [vmem:[%s1868 + $0x38] sm:$0xff]
      %v1877 = vld [vmem:[%s1868 + $0x40] sm:$0xff]
      %v1878 = vld [vmem:[%s1868 + $0x48] sm:$0xff]
      %v1879 = vld [vmem:[%s1868 + $0x50] sm:$0xff]
      %v1880 = vld [vmem:[%s1868 + $0x58] sm:$0xff]
      %v1885 = vunpack.c.l.b16 %v1642
      %v1886 = vunpack.c.l.b16 %v1864
      %v1887 = vunpack.c.l.b16 %v1645
      %v1888 = vunpack.c.l.b16 %v1865
      %v1889 = vunpack.c.l.b16 %v1648
      %v1890 = vunpack.c.l.b16 %v1866
      %v1891 = vunpack.c.l.b16 %v1651
      %v1892 = vunpack.c.l.b16 %v1867
      %v1893 = vpack.c.b16 %v1886, %v1885
      %v1894 = vpack.c.b16 %v1888, %v1887
      %v1895 = vpack.c.b16 %v1890, %v1889
      %v1896 = vpack.c.b16 %v1892, %v1891
      %v1909 = vunpack.c.l.b16 %v1869
      %v1910 = vunpack.c.h.b16 %v1869
      %v1911 = vunpack.c.l.b16 %v1870
      %v1912 = vunpack.c.h.b16 %v1870
      %v1913 = vunpack.c.l.b16 %v1871
      %v1914 = vunpack.c.h.b16 %v1871
      %v1915 = vunpack.c.l.b16 %v1872
      %v1916 = vunpack.c.h.b16 %v1872
      %v1917 = vunpack.c.l.b16 %v1873
      %v1918 = vunpack.c.h.b16 %v1873
      %v1919 = vunpack.c.l.b16 %v1874
      %v1920 = vunpack.c.h.b16 %v1874
      %v1921 = vunpack.c.l.b16 %v1875
      %v1922 = vunpack.c.h.b16 %v1875
      %v1923 = vunpack.c.l.b16 %v1876
      %v1924 = vunpack.c.h.b16 %v1876
      %v1925 = vunpack.c.l.b16 %v1877
      %v1926 = vunpack.c.h.b16 %v1877
      %v1927 = vunpack.c.l.b16 %v1878
      %v1928 = vunpack.c.h.b16 %v1878
      %v1929 = vunpack.c.l.b16 %v1879
      %v1930 = vunpack.c.h.b16 %v1879
      %v1931 = vunpack.c.l.b16 %v1880
      %v1932 = vunpack.c.h.b16 %v1880
      %v1933 = vpack.c.b16 %v1911, %v1909
      %v1934 = vpack.c.b16 %v1912, %v1910
      %v1935 = vpack.c.b16 %v1915, %v1913
      %v1936 = vpack.c.b16 %v1916, %v1914
      %v1937 = vpack.c.b16 %v1919, %v1917
      %v1938 = vpack.c.b16 %v1920, %v1918
      %v1939 = vpack.c.b16 %v1923, %v1921
      %v1940 = vpack.c.b16 %v1924, %v1922
      %v1941 = vpack.c.b16 %v1927, %v1925
      %v1942 = vpack.c.b16 %v1928, %v1926
      %v1943 = vpack.c.b16 %v1931, %v1929
      %v1944 = vpack.c.b16 %v1932, %v1930
      %v1958 = vsel %vm471, %v1893, 0
      %v1961 = vsel %vm471, %v1894, 0
      %v1964 = vsel %vm471, %v1895, 0
      %v1967 = vsel %vm471, %v1896, 0
      %1969 = vmatpush.bf16.msra.mxu0 0
      %1970 = vmatpush.bf16.msra.mxu0 0
      %1971 = vmatpush.bf16.msra.mxu0 %v1943
      %1972 = vmatpush.bf16.msra.mxu0 %v1941
      %1973 = vmatpush.bf16.msra.mxu0 %v1939
      %1974 = vmatpush.bf16.msra.mxu0 %v1937
      %1975 = vmatpush.bf16.msra.mxu0 %v1935
      %1976 = vmatpush.bf16.msra.mxu0 %v1933
      %1977 = vmatmul.bf16.gmra.mxu0 %v1958
      %v1978 = vpop.f32.mrf.mxu0
      %v1979 = vadd.f32 0.0, %v1978
      %v1980 = vpop.f32.mrf.mxu0
      %v1981 = vadd.f32 0.0, %v1980
      %1982 = vmatmul.bf16.gmra.mxu0 %v1961
      %v1983 = vpop.f32.mrf.mxu0
      %v1984 = vadd.f32 0.0, %v1983
      %v1985 = vpop.f32.mrf.mxu0
      %v1986 = vadd.f32 0.0, %v1985
      %1987 = vmatmul.bf16.gmra.mxu0 %v1964
      %v1988 = vpop.f32.mrf.mxu0
      %v1989 = vadd.f32 0.0, %v1988
      %v1990 = vpop.f32.mrf.mxu0
      %v1991 = vadd.f32 0.0, %v1990
      %1992 = vmatmul.bf16.gmra.mxu0 %v1967
      %v1993 = vpop.f32.mrf.mxu0
      %v1994 = vadd.f32 0.0, %v1993
      %v1995 = vpop.f32.mrf.mxu0
      %v1996 = vadd.f32 0.0, %v1995
      %1997 = vdwg.mxu0
      %1998 = vmatpush.bf16.msra.mxu0 0
      %1999 = vmatpush.bf16.msra.mxu0 0
      %2000 = vmatpush.bf16.msra.mxu0 %v1944
      %2001 = vmatpush.bf16.msra.mxu0 %v1942
      %2002 = vmatpush.bf16.msra.mxu0 %v1940
      %2003 = vmatpush.bf16.msra.mxu0 %v1938
      %2004 = vmatpush.bf16.msra.mxu0 %v1936
      %2005 = vmatpush.bf16.msra.mxu0 %v1934
      %2006 = vmatmul.bf16.gmra.mxu0 %v1958
      %v2007 = vpop.f32.mrf.mxu0
      %v2008 = vadd.f32 0.0, %v2007
      %v2009 = vpop.f32.mrf.mxu0
      %v2010 = vadd.f32 0.0, %v2009
      %2011 = vmatmul.bf16.gmra.mxu0 %v1961
      %v2012 = vpop.f32.mrf.mxu0
      %v2013 = vadd.f32 0.0, %v2012
      %v2014 = vpop.f32.mrf.mxu0
      %v2015 = vadd.f32 0.0, %v2014
      %2016 = vmatmul.bf16.gmra.mxu0 %v1964
      %v2017 = vpop.f32.mrf.mxu0
      %v2018 = vadd.f32 0.0, %v2017
      %v2019 = vpop.f32.mrf.mxu0
      %v2020 = vadd.f32 0.0, %v2019
      %2021 = vmatmul.bf16.gmra.mxu0 %v1967
      %v2022 = vpop.f32.mrf.mxu0
      %v2023 = vadd.f32 0.0, %v2022
      %v2024 = vpop.f32.mrf.mxu0
      %v2025 = vadd.f32 0.0, %v2024
      %2026 = vdwg.mxu0
      %v2027 = vadd.f32 %v1848, %v1979
      %v2028 = vadd.f32 %v1849, %v2008
      %v2029 = vadd.f32 %v1850, %v1981
      %v2030 = vadd.f32 %v1851, %v2010
      %v2031 = vadd.f32 %v1852, %v1984
      %v2032 = vadd.f32 %v1853, %v2013
      %v2033 = vadd.f32 %v1854, %v1986
      %v2034 = vadd.f32 %v1855, %v2015
      %v2035 = vadd.f32 %v1856, %v1989
      %v2036 = vadd.f32 %v1857, %v2018
      %v2037 = vadd.f32 %v1858, %v1991
      %v2038 = vadd.f32 %v1859, %v2020
      %v2039 = vadd.f32 %v1860, %v1994
      %v2040 = vadd.f32 %v1861, %v2023
      %v2041 = vadd.f32 %v1862, %v1996
      %v2042 = vadd.f32 %v1863, %v2025
      %v2043 = vld [vmem:[%s2] sm:$0x3]
      %v2045 = vperm.slane %v2043, 0
      %v2046 = vperm.slane %v2043, 1
      %v2049 = vadd.f32 %v2027, %v2045
      %v2050 = vadd.f32 %v2028, %v2046
      %v2051 = vadd.f32 %v2029, %v2045
      %v2052 = vadd.f32 %v2030, %v2046
      %v2053 = vadd.f32 %v2031, %v2045
      %v2054 = vadd.f32 %v2032, %v2046
      %v2055 = vadd.f32 %v2033, %v2045
      %v2056 = vadd.f32 %v2034, %v2046
      %v2057 = vadd.f32 %v2035, %v2045
      %v2058 = vadd.f32 %v2036, %v2046
      %v2059 = vadd.f32 %v2037, %v2045
      %v2060 = vadd.f32 %v2038, %v2046
      %v2061 = vadd.f32 %v2039, %v2045
      %v2062 = vadd.f32 %v2040, %v2046
      %v2063 = vadd.f32 %v2041, %v2045
      %v2064 = vadd.f32 %v2042, %v2046
      %2065 = vmax.xlane.f32.xlu0 %v2049
      %v2066 = vpop.xlane.xlu0 %2065
      %2067 = vmax.xlane.f32.xlu0 %v2051
      %v2068 = vpop.xlane.xlu0 %2067
      %2069 = vmax.xlane.f32.xlu0 %v2053
      %v2070 = vpop.xlane.xlu0 %2069
      %2071 = vmax.xlane.f32.xlu0 %v2055
      %v2072 = vpop.xlane.xlu0 %2071
      %2073 = vmax.xlane.f32.xlu0 %v2057
      %v2074 = vpop.xlane.xlu0 %2073
      %2075 = vmax.xlane.f32.xlu0 %v2059
      %v2076 = vpop.xlane.xlu0 %2075
      %2077 = vmax.xlane.f32.xlu0 %v2061
      %v2078 = vpop.xlane.xlu0 %2077
      %2079 = vmax.xlane.f32.xlu0 %v2063
      %v2080 = vpop.xlane.xlu0 %2079
      %v2081 = vsub.f32 %v2049, %v2066
      %v2082 = vsub.f32 %v2051, %v2068
      %v2083 = vsub.f32 %v2053, %v2070
      %v2084 = vsub.f32 %v2055, %v2072
      %v2085 = vsub.f32 %v2057, %v2074
      %v2086 = vsub.f32 %v2059, %v2076
      %v2087 = vsub.f32 %v2061, %v2078
      %v2088 = vsub.f32 %v2063, %v2080
      %v2089 = vmul.f32 %v2081, 1.442695
      %v2090 = vpow.pop %v2089
      %v2091 = vmul.f32 %v2082, 1.442695
      %v2092 = vpow.pop %v2091
      %v2093 = vmul.f32 %v2083, 1.442695
      %v2094 = vpow.pop %v2093
      %v2095 = vmul.f32 %v2084, 1.442695
      %v2096 = vpow.pop %v2095
      %v2097 = vmul.f32 %v2085, 1.442695
      %v2098 = vpow.pop %v2097
      %v2099 = vmul.f32 %v2086, 1.442695
      %v2100 = vpow.pop %v2099
      %v2101 = vmul.f32 %v2087, 1.442695
      %v2102 = vpow.pop %v2101
      %v2103 = vmul.f32 %v2088, 1.442695
      %v2104 = vpow.pop %v2103
      %v2105 = vld [vmem:[%s3] sm:$0xff]
      %v2106 = vld [vmem:[%s3 + $0x8] sm:$0xff]
      %v2107 = vld [vmem:[%s3 + $0x10] sm:$0xff]
      %v2108 = vld [vmem:[%s3 + $0x18] sm:$0xff]
      %v2109 = vld [vmem:[%s3 + $0x20] sm:$0xff]
      %v2110 = vld [vmem:[%s3 + $0x28] sm:$0xff]
      %v2111 = vld [vmem:[%s3 + $0x30] sm:$0xff]
      %v2112 = vld [vmem:[%s3 + $0x38] sm:$0xff]
      %v2113 = vld [vmem:[%s3 + $0x40] sm:$0xff]
      %v2114 = vld [vmem:[%s3 + $0x48] sm:$0xff]
      %v2115 = vld [vmem:[%s3 + $0x50] sm:$0xff]
      %v2116 = vld [vmem:[%s3 + $0x58] sm:$0xff]
      %v2117 = vld [vmem:[%s3 + $0x60] sm:$0xff]
      %v2118 = vld [vmem:[%s3 + $0x68] sm:$0xff]
      %v2119 = vld [vmem:[%s3 + $0x70] sm:$0xff]
      %v2120 = vld [vmem:[%s3 + $0x78] sm:$0xff]
      %2121 = vmatpush.msra.mxu0 %v2120
      %2122 = vmatpush.msra.mxu0 %v2119
      %2123 = vmatpush.msra.mxu0 %v2118
      %2124 = vmatpush.msra.mxu0 %v2117
      %2125 = vmatpush.msra.mxu0 %v2116
      %2126 = vmatpush.msra.mxu0 %v2115
      %2127 = vmatpush.msra.mxu0 %v2114
      %2128 = vmatpush.msra.mxu0 %v2113
      %2129 = vmatpush.msra.mxu0 %v2112
      %2130 = vmatpush.msra.mxu0 %v2111
      %2131 = vmatpush.msra.mxu0 %v2110
      %2132 = vmatpush.msra.mxu0 %v2109
      %2133 = vmatpush.msra.mxu0 %v2108
      %2134 = vmatpush.msra.mxu0 %v2107
      %2135 = vmatpush.msra.mxu0 %v2106
      %2136 = vmatpush.msra.mxu0 %v2105
      %2137 = vmatmul.f32.gmra.mxu0 %v2090
      %v2138 = vpop.f32.mrf.mxu0
      %v2139 = vadd.f32 0.0, %v2138
      %2140 = vmatmul.f32.gmra.mxu0 %v2092
      %v2141 = vpop.f32.mrf.mxu0
      %v2142 = vadd.f32 0.0, %v2141
      %2143 = vmatmul.f32.gmra.mxu0 %v2094
      %v2144 = vpop.f32.mrf.mxu0
      %v2145 = vadd.f32 0.0, %v2144
      %2146 = vmatmul.f32.gmra.mxu0 %v2096
      %v2147 = vpop.f32.mrf.mxu0
      %v2148 = vadd.f32 0.0, %v2147
      %2149 = vmatmul.f32.gmra.mxu0 %v2098
      %v2150 = vpop.f32.mrf.mxu0
      %v2151 = vadd.f32 0.0, %v2150
      %2152 = vmatmul.f32.gmra.mxu0 %v2100
      %v2153 = vpop.f32.mrf.mxu0
      %v2154 = vadd.f32 0.0, %v2153
      %2155 = vmatmul.f32.gmra.mxu0 %v2102
      %v2156 = vpop.f32.mrf.mxu0
      %v2157 = vadd.f32 0.0, %v2156
      %2158 = vmatmul.f32.gmra.mxu0 %v2104
      %v2159 = vpop.f32.mrf.mxu0
      %v2160 = vadd.f32 0.0, %v2159
      %2161 = vdwg.mxu0
      %v2162 = vmax.f32 %v2139, 1e-30
      %v2163 = vmax.f32 %v2142, 1e-30
      %v2164 = vmax.f32 %v2145, 1e-30
      %v2165 = vmax.f32 %v2148, 1e-30
      %v2166 = vmax.f32 %v2151, 1e-30
      %v2167 = vmax.f32 %v2154, 1e-30
      %v2168 = vmax.f32 %v2157, 1e-30
      %v2169 = vmax.f32 %v2160, 1e-30
      %v2170 = vrcp.pop %v2162
      %v2171 = vmul.f32 %v2162, %v2170
      %v2172 = vsub.f32 1.0, %v2171
      %v2173 = vmul.f32 %v2170, %v2172
      %v2174 = vadd.f32 %v2170, %v2173
      %vm2175 = vweird.f32 %v2162
      %vm2176 = vweird.f32 %v2170
      %vm2177 = vmor %vm2175, %vm2176
      %v2178 = vsel %vm2177, %v2170, %v2174
      %v2179 = vand.u32 2147483647, %v2162
      %vm2180 = vcmp.eq.f32.partialorder %v2179, 8.507059e+37
      %v2181 = vand.u32 %v2162, 2147483648
      %v2182 = vor.u32 1.1754944e-38, %v2181
      %v2183 = vsel %vm2180, %v2182, %v2178
      %v2184 = vmul.f32 %v2090, %v2183
      %v2185 = vrcp.pop %v2163
      %v2186 = vmul.f32 %v2163, %v2185
      %v2187 = vsub.f32 1.0, %v2186
      %v2188 = vmul.f32 %v2185, %v2187
      %v2189 = vadd.f32 %v2185, %v2188
      %vm2190 = vweird.f32 %v2163
      %vm2191 = vweird.f32 %v2185
      %vm2192 = vmor %vm2190, %vm2191
      %v2193 = vsel %vm2192, %v2185, %v2189
      %v2194 = vand.u32 2147483647, %v2163
      %vm2195 = vcmp.eq.f32.partialorder %v2194, 8.507059e+37
      %v2196 = vand.u32 %v2163, 2147483648
      %v2197 = vor.u32 1.1754944e-38, %v2196
      %v2198 = vsel %vm2195, %v2197, %v2193
      %v2199 = vmul.f32 %v2092, %v2198
      %v2200 = vrcp.pop %v2164
      %v2201 = vmul.f32 %v2164, %v2200
      %v2202 = vsub.f32 1.0, %v2201
      %v2203 = vmul.f32 %v2200, %v2202
      %v2204 = vadd.f32 %v2200, %v2203
      %vm2205 = vweird.f32 %v2164
      %vm2206 = vweird.f32 %v2200
      %vm2207 = vmor %vm2205, %vm2206
      %v2208 = vsel %vm2207, %v2200, %v2204
      %v2209 = vand.u32 2147483647, %v2164
      %vm2210 = vcmp.eq.f32.partialorder %v2209, 8.507059e+37
      %v2211 = vand.u32 %v2164, 2147483648
      %v2212 = vor.u32 1.1754944e-38, %v2211
      %v2213 = vsel %vm2210, %v2212, %v2208
      %v2214 = vmul.f32 %v2094, %v2213
      %v2215 = vrcp.pop %v2165
      %v2216 = vmul.f32 %v2165, %v2215
      %v2217 = vsub.f32 1.0, %v2216
      %v2218 = vmul.f32 %v2215, %v2217
      %v2219 = vadd.f32 %v2215, %v2218
      %vm2220 = vweird.f32 %v2165
      %vm2221 = vweird.f32 %v2215
      %vm2222 = vmor %vm2220, %vm2221
      %v2223 = vsel %vm2222, %v2215, %v2219
      %v2224 = vand.u32 2147483647, %v2165
      %vm2225 = vcmp.eq.f32.partialorder %v2224, 8.507059e+37
      %v2226 = vand.u32 %v2165, 2147483648
      %v2227 = vor.u32 1.1754944e-38, %v2226
      %v2228 = vsel %vm2225, %v2227, %v2223
      %v2229 = vmul.f32 %v2096, %v2228
      %v2230 = vrcp.pop %v2166
      %v2231 = vmul.f32 %v2166, %v2230
      %v2232 = vsub.f32 1.0, %v2231
      %v2233 = vmul.f32 %v2230, %v2232
      %v2234 = vadd.f32 %v2230, %v2233
      %vm2235 = vweird.f32 %v2166
      %vm2236 = vweird.f32 %v2230
      %vm2237 = vmor %vm2235, %vm2236
      %v2238 = vsel %vm2237, %v2230, %v2234
      %v2239 = vand.u32 2147483647, %v2166
      %vm2240 = vcmp.eq.f32.partialorder %v2239, 8.507059e+37
      %v2241 = vand.u32 %v2166, 2147483648
      %v2242 = vor.u32 1.1754944e-38, %v2241
      %v2243 = vsel %vm2240, %v2242, %v2238
      %v2244 = vmul.f32 %v2098, %v2243
      %v2245 = vrcp.pop %v2167
      %v2246 = vmul.f32 %v2167, %v2245
      %v2247 = vsub.f32 1.0, %v2246
      %v2248 = vmul.f32 %v2245, %v2247
      %v2249 = vadd.f32 %v2245, %v2248
      %vm2250 = vweird.f32 %v2167
      %vm2251 = vweird.f32 %v2245
      %vm2252 = vmor %vm2250, %vm2251
      %v2253 = vsel %vm2252, %v2245, %v2249
      %v2254 = vand.u32 2147483647, %v2167
      %vm2255 = vcmp.eq.f32.partialorder %v2254, 8.507059e+37
      %v2256 = vand.u32 %v2167, 2147483648
      %v2257 = vor.u32 1.1754944e-38, %v2256
      %v2258 = vsel %vm2255, %v2257, %v2253
      %v2259 = vmul.f32 %v2100, %v2258
      %v2260 = vrcp.pop %v2168
      %v2261 = vmul.f32 %v2168, %v2260
      %v2262 = vsub.f32 1.0, %v2261
      %v2263 = vmul.f32 %v2260, %v2262
      %v2264 = vadd.f32 %v2260, %v2263
      %vm2265 = vweird.f32 %v2168
      %vm2266 = vweird.f32 %v2260
      %vm2267 = vmor %vm2265, %vm2266
      %v2268 = vsel %vm2267, %v2260, %v2264
      %v2269 = vand.u32 2147483647, %v2168
      %vm2270 = vcmp.eq.f32.partialorder %v2269, 8.507059e+37
      %v2271 = vand.u32 %v2168, 2147483648
      %v2272 = vor.u32 1.1754944e-38, %v2271
      %v2273 = vsel %vm2270, %v2272, %v2268
      %v2274 = vmul.f32 %v2102, %v2273
      %v2275 = vrcp.pop %v2169
      %v2276 = vmul.f32 %v2169, %v2275
      %v2277 = vsub.f32 1.0, %v2276
      %v2278 = vmul.f32 %v2275, %v2277
      %v2279 = vadd.f32 %v2275, %v2278
      %vm2280 = vweird.f32 %v2169
      %vm2281 = vweird.f32 %v2275
      %vm2282 = vmor %vm2280, %vm2281
      %v2283 = vsel %vm2282, %v2275, %v2279
      %v2284 = vand.u32 2147483647, %v2169
      %vm2285 = vcmp.eq.f32.partialorder %v2284, 8.507059e+37
      %v2286 = vand.u32 %v2169, 2147483648
      %v2287 = vor.u32 1.1754944e-38, %v2286
      %v2288 = vsel %vm2285, %v2287, %v2283
      %v2289 = vmul.f32 %v2104, %v2288
      %v2290 = vpack.c.bf16 %v2184, %v2184
      %v2291 = vpack.c.bf16 %v2199, %v2199
      %v2292 = vpack.c.bf16 %v2214, %v2214
      %v2293 = vpack.c.bf16 %v2229, %v2229
      %v2294 = vpack.c.bf16 %v2244, %v2244
      %v2295 = vpack.c.bf16 %v2259, %v2259
      %v2296 = vpack.c.bf16 %v2274, %v2274
      %v2297 = vpack.c.bf16 %v2289, %v2289
      %2298 = vst [vmem:[%s302] sm:$0xf] %v2290
      %2299 = vst [vmem:[%s302 + $0x4] sm:$0xf] %v2291
      %2300 = vst [vmem:[%s302 + $0x8] sm:$0xf] %v2292
      %2301 = vst [vmem:[%s302 + $0xc] sm:$0xf] %v2293
      %2302 = vst [vmem:[%s302 + $0x10] sm:$0xf] %v2294
      %2303 = vst [vmem:[%s302 + $0x14] sm:$0xf] %v2295
      %2304 = vst [vmem:[%s302 + $0x18] sm:$0xf] %v2296
      %2305 = vst [vmem:[%s302 + $0x1c] sm:$0xf] %v2297
      %p2306 = scmp.eq.s32.totalorder %s23, 0
      // Predicated region
      $region37: #{transolver_erwin_block.6} parent=35 // pred_check
        %p2307 = pneg %p2306
      $region38: #{transolver_erwin_block.6} parent=35 // pred_check_branch
        %2309 = sbr.rel (%p2307) target = $region40
      $region39: #{transolver_erwin_block.6} parent=35 // pred_region
        %vm2310 = vcmask 261120
        %2311 = vst.msk [vmem:[%s308] sm:$0xff] %vm2310, 0.0
        %2312 = vst.msk [vmem:[%s308 + $0x8] sm:$0xff] %vm2310, 0.0
        %2313 = vst.msk [vmem:[%s308 + $0x10] sm:$0xff] %vm2310, 0.0
        %2314 = vst.msk [vmem:[%s308 + $0x18] sm:$0xff] %vm2310, 0.0
        %2315 = vst.msk [vmem:[%s308 + $0x20] sm:$0xff] %vm2310, 0.0
        %2316 = vst.msk [vmem:[%s308 + $0x28] sm:$0xff] %vm2310, 0.0
        %2317 = vst.msk [vmem:[%s308 + $0x30] sm:$0xff] %vm2310, 0.0
        %2318 = vst.msk [vmem:[%s308 + $0x38] sm:$0xff] %vm2310, 0.0
        %2319 = vst.msk [vmem:[%s308 + $0x40] sm:$0xff] %vm2310, 0.0
        %2320 = vst.msk [vmem:[%s308 + $0x48] sm:$0xff] %vm2310, 0.0
        %2321 = vst.msk [vmem:[%s308 + $0x50] sm:$0xff] %vm2310, 0.0
        %2322 = vst.msk [vmem:[%s308 + $0x58] sm:$0xff] %vm2310, 0.0
        %2323 = vst.msk [vmem:[%s308 + $0x60] sm:$0xff] %vm2310, 0.0
        %2324 = vst.msk [vmem:[%s308 + $0x68] sm:$0xff] %vm2310, 0.0
        %2325 = vst.msk [vmem:[%s308 + $0x70] sm:$0xff] %vm2310, 0.0
        %2326 = vst.msk [vmem:[%s308 + $0x78] sm:$0xff] %vm2310, 0.0
        %vm2327 = vcmask 7168
        %2328 = vst.msk [vmem:[%s313] sm:$0xff] %vm2327, 0.0
        %2329 = vst.msk [vmem:[%s313 + $0x8] sm:$0xff] %vm2327, 0.0
        %2330 = vst.msk [vmem:[%s313 + $0x10] sm:$0xff] %vm2327, 0.0
        %2331 = vst.msk [vmem:[%s313 + $0x18] sm:$0xff] %vm2327, 0.0
        %2332 = vst.msk [vmem:[%s313 + $0x20] sm:$0xff] %vm2327, 0.0
        %2333 = vst.msk [vmem:[%s313 + $0x28] sm:$0xff] %vm2327, 0.0
        %2334 = vst.msk [vmem:[%s313 + $0x30] sm:$0xff] %vm2327, 0.0
        %2335 = vst.msk [vmem:[%s313 + $0x38] sm:$0xff] %vm2327, 0.0
        %2336 = vst.msk [vmem:[%s313 + $0x40] sm:$0xff] %vm2327, 0.0
        %2337 = vst.msk [vmem:[%s313 + $0x48] sm:$0xff] %vm2327, 0.0
        %2338 = vst.msk [vmem:[%s313 + $0x50] sm:$0xff] %vm2327, 0.0
        %2339 = vst.msk [vmem:[%s313 + $0x58] sm:$0xff] %vm2327, 0.0
        %2340 = vst.msk [vmem:[%s313 + $0x60] sm:$0xff] %vm2327, 0.0
        %2341 = vst.msk [vmem:[%s313 + $0x68] sm:$0xff] %vm2327, 0.0
        %2342 = vst.msk [vmem:[%s313 + $0x70] sm:$0xff] %vm2327, 0.0
        %2343 = vst.msk [vmem:[%s313 + $0x78] sm:$0xff] %vm2327, 0.0
      $region40: #{transolver_erwin_block.6} parent=35 // pred_fallthru
        _
      %v2344 = vld [vmem:[%s308] sm:$0xff]
      %v2345 = vld [vmem:[%s308 + $0x8] sm:$0xff]
      %v2346 = vld [vmem:[%s308 + $0x10] sm:$0xff]
      %v2347 = vld [vmem:[%s308 + $0x18] sm:$0xff]
      %v2348 = vld [vmem:[%s308 + $0x20] sm:$0xff]
      %v2349 = vld [vmem:[%s308 + $0x28] sm:$0xff]
      %v2350 = vld [vmem:[%s308 + $0x30] sm:$0xff]
      %v2351 = vld [vmem:[%s308 + $0x38] sm:$0xff]
      %v2352 = vld [vmem:[%s308 + $0x40] sm:$0xff]
      %v2353 = vld [vmem:[%s308 + $0x48] sm:$0xff]
      %v2354 = vld [vmem:[%s308 + $0x50] sm:$0xff]
      %v2355 = vld [vmem:[%s308 + $0x58] sm:$0xff]
      %v2356 = vld [vmem:[%s308 + $0x60] sm:$0xff]
      %v2357 = vld [vmem:[%s308 + $0x68] sm:$0xff]
      %v2358 = vld [vmem:[%s308 + $0x70] sm:$0xff]
      %v2359 = vld [vmem:[%s308 + $0x78] sm:$0xff]
      %v2360 = vpack.c.bf16 %v2052, %v2050
      %v2361 = vpack.c.bf16 %v2056, %v2054
      %v2362 = vpack.c.bf16 %v2060, %v2058
      %v2363 = vpack.c.bf16 %v2064, %v2062
      %v2372 = vunpack.c.l.b16 %v2290
      %v2373 = vunpack.c.l.b16 %v2291
      %v2374 = vunpack.c.l.b16 %v2292
      %v2375 = vunpack.c.l.b16 %v2293
      %v2376 = vunpack.c.l.b16 %v2294
      %v2377 = vunpack.c.l.b16 %v2295
      %v2378 = vunpack.c.l.b16 %v2296
      %v2379 = vunpack.c.l.b16 %v2297
      %v2380 = vpack.c.b16 %v2373, %v2372
      %v2381 = vpack.c.b16 %v2375, %v2374
      %v2382 = vpack.c.b16 %v2377, %v2376
      %v2383 = vpack.c.b16 %v2379, %v2378
      %2388 = vxpose.xlu0.c.b16.start [1/8] %v2380, 128
      %2389 = vxpose.xlu0.c.b16.cont [2/8] %v2381, 128
      %2390 = vxpose.xlu0.c.b16.cont [3/8] %v2382, 128
      %2391 = vxpose.xlu0.c.b16.cont [4/8] %v2383, 128
      %2392 = vxpose.xlu0.c.b16.cont [5/8] 0, 128
      %2393 = vxpose.xlu0.c.b16.cont [6/8] 0, 128
      %2394 = vxpose.xlu0.c.b16.cont [7/8] 0, 128
      %2395 = vxpose.xlu0.c.b16.end [8/8] 0, 128
      %v2396 = vpop.trf.xlu0
      %v2397 = vpop.trf.xlu0
      %v2398 = vpop.trf.xlu0
      %v2399 = vpop.trf.xlu0
      %v2400 = vpop.trf.xlu0
      %v2401 = vpop.trf.xlu0
      %v2402 = vpop.trf.xlu0
      %v2403 = vpop.trf.xlu0
      %vm2404 = vcmask 523264
      %v2406 = vsel %vm2404, %v2396, 0
      %v2409 = vsel %vm2404, %v2397, 0
      %v2412 = vsel %vm2404, %v2398, 0
      %v2415 = vsel %vm2404, %v2399, 0
      %v2418 = vsel %vm2404, %v2400, 0
      %v2421 = vsel %vm2404, %v2401, 0
      %v2424 = vsel %vm2404, %v2402, 0
      %v2427 = vsel %vm2404, %v2403, 0
      %2429 = vmatpush.bf16.msra.mxu0 0
      %2430 = vmatpush.bf16.msra.mxu0 0
      %2431 = vmatpush.bf16.msra.mxu0 0
      %2432 = vmatpush.bf16.msra.mxu0 0
      %2433 = vmatpush.bf16.msra.mxu0 %v2363
      %2434 = vmatpush.bf16.msra.mxu0 %v2362
      %2435 = vmatpush.bf16.msra.mxu0 %v2361
      %2436 = vmatpush.bf16.msra.mxu0 %v2360
      %2437 = vmatmul.bf16.gmra.mxu0 %v2406
      %v2438 = vpop.f32.mrf.mxu0
      %v2439 = vadd.f32 0.0, %v2438
      %v2440 = vpop.f32.mrf.mxu0
      %v2441 = vadd.f32 0.0, %v2440
      %2442 = vmatmul.bf16.gmra.mxu0 %v2409
      %v2443 = vpop.f32.mrf.mxu0
      %v2444 = vadd.f32 0.0, %v2443
      %v2445 = vpop.f32.mrf.mxu0
      %v2446 = vadd.f32 0.0, %v2445
      %2447 = vmatmul.bf16.gmra.mxu0 %v2412
      %v2448 = vpop.f32.mrf.mxu0
      %v2449 = vadd.f32 0.0, %v2448
      %v2450 = vpop.f32.mrf.mxu0
      %v2451 = vadd.f32 0.0, %v2450
      %2452 = vmatmul.bf16.gmra.mxu0 %v2415
      %v2453 = vpop.f32.mrf.mxu0
      %v2454 = vadd.f32 0.0, %v2453
      %v2455 = vpop.f32.mrf.mxu0
      %v2456 = vadd.f32 0.0, %v2455
      %2457 = vmatmul.bf16.gmra.mxu0 %v2418
      %v2458 = vpop.f32.mrf.mxu0
      %v2459 = vadd.f32 0.0, %v2458
      %v2460 = vpop.f32.mrf.mxu0
      %v2461 = vadd.f32 0.0, %v2460
      %2462 = vmatmul.bf16.gmra.mxu0 %v2421
      %v2463 = vpop.f32.mrf.mxu0
      %v2464 = vadd.f32 0.0, %v2463
      %v2465 = vpop.f32.mrf.mxu0
      %v2466 = vadd.f32 0.0, %v2465
      %2467 = vmatmul.bf16.gmra.mxu0 %v2424
      %v2468 = vpop.f32.mrf.mxu0
      %v2469 = vadd.f32 0.0, %v2468
      %v2470 = vpop.f32.mrf.mxu0
      %v2471 = vadd.f32 0.0, %v2470
      %2472 = vmatmul.bf16.gmra.mxu0 %v2427
      %v2473 = vpop.f32.mrf.mxu0
      %v2474 = vadd.f32 0.0, %v2473
      %v2475 = vpop.f32.mrf.mxu0
      %v2476 = vadd.f32 0.0, %v2475
      %2477 = vdwg.mxu0
      %v2478 = vadd.f32 %v2344, %v2439
      %v2479 = vadd.f32 %v2345, %v2441
      %v2480 = vadd.f32 %v2346, %v2444
      %v2481 = vadd.f32 %v2347, %v2446
      %v2482 = vadd.f32 %v2348, %v2449
      %v2483 = vadd.f32 %v2349, %v2451
      %v2484 = vadd.f32 %v2350, %v2454
      %v2485 = vadd.f32 %v2351, %v2456
      %v2486 = vadd.f32 %v2352, %v2459
      %v2487 = vadd.f32 %v2353, %v2461
      %v2488 = vadd.f32 %v2354, %v2464
      %v2489 = vadd.f32 %v2355, %v2466
      %v2490 = vadd.f32 %v2356, %v2469
      %v2491 = vadd.f32 %v2357, %v2471
      %v2492 = vadd.f32 %v2358, %v2474
      %v2493 = vadd.f32 %v2359, %v2476
      %vm2494 = vcmask 261120
      %2495 = vst.msk [vmem:[%s308] sm:$0xff] %vm2494, %v2478
      %2496 = vst.msk [vmem:[%s308 + $0x8] sm:$0xff] %vm2494, %v2479
      %2497 = vst.msk [vmem:[%s308 + $0x10] sm:$0xff] %vm2494, %v2480
      %2498 = vst.msk [vmem:[%s308 + $0x18] sm:$0xff] %vm2494, %v2481
      %2499 = vst.msk [vmem:[%s308 + $0x20] sm:$0xff] %vm2494, %v2482
      %2500 = vst.msk [vmem:[%s308 + $0x28] sm:$0xff] %vm2494, %v2483
      %2501 = vst.msk [vmem:[%s308 + $0x30] sm:$0xff] %vm2494, %v2484
      %2502 = vst.msk [vmem:[%s308 + $0x38] sm:$0xff] %vm2494, %v2485
      %2503 = vst.msk [vmem:[%s308 + $0x40] sm:$0xff] %vm2494, %v2486
      %2504 = vst.msk [vmem:[%s308 + $0x48] sm:$0xff] %vm2494, %v2487
      %2505 = vst.msk [vmem:[%s308 + $0x50] sm:$0xff] %vm2494, %v2488
      %2506 = vst.msk [vmem:[%s308 + $0x58] sm:$0xff] %vm2494, %v2489
      %2507 = vst.msk [vmem:[%s308 + $0x60] sm:$0xff] %vm2494, %v2490
      %2508 = vst.msk [vmem:[%s308 + $0x68] sm:$0xff] %vm2494, %v2491
      %2509 = vst.msk [vmem:[%s308 + $0x70] sm:$0xff] %vm2494, %v2492
      %2510 = vst.msk [vmem:[%s308 + $0x78] sm:$0xff] %vm2494, %v2493
      %v2511 = vld [vmem:[%s313] sm:$0xff]
      %v2512 = vld [vmem:[%s313 + $0x8] sm:$0xff]
      %v2513 = vld [vmem:[%s313 + $0x10] sm:$0xff]
      %v2514 = vld [vmem:[%s313 + $0x18] sm:$0xff]
      %v2515 = vld [vmem:[%s313 + $0x20] sm:$0xff]
      %v2516 = vld [vmem:[%s313 + $0x28] sm:$0xff]
      %v2517 = vld [vmem:[%s313 + $0x30] sm:$0xff]
      %v2518 = vld [vmem:[%s313 + $0x38] sm:$0xff]
      %v2519 = vld [vmem:[%s313 + $0x40] sm:$0xff]
      %v2520 = vld [vmem:[%s313 + $0x48] sm:$0xff]
      %v2521 = vld [vmem:[%s313 + $0x50] sm:$0xff]
      %v2522 = vld [vmem:[%s313 + $0x58] sm:$0xff]
      %v2523 = vld [vmem:[%s313 + $0x60] sm:$0xff]
      %v2524 = vld [vmem:[%s313 + $0x68] sm:$0xff]
      %v2525 = vld [vmem:[%s313 + $0x70] sm:$0xff]
      %v2526 = vld [vmem:[%s313 + $0x78] sm:$0xff]
      %2527 = vxpose.xlu0.b32.start [1/16] %v2184, 128
      %2528 = vxpose.xlu0.b32.cont [2/16] %v2199, 128
      %2529 = vxpose.xlu0.b32.cont [3/16] %v2214, 128
      %2530 = vxpose.xlu0.b32.cont [4/16] %v2229, 128
      %2531 = vxpose.xlu0.b32.cont [5/16] %v2244, 128
      %2532 = vxpose.xlu0.b32.cont [6/16] %v2259, 128
      %2533 = vxpose.xlu0.b32.cont [7/16] %v2274, 128
      %2534 = vxpose.xlu0.b32.cont [8/16] %v2289, 128
      %2535 = vxpose.xlu0.b32.cont [9/16] 0.0, 128
      %2536 = vxpose.xlu0.b32.cont [10/16] 0.0, 128
      %2537 = vxpose.xlu0.b32.cont [11/16] 0.0, 128
      %2538 = vxpose.xlu0.b32.cont [12/16] 0.0, 128
      %2539 = vxpose.xlu0.b32.cont [13/16] 0.0, 128
      %2540 = vxpose.xlu0.b32.cont [14/16] 0.0, 128
      %2541 = vxpose.xlu0.b32.cont [15/16] 0.0, 128
      %2542 = vxpose.xlu0.b32.end [16/16] 0.0, 128
      %v2543 = vpop.trf.xlu0
      %v2544 = vpop.trf.xlu0
      %v2545 = vpop.trf.xlu0
      %v2546 = vpop.trf.xlu0
      %v2547 = vpop.trf.xlu0
      %v2548 = vpop.trf.xlu0
      %v2549 = vpop.trf.xlu0
      %v2550 = vpop.trf.xlu0
      %v2551 = vpop.trf.xlu0
      %v2552 = vpop.trf.xlu0
      %v2553 = vpop.trf.xlu0
      %v2554 = vpop.trf.xlu0
      %v2555 = vpop.trf.xlu0
      %v2556 = vpop.trf.xlu0
      %v2557 = vpop.trf.xlu0
      %v2558 = vpop.trf.xlu0
      %v2560 = vsel %vm2404, %v2543, 0
      %v2563 = vsel %vm2404, %v2544, 0
      %v2566 = vsel %vm2404, %v2545, 0
      %v2569 = vsel %vm2404, %v2546, 0
      %v2572 = vsel %vm2404, %v2547, 0
      %v2575 = vsel %vm2404, %v2548, 0
      %v2578 = vsel %vm2404, %v2549, 0
      %v2581 = vsel %vm2404, %v2550, 0
      %v2584 = vsel %vm2404, %v2551, 0
      %v2587 = vsel %vm2404, %v2552, 0
      %v2590 = vsel %vm2404, %v2553, 0
      %v2593 = vsel %vm2404, %v2554, 0
      %v2596 = vsel %vm2404, %v2555, 0
      %v2599 = vsel %vm2404, %v2556, 0
      %v2602 = vsel %vm2404, %v2557, 0
      %v2605 = vsel %vm2404, %v2558, 0
      %2607 = vmatpush.msra.mxu0 0.0
      %2608 = vmatpush.msra.mxu0 0.0
      %2609 = vmatpush.msra.mxu0 0.0
      %2610 = vmatpush.msra.mxu0 0.0
      %2611 = vmatpush.msra.mxu0 0.0
      %2612 = vmatpush.msra.mxu0 0.0
      %2613 = vmatpush.msra.mxu0 0.0
      %2614 = vmatpush.msra.mxu0 0.0
      %2615 = vmatpush.msra.mxu0 1.0
      %2616 = vmatpush.msra.mxu0 1.0
      %2617 = vmatpush.msra.mxu0 1.0
      %2618 = vmatpush.msra.mxu0 1.0
      %2619 = vmatpush.msra.mxu0 1.0
      %2620 = vmatpush.msra.mxu0 1.0
      %2621 = vmatpush.msra.mxu0 1.0
      %2622 = vmatpush.msra.mxu0 1.0
      %2623 = vmatmul.f32.gmra.mxu0 %v2560
      %v2624 = vpop.f32.mrf.mxu0
      %v2625 = vadd.f32 0.0, %v2624
      %2626 = vmatmul.f32.gmra.mxu0 %v2563
      %v2627 = vpop.f32.mrf.mxu0
      %v2628 = vadd.f32 0.0, %v2627
      %2629 = vmatmul.f32.gmra.mxu0 %v2566
      %v2630 = vpop.f32.mrf.mxu0
      %v2631 = vadd.f32 0.0, %v2630
      %2632 = vmatmul.f32.gmra.mxu0 %v2569
      %v2633 = vpop.f32.mrf.mxu0
      %v2634 = vadd.f32 0.0, %v2633
      %2635 = vmatmul.f32.gmra.mxu0 %v2572
      %v2636 = vpop.f32.mrf.mxu0
      %v2637 = vadd.f32 0.0, %v2636
      %2638 = vmatmul.f32.gmra.mxu0 %v2575
      %v2639 = vpop.f32.mrf.mxu0
      %v2640 = vadd.f32 0.0, %v2639
      %2641 = vmatmul.f32.gmra.mxu0 %v2578
      %v2642 = vpop.f32.mrf.mxu0
      %v2643 = vadd.f32 0.0, %v2642
      %2644 = vmatmul.f32.gmra.mxu0 %v2581
      %v2645 = vpop.f32.mrf.mxu0
      %v2646 = vadd.f32 0.0, %v2645
      %2647 = vmatmul.f32.gmra.mxu0 %v2584
      %v2648 = vpop.f32.mrf.mxu0
      %v2649 = vadd.f32 0.0, %v2648
      %2650 = vmatmul.f32.gmra.mxu0 %v2587
      %v2651 = vpop.f32.mrf.mxu0
      %v2652 = vadd.f32 0.0, %v2651
      %2653 = vmatmul.f32.gmra.mxu0 %v2590
      %v2654 = vpop.f32.mrf.mxu0
      %v2655 = vadd.f32 0.0, %v2654
      %2656 = vmatmul.f32.gmra.mxu0 %v2593
      %v2657 = vpop.f32.mrf.mxu0
      %v2658 = vadd.f32 0.0, %v2657
      %2659 = vmatmul.f32.gmra.mxu0 %v2596
      %v2660 = vpop.f32.mrf.mxu0
      %v2661 = vadd.f32 0.0, %v2660
      %2662 = vmatmul.f32.gmra.mxu0 %v2599
      %v2663 = vpop.f32.mrf.mxu0
      %v2664 = vadd.f32 0.0, %v2663
      %2665 = vmatmul.f32.gmra.mxu0 %v2602
      %v2666 = vpop.f32.mrf.mxu0
      %v2667 = vadd.f32 0.0, %v2666
      %2668 = vmatmul.f32.gmra.mxu0 %v2605
      %v2669 = vpop.f32.mrf.mxu0
      %v2670 = vadd.f32 0.0, %v2669
      %2671 = vdwg.mxu0
      %v2672 = vadd.f32 %v2511, %v2625
      %v2673 = vadd.f32 %v2512, %v2628
      %v2674 = vadd.f32 %v2513, %v2631
      %v2675 = vadd.f32 %v2514, %v2634
      %v2676 = vadd.f32 %v2515, %v2637
      %v2677 = vadd.f32 %v2516, %v2640
      %v2678 = vadd.f32 %v2517, %v2643
      %v2679 = vadd.f32 %v2518, %v2646
      %v2680 = vadd.f32 %v2519, %v2649
      %v2681 = vadd.f32 %v2520, %v2652
      %v2682 = vadd.f32 %v2521, %v2655
      %v2683 = vadd.f32 %v2522, %v2658
      %v2684 = vadd.f32 %v2523, %v2661
      %v2685 = vadd.f32 %v2524, %v2664
      %v2686 = vadd.f32 %v2525, %v2667
      %v2687 = vadd.f32 %v2526, %v2670
      %vm2688 = vcmask 7168
      %2689 = vst.msk [vmem:[%s313] sm:$0xff] %vm2688, %v2672
      %2690 = vst.msk [vmem:[%s313 + $0x8] sm:$0xff] %vm2688, %v2673
      %2691 = vst.msk [vmem:[%s313 + $0x10] sm:$0xff] %vm2688, %v2674
      %2692 = vst.msk [vmem:[%s313 + $0x18] sm:$0xff] %vm2688, %v2675
      %2693 = vst.msk [vmem:[%s313 + $0x20] sm:$0xff] %vm2688, %v2676
      %2694 = vst.msk [vmem:[%s313 + $0x28] sm:$0xff] %vm2688, %v2677
      %2695 = vst.msk [vmem:[%s313 + $0x30] sm:$0xff] %vm2688, %v2678
      %2696 = vst.msk [vmem:[%s313 + $0x38] sm:$0xff] %vm2688, %v2679
      %2697 = vst.msk [vmem:[%s313 + $0x40] sm:$0xff] %vm2688, %v2680
      %2698 = vst.msk [vmem:[%s313 + $0x48] sm:$0xff] %vm2688, %v2681
      %2699 = vst.msk [vmem:[%s313 + $0x50] sm:$0xff] %vm2688, %v2682
      %2700 = vst.msk [vmem:[%s313 + $0x58] sm:$0xff] %vm2688, %v2683
      %2701 = vst.msk [vmem:[%s313 + $0x60] sm:$0xff] %vm2688, %v2684
      %2702 = vst.msk [vmem:[%s313 + $0x68] sm:$0xff] %vm2688, %v2685
      %2703 = vst.msk [vmem:[%s313 + $0x70] sm:$0xff] %vm2688, %v2686
      %2704 = vst.msk [vmem:[%s313 + $0x78] sm:$0xff] %vm2688, %v2687
      %s2705 = smul.u32 8, %s23
      %p2706 = scmp.lt.s32.totalorder %s22, 1
      %s2707 = scalar_select %p2706, %s22, 1
      %p2708 = scmp.lt.s32.totalorder %s2705, 7
      %s2709 = scalar_select %p2708, %s2705, 7
      %s2710 = smul.addr %s2707, 8
      %s2711 = sadd.s32 %s2709, %s2710
      %s2712 = smul.addr %s2711, 4
      %s2713 = scalar_lea.vmem %s4, %s2712
      %p2714 = scmp.lt.s32.totalorder %s22, 1
      %s2715 = scalar_select %p2714, %s22, 1
      %s2716 = smul.addr %s2715, 16
      %s2717 = smul.addr %s2716, 8
      %s2718 = scalar_lea.vmem %s5, %s2717
      %p2719 = scmp.lt.s32.totalorder %s22, 1
      %s2720 = scalar_select %p2719, %s22, 1
      %s2721 = smul.addr %s2720, 16
      %s2722 = smul.addr %s2721, 8
      %s2723 = scalar_lea.vmem %s6, %s2722
      // Predicated region
      $region41: #{transolver_erwin_block.6} parent=35 // pred_check
        %p2724 = pneg %p141
      $region42: #{transolver_erwin_block.6} parent=35 // pred_check_branch
        %2726 = sbr.rel (%p2724) target = $region44
      $region43: #{transolver_erwin_block.6} parent=35 // pred_region
        %s2727 = smul.u32 8, %s23
      $region44: #{transolver_erwin_block.6} parent=35 // pred_fallthru
        _
      // Predicated region
      $region45: #{transolver_erwin_block.6} parent=35 // pred_check
        %p2728 = pneg %p167
      $region46: #{transolver_erwin_block.6} parent=35 // pred_check_branch
        %2730 = sbr.rel (%p2728) target = $region48
      $region47: #{transolver_erwin_block.6} parent=35 // pred_region
        _
      $region48: #{transolver_erwin_block.6} parent=35 // pred_fallthru
        _
      // Predicated region
      $region49: #{transolver_erwin_block.6} parent=35 // pred_check
        %p2731 = pneg %p193
      $region50: #{transolver_erwin_block.6} parent=35 // pred_check_branch
        %2733 = sbr.rel (%p2731) target = $region52
      $region51: #{transolver_erwin_block.6} parent=35 // pred_region
        _
      $region52: #{transolver_erwin_block.6} parent=35 // pred_fallthru
        _
    $region36: #{transolver_erwin_block.6} parent=5 // pred_fallthru
      _
    %p2734 = scmp.le.s32.totalorder 2, %s13
    // Predicated region
    $region53: #{transolver_erwin_block.6} parent=5 // pred_check
      %p2735 = pneg %p2734
    $region54: #{transolver_erwin_block.6} parent=5 // pred_check_branch
      %2737 = sbr.rel (%p2735) target = $region56
    $region55: #{transolver_erwin_block.6} parent=5 // pred_region
      %s2738 = ssub.s32 %s13, 2
      // Predicated region
      $region57: #{transolver_erwin_block.6} parent=55 // pred_check
        %p2739 = pneg %p147
      $region58: #{transolver_erwin_block.6} parent=55 // pred_check_branch
        %2741 = sbr.rel (%p2739) target = $region60
      $region59: #{transolver_erwin_block.6} parent=55 // pred_region
        %s2742 = smul.u32 8, %s25
        %p2743 = scmp.lt.s32.totalorder %s24, 1
        %s2744 = scalar_select %p2743, %s24, 1
        %p2745 = scmp.lt.s32.totalorder %s2742, 7
        %s2746 = scalar_select %p2745, %s2742, 7
        %s2747 = smul.addr %s2744, 8
        %s2748 = sadd.s32 %s2746, %s2747
        %s2749 = smul.addr %s2748, 4
        %s2750 = scalar_lea.vmem %s4, %s2749
      $region60: #{transolver_erwin_block.6} parent=55 // pred_fallthru
        _
      // Predicated region
      $region61: #{transolver_erwin_block.6} parent=55 // pred_check
        %p2751 = pneg %p173
      $region62: #{transolver_erwin_block.6} parent=55 // pred_check_branch
        %2753 = sbr.rel (%p2751) target = $region64
      $region63: #{transolver_erwin_block.6} parent=55 // pred_region
        %p2754 = scmp.lt.s32.totalorder %s24, 1
        %s2755 = scalar_select %p2754, %s24, 1
        %s2756 = smul.addr %s2755, 16
        %s2757 = smul.addr %s2756, 8
        %s2758 = scalar_lea.vmem %s5, %s2757
      $region64: #{transolver_erwin_block.6} parent=55 // pred_fallthru
        _
      // Predicated region
      $region65: #{transolver_erwin_block.6} parent=55 // pred_check
        %p2759 = pneg %p199
      $region66: #{transolver_erwin_block.6} parent=55 // pred_check_branch
        %2761 = sbr.rel (%p2759) target = $region68
      $region67: #{transolver_erwin_block.6} parent=55 // pred_region
        %p2762 = scmp.lt.s32.totalorder %s24, 1
        %s2763 = scalar_select %p2762, %s24, 1
        %s2764 = smul.addr %s2763, 16
        %s2765 = smul.addr %s2764, 8
        %s2766 = scalar_lea.vmem %s6, %s2765
      $region68: #{transolver_erwin_block.6} parent=55 // pred_fallthru
        _
    $region56: #{transolver_erwin_block.6} parent=5 // pred_fallthru
      _
  $region6: #{transolver_erwin_block.6} parent=0 // loop_footer
    %s17 = sadd.s32 1, %s13
  $region7: #{transolver_erwin_block.6} parent=0 // loop_footer_branch
    %12 = sbr.rel target = $region3
  $region8: #{transolver_erwin_block.6} parent=0 // loop_exit
    _

</llo_original>
